<compile_context>
chip_gen: v7x
topology: tpu7x:2x2x1
jax: 0.10.0
libtpu: 0.0.40
codegen_flags: <defaults>
</compile_context>

<pallas_src>
import functools

import jax
import jax.numpy as jnp
from jax.experimental import pallas as pl
from jax.experimental.pallas import tpu as pltpu

H = W = 28
HW = H * W                 # 784
KH = KW = 3
NUM_CLASSES = 10
PAD = 128                  # lane-aligned offset of the staged tile in the scratch
BORDER = 32                # zeroed border; taps reach at most +/- (W+1) = 29 lanes
SW = PAD + HW + BORDER     # scratch width (944)


def _net_kernel(x_ref, wc_ref, bc_ref, ml_ref, mr_ref, w2_ref, b2_ref, *rest,
                pretraining):
    """Conv2d(1,1,3,pad=1) -> ReLU -> Flatten -> Linear(784,10) -> ReLU
    [-> Linear(10,10) if not pretraining], one batch tile per grid step."""
    if pretraining:
        o_ref, xs_ref = rest
        w3_ref = b3_ref = None
    else:
        w3_ref, b3_ref, o_ref, xs_ref = rest

    tb = x_ref.shape[0]

    # Zero only the two borders the shifted taps can read; the interior
    # [PAD, PAD+HW) is fully overwritten every step by the staging store.
    zero_border = jnp.zeros((tb, BORDER), jnp.float32)
    xs_ref[:, PAD - BORDER:PAD] = zero_border
    xs_ref[:, PAD + HW:PAD + HW + BORDER] = zero_border
    # Stage the flat image tile at a lane-aligned offset (PAD = 128).
    xs_ref[:, PAD:PAD + HW] = x_ref[...]

    def tap(off):
        # Direct ref-slice read: out-of-range rows fall into the zero border.
        return xs_ref[:, PAD + off:PAD + off + HW]

    # 3x3 conv as 9 shifted multiply-adds in the flat (tb, 784) layout.
    # Column wrap-around (j-1 / j+1 crossing a row boundary) is masked out.
    s_c = (wc_ref[0, 1] * tap(-W) + wc_ref[1, 1] * tap(0) + wc_ref[2, 1] * tap(W))
    s_l = (wc_ref[0, 0] * tap(-W - 1) + wc_ref[1, 0] * tap(-1) + wc_ref[2, 0] * tap(W - 1))
    s_r = (wc_ref[0, 2] * tap(-W + 1) + wc_ref[1, 2] * tap(1) + wc_ref[2, 2] * tap(W + 1))
    conv = s_c + ml_ref[...] * s_l + mr_ref[...] * s_r
    conv = jnp.maximum(conv + bc_ref[0, 0], 0.0)          # bias + ReLU, (tb, 784)

    # Flatten is already done (lane-dense flat layout): one K=784 MXU matmul.
    acc = jnp.dot(conv, w2_ref[...], preferred_element_type=jnp.float32)
    acc = jnp.maximum(acc + b2_ref[...], 0.0)              # (tb, 10)

    if not pretraining:
        acc = jnp.dot(acc, w3_ref[...], preferred_element_type=jnp.float32) + b3_ref[...]

    o_ref[...] = acc


def net_forward(x, params, *, pretraining=True, tb=128):
    """x: (B, 1, 28, 28) float32 (NCHW like PyTorch). Returns (B, 10)."""
    B = x.shape[0]
    x_flat = x.reshape(B, HW)                              # C == 1, free reshape
    if B <= tb:
        tb = B
    else:
        assert B % tb == 0 and tb % 8 == 0, "batch tile must divide B and be a multiple of 8"
    grid = (B // tb,)

    wconv = params["conv_w"][0, 0]                         # (3, 3) scalars -> SMEM
    bconv = params["conv_b"].reshape(1, 1)                 # (1, 1)
    col = jnp.arange(HW, dtype=jnp.int32) % W
    mask_l = (col != 0).astype(jnp.float32).reshape(1, HW)      # kills j-1 wrap
    mask_r = (col != W - 1).astype(jnp.float32).reshape(1, HW)  # kills j+1 wrap
    w2 = params["fc1_w"].T                                 # (784, 10)
    b2 = params["fc1_b"].reshape(1, NUM_CLASSES)

    def const_spec(shape):                                 # VMEM-resident constants
        return pl.BlockSpec(shape, lambda *_: (0,) * len(shape))

    args = [x_flat, wconv, bconv, mask_l, mask_r, w2, b2]
    in_specs = [
        pl.BlockSpec((tb, HW), lambda i: (i, 0)),                      # batch-tiled input
        pl.BlockSpec(memory_space=pltpu.MemorySpace.SMEM),             # conv weight
        pl.BlockSpec(memory_space=pltpu.MemorySpace.SMEM),             # conv bias
        const_spec((1, HW)), const_spec((1, HW)),                      # column masks
        const_spec((HW, NUM_CLASSES)), const_spec((1, NUM_CLASSES)),   # fc1 w, b
    ]
    if not pretraining:
        args += [params["fc2_w"].T, params["fc2_b"].reshape(1, NUM_CLASSES)]
        in_specs += [const_spec((NUM_CLASSES, NUM_CLASSES)),
                     const_spec((1, NUM_CLASSES))]

    kernel = functools.partial(_net_kernel, pretraining=pretraining)
    return pl.pallas_call(
        kernel,
        out_shape=jax.ShapeDtypeStruct((B, NUM_CLASSES), jnp.float32),
        grid=grid,
        in_specs=in_specs,
        out_specs=pl.BlockSpec((tb, NUM_CLASSES), lambda i: (i, 0)),
        scratch_shapes=[pltpu.VMEM((tb, SW), jnp.float32)],
        compiler_params=pltpu.CompilerParams(dimension_semantics=("parallel",)),
    )(*args)


def _reference_forward(x, params, *, pretraining=True):
    """Pure-JAX reference matching the PyTorch module."""
    conv = jax.lax.conv_general_dilated(
        x, params["conv_w"], window_strides=(1, 1), padding="SAME",
        dimension_numbers=("NCHW", "OIHW", "NCHW"))
    conv = jax.nn.relu(conv + params["conv_b"].reshape(1, 1, 1, 1))
    flat = conv.reshape(conv.shape[0], -1)                          # (B, 784)
    y = jax.nn.relu(flat @ params["fc1_w"].T + params["fc1_b"])
    if not pretraining:
        y = y @ params["fc2_w"].T + params["fc2_b"]
    return y


def make_params(key):
    k1, k2, k3, k4, k5, k6 = jax.random.split(key, 6)
    return {
        "conv_w": 0.1 * jax.random.normal(k1, (1, 1, KH, KW), jnp.float32),
        "conv_b": 0.1 * jax.random.normal(k2, (1,), jnp.float32),
        "fc1_w": 0.05 * jax.random.normal(k3, (NUM_CLASSES, H * W), jnp.float32),
        "fc1_b": 0.05 * jax.random.normal(k4, (NUM_CLASSES,), jnp.float32),
        "fc2_w": 0.1 * jax.random.normal(k5, (NUM_CLASSES, NUM_CLASSES), jnp.float32),
        "fc2_b": 0.1 * jax.random.normal(k6, (NUM_CLASSES,), jnp.float32),
    }


if __name__ == "__main__":
    key = jax.random.PRNGKey(0)
    kx, kp = jax.random.split(key)
    params = make_params(kp)

    # Linear(28*28, 10) fixes the spatial size at 28x28; batch tiled by 128
    # -> grid=(2,), one tile per TensorCore on v7x, big tile amortizes the
    # per-grid-step overhead on v5e/v6e.
    B = 256
    x = jax.random.normal(kx, (B, 1, 28, 28), jnp.float32)

    # Default module state: pretraining=True (layer3 skipped).
    out = jax.block_until_ready(net_forward(x, params, pretraining=True, tb=128))
    ref = _reference_forward(x, params, pretraining=True)

    # fix_backbone() / pretraining=False path (adds Linear(10, 10)).
    out_ft = jax.block_until_ready(net_forward(x, params, pretraining=False, tb=128))
    ref_ft = _reference_forward(x, params, pretraining=False)

    assert out.shape == (B, NUM_CLASSES) and out_ft.shape == (B, NUM_CLASSES)
    assert jnp.allclose(out, ref, rtol=1e-4, atol=1e-4)
    assert jnp.allclose(out_ft, ref_ft, rtol=1e-4, atol=1e-4)
    print("KERNEL_OK")
</pallas_src>

<mosaic_0001>
module attributes {stable_mosaic.version = 11 : i64} {
  func.func @_net_kernel(%arg0: i32, %arg1: memref<128x784xf32, #tpu.memory_space<vmem>>, %arg2: memref<3x3xf32, #tpu.memory_space<smem>>, %arg3: memref<1x1xf32, #tpu.memory_space<smem>>, %arg4: memref<1x784xf32, #tpu.memory_space<vmem>>, %arg5: memref<1x784xf32, #tpu.memory_space<vmem>>, %arg6: memref<784x10xf32, #tpu.memory_space<vmem>>, %arg7: memref<1x10xf32, #tpu.memory_space<vmem>>, %arg8: memref<128x10xf32, #tpu.memory_space<vmem>>, %arg9: memref<128x944xf32, #tpu.memory_space<vmem>>) attributes {dimension_semantics = [#tpu.dimension_semantics<parallel>], iteration_bounds = array<i64: 2>, scalar_prefetch = 0 : i64, scratch_operands = 1 : i64, tpu.core_type = #tpu.core_type<tc>, window_params = [{transform_indices = @transform_0, window_bounds = array<i64: 128, 784>}, {transform_indices = @transform_1, window_bounds = array<i64: 3, 3>}, {transform_indices = @transform_2, window_bounds = array<i64: 1, 1>}, {pipeline_mode = #tpu.pipeline_mode<synchronous>, transform_indices = @transform_3, window_bounds = array<i64: 1, 784>}, {pipeline_mode = #tpu.pipeline_mode<synchronous>, transform_indices = @transform_4, window_bounds = array<i64: 1, 784>}, {pipeline_mode = #tpu.pipeline_mode<synchronous>, transform_indices = @transform_5, window_bounds = array<i64: 784, 10>}, {pipeline_mode = #tpu.pipeline_mode<synchronous>, transform_indices = @transform_6, window_bounds = array<i64: 1, 10>}, {transform_indices = @transform_7, window_bounds = array<i64: 128, 10>}]} {
    %cst = arith.constant 0.000000e+00 : f32
    %0 = vector.broadcast %cst : f32 to vector<128x32xf32>
    %c0 = arith.constant 0 : index
    %c96 = arith.constant 96 : index
    %1 = vector.load %arg9[%c0, %c96] : memref<128x944xf32, #tpu.memory_space<vmem>>, vector<128x32xf32>
    tpu.vector_store %arg9[%c0, %c96], %0 {strides = array<i32>} : memref<128x944xf32, #tpu.memory_space<vmem>>, vector<128x32xf32>,
    %c0_0 = arith.constant 0 : index
    %c912 = arith.constant 912 : index
    %2 = vector.load %arg9[%c0_0, %c912] : memref<128x944xf32, #tpu.memory_space<vmem>>, vector<128x32xf32>
    tpu.vector_store %arg9[%c0_0, %c912], %0 {strides = array<i32>} : memref<128x944xf32, #tpu.memory_space<vmem>>, vector<128x32xf32>,
    %c0_1 = arith.constant 0 : index
    %c0_2 = arith.constant 0 : index
    %3 = vector.load %arg1[%c0_1, %c0_2] : memref<128x784xf32, #tpu.memory_space<vmem>>, vector<128x784xf32>
    %c0_3 = arith.constant 0 : index
    %c128 = arith.constant 128 : index
    %4 = vector.load %arg9[%c0_3, %c128] : memref<128x944xf32, #tpu.memory_space<vmem>>, vector<128x784xf32>
    tpu.vector_store %arg9[%c0_3, %c128], %3 {strides = array<i32>} : memref<128x944xf32, #tpu.memory_space<vmem>>, vector<128x784xf32>,
    %c0_4 = arith.constant 0 : index
    %c1 = arith.constant 1 : index
    %5 = memref.load %arg2[%c0_4, %c1] : memref<3x3xf32, #tpu.memory_space<smem>>
    %c0_5 = arith.constant 0 : index
    %c100 = arith.constant 100 : index
    %6 = vector.load %arg9[%c0_5, %c100] : memref<128x944xf32, #tpu.memory_space<vmem>>, vector<128x784xf32>
    %7 = vector.broadcast %5 : f32 to vector<128x784xf32>
    %8 = arith.mulf %7, %6 : vector<128x784xf32>
    %c1_6 = arith.constant 1 : index
    %c1_7 = arith.constant 1 : index
    %9 = memref.load %arg2[%c1_6, %c1_7] : memref<3x3xf32, #tpu.memory_space<smem>>
    %c0_8 = arith.constant 0 : index
    %c128_9 = arith.constant 128 : index
    %10 = vector.load %arg9[%c0_8, %c128_9] : memref<128x944xf32, #tpu.memory_space<vmem>>, vector<128x784xf32>
    %11 = vector.broadcast %9 : f32 to vector<128x784xf32>
    %12 = arith.mulf %11, %10 : vector<128x784xf32>
    %13 = arith.addf %8, %12 : vector<128x784xf32>
    %c2 = arith.constant 2 : index
    %c1_10 = arith.constant 1 : index
    %14 = memref.load %arg2[%c2, %c1_10] : memref<3x3xf32, #tpu.memory_space<smem>>
    %c0_11 = arith.constant 0 : index
    %c156 = arith.constant 156 : index
    %15 = vector.load %arg9[%c0_11, %c156] : memref<128x944xf32, #tpu.memory_space<vmem>>, vector<128x784xf32>
    %16 = vector.broadcast %14 : f32 to vector<128x784xf32>
    %17 = arith.mulf %16, %15 : vector<128x784xf32>
    %18 = arith.addf %13, %17 : vector<128x784xf32>
    %c0_12 = arith.constant 0 : index
    %c0_13 = arith.constant 0 : index
    %19 = memref.load %arg2[%c0_12, %c0_13] : memref<3x3xf32, #tpu.memory_space<smem>>
    %c0_14 = arith.constant 0 : index
    %c99 = arith.constant 99 : index
    %20 = vector.load %arg9[%c0_14, %c99] : memref<128x944xf32, #tpu.memory_space<vmem>>, vector<128x784xf32>
    %21 = vector.broadcast %19 : f32 to vector<128x784xf32>
    %22 = arith.mulf %21, %20 : vector<128x784xf32>
    %c1_15 = arith.constant 1 : index
    %c0_16 = arith.constant 0 : index
    %23 = memref.load %arg2[%c1_15, %c0_16] : memref<3x3xf32, #tpu.memory_space<smem>>
    %c0_17 = arith.constant 0 : index
    %c127 = arith.constant 127 : index
    %24 = vector.load %arg9[%c0_17, %c127] : memref<128x944xf32, #tpu.memory_space<vmem>>, vector<128x784xf32>
    %25 = vector.broadcast %23 : f32 to vector<128x784xf32>
    %26 = arith.mulf %25, %24 : vector<128x784xf32>
    %27 = arith.addf %22, %26 : vector<128x784xf32>
    %c2_18 = arith.constant 2 : index
    %c0_19 = arith.constant 0 : index
    %28 = memref.load %arg2[%c2_18, %c0_19] : memref<3x3xf32, #tpu.memory_space<smem>>
    %c0_20 = arith.constant 0 : index
    %c155 = arith.constant 155 : index
    %29 = vector.load %arg9[%c0_20, %c155] : memref<128x944xf32, #tpu.memory_space<vmem>>, vector<128x784xf32>
    %30 = vector.broadcast %28 : f32 to vector<128x784xf32>
    %31 = arith.mulf %30, %29 : vector<128x784xf32>
    %32 = arith.addf %27, %31 : vector<128x784xf32>
    %c0_21 = arith.constant 0 : index
    %c2_22 = arith.constant 2 : index
    %33 = memref.load %arg2[%c0_21, %c2_22] : memref<3x3xf32, #tpu.memory_space<smem>>
    %c0_23 = arith.constant 0 : index
    %c101 = arith.constant 101 : index
    %34 = vector.load %arg9[%c0_23, %c101] : memref<128x944xf32, #tpu.memory_space<vmem>>, vector<128x784xf32>
    %35 = vector.broadcast %33 : f32 to vector<128x784xf32>
    %36 = arith.mulf %35, %34 : vector<128x784xf32>
    %c1_24 = arith.constant 1 : index
    %c2_25 = arith.constant 2 : index
    %37 = memref.load %arg2[%c1_24, %c2_25] : memref<3x3xf32, #tpu.memory_space<smem>>
    %c0_26 = arith.constant 0 : index
    %c129 = arith.constant 129 : index
    %38 = vector.load %arg9[%c0_26, %c129] : memref<128x944xf32, #tpu.memory_space<vmem>>, vector<128x784xf32>
    %39 = vector.broadcast %37 : f32 to vector<128x784xf32>
    %40 = arith.mulf %39, %38 : vector<128x784xf32>
    %41 = arith.addf %36, %40 : vector<128x784xf32>
    %c2_27 = arith.constant 2 : index
    %c2_28 = arith.constant 2 : index
    %42 = memref.load %arg2[%c2_27, %c2_28] : memref<3x3xf32, #tpu.memory_space<smem>>
    %c0_29 = arith.constant 0 : index
    %c157 = arith.constant 157 : index
    %43 = vector.load %arg9[%c0_29, %c157] : memref<128x944xf32, #tpu.memory_space<vmem>>, vector<128x784xf32>
    %44 = vector.broadcast %42 : f32 to vector<128x784xf32>
    %45 = arith.mulf %44, %43 : vector<128x784xf32>
    %46 = arith.addf %41, %45 : vector<128x784xf32>
    %c0_30 = arith.constant 0 : index
    %c0_31 = arith.constant 0 : index
    %47 = vector.load %arg4[%c0_30, %c0_31] : memref<1x784xf32, #tpu.memory_space<vmem>>, vector<1x784xf32>
    %48 = vector.broadcast %47 : vector<1x784xf32> to vector<128x784xf32>
    %49 = arith.mulf %48, %32 : vector<128x784xf32>
    %50 = arith.addf %18, %49 : vector<128x784xf32>
    %c0_32 = arith.constant 0 : index
    %c0_33 = arith.constant 0 : index
    %51 = vector.load %arg5[%c0_32, %c0_33] : memref<1x784xf32, #tpu.memory_space<vmem>>, vector<1x784xf32>
    %52 = vector.broadcast %51 : vector<1x784xf32> to vector<128x784xf32>
    %53 = arith.mulf %52, %46 : vector<128x784xf32>
    %54 = arith.addf %50, %53 : vector<128x784xf32>
    %c0_34 = arith.constant 0 : index
    %c0_35 = arith.constant 0 : index
    %55 = memref.load %arg3[%c0_34, %c0_35] : memref<1x1xf32, #tpu.memory_space<smem>>
    %56 = vector.broadcast %55 : f32 to vector<128x784xf32>
    %57 = arith.addf %54, %56 : vector<128x784xf32>
    %cst_36 = arith.constant 0.000000e+00 : f32
    %58 = vector.broadcast %cst_36 : f32 to vector<128x784xf32>
    %59 = arith.maximumf %57, %58 : vector<128x784xf32>
    %c0_37 = arith.constant 0 : index
    %c0_38 = arith.constant 0 : index
    %60 = vector.load %arg6[%c0_37, %c0_38] : memref<784x10xf32, #tpu.memory_space<vmem>>, vector<784x10xf32>
    %cst_39 = arith.constant dense<0.000000e+00> : vector<128x10xf32>
    %61 = tpu.matmul %59, %60, %cst_39 {dimension_numbers = #tpu.dot_dimension_numbers<[1], [0], [0], [1], [0, 0, 1, 1], [], []>} : vector<128x784xf32>, vector<784x10xf32>, vector<128x10xf32> -> vector<128x10xf32>
    %c0_40 = arith.constant 0 : index
    %c0_41 = arith.constant 0 : index
    %62 = vector.load %arg7[%c0_40, %c0_41] : memref<1x10xf32, #tpu.memory_space<vmem>>, vector<1x10xf32>
    %63 = vector.broadcast %62 : vector<1x10xf32> to vector<128x10xf32>
    %64 = arith.addf %61, %63 : vector<128x10xf32>
    %cst_42 = arith.constant 0.000000e+00 : f32
    %65 = vector.broadcast %cst_42 : f32 to vector<128x10xf32>
    %66 = arith.maximumf %64, %65 : vector<128x10xf32>
    %c0_43 = arith.constant 0 : index
    %c0_44 = arith.constant 0 : index
    %67 = vector.load %arg8[%c0_43, %c0_44] : memref<128x10xf32, #tpu.memory_space<vmem>>, vector<128x10xf32>
    tpu.vector_store %arg8[%c0_43, %c0_44], %66 {strides = array<i32>} : memref<128x10xf32, #tpu.memory_space<vmem>>, vector<128x10xf32>,
    return
  }
  func.func @transform_0(%arg0: i32) -> (i32, i32) {
    %c0_i32 = arith.constant 0 : i32
    %c0_i32_0 = arith.constant 0 : i32
    return %arg0, %c0_i32 : i32, i32
  }
  func.func @transform_1(%arg0: i32) -> (i32, i32) {
    %c0_i32 = arith.constant 0 : i32
    %c0_i32_0 = arith.constant 0 : i32
    %c0_i32_1 = arith.constant 0 : i32
    return %c0_i32, %c0_i32_0 : i32, i32
  }
  func.func @transform_2(%arg0: i32) -> (i32, i32) {
    %c0_i32 = arith.constant 0 : i32
    %c0_i32_0 = arith.constant 0 : i32
    %c0_i32_1 = arith.constant 0 : i32
    return %c0_i32, %c0_i32_0 : i32, i32
  }
  func.func @transform_3(%arg0: i32) -> (i32, i32) {
    %c0_i32 = arith.constant 0 : i32
    %c0_i32_0 = arith.constant 0 : i32
    %c0_i32_1 = arith.constant 0 : i32
    return %c0_i32, %c0_i32_0 : i32, i32
  }
  func.func @transform_4(%arg0: i32) -> (i32, i32) {
    %c0_i32 = arith.constant 0 : i32
    %c0_i32_0 = arith.constant 0 : i32
    %c0_i32_1 = arith.constant 0 : i32
    return %c0_i32, %c0_i32_0 : i32, i32
  }
  func.func @transform_5(%arg0: i32) -> (i32, i32) {
    %c0_i32 = arith.constant 0 : i32
    %c0_i32_0 = arith.constant 0 : i32
    %c0_i32_1 = arith.constant 0 : i32
    return %c0_i32, %c0_i32_0 : i32, i32
  }
  func.func @transform_6(%arg0: i32) -> (i32, i32) {
    %c0_i32 = arith.constant 0 : i32
    %c0_i32_0 = arith.constant 0 : i32
    %c0_i32_1 = arith.constant 0 : i32
    return %c0_i32, %c0_i32_0 : i32, i32
  }
  func.func @transform_7(%arg0: i32) -> (i32, i32) {
    %c0_i32 = arith.constant 0 : i32
    %c0_i32_0 = arith.constant 0 : i32
    return %arg0, %c0_i32 : i32, i32
  }
}

</mosaic_0001>

<llo_original>
// kernel: tpu_custom_call.1
$region0: #{tpu_custom_call.1}
  #allocation0 [shape = 'u32[]', space=smem, size = 0x4, offset = 0x4, fixed_abs, tag = 'smem constant byte address 0x4 - core index']
  #allocation1 [shape = 'u32[144,128]{1,0:T(1,128)}', space=vmem, size = 0x12000, scoped, tag = 'internal scratch']
  #allocation2 [shape = 'f32[128,944]{1,0:T(8,128)}', space=vmem, size = 0x80000, scoped, tag = 'scratch operand']
  #allocation3 [shape = 'f32[1,1]{1,0:T(1,128)S(6)}', space=smem, size = 0x200, scoped, tag = 'scoped memory for tpu_custom_call.1']
  %s0 = inlined_call_operand.vmem [shape: f32[256,784], index: 0, kind: input, shape index: {}]
  %s1 = inlined_call_operand.vmem [shape: f32[3,3], index: 1, kind: input, shape index: {}]
  %s2 = inlined_call_operand.<no memory space> [shape: f32[1,1], index: 2, kind: input, shape index: {}]
  %s3 = inlined_call_operand.vmem [shape: f32[1,784], index: 3, kind: input, shape index: {}]
  %s4 = inlined_call_operand.vmem [shape: f32[1,784], index: 4, kind: input, shape index: {}]
  %s5 = inlined_call_operand.vmem [shape: f32[784,10], index: 5, kind: input, shape index: {}]
  %s6 = inlined_call_operand.vmem [shape: f32[1,10], index: 6, kind: input, shape index: {}]
  %s7 = inlined_call_operand.vmem [shape: f32[256,10], index: 7, kind: output, shape index: {}]
  %s8 = sld [smem:[#allocation0]]
  $region65: #{tpu_custom_call.1} parent=0
    _
  %s10 = ssub.s32 1, %s8
  %s11 = scalar_select 0, %s10, %s8
  %12 = sst [smem:[#allocation3]] %s2
  $region1: #{tpu_custom_call.1} parent=0
    #allocation4 [shape = 'u8[2048]{0}', space=smem, size = 0x800, scoped, tag = 'input window, operand 1, single buffered']
    #allocation5 [shape = 's32[2]{0}', space=sflag, size = 0x8, scoped, tag = 'scoped memory for tpu_custom_call.1']
    %13 = vsyncpa [#allocation5], 0
    loop: start=0, step=1, limit=4
    $region2: #{tpu_custom_call.1} parent=1 // loop_pre_header
      _
    $region3: #{tpu_custom_call.1} parent=1 // loop_header
      %s15 = sphi 0, %s19
      %p16 = scmp.ge.s32.totalorder %s15, 4
      %s25 = sphi 0, %s27
      %s28 = sphi 0, %s25
      %s29 = sphi 0, %s28
      %s45 = sphi 0, %s29
      %s49 = sphi 0, %s49
      %s51 = sphi 0, %s49
      %s52 = sphi 0, %s51
      %s66 = sphi 0, %s52
      %s70 = sphi 0, %s70
      %s72 = sphi 0, %s70
      %s73 = sphi 0, %s72
      %s87 = sphi 0, %s73
      %s91 = sphi 0, %s91
      %s93 = sphi 0, %s91
      %s94 = sphi 0, %s93
      %s108 = sphi 0, %s94
      %s112 = sphi 0, %s112
      %s114 = sphi 0, %s112
      %s115 = sphi 0, %s114
      %s129 = sphi 0, %s115
      %s133 = sphi 0, %s133
      %s135 = sphi 0, %s133
      %s136 = sphi 0, %s135
      %s150 = sphi 0, %s136
      %s154 = sphi 0, %s154
      %s156 = sphi 0, %s154
      %s157 = sphi 0, %s156
      %s171 = sphi 0, %s157
      %s177 = sphi 0, %s179
      %s180 = sphi 0, %s177
      %s181 = sphi 0, %s180
      %s197 = sphi 0, %s181
    $region4: #{tpu_custom_call.1} parent=1 // loop_header_branch
      %18 = sbr.rel (%p16) target = $region8
    $region5: #{tpu_custom_call.1} parent=1 // loop_body
      %s20 = ssub.s32 %s15, 1
      %s21 = ssub.s32 %s15, 2
      %s22 = sadd.s32 %s15, 1
      %s23 = ssub.s32 %s15, %s22
      %p24 = scmp.eq.s32.totalorder %s23, 0
      %s26 = sadd.s32 %s25, 1
      %s27 = scalar_select %p24, %s25, %s26
      %p30 = pneg %p24
      %p31 = scmp.eq.s32.totalorder %s15, 1
      %p32 = por %p30, %p31
      %p33 = scmp.ne.s32.totalorder %s25, %s28
      %p34 = scmp.eq.s32.totalorder %s15, 0
      %p35 = por %p33, %p34
      %p36 = scmp.ne.s32.totalorder %s25, %s28
      %p37 = scmp.eq.s32.totalorder %s20, 1
      %p38 = por %p36, %p37
      %p39 = scmp.ne.s32.totalorder %s28, %s29
      %p40 = scmp.eq.s32.totalorder %s20, 0
      %p41 = por %p39, %p40
      %p42 = scmp.ne.s32.totalorder %s28, %s29
      %p43 = scmp.eq.s32.totalorder %s21, 1
      %p44 = por %p42, %p43
      %p46 = scmp.ne.s32.totalorder %s29, %s45
      %p47 = scmp.eq.s32.totalorder %s21, 0
      %p48 = por %p46, %p47
      %s50 = sadd.s32 %s49, 1
      %p53 = scmp.eq.s32.totalorder %s15, 1
      %p54 = scmp.ne.s32.totalorder %s49, %s51
      %p55 = scmp.eq.s32.totalorder %s15, 0
      %p56 = por %p54, %p55
      %p57 = scmp.ne.s32.totalorder %s49, %s51
      %p58 = scmp.eq.s32.totalorder %s20, 1
      %p59 = por %p57, %p58
      %p60 = scmp.ne.s32.totalorder %s51, %s52
      %p61 = scmp.eq.s32.totalorder %s20, 0
      %p62 = por %p60, %p61
      %p63 = scmp.ne.s32.totalorder %s51, %s52
      %p64 = scmp.eq.s32.totalorder %s21, 1
      %p65 = por %p63, %p64
      %p67 = scmp.ne.s32.totalorder %s52, %s66
      %p68 = scmp.eq.s32.totalorder %s21, 0
      %p69 = por %p67, %p68
      %s71 = sadd.s32 %s70, 1
      %p74 = scmp.eq.s32.totalorder %s15, 1
      %p75 = scmp.ne.s32.totalorder %s70, %s72
      %p76 = scmp.eq.s32.totalorder %s15, 0
      %p77 = por %p75, %p76
      %p78 = scmp.ne.s32.totalorder %s70, %s72
      %p79 = scmp.eq.s32.totalorder %s20, 1
      %p80 = por %p78, %p79
      %p81 = scmp.ne.s32.totalorder %s72, %s73
      %p82 = scmp.eq.s32.totalorder %s20, 0
      %p83 = por %p81, %p82
      %p84 = scmp.ne.s32.totalorder %s72, %s73
      %p85 = scmp.eq.s32.totalorder %s21, 1
      %p86 = por %p84, %p85
      %p88 = scmp.ne.s32.totalorder %s73, %s87
      %p89 = scmp.eq.s32.totalorder %s21, 0
      %p90 = por %p88, %p89
      %s92 = sadd.s32 %s91, 1
      %p95 = scmp.eq.s32.totalorder %s15, 1
      %p96 = scmp.ne.s32.totalorder %s91, %s93
      %p97 = scmp.eq.s32.totalorder %s15, 0
      %p98 = por %p96, %p97
      %p99 = scmp.ne.s32.totalorder %s91, %s93
      %p100 = scmp.eq.s32.totalorder %s20, 1
      %p101 = por %p99, %p100
      %p102 = scmp.ne.s32.totalorder %s93, %s94
      %p103 = scmp.eq.s32.totalorder %s20, 0
      %p104 = por %p102, %p103
      %p105 = scmp.ne.s32.totalorder %s93, %s94
      %p106 = scmp.eq.s32.totalorder %s21, 1
      %p107 = por %p105, %p106
      %p109 = scmp.ne.s32.totalorder %s94, %s108
      %p110 = scmp.eq.s32.totalorder %s21, 0
      %p111 = por %p109, %p110
      %s113 = sadd.s32 %s112, 1
      %p116 = scmp.eq.s32.totalorder %s15, 1
      %p117 = scmp.ne.s32.totalorder %s112, %s114
      %p118 = scmp.eq.s32.totalorder %s15, 0
      %p119 = por %p117, %p118
      %p120 = scmp.ne.s32.totalorder %s112, %s114
      %p121 = scmp.eq.s32.totalorder %s20, 1
      %p122 = por %p120, %p121
      %p123 = scmp.ne.s32.totalorder %s114, %s115
      %p124 = scmp.eq.s32.totalorder %s20, 0
      %p125 = por %p123, %p124
      %p126 = scmp.ne.s32.totalorder %s114, %s115
      %p127 = scmp.eq.s32.totalorder %s21, 1
      %p128 = por %p126, %p127
      %p130 = scmp.ne.s32.totalorder %s115, %s129
      %p131 = scmp.eq.s32.totalorder %s21, 0
      %p132 = por %p130, %p131
      %s134 = sadd.s32 %s133, 1
      %p137 = scmp.eq.s32.totalorder %s15, 1
      %p138 = scmp.ne.s32.totalorder %s133, %s135
      %p139 = scmp.eq.s32.totalorder %s15, 0
      %p140 = por %p138, %p139
      %p141 = scmp.ne.s32.totalorder %s133, %s135
      %p142 = scmp.eq.s32.totalorder %s20, 1
      %p143 = por %p141, %p142
      %p144 = scmp.ne.s32.totalorder %s135, %s136
      %p145 = scmp.eq.s32.totalorder %s20, 0
      %p146 = por %p144, %p145
      %p147 = scmp.ne.s32.totalorder %s135, %s136
      %p148 = scmp.eq.s32.totalorder %s21, 1
      %p149 = por %p147, %p148
      %p151 = scmp.ne.s32.totalorder %s136, %s150
      %p152 = scmp.eq.s32.totalorder %s21, 0
      %p153 = por %p151, %p152
      %s155 = sadd.s32 %s154, 1
      %p158 = scmp.eq.s32.totalorder %s15, 1
      %p159 = scmp.ne.s32.totalorder %s154, %s156
      %p160 = scmp.eq.s32.totalorder %s15, 0
      %p161 = por %p159, %p160
      %p162 = scmp.ne.s32.totalorder %s154, %s156
      %p163 = scmp.eq.s32.totalorder %s20, 1
      %p164 = por %p162, %p163
      %p165 = scmp.ne.s32.totalorder %s156, %s157
      %p166 = scmp.eq.s32.totalorder %s20, 0
      %p167 = por %p165, %p166
      %p168 = scmp.ne.s32.totalorder %s156, %s157
      %p169 = scmp.eq.s32.totalorder %s21, 1
      %p170 = por %p168, %p169
      %p172 = scmp.ne.s32.totalorder %s157, %s171
      %p173 = scmp.eq.s32.totalorder %s21, 0
      %p174 = por %p172, %p173
      %s175 = ssub.s32 %s15, %s22
      %p176 = scmp.eq.s32.totalorder %s175, 0
      %s178 = sadd.s32 %s177, 1
      %s179 = scalar_select %p176, %s177, %s178
      %p182 = pneg %p176
      %p183 = scmp.eq.s32.totalorder %s15, 1
      %p184 = por %p182, %p183
      %p185 = scmp.ne.s32.totalorder %s177, %s180
      %p186 = scmp.eq.s32.totalorder %s15, 0
      %p187 = por %p185, %p186
      %p188 = scmp.ne.s32.totalorder %s177, %s180
      %p189 = scmp.eq.s32.totalorder %s20, 1
      %p190 = por %p188, %p189
      %p191 = scmp.ne.s32.totalorder %s180, %s181
      %p192 = scmp.eq.s32.totalorder %s20, 0
      %p193 = por %p191, %p192
      %p194 = scmp.ne.s32.totalorder %s180, %s181
      %p195 = scmp.eq.s32.totalorder %s21, 1
      %p196 = por %p194, %p195
      %p198 = scmp.ne.s32.totalorder %s181, %s197
      %p199 = scmp.eq.s32.totalorder %s21, 0
      %p200 = por %p198, %p199
      %p201 = scmp.le.s32.totalorder 1, %s15
      %p202 = scmp.lt.s32.totalorder %s15, 3
      %p203 = pnand %p201, %p202
      %p204 = pneg %p203
      // Predicated region
      $region9: #{tpu_custom_call.1} parent=5 // pred_check
        _
      $region10: #{tpu_custom_call.1} parent=5 // pred_check_branch
        %206 = sbr.rel (%p203) target = $region12
      $region11: #{tpu_custom_call.1} parent=5 // pred_region
        %s207 = ssub.s32 %s15, 1
        // Predicated region
        $region13: #{tpu_custom_call.1} parent=11 // pred_check
          %p208 = pneg %p62
        $region14: #{tpu_custom_call.1} parent=11 // pred_check_branch
          %210 = sbr.rel (%p208) target = $region16
        $region15: #{tpu_custom_call.1} parent=11 // pred_region
          %s212 = ssub.s32 64, 64
          %213 = vsyncadd [#allocation5], %s212
          %s215 = sshll.u32 %s1, 4
          %s216 = int_to_ptr.vmem [resolvable:$true] %s215
          %218 = dma.vmem_to_smem %s216, 64, [#allocation4], [#allocation5]
        $region16: #{tpu_custom_call.1} parent=11 // pred_fallthru
          _
        // Predicated region
        $region17: #{tpu_custom_call.1} parent=11 // pred_check
          %p219 = pneg %p83
        $region18: #{tpu_custom_call.1} parent=11 // pred_check_branch
          %221 = sbr.rel (%p219) target = $region20
        $region19: #{tpu_custom_call.1} parent=11 // pred_region
          _
        $region20: #{tpu_custom_call.1} parent=11 // pred_fallthru
          _
        // Predicated region
        $region21: #{tpu_custom_call.1} parent=11 // pred_check
          %p222 = pneg %p104
        $region22: #{tpu_custom_call.1} parent=11 // pred_check_branch
          %224 = sbr.rel (%p222) target = $region24
        $region23: #{tpu_custom_call.1} parent=11 // pred_region
          _
        $region24: #{tpu_custom_call.1} parent=11 // pred_fallthru
          _
        // Predicated region
        $region25: #{tpu_custom_call.1} parent=11 // pred_check
          %p225 = pneg %p125
        $region26: #{tpu_custom_call.1} parent=11 // pred_check_branch
          %227 = sbr.rel (%p225) target = $region28
        $region27: #{tpu_custom_call.1} parent=11 // pred_region
          _
        $region28: #{tpu_custom_call.1} parent=11 // pred_fallthru
          _
        // Predicated region
        $region29: #{tpu_custom_call.1} parent=11 // pred_check
          %p228 = pneg %p146
        $region30: #{tpu_custom_call.1} parent=11 // pred_check_branch
          %230 = sbr.rel (%p228) target = $region32
        $region31: #{tpu_custom_call.1} parent=11 // pred_region
          _
        $region32: #{tpu_custom_call.1} parent=11 // pred_fallthru
          _
        // Predicated region
        $region33: #{tpu_custom_call.1} parent=11 // pred_check
          %p231 = pneg %p167
        $region34: #{tpu_custom_call.1} parent=11 // pred_check_branch
          %233 = sbr.rel (%p231) target = $region36
        $region35: #{tpu_custom_call.1} parent=11 // pred_region
          _
        $region36: #{tpu_custom_call.1} parent=11 // pred_fallthru
          _
      $region12: #{tpu_custom_call.1} parent=5 // pred_fallthru
        _
      %p234 = scmp.lt.s32.totalorder %s15, 2
      // Predicated region
      $region37: #{tpu_custom_call.1} parent=5 // pred_check
        %p235 = pneg %p234
      $region38: #{tpu_custom_call.1} parent=5 // pred_check_branch
        %237 = sbr.rel (%p235) target = $region40
      $region39: #{tpu_custom_call.1} parent=5 // pred_region
        // Predicated region
        $region41: #{tpu_custom_call.1} parent=39 // pred_check
          %p238 = pneg %p35
        $region42: #{tpu_custom_call.1} parent=39 // pred_check_branch
          %240 = sbr.rel (%p238) target = $region44
        $region43: #{tpu_custom_call.1} parent=39 // pred_region
          %s241 = smul.u32 16, %s15
          %p242 = scmp.lt.s32.totalorder %s241, 31
          %s243 = scalar_select %p242, %s241, 31
          %s244 = smul.addr %s243, 7
          %s245 = smul.addr %s244, 8
          %s246 = scalar_lea.vmem %s0, %s245
          %s247 = smul.u32 16, %s15
        $region44: #{tpu_custom_call.1} parent=39 // pred_fallthru
          _
      $region40: #{tpu_custom_call.1} parent=5 // pred_fallthru
        _
      %p248 = scmp.le.s32.totalorder 1, %s15
      %p249 = scmp.lt.s32.totalorder %s15, 3
      %p250 = pnand %p248, %p249
      %p251 = pneg %p250
      // Predicated region
      $region45: #{tpu_custom_call.1} parent=5 // pred_check
        _
      $region46: #{tpu_custom_call.1} parent=5 // pred_check_branch
        %253 = sbr.rel (%p250) target = $region48
      $region47: #{tpu_custom_call.1} parent=5 // pred_region
        %s254 = ssub.s32 %s15, 1
        // Predicated region
        $region49: #{tpu_custom_call.1} parent=47 // pred_check
          %p255 = pneg %p62
        $region50: #{tpu_custom_call.1} parent=47 // pred_check_branch
          %257 = sbr.rel (%p255) target = $region52
        $region51: #{tpu_custom_call.1} parent=47 // pred_region
          %258 = dma.done [#allocation5], 64
        $region52: #{tpu_custom_call.1} parent=47 // pred_fallthru
          _
        %259 = sfence
        %s260 = smul.u32 16, %s20
        %p261 = scmp.lt.s32.totalorder %s260, 31
        %s262 = scalar_select %p261, %s260, 31
        %s263 = smul.addr %s262, 7
        %s264 = smul.addr %s263, 8
        %s265 = scalar_lea.vmem %s0, %s264
        %p266 = pneg %p41
        %p267 = pneg %p38
        %p268 = pneg %p62
        %p269 = pneg %p59
        %p270 = pneg %p83
        %p271 = pneg %p80
        %p272 = pneg %p104
        %p273 = pneg %p101
        %p274 = pneg %p125
        %p275 = pneg %p122
        %p276 = pneg %p146
        %p277 = pneg %p143
        %p278 = pneg %p167
        %p279 = pneg %p164
        %p280 = pneg %p193
        %p281 = pneg %p190
        %s282 = smul.u32 16, %s20
        %p283 = scmp.lt.s32.totalorder %s282, 31
        %s284 = scalar_select %p283, %s282, 31
        %s285 = smul.addr %s284, 8
        %s286 = scalar_lea.vmem %s7, %s285
        %s287 = smul.u32 16, %s20
        %p288 = scmp.lt.s32.totalorder %s287, 31
        %s289 = scalar_select %p288, %s287, 31
        %s290 = smul.addr %s289, 7
        %s291 = smul.addr %s290, 8
        %s292 = scalar_lea.vmem %s0, %s291
        %s293 = smul.u32 16, %s20
        %s294 = smul.u32 16, %s20
        %p295 = scmp.lt.s32.totalorder %s294, 31
        %s296 = scalar_select %p295, %s294, 31
        %s297 = smul.addr %s296, 8
        %s298 = scalar_lea.vmem %s7, %s297
        %s299 = smul.u32 16, %s20
        %vm300 = vcmask 1048320
        %301 = vst.msk [vmem:[#allocation2] sm:$0xff] %vm300, 0.0
        %302 = vst.msk [vmem:[#allocation2 + $0x40] sm:$0xff] %vm300, 0.0
        %303 = vst.msk [vmem:[#allocation2 + $0x80] sm:$0xff] %vm300, 0.0
        %304 = vst.msk [vmem:[#allocation2 + $0xc0] sm:$0xff] %vm300, 0.0
        %305 = vst.msk [vmem:[#allocation2 + $0x100] sm:$0xff] %vm300, 0.0
        %306 = vst.msk [vmem:[#allocation2 + $0x140] sm:$0xff] %vm300, 0.0
        %307 = vst.msk [vmem:[#allocation2 + $0x180] sm:$0xff] %vm300, 0.0
        %308 = vst.msk [vmem:[#allocation2 + $0x1c0] sm:$0xff] %vm300, 0.0
        %309 = vst.msk [vmem:[#allocation2 + $0x200] sm:$0xff] %vm300, 0.0
        %310 = vst.msk [vmem:[#allocation2 + $0x240] sm:$0xff] %vm300, 0.0
        %311 = vst.msk [vmem:[#allocation2 + $0x280] sm:$0xff] %vm300, 0.0
        %312 = vst.msk [vmem:[#allocation2 + $0x2c0] sm:$0xff] %vm300, 0.0
        %313 = vst.msk [vmem:[#allocation2 + $0x300] sm:$0xff] %vm300, 0.0
        %314 = vst.msk [vmem:[#allocation2 + $0x340] sm:$0xff] %vm300, 0.0
        %315 = vst.msk [vmem:[#allocation2 + $0x380] sm:$0xff] %vm300, 0.0
        %316 = vst.msk [vmem:[#allocation2 + $0x3c0] sm:$0xff] %vm300, 0.0
        %vm317 = vcmask 392320
        %318 = vst.msk [vmem:[#allocation2 + $0x38] sm:$0xff] %vm317, 0.0
        %319 = vst.msk [vmem:[#allocation2 + $0x78] sm:$0xff] %vm317, 0.0
        %320 = vst.msk [vmem:[#allocation2 + $0xb8] sm:$0xff] %vm317, 0.0
        %321 = vst.msk [vmem:[#allocation2 + $0xf8] sm:$0xff] %vm317, 0.0
        %322 = vst.msk [vmem:[#allocation2 + $0x138] sm:$0xff] %vm317, 0.0
        %323 = vst.msk [vmem:[#allocation2 + $0x178] sm:$0xff] %vm317, 0.0
        %324 = vst.msk [vmem:[#allocation2 + $0x1b8] sm:$0xff] %vm317, 0.0
        %325 = vst.msk [vmem:[#allocation2 + $0x1f8] sm:$0xff] %vm317, 0.0
        %326 = vst.msk [vmem:[#allocation2 + $0x238] sm:$0xff] %vm317, 0.0
        %327 = vst.msk [vmem:[#allocation2 + $0x278] sm:$0xff] %vm317, 0.0
        %328 = vst.msk [vmem:[#allocation2 + $0x2b8] sm:$0xff] %vm317, 0.0
        %329 = vst.msk [vmem:[#allocation2 + $0x2f8] sm:$0xff] %vm317, 0.0
        %330 = vst.msk [vmem:[#allocation2 + $0x338] sm:$0xff] %vm317, 0.0
        %331 = vst.msk [vmem:[#allocation2 + $0x378] sm:$0xff] %vm317, 0.0
        %332 = vst.msk [vmem:[#allocation2 + $0x3b8] sm:$0xff] %vm317, 0.0
        %333 = vst.msk [vmem:[#allocation2 + $0x3f8] sm:$0xff] %vm317, 0.0
        %v334 = vld [vmem:[%s292] sm:$0xff]
        %v335 = vld [vmem:[%s292 + $0x8] sm:$0xff]
        %v336 = vld [vmem:[%s292 + $0x10] sm:$0xff]
        %v337 = vld [vmem:[%s292 + $0x18] sm:$0xff]
        %v338 = vld [vmem:[%s292 + $0x20] sm:$0xff]
        %v339 = vld [vmem:[%s292 + $0x28] sm:$0xff]
        %v340 = vld [vmem:[%s292 + $0x30] sm:$0xff]
        %v341 = vld [vmem:[%s292 + $0x38] sm:$0xff]
        %v342 = vld [vmem:[%s292 + $0x40] sm:$0xff]
        %v343 = vld [vmem:[%s292 + $0x48] sm:$0xff]
        %v344 = vld [vmem:[%s292 + $0x50] sm:$0xff]
        %v345 = vld [vmem:[%s292 + $0x58] sm:$0xff]
        %v346 = vld [vmem:[%s292 + $0x60] sm:$0xff]
        %v347 = vld [vmem:[%s292 + $0x68] sm:$0xff]
        %v348 = vld [vmem:[%s292 + $0x70] sm:$0xff]
        %v349 = vld [vmem:[%s292 + $0x78] sm:$0xff]
        %v350 = vld [vmem:[%s292 + $0x80] sm:$0xff]
        %v351 = vld [vmem:[%s292 + $0x88] sm:$0xff]
        %v352 = vld [vmem:[%s292 + $0x90] sm:$0xff]
        %v353 = vld [vmem:[%s292 + $0x98] sm:$0xff]
        %v354 = vld [vmem:[%s292 + $0xa0] sm:$0xff]
        %v355 = vld [vmem:[%s292 + $0xa8] sm:$0xff]
        %v356 = vld [vmem:[%s292 + $0xb0] sm:$0xff]
        %v357 = vld [vmem:[%s292 + $0xb8] sm:$0xff]
        %v358 = vld [vmem:[%s292 + $0xc0] sm:$0xff]
        %v359 = vld [vmem:[%s292 + $0xc8] sm:$0xff]
        %v360 = vld [vmem:[%s292 + $0xd0] sm:$0xff]
        %v361 = vld [vmem:[%s292 + $0xd8] sm:$0xff]
        %v362 = vld [vmem:[%s292 + $0xe0] sm:$0xff]
        %v363 = vld [vmem:[%s292 + $0xe8] sm:$0xff]
        %v364 = vld [vmem:[%s292 + $0xf0] sm:$0xff]
        %v365 = vld [vmem:[%s292 + $0xf8] sm:$0xff]
        %v366 = vld [vmem:[%s292 + $0x100] sm:$0xff]
        %v367 = vld [vmem:[%s292 + $0x108] sm:$0xff]
        %v368 = vld [vmem:[%s292 + $0x110] sm:$0xff]
        %v369 = vld [vmem:[%s292 + $0x118] sm:$0xff]
        %v370 = vld [vmem:[%s292 + $0x120] sm:$0xff]
        %v371 = vld [vmem:[%s292 + $0x128] sm:$0xff]
        %v372 = vld [vmem:[%s292 + $0x130] sm:$0xff]
        %v373 = vld [vmem:[%s292 + $0x138] sm:$0xff]
        %v374 = vld [vmem:[%s292 + $0x140] sm:$0xff]
        %v375 = vld [vmem:[%s292 + $0x148] sm:$0xff]
        %v376 = vld [vmem:[%s292 + $0x150] sm:$0xff]
        %v377 = vld [vmem:[%s292 + $0x158] sm:$0xff]
        %v378 = vld [vmem:[%s292 + $0x160] sm:$0xff]
        %v379 = vld [vmem:[%s292 + $0x168] sm:$0xff]
        %v380 = vld [vmem:[%s292 + $0x170] sm:$0xff]
        %v381 = vld [vmem:[%s292 + $0x178] sm:$0xff]
        %v382 = vld [vmem:[%s292 + $0x180] sm:$0xff]
        %v383 = vld [vmem:[%s292 + $0x188] sm:$0xff]
        %v384 = vld [vmem:[%s292 + $0x190] sm:$0xff]
        %v385 = vld [vmem:[%s292 + $0x198] sm:$0xff]
        %v386 = vld [vmem:[%s292 + $0x1a0] sm:$0xff]
        %v387 = vld [vmem:[%s292 + $0x1a8] sm:$0xff]
        %v388 = vld [vmem:[%s292 + $0x1b0] sm:$0xff]
        %v389 = vld [vmem:[%s292 + $0x1b8] sm:$0xff]
        %v390 = vld [vmem:[%s292 + $0x1c0] sm:$0xff]
        %v391 = vld [vmem:[%s292 + $0x1c8] sm:$0xff]
        %v392 = vld [vmem:[%s292 + $0x1d0] sm:$0xff]
        %v393 = vld [vmem:[%s292 + $0x1d8] sm:$0xff]
        %v394 = vld [vmem:[%s292 + $0x1e0] sm:$0xff]
        %v395 = vld [vmem:[%s292 + $0x1e8] sm:$0xff]
        %v396 = vld [vmem:[%s292 + $0x1f0] sm:$0xff]
        %v397 = vld [vmem:[%s292 + $0x1f8] sm:$0xff]
        %v398 = vld [vmem:[%s292 + $0x200] sm:$0xff]
        %v399 = vld [vmem:[%s292 + $0x208] sm:$0xff]
        %v400 = vld [vmem:[%s292 + $0x210] sm:$0xff]
        %v401 = vld [vmem:[%s292 + $0x218] sm:$0xff]
        %v402 = vld [vmem:[%s292 + $0x220] sm:$0xff]
        %v403 = vld [vmem:[%s292 + $0x228] sm:$0xff]
        %v404 = vld [vmem:[%s292 + $0x230] sm:$0xff]
        %v405 = vld [vmem:[%s292 + $0x238] sm:$0xff]
        %v406 = vld [vmem:[%s292 + $0x240] sm:$0xff]
        %v407 = vld [vmem:[%s292 + $0x248] sm:$0xff]
        %v408 = vld [vmem:[%s292 + $0x250] sm:$0xff]
        %v409 = vld [vmem:[%s292 + $0x258] sm:$0xff]
        %v410 = vld [vmem:[%s292 + $0x260] sm:$0xff]
        %v411 = vld [vmem:[%s292 + $0x268] sm:$0xff]
        %v412 = vld [vmem:[%s292 + $0x270] sm:$0xff]
        %v413 = vld [vmem:[%s292 + $0x278] sm:$0xff]
        %v414 = vld [vmem:[%s292 + $0x280] sm:$0xff]
        %v415 = vld [vmem:[%s292 + $0x288] sm:$0xff]
        %v416 = vld [vmem:[%s292 + $0x290] sm:$0xff]
        %v417 = vld [vmem:[%s292 + $0x298] sm:$0xff]
        %v418 = vld [vmem:[%s292 + $0x2a0] sm:$0xff]
        %v419 = vld [vmem:[%s292 + $0x2a8] sm:$0xff]
        %v420 = vld [vmem:[%s292 + $0x2b0] sm:$0xff]
        %v421 = vld [vmem:[%s292 + $0x2b8] sm:$0xff]
        %v422 = vld [vmem:[%s292 + $0x2c0] sm:$0xff]
        %v423 = vld [vmem:[%s292 + $0x2c8] sm:$0xff]
        %v424 = vld [vmem:[%s292 + $0x2d0] sm:$0xff]
        %v425 = vld [vmem:[%s292 + $0x2d8] sm:$0xff]
        %v426 = vld [vmem:[%s292 + $0x2e0] sm:$0xff]
        %v427 = vld [vmem:[%s292 + $0x2e8] sm:$0xff]
        %v428 = vld [vmem:[%s292 + $0x2f0] sm:$0xff]
        %v429 = vld [vmem:[%s292 + $0x2f8] sm:$0xff]
        %v430 = vld [vmem:[%s292 + $0x300] sm:$0xff]
        %v431 = vld [vmem:[%s292 + $0x308] sm:$0xff]
        %v432 = vld [vmem:[%s292 + $0x310] sm:$0xff]
        %v433 = vld [vmem:[%s292 + $0x318] sm:$0xff]
        %v434 = vld [vmem:[%s292 + $0x320] sm:$0xff]
        %v435 = vld [vmem:[%s292 + $0x328] sm:$0xff]
        %v436 = vld [vmem:[%s292 + $0x330] sm:$0xff]
        %v437 = vld [vmem:[%s292 + $0x338] sm:$0xff]
        %v438 = vld [vmem:[%s292 + $0x340] sm:$0xff]
        %v439 = vld [vmem:[%s292 + $0x348] sm:$0xff]
        %v440 = vld [vmem:[%s292 + $0x350] sm:$0xff]
        %v441 = vld [vmem:[%s292 + $0x358] sm:$0xff]
        %v442 = vld [vmem:[%s292 + $0x360] sm:$0xff]
        %v443 = vld [vmem:[%s292 + $0x368] sm:$0xff]
        %v444 = vld [vmem:[%s292 + $0x370] sm:$0xff]
        %v445 = vld [vmem:[%s292 + $0x378] sm:$0xff]
        %446 = vst [vmem:[#allocation2 + $0x8] sm:$0xff] %v334
        %447 = vst [vmem:[#allocation2 + $0x10] sm:$0xff] %v335
        %448 = vst [vmem:[#allocation2 + $0x18] sm:$0xff] %v336
        %449 = vst [vmem:[#allocation2 + $0x20] sm:$0xff] %v337
        %450 = vst [vmem:[#allocation2 + $0x28] sm:$0xff] %v338
        %451 = vst [vmem:[#allocation2 + $0x30] sm:$0xff] %v339
        %vm452 = vcmask 130048
        %453 = vst.msk [vmem:[#allocation2 + $0x38] sm:$0xff] %vm452, %v340
        %454 = vst [vmem:[#allocation2 + $0x48] sm:$0xff] %v341
        %455 = vst [vmem:[#allocation2 + $0x50] sm:$0xff] %v342
        %456 = vst [vmem:[#allocation2 + $0x58] sm:$0xff] %v343
        %457 = vst [vmem:[#allocation2 + $0x60] sm:$0xff] %v344
        %458 = vst [vmem:[#allocation2 + $0x68] sm:$0xff] %v345
        %459 = vst [vmem:[#allocation2 + $0x70] sm:$0xff] %v346
        %460 = vst.msk [vmem:[#allocation2 + $0x78] sm:$0xff] %vm452, %v347
        %461 = vst [vmem:[#allocation2 + $0x88] sm:$0xff] %v348
        %462 = vst [vmem:[#allocation2 + $0x90] sm:$0xff] %v349
        %463 = vst [vmem:[#allocation2 + $0x98] sm:$0xff] %v350
        %464 = vst [vmem:[#allocation2 + $0xa0] sm:$0xff] %v351
        %465 = vst [vmem:[#allocation2 + $0xa8] sm:$0xff] %v352
        %466 = vst [vmem:[#allocation2 + $0xb0] sm:$0xff] %v353
        %467 = vst.msk [vmem:[#allocation2 + $0xb8] sm:$0xff] %vm452, %v354
        %468 = vst [vmem:[#allocation2 + $0xc8] sm:$0xff] %v355
        %469 = vst [vmem:[#allocation2 + $0xd0] sm:$0xff] %v356
        %470 = vst [vmem:[#allocation2 + $0xd8] sm:$0xff] %v357
        %471 = vst [vmem:[#allocation2 + $0xe0] sm:$0xff] %v358
        %472 = vst [vmem:[#allocation2 + $0xe8] sm:$0xff] %v359
        %473 = vst [vmem:[#allocation2 + $0xf0] sm:$0xff] %v360
        %474 = vst.msk [vmem:[#allocation2 + $0xf8] sm:$0xff] %vm452, %v361
        %475 = vst [vmem:[#allocation2 + $0x108] sm:$0xff] %v362
        %476 = vst [vmem:[#allocation2 + $0x110] sm:$0xff] %v363
        %477 = vst [vmem:[#allocation2 + $0x118] sm:$0xff] %v364
        %478 = vst [vmem:[#allocation2 + $0x120] sm:$0xff] %v365
        %479 = vst [vmem:[#allocation2 + $0x128] sm:$0xff] %v366
        %480 = vst [vmem:[#allocation2 + $0x130] sm:$0xff] %v367
        %481 = vst.msk [vmem:[#allocation2 + $0x138] sm:$0xff] %vm452, %v368
        %482 = vst [vmem:[#allocation2 + $0x148] sm:$0xff] %v369
        %483 = vst [vmem:[#allocation2 + $0x150] sm:$0xff] %v370
        %484 = vst [vmem:[#allocation2 + $0x158] sm:$0xff] %v371
        %485 = vst [vmem:[#allocation2 + $0x160] sm:$0xff] %v372
        %486 = vst [vmem:[#allocation2 + $0x168] sm:$0xff] %v373
        %487 = vst [vmem:[#allocation2 + $0x170] sm:$0xff] %v374
        %488 = vst.msk [vmem:[#allocation2 + $0x178] sm:$0xff] %vm452, %v375
        %489 = vst [vmem:[#allocation2 + $0x188] sm:$0xff] %v376
        %490 = vst [vmem:[#allocation2 + $0x190] sm:$0xff] %v377
        %491 = vst [vmem:[#allocation2 + $0x198] sm:$0xff] %v378
        %492 = vst [vmem:[#allocation2 + $0x1a0] sm:$0xff] %v379
        %493 = vst [vmem:[#allocation2 + $0x1a8] sm:$0xff] %v380
        %494 = vst [vmem:[#allocation2 + $0x1b0] sm:$0xff] %v381
        %495 = vst.msk [vmem:[#allocation2 + $0x1b8] sm:$0xff] %vm452, %v382
        %496 = vst [vmem:[#allocation2 + $0x1c8] sm:$0xff] %v383
        %497 = vst [vmem:[#allocation2 + $0x1d0] sm:$0xff] %v384
        %498 = vst [vmem:[#allocation2 + $0x1d8] sm:$0xff] %v385
        %499 = vst [vmem:[#allocation2 + $0x1e0] sm:$0xff] %v386
        %500 = vst [vmem:[#allocation2 + $0x1e8] sm:$0xff] %v387
        %501 = vst [vmem:[#allocation2 + $0x1f0] sm:$0xff] %v388
        %502 = vst.msk [vmem:[#allocation2 + $0x1f8] sm:$0xff] %vm452, %v389
        %503 = vst [vmem:[#allocation2 + $0x208] sm:$0xff] %v390
        %504 = vst [vmem:[#allocation2 + $0x210] sm:$0xff] %v391
        %505 = vst [vmem:[#allocation2 + $0x218] sm:$0xff] %v392
        %506 = vst [vmem:[#allocation2 + $0x220] sm:$0xff] %v393
        %507 = vst [vmem:[#allocation2 + $0x228] sm:$0xff] %v394
        %508 = vst [vmem:[#allocation2 + $0x230] sm:$0xff] %v395
        %509 = vst.msk [vmem:[#allocation2 + $0x238] sm:$0xff] %vm452, %v396
        %510 = vst [vmem:[#allocation2 + $0x248] sm:$0xff] %v397
        %511 = vst [vmem:[#allocation2 + $0x250] sm:$0xff] %v398
        %512 = vst [vmem:[#allocation2 + $0x258] sm:$0xff] %v399
        %513 = vst [vmem:[#allocation2 + $0x260] sm:$0xff] %v400
        %514 = vst [vmem:[#allocation2 + $0x268] sm:$0xff] %v401
        %515 = vst [vmem:[#allocation2 + $0x270] sm:$0xff] %v402
        %516 = vst.msk [vmem:[#allocation2 + $0x278] sm:$0xff] %vm452, %v403
        %517 = vst [vmem:[#allocation2 + $0x288] sm:$0xff] %v404
        %518 = vst [vmem:[#allocation2 + $0x290] sm:$0xff] %v405
        %519 = vst [vmem:[#allocation2 + $0x298] sm:$0xff] %v406
        %520 = vst [vmem:[#allocation2 + $0x2a0] sm:$0xff] %v407
        %521 = vst [vmem:[#allocation2 + $0x2a8] sm:$0xff] %v408
        %522 = vst [vmem:[#allocation2 + $0x2b0] sm:$0xff] %v409
        %523 = vst.msk [vmem:[#allocation2 + $0x2b8] sm:$0xff] %vm452, %v410
        %524 = vst [vmem:[#allocation2 + $0x2c8] sm:$0xff] %v411
        %525 = vst [vmem:[#allocation2 + $0x2d0] sm:$0xff] %v412
        %526 = vst [vmem:[#allocation2 + $0x2d8] sm:$0xff] %v413
        %527 = vst [vmem:[#allocation2 + $0x2e0] sm:$0xff] %v414
        %528 = vst [vmem:[#allocation2 + $0x2e8] sm:$0xff] %v415
        %529 = vst [vmem:[#allocation2 + $0x2f0] sm:$0xff] %v416
        %530 = vst.msk [vmem:[#allocation2 + $0x2f8] sm:$0xff] %vm452, %v417
        %531 = vst [vmem:[#allocation2 + $0x308] sm:$0xff] %v418
        %532 = vst [vmem:[#allocation2 + $0x310] sm:$0xff] %v419
        %533 = vst [vmem:[#allocation2 + $0x318] sm:$0xff] %v420
        %534 = vst [vmem:[#allocation2 + $0x320] sm:$0xff] %v421
        %535 = vst [vmem:[#allocation2 + $0x328] sm:$0xff] %v422
        %536 = vst [vmem:[#allocation2 + $0x330] sm:$0xff] %v423
        %537 = vst.msk [vmem:[#allocation2 + $0x338] sm:$0xff] %vm452, %v424
        %538 = vst [vmem:[#allocation2 + $0x348] sm:$0xff] %v425
        %539 = vst [vmem:[#allocation2 + $0x350] sm:$0xff] %v426
        %540 = vst [vmem:[#allocation2 + $0x358] sm:$0xff] %v427
        %541 = vst [vmem:[#allocation2 + $0x360] sm:$0xff] %v428
        %542 = vst [vmem:[#allocation2 + $0x368] sm:$0xff] %v429
        %543 = vst [vmem:[#allocation2 + $0x370] sm:$0xff] %v430
        %544 = vst.msk [vmem:[#allocation2 + $0x378] sm:$0xff] %vm452, %v431
        %545 = vst [vmem:[#allocation2 + $0x388] sm:$0xff] %v432
        %546 = vst [vmem:[#allocation2 + $0x390] sm:$0xff] %v433
        %547 = vst [vmem:[#allocation2 + $0x398] sm:$0xff] %v434
        %548 = vst [vmem:[#allocation2 + $0x3a0] sm:$0xff] %v435
        %549 = vst [vmem:[#allocation2 + $0x3a8] sm:$0xff] %v436
        %550 = vst [vmem:[#allocation2 + $0x3b0] sm:$0xff] %v437
        %551 = vst.msk [vmem:[#allocation2 + $0x3b8] sm:$0xff] %vm452, %v438
        %552 = vst [vmem:[#allocation2 + $0x3c8] sm:$0xff] %v439
        %553 = vst [vmem:[#allocation2 + $0x3d0] sm:$0xff] %v440
        %554 = vst [vmem:[#allocation2 + $0x3d8] sm:$0xff] %v441
        %555 = vst [vmem:[#allocation2 + $0x3e0] sm:$0xff] %v442
        %556 = vst [vmem:[#allocation2 + $0x3e8] sm:$0xff] %v443
        %557 = vst [vmem:[#allocation2 + $0x3f0] sm:$0xff] %v444
        %558 = vst.msk [vmem:[#allocation2 + $0x3f8] sm:$0xff] %vm452, %v445
        %s559 = sld [smem:[#allocation4 + $0x1]]
        %v560 = vld [vmem:[#allocation2] sm:$0xff]
        %v561 = vld [vmem:[#allocation2 + $0x8] sm:$0xff]
        %v562 = vld [vmem:[#allocation2 + $0x10] sm:$0xff]
        %v563 = vld [vmem:[#allocation2 + $0x18] sm:$0xff]
        %v564 = vld [vmem:[#allocation2 + $0x20] sm:$0xff]
        %v565 = vld [vmem:[#allocation2 + $0x28] sm:$0xff]
        %v566 = vld [vmem:[#allocation2 + $0x30] sm:$0xff]
        %v567 = vld [vmem:[#allocation2 + $0x40] sm:$0xff]
        %v568 = vld [vmem:[#allocation2 + $0x48] sm:$0xff]
        %v569 = vld [vmem:[#allocation2 + $0x50] sm:$0xff]
        %v570 = vld [vmem:[#allocation2 + $0x58] sm:$0xff]
        %v571 = vld [vmem:[#allocation2 + $0x60] sm:$0xff]
        %v572 = vld [vmem:[#allocation2 + $0x68] sm:$0xff]
        %v573 = vld [vmem:[#allocation2 + $0x70] sm:$0xff]
        %v574 = vld [vmem:[#allocation2 + $0x80] sm:$0xff]
        %v575 = vld [vmem:[#allocation2 + $0x88] sm:$0xff]
        %v576 = vld [vmem:[#allocation2 + $0x90] sm:$0xff]
        %v577 = vld [vmem:[#allocation2 + $0x98] sm:$0xff]
        %v578 = vld [vmem:[#allocation2 + $0xa0] sm:$0xff]
        %v579 = vld [vmem:[#allocation2 + $0xa8] sm:$0xff]
        %v580 = vld [vmem:[#allocation2 + $0xb0] sm:$0xff]
        %v581 = vld [vmem:[#allocation2 + $0xc0] sm:$0xff]
        %v582 = vld [vmem:[#allocation2 + $0xc8] sm:$0xff]
        %v583 = vld [vmem:[#allocation2 + $0xd0] sm:$0xff]
        %v584 = vld [vmem:[#allocation2 + $0xd8] sm:$0xff]
        %v585 = vld [vmem:[#allocation2 + $0xe0] sm:$0xff]
        %v586 = vld [vmem:[#allocation2 + $0xe8] sm:$0xff]
        %v587 = vld [vmem:[#allocation2 + $0xf0] sm:$0xff]
        %v588 = vld [vmem:[#allocation2 + $0x100] sm:$0xff]
        %v589 = vld [vmem:[#allocation2 + $0x108] sm:$0xff]
        %v590 = vld [vmem:[#allocation2 + $0x110] sm:$0xff]
        %v591 = vld [vmem:[#allocation2 + $0x118] sm:$0xff]
        %v592 = vld [vmem:[#allocation2 + $0x120] sm:$0xff]
        %v593 = vld [vmem:[#allocation2 + $0x128] sm:$0xff]
        %v594 = vld [vmem:[#allocation2 + $0x130] sm:$0xff]
        %v595 = vld [vmem:[#allocation2 + $0x140] sm:$0xff]
        %v596 = vld [vmem:[#allocation2 + $0x148] sm:$0xff]
        %v597 = vld [vmem:[#allocation2 + $0x150] sm:$0xff]
        %v598 = vld [vmem:[#allocation2 + $0x158] sm:$0xff]
        %v599 = vld [vmem:[#allocation2 + $0x160] sm:$0xff]
        %v600 = vld [vmem:[#allocation2 + $0x168] sm:$0xff]
        %v601 = vld [vmem:[#allocation2 + $0x170] sm:$0xff]
        %v602 = vld [vmem:[#allocation2 + $0x180] sm:$0xff]
        %v603 = vld [vmem:[#allocation2 + $0x188] sm:$0xff]
        %v604 = vld [vmem:[#allocation2 + $0x190] sm:$0xff]
        %v605 = vld [vmem:[#allocation2 + $0x198] sm:$0xff]
        %v606 = vld [vmem:[#allocation2 + $0x1a0] sm:$0xff]
        %v607 = vld [vmem:[#allocation2 + $0x1a8] sm:$0xff]
        %v608 = vld [vmem:[#allocation2 + $0x1b0] sm:$0xff]
        %v609 = vld [vmem:[#allocation2 + $0x1c0] sm:$0xff]
        %v610 = vld [vmem:[#allocation2 + $0x1c8] sm:$0xff]
        %v611 = vld [vmem:[#allocation2 + $0x1d0] sm:$0xff]
        %v612 = vld [vmem:[#allocation2 + $0x1d8] sm:$0xff]
        %v613 = vld [vmem:[#allocation2 + $0x1e0] sm:$0xff]
        %v614 = vld [vmem:[#allocation2 + $0x1e8] sm:$0xff]
        %v615 = vld [vmem:[#allocation2 + $0x1f0] sm:$0xff]
        %v616 = vld [vmem:[#allocation2 + $0x200] sm:$0xff]
        %v617 = vld [vmem:[#allocation2 + $0x208] sm:$0xff]
        %v618 = vld [vmem:[#allocation2 + $0x210] sm:$0xff]
        %v619 = vld [vmem:[#allocation2 + $0x218] sm:$0xff]
        %v620 = vld [vmem:[#allocation2 + $0x220] sm:$0xff]
        %v621 = vld [vmem:[#allocation2 + $0x228] sm:$0xff]
        %v622 = vld [vmem:[#allocation2 + $0x230] sm:$0xff]
        %v623 = vld [vmem:[#allocation2 + $0x240] sm:$0xff]
        %v624 = vld [vmem:[#allocation2 + $0x248] sm:$0xff]
        %v625 = vld [vmem:[#allocation2 + $0x250] sm:$0xff]
        %v626 = vld [vmem:[#allocation2 + $0x258] sm:$0xff]
        %v627 = vld [vmem:[#allocation2 + $0x260] sm:$0xff]
        %v628 = vld [vmem:[#allocation2 + $0x268] sm:$0xff]
        %v629 = vld [vmem:[#allocation2 + $0x270] sm:$0xff]
        %v630 = vld [vmem:[#allocation2 + $0x280] sm:$0xff]
        %v631 = vld [vmem:[#allocation2 + $0x288] sm:$0xff]
        %v632 = vld [vmem:[#allocation2 + $0x290] sm:$0xff]
        %v633 = vld [vmem:[#allocation2 + $0x298] sm:$0xff]
        %v634 = vld [vmem:[#allocation2 + $0x2a0] sm:$0xff]
        %v635 = vld [vmem:[#allocation2 + $0x2a8] sm:$0xff]
        %v636 = vld [vmem:[#allocation2 + $0x2b0] sm:$0xff]
        %v637 = vld [vmem:[#allocation2 + $0x2c0] sm:$0xff]
        %v638 = vld [vmem:[#allocation2 + $0x2c8] sm:$0xff]
        %v639 = vld [vmem:[#allocation2 + $0x2d0] sm:$0xff]
        %v640 = vld [vmem:[#allocation2 + $0x2d8] sm:$0xff]
        %v641 = vld [vmem:[#allocation2 + $0x2e0] sm:$0xff]
        %v642 = vld [vmem:[#allocation2 + $0x2e8] sm:$0xff]
        %v643 = vld [vmem:[#allocation2 + $0x2f0] sm:$0xff]
        %v644 = vld [vmem:[#allocation2 + $0x300] sm:$0xff]
        %v645 = vld [vmem:[#allocation2 + $0x308] sm:$0xff]
        %v646 = vld [vmem:[#allocation2 + $0x310] sm:$0xff]
        %v647 = vld [vmem:[#allocation2 + $0x318] sm:$0xff]
        %v648 = vld [vmem:[#allocation2 + $0x320] sm:$0xff]
        %v649 = vld [vmem:[#allocation2 + $0x328] sm:$0xff]
        %v650 = vld [vmem:[#allocation2 + $0x330] sm:$0xff]
        %v651 = vld [vmem:[#allocation2 + $0x340] sm:$0xff]
        %v652 = vld [vmem:[#allocation2 + $0x348] sm:$0xff]
        %v653 = vld [vmem:[#allocation2 + $0x350] sm:$0xff]
        %v654 = vld [vmem:[#allocation2 + $0x358] sm:$0xff]
        %v655 = vld [vmem:[#allocation2 + $0x360] sm:$0xff]
        %v656 = vld [vmem:[#allocation2 + $0x368] sm:$0xff]
        %v657 = vld [vmem:[#allocation2 + $0x370] sm:$0xff]
        %v658 = vld [vmem:[#allocation2 + $0x380] sm:$0xff]
        %v659 = vld [vmem:[#allocation2 + $0x388] sm:$0xff]
        %v660 = vld [vmem:[#allocation2 + $0x390] sm:$0xff]
        %v661 = vld [vmem:[#allocation2 + $0x398] sm:$0xff]
        %v662 = vld [vmem:[#allocation2 + $0x3a0] sm:$0xff]
        %v663 = vld [vmem:[#allocation2 + $0x3a8] sm:$0xff]
        %v664 = vld [vmem:[#allocation2 + $0x3b0] sm:$0xff]
        %v665 = vld [vmem:[#allocation2 + $0x3c0] sm:$0xff]
        %v666 = vld [vmem:[#allocation2 + $0x3c8] sm:$0xff]
        %v667 = vld [vmem:[#allocation2 + $0x3d0] sm:$0xff]
        %v668 = vld [vmem:[#allocation2 + $0x3d8] sm:$0xff]
        %v669 = vld [vmem:[#allocation2 + $0x3e0] sm:$0xff]
        %v670 = vld [vmem:[#allocation2 + $0x3e8] sm:$0xff]
        %v671 = vld [vmem:[#allocation2 + $0x3f0] sm:$0xff]
        %v672 = vstv %s559
        %v673 = vmul.f32 %v672, %v560
        %v674 = vmul.f32 %v672, %v561
        %v675 = vmul.f32 %v672, %v562
        %v676 = vmul.f32 %v672, %v563
        %v677 = vmul.f32 %v672, %v564
        %v678 = vmul.f32 %v672, %v565
        %v679 = vmul.f32 %v672, %v566
        %v680 = vmul.f32 %v672, %v567
        %v681 = vmul.f32 %v672, %v568
        %v682 = vmul.f32 %v672, %v569
        %v683 = vmul.f32 %v672, %v570
        %v684 = vmul.f32 %v672, %v571
        %v685 = vmul.f32 %v672, %v572
        %v686 = vmul.f32 %v672, %v573
        %v687 = vmul.f32 %v672, %v574
        %v688 = vmul.f32 %v672, %v575
        %v689 = vmul.f32 %v672, %v576
        %v690 = vmul.f32 %v672, %v577
        %v691 = vmul.f32 %v672, %v578
        %v692 = vmul.f32 %v672, %v579
        %v693 = vmul.f32 %v672, %v580
        %v694 = vmul.f32 %v672, %v581
        %v695 = vmul.f32 %v672, %v582
        %v696 = vmul.f32 %v672, %v583
        %v697 = vmul.f32 %v672, %v584
        %v698 = vmul.f32 %v672, %v585
        %v699 = vmul.f32 %v672, %v586
        %v700 = vmul.f32 %v672, %v587
        %v701 = vmul.f32 %v672, %v588
        %v702 = vmul.f32 %v672, %v589
        %v703 = vmul.f32 %v672, %v590
        %v704 = vmul.f32 %v672, %v591
        %v705 = vmul.f32 %v672, %v592
        %v706 = vmul.f32 %v672, %v593
        %v707 = vmul.f32 %v672, %v594
        %v708 = vmul.f32 %v672, %v595
        %v709 = vmul.f32 %v672, %v596
        %v710 = vmul.f32 %v672, %v597
        %v711 = vmul.f32 %v672, %v598
        %v712 = vmul.f32 %v672, %v599
        %v713 = vmul.f32 %v672, %v600
        %v714 = vmul.f32 %v672, %v601
        %v715 = vmul.f32 %v672, %v602
        %v716 = vmul.f32 %v672, %v603
        %v717 = vmul.f32 %v672, %v604
        %v718 = vmul.f32 %v672, %v605
        %v719 = vmul.f32 %v672, %v606
        %v720 = vmul.f32 %v672, %v607
        %v721 = vmul.f32 %v672, %v608
        %v722 = vmul.f32 %v672, %v609
        %v723 = vmul.f32 %v672, %v610
        %v724 = vmul.f32 %v672, %v611
        %v725 = vmul.f32 %v672, %v612
        %v726 = vmul.f32 %v672, %v613
        %v727 = vmul.f32 %v672, %v614
        %v728 = vmul.f32 %v672, %v615
        %v729 = vmul.f32 %v672, %v616
        %v730 = vmul.f32 %v672, %v617
        %v731 = vmul.f32 %v672, %v618
        %v732 = vmul.f32 %v672, %v619
        %v733 = vmul.f32 %v672, %v620
        %v734 = vmul.f32 %v672, %v621
        %v735 = vmul.f32 %v672, %v622
        %v736 = vmul.f32 %v672, %v623
        %v737 = vmul.f32 %v672, %v624
        %v738 = vmul.f32 %v672, %v625
        %v739 = vmul.f32 %v672, %v626
        %v740 = vmul.f32 %v672, %v627
        %v741 = vmul.f32 %v672, %v628
        %v742 = vmul.f32 %v672, %v629
        %v743 = vmul.f32 %v672, %v630
        %v744 = vmul.f32 %v672, %v631
        %v745 = vmul.f32 %v672, %v632
        %v746 = vmul.f32 %v672, %v633
        %v747 = vmul.f32 %v672, %v634
        %v748 = vmul.f32 %v672, %v635
        %v749 = vmul.f32 %v672, %v636
        %v750 = vmul.f32 %v672, %v637
        %v751 = vmul.f32 %v672, %v638
        %v752 = vmul.f32 %v672, %v639
        %v753 = vmul.f32 %v672, %v640
        %v754 = vmul.f32 %v672, %v641
        %v755 = vmul.f32 %v672, %v642
        %v756 = vmul.f32 %v672, %v643
        %v757 = vmul.f32 %v672, %v644
        %v758 = vmul.f32 %v672, %v645
        %v759 = vmul.f32 %v672, %v646
        %v760 = vmul.f32 %v672, %v647
        %v761 = vmul.f32 %v672, %v648
        %v762 = vmul.f32 %v672, %v649
        %v763 = vmul.f32 %v672, %v650
        %v764 = vmul.f32 %v672, %v651
        %v765 = vmul.f32 %v672, %v652
        %v766 = vmul.f32 %v672, %v653
        %v767 = vmul.f32 %v672, %v654
        %v768 = vmul.f32 %v672, %v655
        %v769 = vmul.f32 %v672, %v656
        %v770 = vmul.f32 %v672, %v657
        %v771 = vmul.f32 %v672, %v658
        %v772 = vmul.f32 %v672, %v659
        %v773 = vmul.f32 %v672, %v660
        %v774 = vmul.f32 %v672, %v661
        %v775 = vmul.f32 %v672, %v662
        %v776 = vmul.f32 %v672, %v663
        %v777 = vmul.f32 %v672, %v664
        %v778 = vmul.f32 %v672, %v665
        %v779 = vmul.f32 %v672, %v666
        %v780 = vmul.f32 %v672, %v667
        %v781 = vmul.f32 %v672, %v668
        %v782 = vmul.f32 %v672, %v669
        %v783 = vmul.f32 %v672, %v670
        %v784 = vmul.f32 %v672, %v671
        %s785 = sld [smem:[#allocation4 + $0x81]]
        %v786 = vld [vmem:[#allocation2 + $0x8] sm:$0xff]
        %v787 = vld [vmem:[#allocation2 + $0x10] sm:$0xff]
        %v788 = vld [vmem:[#allocation2 + $0x18] sm:$0xff]
        %v789 = vld [vmem:[#allocation2 + $0x20] sm:$0xff]
        %v790 = vld [vmem:[#allocation2 + $0x28] sm:$0xff]
        %v791 = vld [vmem:[#allocation2 + $0x30] sm:$0xff]
        %v792 = vld [vmem:[#allocation2 + $0x38] sm:$0xff]
        %v793 = vld [vmem:[#allocation2 + $0x48] sm:$0xff]
        %v794 = vld [vmem:[#allocation2 + $0x50] sm:$0xff]
        %v795 = vld [vmem:[#allocation2 + $0x58] sm:$0xff]
        %v796 = vld [vmem:[#allocation2 + $0x60] sm:$0xff]
        %v797 = vld [vmem:[#allocation2 + $0x68] sm:$0xff]
        %v798 = vld [vmem:[#allocation2 + $0x70] sm:$0xff]
        %v799 = vld [vmem:[#allocation2 + $0x78] sm:$0xff]
        %v800 = vld [vmem:[#allocation2 + $0x88] sm:$0xff]
        %v801 = vld [vmem:[#allocation2 + $0x90] sm:$0xff]
        %v802 = vld [vmem:[#allocation2 + $0x98] sm:$0xff]
        %v803 = vld [vmem:[#allocation2 + $0xa0] sm:$0xff]
        %v804 = vld [vmem:[#allocation2 + $0xa8] sm:$0xff]
        %v805 = vld [vmem:[#allocation2 + $0xb0] sm:$0xff]
        %v806 = vld [vmem:[#allocation2 + $0xb8] sm:$0xff]
        %v807 = vld [vmem:[#allocation2 + $0xc8] sm:$0xff]
        %v808 = vld [vmem:[#allocation2 + $0xd0] sm:$0xff]
        %v809 = vld [vmem:[#allocation2 + $0xd8] sm:$0xff]
        %v810 = vld [vmem:[#allocation2 + $0xe0] sm:$0xff]
        %v811 = vld [vmem:[#allocation2 + $0xe8] sm:$0xff]
        %v812 = vld [vmem:[#allocation2 + $0xf0] sm:$0xff]
        %v813 = vld [vmem:[#allocation2 + $0xf8] sm:$0xff]
        %v814 = vld [vmem:[#allocation2 + $0x108] sm:$0xff]
        %v815 = vld [vmem:[#allocation2 + $0x110] sm:$0xff]
        %v816 = vld [vmem:[#allocation2 + $0x118] sm:$0xff]
        %v817 = vld [vmem:[#allocation2 + $0x120] sm:$0xff]
        %v818 = vld [vmem:[#allocation2 + $0x128] sm:$0xff]
        %v819 = vld [vmem:[#allocation2 + $0x130] sm:$0xff]
        %v820 = vld [vmem:[#allocation2 + $0x138] sm:$0xff]
        %v821 = vld [vmem:[#allocation2 + $0x148] sm:$0xff]
        %v822 = vld [vmem:[#allocation2 + $0x150] sm:$0xff]
        %v823 = vld [vmem:[#allocation2 + $0x158] sm:$0xff]
        %v824 = vld [vmem:[#allocation2 + $0x160] sm:$0xff]
        %v825 = vld [vmem:[#allocation2 + $0x168] sm:$0xff]
        %v826 = vld [vmem:[#allocation2 + $0x170] sm:$0xff]
        %v827 = vld [vmem:[#allocation2 + $0x178] sm:$0xff]
        %v828 = vld [vmem:[#allocation2 + $0x188] sm:$0xff]
        %v829 = vld [vmem:[#allocation2 + $0x190] sm:$0xff]
        %v830 = vld [vmem:[#allocation2 + $0x198] sm:$0xff]
        %v831 = vld [vmem:[#allocation2 + $0x1a0] sm:$0xff]
        %v832 = vld [vmem:[#allocation2 + $0x1a8] sm:$0xff]
        %v833 = vld [vmem:[#allocation2 + $0x1b0] sm:$0xff]
        %v834 = vld [vmem:[#allocation2 + $0x1b8] sm:$0xff]
        %v835 = vld [vmem:[#allocation2 + $0x1c8] sm:$0xff]
        %v836 = vld [vmem:[#allocation2 + $0x1d0] sm:$0xff]
        %v837 = vld [vmem:[#allocation2 + $0x1d8] sm:$0xff]
        %v838 = vld [vmem:[#allocation2 + $0x1e0] sm:$0xff]
        %v839 = vld [vmem:[#allocation2 + $0x1e8] sm:$0xff]
        %v840 = vld [vmem:[#allocation2 + $0x1f0] sm:$0xff]
        %v841 = vld [vmem:[#allocation2 + $0x1f8] sm:$0xff]
        %v842 = vld [vmem:[#allocation2 + $0x208] sm:$0xff]
        %v843 = vld [vmem:[#allocation2 + $0x210] sm:$0xff]
        %v844 = vld [vmem:[#allocation2 + $0x218] sm:$0xff]
        %v845 = vld [vmem:[#allocation2 + $0x220] sm:$0xff]
        %v846 = vld [vmem:[#allocation2 + $0x228] sm:$0xff]
        %v847 = vld [vmem:[#allocation2 + $0x230] sm:$0xff]
        %v848 = vld [vmem:[#allocation2 + $0x238] sm:$0xff]
        %v849 = vld [vmem:[#allocation2 + $0x248] sm:$0xff]
        %v850 = vld [vmem:[#allocation2 + $0x250] sm:$0xff]
        %v851 = vld [vmem:[#allocation2 + $0x258] sm:$0xff]
        %v852 = vld [vmem:[#allocation2 + $0x260] sm:$0xff]
        %v853 = vld [vmem:[#allocation2 + $0x268] sm:$0xff]
        %v854 = vld [vmem:[#allocation2 + $0x270] sm:$0xff]
        %v855 = vld [vmem:[#allocation2 + $0x278] sm:$0xff]
        %v856 = vld [vmem:[#allocation2 + $0x288] sm:$0xff]
        %v857 = vld [vmem:[#allocation2 + $0x290] sm:$0xff]
        %v858 = vld [vmem:[#allocation2 + $0x298] sm:$0xff]
        %v859 = vld [vmem:[#allocation2 + $0x2a0] sm:$0xff]
        %v860 = vld [vmem:[#allocation2 + $0x2a8] sm:$0xff]
        %v861 = vld [vmem:[#allocation2 + $0x2b0] sm:$0xff]
        %v862 = vld [vmem:[#allocation2 + $0x2b8] sm:$0xff]
        %v863 = vld [vmem:[#allocation2 + $0x2c8] sm:$0xff]
        %v864 = vld [vmem:[#allocation2 + $0x2d0] sm:$0xff]
        %v865 = vld [vmem:[#allocation2 + $0x2d8] sm:$0xff]
        %v866 = vld [vmem:[#allocation2 + $0x2e0] sm:$0xff]
        %v867 = vld [vmem:[#allocation2 + $0x2e8] sm:$0xff]
        %v868 = vld [vmem:[#allocation2 + $0x2f0] sm:$0xff]
        %v869 = vld [vmem:[#allocation2 + $0x2f8] sm:$0xff]
        %v870 = vld [vmem:[#allocation2 + $0x308] sm:$0xff]
        %v871 = vld [vmem:[#allocation2 + $0x310] sm:$0xff]
        %v872 = vld [vmem:[#allocation2 + $0x318] sm:$0xff]
        %v873 = vld [vmem:[#allocation2 + $0x320] sm:$0xff]
        %v874 = vld [vmem:[#allocation2 + $0x328] sm:$0xff]
        %v875 = vld [vmem:[#allocation2 + $0x330] sm:$0xff]
        %v876 = vld [vmem:[#allocation2 + $0x338] sm:$0xff]
        %v877 = vld [vmem:[#allocation2 + $0x348] sm:$0xff]
        %v878 = vld [vmem:[#allocation2 + $0x350] sm:$0xff]
        %v879 = vld [vmem:[#allocation2 + $0x358] sm:$0xff]
        %v880 = vld [vmem:[#allocation2 + $0x360] sm:$0xff]
        %v881 = vld [vmem:[#allocation2 + $0x368] sm:$0xff]
        %v882 = vld [vmem:[#allocation2 + $0x370] sm:$0xff]
        %v883 = vld [vmem:[#allocation2 + $0x378] sm:$0xff]
        %v884 = vld [vmem:[#allocation2 + $0x388] sm:$0xff]
        %v885 = vld [vmem:[#allocation2 + $0x390] sm:$0xff]
        %v886 = vld [vmem:[#allocation2 + $0x398] sm:$0xff]
        %v887 = vld [vmem:[#allocation2 + $0x3a0] sm:$0xff]
        %v888 = vld [vmem:[#allocation2 + $0x3a8] sm:$0xff]
        %v889 = vld [vmem:[#allocation2 + $0x3b0] sm:$0xff]
        %v890 = vld [vmem:[#allocation2 + $0x3b8] sm:$0xff]
        %v891 = vld [vmem:[#allocation2 + $0x3c8] sm:$0xff]
        %v892 = vld [vmem:[#allocation2 + $0x3d0] sm:$0xff]
        %v893 = vld [vmem:[#allocation2 + $0x3d8] sm:$0xff]
        %v894 = vld [vmem:[#allocation2 + $0x3e0] sm:$0xff]
        %v895 = vld [vmem:[#allocation2 + $0x3e8] sm:$0xff]
        %v896 = vld [vmem:[#allocation2 + $0x3f0] sm:$0xff]
        %v897 = vld [vmem:[#allocation2 + $0x3f8] sm:$0xff]
        %v898 = vstv %s785
        %v899 = vmul.f32 %v898, %v786
        %v900 = vmul.f32 %v898, %v787
        %v901 = vmul.f32 %v898, %v788
        %v902 = vmul.f32 %v898, %v789
        %v903 = vmul.f32 %v898, %v790
        %v904 = vmul.f32 %v898, %v791
        %v905 = vmul.f32 %v898, %v792
        %v906 = vmul.f32 %v898, %v793
        %v907 = vmul.f32 %v898, %v794
        %v908 = vmul.f32 %v898, %v795
        %v909 = vmul.f32 %v898, %v796
        %v910 = vmul.f32 %v898, %v797
        %v911 = vmul.f32 %v898, %v798
        %v912 = vmul.f32 %v898, %v799
        %v913 = vmul.f32 %v898, %v800
        %v914 = vmul.f32 %v898, %v801
        %v915 = vmul.f32 %v898, %v802
        %v916 = vmul.f32 %v898, %v803
        %v917 = vmul.f32 %v898, %v804
        %v918 = vmul.f32 %v898, %v805
        %v919 = vmul.f32 %v898, %v806
        %v920 = vmul.f32 %v898, %v807
        %v921 = vmul.f32 %v898, %v808
        %v922 = vmul.f32 %v898, %v809
        %v923 = vmul.f32 %v898, %v810
        %v924 = vmul.f32 %v898, %v811
        %v925 = vmul.f32 %v898, %v812
        %v926 = vmul.f32 %v898, %v813
        %v927 = vmul.f32 %v898, %v814
        %v928 = vmul.f32 %v898, %v815
        %v929 = vmul.f32 %v898, %v816
        %v930 = vmul.f32 %v898, %v817
        %v931 = vmul.f32 %v898, %v818
        %v932 = vmul.f32 %v898, %v819
        %v933 = vmul.f32 %v898, %v820
        %v934 = vmul.f32 %v898, %v821
        %v935 = vmul.f32 %v898, %v822
        %v936 = vmul.f32 %v898, %v823
        %v937 = vmul.f32 %v898, %v824
        %v938 = vmul.f32 %v898, %v825
        %v939 = vmul.f32 %v898, %v826
        %v940 = vmul.f32 %v898, %v827
        %v941 = vmul.f32 %v898, %v828
        %v942 = vmul.f32 %v898, %v829
        %v943 = vmul.f32 %v898, %v830
        %v944 = vmul.f32 %v898, %v831
        %v945 = vmul.f32 %v898, %v832
        %v946 = vmul.f32 %v898, %v833
        %v947 = vmul.f32 %v898, %v834
        %v948 = vmul.f32 %v898, %v835
        %v949 = vmul.f32 %v898, %v836
        %v950 = vmul.f32 %v898, %v837
        %v951 = vmul.f32 %v898, %v838
        %v952 = vmul.f32 %v898, %v839
        %v953 = vmul.f32 %v898, %v840
        %v954 = vmul.f32 %v898, %v841
        %v955 = vmul.f32 %v898, %v842
        %v956 = vmul.f32 %v898, %v843
        %v957 = vmul.f32 %v898, %v844
        %v958 = vmul.f32 %v898, %v845
        %v959 = vmul.f32 %v898, %v846
        %v960 = vmul.f32 %v898, %v847
        %v961 = vmul.f32 %v898, %v848
        %v962 = vmul.f32 %v898, %v849
        %v963 = vmul.f32 %v898, %v850
        %v964 = vmul.f32 %v898, %v851
        %v965 = vmul.f32 %v898, %v852
        %v966 = vmul.f32 %v898, %v853
        %v967 = vmul.f32 %v898, %v854
        %v968 = vmul.f32 %v898, %v855
        %v969 = vmul.f32 %v898, %v856
        %v970 = vmul.f32 %v898, %v857
        %v971 = vmul.f32 %v898, %v858
        %v972 = vmul.f32 %v898, %v859
        %v973 = vmul.f32 %v898, %v860
        %v974 = vmul.f32 %v898, %v861
        %v975 = vmul.f32 %v898, %v862
        %v976 = vmul.f32 %v898, %v863
        %v977 = vmul.f32 %v898, %v864
        %v978 = vmul.f32 %v898, %v865
        %v979 = vmul.f32 %v898, %v866
        %v980 = vmul.f32 %v898, %v867
        %v981 = vmul.f32 %v898, %v868
        %v982 = vmul.f32 %v898, %v869
        %v983 = vmul.f32 %v898, %v870
        %v984 = vmul.f32 %v898, %v871
        %v985 = vmul.f32 %v898, %v872
        %v986 = vmul.f32 %v898, %v873
        %v987 = vmul.f32 %v898, %v874
        %v988 = vmul.f32 %v898, %v875
        %v989 = vmul.f32 %v898, %v876
        %v990 = vmul.f32 %v898, %v877
        %v991 = vmul.f32 %v898, %v878
        %v992 = vmul.f32 %v898, %v879
        %v993 = vmul.f32 %v898, %v880
        %v994 = vmul.f32 %v898, %v881
        %v995 = vmul.f32 %v898, %v882
        %v996 = vmul.f32 %v898, %v883
        %v997 = vmul.f32 %v898, %v884
        %v998 = vmul.f32 %v898, %v885
        %v999 = vmul.f32 %v898, %v886
        %v1000 = vmul.f32 %v898, %v887
        %v1001 = vmul.f32 %v898, %v888
        %v1002 = vmul.f32 %v898, %v889
        %v1003 = vmul.f32 %v898, %v890
        %v1004 = vmul.f32 %v898, %v891
        %v1005 = vmul.f32 %v898, %v892
        %v1006 = vmul.f32 %v898, %v893
        %v1007 = vmul.f32 %v898, %v894
        %v1008 = vmul.f32 %v898, %v895
        %v1009 = vmul.f32 %v898, %v896
        %v1010 = vmul.f32 %v898, %v897
        %1123 = vrot.lane.b32.xlu0 %v899, 100
        %v1124 = vpop.permute.xlu0 %1123
        %1125 = vrot.lane.b32.xlu0 %v900, 100
        %v1126 = vpop.permute.xlu0 %1125
        %1127 = vrot.lane.b32.xlu0 %v901, 100
        %v1128 = vpop.permute.xlu0 %1127
        %1129 = vrot.lane.b32.xlu0 %v902, 100
        %v1130 = vpop.permute.xlu0 %1129
        %1131 = vrot.lane.b32.xlu0 %v903, 100
        %v1132 = vpop.permute.xlu0 %1131
        %1133 = vrot.lane.b32.xlu0 %v904, 100
        %v1134 = vpop.permute.xlu0 %1133
        %1135 = vrot.lane.b32.xlu0 %v905, 100
        %v1136 = vpop.permute.xlu0 %1135
        %1137 = vrot.lane.b32.xlu0 %v906, 100
        %v1138 = vpop.permute.xlu0 %1137
        %1139 = vrot.lane.b32.xlu0 %v907, 100
        %v1140 = vpop.permute.xlu0 %1139
        %1141 = vrot.lane.b32.xlu0 %v908, 100
        %v1142 = vpop.permute.xlu0 %1141
        %1143 = vrot.lane.b32.xlu0 %v909, 100
        %v1144 = vpop.permute.xlu0 %1143
        %1145 = vrot.lane.b32.xlu0 %v910, 100
        %v1146 = vpop.permute.xlu0 %1145
        %1147 = vrot.lane.b32.xlu0 %v911, 100
        %v1148 = vpop.permute.xlu0 %1147
        %1149 = vrot.lane.b32.xlu0 %v912, 100
        %v1150 = vpop.permute.xlu0 %1149
        %1151 = vrot.lane.b32.xlu0 %v913, 100
        %v1152 = vpop.permute.xlu0 %1151
        %1153 = vrot.lane.b32.xlu0 %v914, 100
        %v1154 = vpop.permute.xlu0 %1153
        %1155 = vrot.lane.b32.xlu0 %v915, 100
        %v1156 = vpop.permute.xlu0 %1155
        %1157 = vrot.lane.b32.xlu0 %v916, 100
        %v1158 = vpop.permute.xlu0 %1157
        %1159 = vrot.lane.b32.xlu0 %v917, 100
        %v1160 = vpop.permute.xlu0 %1159
        %1161 = vrot.lane.b32.xlu0 %v918, 100
        %v1162 = vpop.permute.xlu0 %1161
        %1163 = vrot.lane.b32.xlu0 %v919, 100
        %v1164 = vpop.permute.xlu0 %1163
        %1165 = vrot.lane.b32.xlu0 %v920, 100
        %v1166 = vpop.permute.xlu0 %1165
        %1167 = vrot.lane.b32.xlu0 %v921, 100
        %v1168 = vpop.permute.xlu0 %1167
        %1169 = vrot.lane.b32.xlu0 %v922, 100
        %v1170 = vpop.permute.xlu0 %1169
        %1171 = vrot.lane.b32.xlu0 %v923, 100
        %v1172 = vpop.permute.xlu0 %1171
        %1173 = vrot.lane.b32.xlu0 %v924, 100
        %v1174 = vpop.permute.xlu0 %1173
        %1175 = vrot.lane.b32.xlu0 %v925, 100
        %v1176 = vpop.permute.xlu0 %1175
        %1177 = vrot.lane.b32.xlu0 %v926, 100
        %v1178 = vpop.permute.xlu0 %1177
        %1179 = vrot.lane.b32.xlu0 %v927, 100
        %v1180 = vpop.permute.xlu0 %1179
        %1181 = vrot.lane.b32.xlu0 %v928, 100
        %v1182 = vpop.permute.xlu0 %1181
        %1183 = vrot.lane.b32.xlu0 %v929, 100
        %v1184 = vpop.permute.xlu0 %1183
        %1185 = vrot.lane.b32.xlu0 %v930, 100
        %v1186 = vpop.permute.xlu0 %1185
        %1187 = vrot.lane.b32.xlu0 %v931, 100
        %v1188 = vpop.permute.xlu0 %1187
        %1189 = vrot.lane.b32.xlu0 %v932, 100
        %v1190 = vpop.permute.xlu0 %1189
        %1191 = vrot.lane.b32.xlu0 %v933, 100
        %v1192 = vpop.permute.xlu0 %1191
        %1193 = vrot.lane.b32.xlu0 %v934, 100
        %v1194 = vpop.permute.xlu0 %1193
        %1195 = vrot.lane.b32.xlu0 %v935, 100
        %v1196 = vpop.permute.xlu0 %1195
        %1197 = vrot.lane.b32.xlu0 %v936, 100
        %v1198 = vpop.permute.xlu0 %1197
        %1199 = vrot.lane.b32.xlu0 %v937, 100
        %v1200 = vpop.permute.xlu0 %1199
        %1201 = vrot.lane.b32.xlu0 %v938, 100
        %v1202 = vpop.permute.xlu0 %1201
        %1203 = vrot.lane.b32.xlu0 %v939, 100
        %v1204 = vpop.permute.xlu0 %1203
        %1205 = vrot.lane.b32.xlu0 %v940, 100
        %v1206 = vpop.permute.xlu0 %1205
        %1207 = vrot.lane.b32.xlu0 %v941, 100
        %v1208 = vpop.permute.xlu0 %1207
        %1209 = vrot.lane.b32.xlu0 %v942, 100
        %v1210 = vpop.permute.xlu0 %1209
        %1211 = vrot.lane.b32.xlu0 %v943, 100
        %v1212 = vpop.permute.xlu0 %1211
        %1213 = vrot.lane.b32.xlu0 %v944, 100
        %v1214 = vpop.permute.xlu0 %1213
        %1215 = vrot.lane.b32.xlu0 %v945, 100
        %v1216 = vpop.permute.xlu0 %1215
        %1217 = vrot.lane.b32.xlu0 %v946, 100
        %v1218 = vpop.permute.xlu0 %1217
        %1219 = vrot.lane.b32.xlu0 %v947, 100
        %v1220 = vpop.permute.xlu0 %1219
        %1221 = vrot.lane.b32.xlu0 %v948, 100
        %v1222 = vpop.permute.xlu0 %1221
        %1223 = vrot.lane.b32.xlu0 %v949, 100
        %v1224 = vpop.permute.xlu0 %1223
        %1225 = vrot.lane.b32.xlu0 %v950, 100
        %v1226 = vpop.permute.xlu0 %1225
        %1227 = vrot.lane.b32.xlu0 %v951, 100
        %v1228 = vpop.permute.xlu0 %1227
        %1229 = vrot.lane.b32.xlu0 %v952, 100
        %v1230 = vpop.permute.xlu0 %1229
        %1231 = vrot.lane.b32.xlu0 %v953, 100
        %v1232 = vpop.permute.xlu0 %1231
        %1233 = vrot.lane.b32.xlu0 %v954, 100
        %v1234 = vpop.permute.xlu0 %1233
        %1235 = vrot.lane.b32.xlu0 %v955, 100
        %v1236 = vpop.permute.xlu0 %1235
        %1237 = vrot.lane.b32.xlu0 %v956, 100
        %v1238 = vpop.permute.xlu0 %1237
        %1239 = vrot.lane.b32.xlu0 %v957, 100
        %v1240 = vpop.permute.xlu0 %1239
        %1241 = vrot.lane.b32.xlu0 %v958, 100
        %v1242 = vpop.permute.xlu0 %1241
        %1243 = vrot.lane.b32.xlu0 %v959, 100
        %v1244 = vpop.permute.xlu0 %1243
        %1245 = vrot.lane.b32.xlu0 %v960, 100
        %v1246 = vpop.permute.xlu0 %1245
        %1247 = vrot.lane.b32.xlu0 %v961, 100
        %v1248 = vpop.permute.xlu0 %1247
        %1249 = vrot.lane.b32.xlu0 %v962, 100
        %v1250 = vpop.permute.xlu0 %1249
        %1251 = vrot.lane.b32.xlu0 %v963, 100
        %v1252 = vpop.permute.xlu0 %1251
        %1253 = vrot.lane.b32.xlu0 %v964, 100
        %v1254 = vpop.permute.xlu0 %1253
        %1255 = vrot.lane.b32.xlu0 %v965, 100
        %v1256 = vpop.permute.xlu0 %1255
        %1257 = vrot.lane.b32.xlu0 %v966, 100
        %v1258 = vpop.permute.xlu0 %1257
        %1259 = vrot.lane.b32.xlu0 %v967, 100
        %v1260 = vpop.permute.xlu0 %1259
        %1261 = vrot.lane.b32.xlu0 %v968, 100
        %v1262 = vpop.permute.xlu0 %1261
        %1263 = vrot.lane.b32.xlu0 %v969, 100
        %v1264 = vpop.permute.xlu0 %1263
        %1265 = vrot.lane.b32.xlu0 %v970, 100
        %v1266 = vpop.permute.xlu0 %1265
        %1267 = vrot.lane.b32.xlu0 %v971, 100
        %v1268 = vpop.permute.xlu0 %1267
        %1269 = vrot.lane.b32.xlu0 %v972, 100
        %v1270 = vpop.permute.xlu0 %1269
        %1271 = vrot.lane.b32.xlu0 %v973, 100
        %v1272 = vpop.permute.xlu0 %1271
        %1273 = vrot.lane.b32.xlu0 %v974, 100
        %v1274 = vpop.permute.xlu0 %1273
        %1275 = vrot.lane.b32.xlu0 %v975, 100
        %v1276 = vpop.permute.xlu0 %1275
        %1277 = vrot.lane.b32.xlu0 %v976, 100
        %v1278 = vpop.permute.xlu0 %1277
        %1279 = vrot.lane.b32.xlu0 %v977, 100
        %v1280 = vpop.permute.xlu0 %1279
        %1281 = vrot.lane.b32.xlu0 %v978, 100
        %v1282 = vpop.permute.xlu0 %1281
        %1283 = vrot.lane.b32.xlu0 %v979, 100
        %v1284 = vpop.permute.xlu0 %1283
        %1285 = vrot.lane.b32.xlu0 %v980, 100
        %v1286 = vpop.permute.xlu0 %1285
        %1287 = vrot.lane.b32.xlu0 %v981, 100
        %v1288 = vpop.permute.xlu0 %1287
        %1289 = vrot.lane.b32.xlu0 %v982, 100
        %v1290 = vpop.permute.xlu0 %1289
        %1291 = vrot.lane.b32.xlu0 %v983, 100
        %v1292 = vpop.permute.xlu0 %1291
        %1293 = vrot.lane.b32.xlu0 %v984, 100
        %v1294 = vpop.permute.xlu0 %1293
        %1295 = vrot.lane.b32.xlu0 %v985, 100
        %v1296 = vpop.permute.xlu0 %1295
        %1297 = vrot.lane.b32.xlu0 %v986, 100
        %v1298 = vpop.permute.xlu0 %1297
        %1299 = vrot.lane.b32.xlu0 %v987, 100
        %v1300 = vpop.permute.xlu0 %1299
        %1301 = vrot.lane.b32.xlu0 %v988, 100
        %v1302 = vpop.permute.xlu0 %1301
        %1303 = vrot.lane.b32.xlu0 %v989, 100
        %v1304 = vpop.permute.xlu0 %1303
        %1305 = vrot.lane.b32.xlu0 %v990, 100
        %v1306 = vpop.permute.xlu0 %1305
        %1307 = vrot.lane.b32.xlu0 %v991, 100
        %v1308 = vpop.permute.xlu0 %1307
        %1309 = vrot.lane.b32.xlu0 %v992, 100
        %v1310 = vpop.permute.xlu0 %1309
        %1311 = vrot.lane.b32.xlu0 %v993, 100
        %v1312 = vpop.permute.xlu0 %1311
        %1313 = vrot.lane.b32.xlu0 %v994, 100
        %v1314 = vpop.permute.xlu0 %1313
        %1315 = vrot.lane.b32.xlu0 %v995, 100
        %v1316 = vpop.permute.xlu0 %1315
        %1317 = vrot.lane.b32.xlu0 %v996, 100
        %v1318 = vpop.permute.xlu0 %1317
        %1319 = vrot.lane.b32.xlu0 %v997, 100
        %v1320 = vpop.permute.xlu0 %1319
        %1321 = vrot.lane.b32.xlu0 %v998, 100
        %v1322 = vpop.permute.xlu0 %1321
        %1323 = vrot.lane.b32.xlu0 %v999, 100
        %v1324 = vpop.permute.xlu0 %1323
        %1325 = vrot.lane.b32.xlu0 %v1000, 100
        %v1326 = vpop.permute.xlu0 %1325
        %1327 = vrot.lane.b32.xlu0 %v1001, 100
        %v1328 = vpop.permute.xlu0 %1327
        %1329 = vrot.lane.b32.xlu0 %v1002, 100
        %v1330 = vpop.permute.xlu0 %1329
        %1331 = vrot.lane.b32.xlu0 %v1003, 100
        %v1332 = vpop.permute.xlu0 %1331
        %1333 = vrot.lane.b32.xlu0 %v1004, 100
        %v1334 = vpop.permute.xlu0 %1333
        %1335 = vrot.lane.b32.xlu0 %v1005, 100
        %v1336 = vpop.permute.xlu0 %1335
        %1337 = vrot.lane.b32.xlu0 %v1006, 100
        %v1338 = vpop.permute.xlu0 %1337
        %1339 = vrot.lane.b32.xlu0 %v1007, 100
        %v1340 = vpop.permute.xlu0 %1339
        %1341 = vrot.lane.b32.xlu0 %v1008, 100
        %v1342 = vpop.permute.xlu0 %1341
        %1343 = vrot.lane.b32.xlu0 %v1009, 100
        %v1344 = vpop.permute.xlu0 %1343
        %1345 = vrot.lane.b32.xlu0 %v1010, 100
        %v1346 = vpop.permute.xlu0 %1345
        %vm1347 = vcmask 818176
        %v1348 = vsel %vm1347, %v1124, %v1126
        %v1349 = vsel %vm1347, %v1126, %v1128
        %v1350 = vsel %vm1347, %v1128, %v1130
        %v1351 = vsel %vm1347, %v1130, %v1132
        %v1352 = vsel %vm1347, %v1132, %v1134
        %v1353 = vsel %vm1347, %v1134, %v1136
        %v1354 = vsel %vm1347, %v1138, %v1140
        %v1355 = vsel %vm1347, %v1140, %v1142
        %v1356 = vsel %vm1347, %v1142, %v1144
        %v1357 = vsel %vm1347, %v1144, %v1146
        %v1358 = vsel %vm1347, %v1146, %v1148
        %v1359 = vsel %vm1347, %v1148, %v1150
        %v1360 = vsel %vm1347, %v1152, %v1154
        %v1361 = vsel %vm1347, %v1154, %v1156
        %v1362 = vsel %vm1347, %v1156, %v1158
        %v1363 = vsel %vm1347, %v1158, %v1160
        %v1364 = vsel %vm1347, %v1160, %v1162
        %v1365 = vsel %vm1347, %v1162, %v1164
        %v1366 = vsel %vm1347, %v1166, %v1168
        %v1367 = vsel %vm1347, %v1168, %v1170
        %v1368 = vsel %vm1347, %v1170, %v1172
        %v1369 = vsel %vm1347, %v1172, %v1174
        %v1370 = vsel %vm1347, %v1174, %v1176
        %v1371 = vsel %vm1347, %v1176, %v1178
        %v1372 = vsel %vm1347, %v1180, %v1182
        %v1373 = vsel %vm1347, %v1182, %v1184
        %v1374 = vsel %vm1347, %v1184, %v1186
        %v1375 = vsel %vm1347, %v1186, %v1188
        %v1376 = vsel %vm1347, %v1188, %v1190
        %v1377 = vsel %vm1347, %v1190, %v1192
        %v1378 = vsel %vm1347, %v1194, %v1196
        %v1379 = vsel %vm1347, %v1196, %v1198
        %v1380 = vsel %vm1347, %v1198, %v1200
        %v1381 = vsel %vm1347, %v1200, %v1202
        %v1382 = vsel %vm1347, %v1202, %v1204
        %v1383 = vsel %vm1347, %v1204, %v1206
        %v1384 = vsel %vm1347, %v1208, %v1210
        %v1385 = vsel %vm1347, %v1210, %v1212
        %v1386 = vsel %vm1347, %v1212, %v1214
        %v1387 = vsel %vm1347, %v1214, %v1216
        %v1388 = vsel %vm1347, %v1216, %v1218
        %v1389 = vsel %vm1347, %v1218, %v1220
        %v1390 = vsel %vm1347, %v1222, %v1224
        %v1391 = vsel %vm1347, %v1224, %v1226
        %v1392 = vsel %vm1347, %v1226, %v1228
        %v1393 = vsel %vm1347, %v1228, %v1230
        %v1394 = vsel %vm1347, %v1230, %v1232
        %v1395 = vsel %vm1347, %v1232, %v1234
        %v1396 = vsel %vm1347, %v1236, %v1238
        %v1397 = vsel %vm1347, %v1238, %v1240
        %v1398 = vsel %vm1347, %v1240, %v1242
        %v1399 = vsel %vm1347, %v1242, %v1244
        %v1400 = vsel %vm1347, %v1244, %v1246
        %v1401 = vsel %vm1347, %v1246, %v1248
        %v1402 = vsel %vm1347, %v1250, %v1252
        %v1403 = vsel %vm1347, %v1252, %v1254
        %v1404 = vsel %vm1347, %v1254, %v1256
        %v1405 = vsel %vm1347, %v1256, %v1258
        %v1406 = vsel %vm1347, %v1258, %v1260
        %v1407 = vsel %vm1347, %v1260, %v1262
        %v1408 = vsel %vm1347, %v1264, %v1266
        %v1409 = vsel %vm1347, %v1266, %v1268
        %v1410 = vsel %vm1347, %v1268, %v1270
        %v1411 = vsel %vm1347, %v1270, %v1272
        %v1412 = vsel %vm1347, %v1272, %v1274
        %v1413 = vsel %vm1347, %v1274, %v1276
        %v1414 = vsel %vm1347, %v1278, %v1280
        %v1415 = vsel %vm1347, %v1280, %v1282
        %v1416 = vsel %vm1347, %v1282, %v1284
        %v1417 = vsel %vm1347, %v1284, %v1286
        %v1418 = vsel %vm1347, %v1286, %v1288
        %v1419 = vsel %vm1347, %v1288, %v1290
        %v1420 = vsel %vm1347, %v1292, %v1294
        %v1421 = vsel %vm1347, %v1294, %v1296
        %v1422 = vsel %vm1347, %v1296, %v1298
        %v1423 = vsel %vm1347, %v1298, %v1300
        %v1424 = vsel %vm1347, %v1300, %v1302
        %v1425 = vsel %vm1347, %v1302, %v1304
        %v1426 = vsel %vm1347, %v1306, %v1308
        %v1427 = vsel %vm1347, %v1308, %v1310
        %v1428 = vsel %vm1347, %v1310, %v1312
        %v1429 = vsel %vm1347, %v1312, %v1314
        %v1430 = vsel %vm1347, %v1314, %v1316
        %v1431 = vsel %vm1347, %v1316, %v1318
        %v1432 = vsel %vm1347, %v1320, %v1322
        %v1433 = vsel %vm1347, %v1322, %v1324
        %v1434 = vsel %vm1347, %v1324, %v1326
        %v1435 = vsel %vm1347, %v1326, %v1328
        %v1436 = vsel %vm1347, %v1328, %v1330
        %v1437 = vsel %vm1347, %v1330, %v1332
        %v1438 = vsel %vm1347, %v1334, %v1336
        %v1439 = vsel %vm1347, %v1336, %v1338
        %v1440 = vsel %vm1347, %v1338, %v1340
        %v1441 = vsel %vm1347, %v1340, %v1342
        %v1442 = vsel %vm1347, %v1342, %v1344
        %v1443 = vsel %vm1347, %v1344, %v1346
        %v1556 = vadd.f32 %v673, %v1124
        %v1557 = vadd.f32 %v674, %v1348
        %v1558 = vadd.f32 %v675, %v1349
        %v1559 = vadd.f32 %v676, %v1350
        %v1560 = vadd.f32 %v677, %v1351
        %v1561 = vadd.f32 %v678, %v1352
        %v1562 = vadd.f32 %v679, %v1353
        %v1563 = vadd.f32 %v680, %v1138
        %v1564 = vadd.f32 %v681, %v1354
        %v1565 = vadd.f32 %v682, %v1355
        %v1566 = vadd.f32 %v683, %v1356
        %v1567 = vadd.f32 %v684, %v1357
        %v1568 = vadd.f32 %v685, %v1358
        %v1569 = vadd.f32 %v686, %v1359
        %v1570 = vadd.f32 %v687, %v1152
        %v1571 = vadd.f32 %v688, %v1360
        %v1572 = vadd.f32 %v689, %v1361
        %v1573 = vadd.f32 %v690, %v1362
        %v1574 = vadd.f32 %v691, %v1363
        %v1575 = vadd.f32 %v692, %v1364
        %v1576 = vadd.f32 %v693, %v1365
        %v1577 = vadd.f32 %v694, %v1166
        %v1578 = vadd.f32 %v695, %v1366
        %v1579 = vadd.f32 %v696, %v1367
        %v1580 = vadd.f32 %v697, %v1368
        %v1581 = vadd.f32 %v698, %v1369
        %v1582 = vadd.f32 %v699, %v1370
        %v1583 = vadd.f32 %v700, %v1371
        %v1584 = vadd.f32 %v701, %v1180
        %v1585 = vadd.f32 %v702, %v1372
        %v1586 = vadd.f32 %v703, %v1373
        %v1587 = vadd.f32 %v704, %v1374
        %v1588 = vadd.f32 %v705, %v1375
        %v1589 = vadd.f32 %v706, %v1376
        %v1590 = vadd.f32 %v707, %v1377
        %v1591 = vadd.f32 %v708, %v1194
        %v1592 = vadd.f32 %v709, %v1378
        %v1593 = vadd.f32 %v710, %v1379
        %v1594 = vadd.f32 %v711, %v1380
        %v1595 = vadd.f32 %v712, %v1381
        %v1596 = vadd.f32 %v713, %v1382
        %v1597 = vadd.f32 %v714, %v1383
        %v1598 = vadd.f32 %v715, %v1208
        %v1599 = vadd.f32 %v716, %v1384
        %v1600 = vadd.f32 %v717, %v1385
        %v1601 = vadd.f32 %v718, %v1386
        %v1602 = vadd.f32 %v719, %v1387
        %v1603 = vadd.f32 %v720, %v1388
        %v1604 = vadd.f32 %v721, %v1389
        %v1605 = vadd.f32 %v722, %v1222
        %v1606 = vadd.f32 %v723, %v1390
        %v1607 = vadd.f32 %v724, %v1391
        %v1608 = vadd.f32 %v725, %v1392
        %v1609 = vadd.f32 %v726, %v1393
        %v1610 = vadd.f32 %v727, %v1394
        %v1611 = vadd.f32 %v728, %v1395
        %v1612 = vadd.f32 %v729, %v1236
        %v1613 = vadd.f32 %v730, %v1396
        %v1614 = vadd.f32 %v731, %v1397
        %v1615 = vadd.f32 %v732, %v1398
        %v1616 = vadd.f32 %v733, %v1399
        %v1617 = vadd.f32 %v734, %v1400
        %v1618 = vadd.f32 %v735, %v1401
        %v1619 = vadd.f32 %v736, %v1250
        %v1620 = vadd.f32 %v737, %v1402
        %v1621 = vadd.f32 %v738, %v1403
        %v1622 = vadd.f32 %v739, %v1404
        %v1623 = vadd.f32 %v740, %v1405
        %v1624 = vadd.f32 %v741, %v1406
        %v1625 = vadd.f32 %v742, %v1407
        %v1626 = vadd.f32 %v743, %v1264
        %v1627 = vadd.f32 %v744, %v1408
        %v1628 = vadd.f32 %v745, %v1409
        %v1629 = vadd.f32 %v746, %v1410
        %v1630 = vadd.f32 %v747, %v1411
        %v1631 = vadd.f32 %v748, %v1412
        %v1632 = vadd.f32 %v749, %v1413
        %v1633 = vadd.f32 %v750, %v1278
        %v1634 = vadd.f32 %v751, %v1414
        %v1635 = vadd.f32 %v752, %v1415
        %v1636 = vadd.f32 %v753, %v1416
        %v1637 = vadd.f32 %v754, %v1417
        %v1638 = vadd.f32 %v755, %v1418
        %v1639 = vadd.f32 %v756, %v1419
        %v1640 = vadd.f32 %v757, %v1292
        %v1641 = vadd.f32 %v758, %v1420
        %v1642 = vadd.f32 %v759, %v1421
        %v1643 = vadd.f32 %v760, %v1422
        %v1644 = vadd.f32 %v761, %v1423
        %v1645 = vadd.f32 %v762, %v1424
        %v1646 = vadd.f32 %v763, %v1425
        %v1647 = vadd.f32 %v764, %v1306
        %v1648 = vadd.f32 %v765, %v1426
        %v1649 = vadd.f32 %v766, %v1427
        %v1650 = vadd.f32 %v767, %v1428
        %v1651 = vadd.f32 %v768, %v1429
        %v1652 = vadd.f32 %v769, %v1430
        %v1653 = vadd.f32 %v770, %v1431
        %v1654 = vadd.f32 %v771, %v1320
        %v1655 = vadd.f32 %v772, %v1432
        %v1656 = vadd.f32 %v773, %v1433
        %v1657 = vadd.f32 %v774, %v1434
        %v1658 = vadd.f32 %v775, %v1435
        %v1659 = vadd.f32 %v776, %v1436
        %v1660 = vadd.f32 %v777, %v1437
        %v1661 = vadd.f32 %v778, %v1334
        %v1662 = vadd.f32 %v779, %v1438
        %v1663 = vadd.f32 %v780, %v1439
        %v1664 = vadd.f32 %v781, %v1440
        %v1665 = vadd.f32 %v782, %v1441
        %v1666 = vadd.f32 %v783, %v1442
        %v1667 = vadd.f32 %v784, %v1443
        %s1668 = sld [smem:[#allocation4 + $0x101]]
        %v1669 = vstv %s1668
        %v1670 = vmul.f32 %v1669, %v786
        %v1671 = vmul.f32 %v1669, %v787
        %v1672 = vmul.f32 %v1669, %v788
        %v1673 = vmul.f32 %v1669, %v789
        %v1674 = vmul.f32 %v1669, %v790
        %v1675 = vmul.f32 %v1669, %v791
        %v1676 = vmul.f32 %v1669, %v792
        %v1677 = vmul.f32 %v1669, %v793
        %v1678 = vmul.f32 %v1669, %v794
        %v1679 = vmul.f32 %v1669, %v795
        %v1680 = vmul.f32 %v1669, %v796
        %v1681 = vmul.f32 %v1669, %v797
        %v1682 = vmul.f32 %v1669, %v798
        %v1683 = vmul.f32 %v1669, %v799
        %v1684 = vmul.f32 %v1669, %v800
        %v1685 = vmul.f32 %v1669, %v801
        %v1686 = vmul.f32 %v1669, %v802
        %v1687 = vmul.f32 %v1669, %v803
        %v1688 = vmul.f32 %v1669, %v804
        %v1689 = vmul.f32 %v1669, %v805
        %v1690 = vmul.f32 %v1669, %v806
        %v1691 = vmul.f32 %v1669, %v807
        %v1692 = vmul.f32 %v1669, %v808
        %v1693 = vmul.f32 %v1669, %v809
        %v1694 = vmul.f32 %v1669, %v810
        %v1695 = vmul.f32 %v1669, %v811
        %v1696 = vmul.f32 %v1669, %v812
        %v1697 = vmul.f32 %v1669, %v813
        %v1698 = vmul.f32 %v1669, %v814
        %v1699 = vmul.f32 %v1669, %v815
        %v1700 = vmul.f32 %v1669, %v816
        %v1701 = vmul.f32 %v1669, %v817
        %v1702 = vmul.f32 %v1669, %v818
        %v1703 = vmul.f32 %v1669, %v819
        %v1704 = vmul.f32 %v1669, %v820
        %v1705 = vmul.f32 %v1669, %v821
        %v1706 = vmul.f32 %v1669, %v822
        %v1707 = vmul.f32 %v1669, %v823
        %v1708 = vmul.f32 %v1669, %v824
        %v1709 = vmul.f32 %v1669, %v825
        %v1710 = vmul.f32 %v1669, %v826
        %v1711 = vmul.f32 %v1669, %v827
        %v1712 = vmul.f32 %v1669, %v828
        %v1713 = vmul.f32 %v1669, %v829
        %v1714 = vmul.f32 %v1669, %v830
        %v1715 = vmul.f32 %v1669, %v831
        %v1716 = vmul.f32 %v1669, %v832
        %v1717 = vmul.f32 %v1669, %v833
        %v1718 = vmul.f32 %v1669, %v834
        %v1719 = vmul.f32 %v1669, %v835
        %v1720 = vmul.f32 %v1669, %v836
        %v1721 = vmul.f32 %v1669, %v837
        %v1722 = vmul.f32 %v1669, %v838
        %v1723 = vmul.f32 %v1669, %v839
        %v1724 = vmul.f32 %v1669, %v840
        %v1725 = vmul.f32 %v1669, %v841
        %v1726 = vmul.f32 %v1669, %v842
        %v1727 = vmul.f32 %v1669, %v843
        %v1728 = vmul.f32 %v1669, %v844
        %v1729 = vmul.f32 %v1669, %v845
        %v1730 = vmul.f32 %v1669, %v846
        %v1731 = vmul.f32 %v1669, %v847
        %v1732 = vmul.f32 %v1669, %v848
        %v1733 = vmul.f32 %v1669, %v849
        %v1734 = vmul.f32 %v1669, %v850
        %v1735 = vmul.f32 %v1669, %v851
        %v1736 = vmul.f32 %v1669, %v852
        %v1737 = vmul.f32 %v1669, %v853
        %v1738 = vmul.f32 %v1669, %v854
        %v1739 = vmul.f32 %v1669, %v855
        %v1740 = vmul.f32 %v1669, %v856
        %v1741 = vmul.f32 %v1669, %v857
        %v1742 = vmul.f32 %v1669, %v858
        %v1743 = vmul.f32 %v1669, %v859
        %v1744 = vmul.f32 %v1669, %v860
        %v1745 = vmul.f32 %v1669, %v861
        %v1746 = vmul.f32 %v1669, %v862
        %v1747 = vmul.f32 %v1669, %v863
        %v1748 = vmul.f32 %v1669, %v864
        %v1749 = vmul.f32 %v1669, %v865
        %v1750 = vmul.f32 %v1669, %v866
        %v1751 = vmul.f32 %v1669, %v867
        %v1752 = vmul.f32 %v1669, %v868
        %v1753 = vmul.f32 %v1669, %v869
        %v1754 = vmul.f32 %v1669, %v870
        %v1755 = vmul.f32 %v1669, %v871
        %v1756 = vmul.f32 %v1669, %v872
        %v1757 = vmul.f32 %v1669, %v873
        %v1758 = vmul.f32 %v1669, %v874
        %v1759 = vmul.f32 %v1669, %v875
        %v1760 = vmul.f32 %v1669, %v876
        %v1761 = vmul.f32 %v1669, %v877
        %v1762 = vmul.f32 %v1669, %v878
        %v1763 = vmul.f32 %v1669, %v879
        %v1764 = vmul.f32 %v1669, %v880
        %v1765 = vmul.f32 %v1669, %v881
        %v1766 = vmul.f32 %v1669, %v882
        %v1767 = vmul.f32 %v1669, %v883
        %v1768 = vmul.f32 %v1669, %v884
        %v1769 = vmul.f32 %v1669, %v885
        %v1770 = vmul.f32 %v1669, %v886
        %v1771 = vmul.f32 %v1669, %v887
        %v1772 = vmul.f32 %v1669, %v888
        %v1773 = vmul.f32 %v1669, %v889
        %v1774 = vmul.f32 %v1669, %v890
        %v1775 = vmul.f32 %v1669, %v891
        %v1776 = vmul.f32 %v1669, %v892
        %v1777 = vmul.f32 %v1669, %v893
        %v1778 = vmul.f32 %v1669, %v894
        %v1779 = vmul.f32 %v1669, %v895
        %v1780 = vmul.f32 %v1669, %v896
        %v1781 = vmul.f32 %v1669, %v897
        %1894 = vrot.lane.b32.xlu0 %v1670, 72
        %v1895 = vpop.permute.xlu0 %1894
        %1896 = vrot.lane.b32.xlu0 %v1671, 72
        %v1897 = vpop.permute.xlu0 %1896
        %1898 = vrot.lane.b32.xlu0 %v1672, 72
        %v1899 = vpop.permute.xlu0 %1898
        %1900 = vrot.lane.b32.xlu0 %v1673, 72
        %v1901 = vpop.permute.xlu0 %1900
        %1902 = vrot.lane.b32.xlu0 %v1674, 72
        %v1903 = vpop.permute.xlu0 %1902
        %1904 = vrot.lane.b32.xlu0 %v1675, 72
        %v1905 = vpop.permute.xlu0 %1904
        %1906 = vrot.lane.b32.xlu0 %v1676, 72
        %v1907 = vpop.permute.xlu0 %1906
        %1908 = vrot.lane.b32.xlu0 %v1677, 72
        %v1909 = vpop.permute.xlu0 %1908
        %1910 = vrot.lane.b32.xlu0 %v1678, 72
        %v1911 = vpop.permute.xlu0 %1910
        %1912 = vrot.lane.b32.xlu0 %v1679, 72
        %v1913 = vpop.permute.xlu0 %1912
        %1914 = vrot.lane.b32.xlu0 %v1680, 72
        %v1915 = vpop.permute.xlu0 %1914
        %1916 = vrot.lane.b32.xlu0 %v1681, 72
        %v1917 = vpop.permute.xlu0 %1916
        %1918 = vrot.lane.b32.xlu0 %v1682, 72
        %v1919 = vpop.permute.xlu0 %1918
        %1920 = vrot.lane.b32.xlu0 %v1683, 72
        %v1921 = vpop.permute.xlu0 %1920
        %1922 = vrot.lane.b32.xlu0 %v1684, 72
        %v1923 = vpop.permute.xlu0 %1922
        %1924 = vrot.lane.b32.xlu0 %v1685, 72
        %v1925 = vpop.permute.xlu0 %1924
        %1926 = vrot.lane.b32.xlu0 %v1686, 72
        %v1927 = vpop.permute.xlu0 %1926
        %1928 = vrot.lane.b32.xlu0 %v1687, 72
        %v1929 = vpop.permute.xlu0 %1928
        %1930 = vrot.lane.b32.xlu0 %v1688, 72
        %v1931 = vpop.permute.xlu0 %1930
        %1932 = vrot.lane.b32.xlu0 %v1689, 72
        %v1933 = vpop.permute.xlu0 %1932
        %1934 = vrot.lane.b32.xlu0 %v1690, 72
        %v1935 = vpop.permute.xlu0 %1934
        %1936 = vrot.lane.b32.xlu0 %v1691, 72
        %v1937 = vpop.permute.xlu0 %1936
        %1938 = vrot.lane.b32.xlu0 %v1692, 72
        %v1939 = vpop.permute.xlu0 %1938
        %1940 = vrot.lane.b32.xlu0 %v1693, 72
        %v1941 = vpop.permute.xlu0 %1940
        %1942 = vrot.lane.b32.xlu0 %v1694, 72
        %v1943 = vpop.permute.xlu0 %1942
        %1944 = vrot.lane.b32.xlu0 %v1695, 72
        %v1945 = vpop.permute.xlu0 %1944
        %1946 = vrot.lane.b32.xlu0 %v1696, 72
        %v1947 = vpop.permute.xlu0 %1946
        %1948 = vrot.lane.b32.xlu0 %v1697, 72
        %v1949 = vpop.permute.xlu0 %1948
        %1950 = vrot.lane.b32.xlu0 %v1698, 72
        %v1951 = vpop.permute.xlu0 %1950
        %1952 = vrot.lane.b32.xlu0 %v1699, 72
        %v1953 = vpop.permute.xlu0 %1952
        %1954 = vrot.lane.b32.xlu0 %v1700, 72
        %v1955 = vpop.permute.xlu0 %1954
        %1956 = vrot.lane.b32.xlu0 %v1701, 72
        %v1957 = vpop.permute.xlu0 %1956
        %1958 = vrot.lane.b32.xlu0 %v1702, 72
        %v1959 = vpop.permute.xlu0 %1958
        %1960 = vrot.lane.b32.xlu0 %v1703, 72
        %v1961 = vpop.permute.xlu0 %1960
        %1962 = vrot.lane.b32.xlu0 %v1704, 72
        %v1963 = vpop.permute.xlu0 %1962
        %1964 = vrot.lane.b32.xlu0 %v1705, 72
        %v1965 = vpop.permute.xlu0 %1964
        %1966 = vrot.lane.b32.xlu0 %v1706, 72
        %v1967 = vpop.permute.xlu0 %1966
        %1968 = vrot.lane.b32.xlu0 %v1707, 72
        %v1969 = vpop.permute.xlu0 %1968
        %1970 = vrot.lane.b32.xlu0 %v1708, 72
        %v1971 = vpop.permute.xlu0 %1970
        %1972 = vrot.lane.b32.xlu0 %v1709, 72
        %v1973 = vpop.permute.xlu0 %1972
        %1974 = vrot.lane.b32.xlu0 %v1710, 72
        %v1975 = vpop.permute.xlu0 %1974
        %1976 = vrot.lane.b32.xlu0 %v1711, 72
        %v1977 = vpop.permute.xlu0 %1976
        %1978 = vrot.lane.b32.xlu0 %v1712, 72
        %v1979 = vpop.permute.xlu0 %1978
        %1980 = vrot.lane.b32.xlu0 %v1713, 72
        %v1981 = vpop.permute.xlu0 %1980
        %1982 = vrot.lane.b32.xlu0 %v1714, 72
        %v1983 = vpop.permute.xlu0 %1982
        %1984 = vrot.lane.b32.xlu0 %v1715, 72
        %v1985 = vpop.permute.xlu0 %1984
        %1986 = vrot.lane.b32.xlu0 %v1716, 72
        %v1987 = vpop.permute.xlu0 %1986
        %1988 = vrot.lane.b32.xlu0 %v1717, 72
        %v1989 = vpop.permute.xlu0 %1988
        %1990 = vrot.lane.b32.xlu0 %v1718, 72
        %v1991 = vpop.permute.xlu0 %1990
        %1992 = vrot.lane.b32.xlu0 %v1719, 72
        %v1993 = vpop.permute.xlu0 %1992
        %1994 = vrot.lane.b32.xlu0 %v1720, 72
        %v1995 = vpop.permute.xlu0 %1994
        %1996 = vrot.lane.b32.xlu0 %v1721, 72
        %v1997 = vpop.permute.xlu0 %1996
        %1998 = vrot.lane.b32.xlu0 %v1722, 72
        %v1999 = vpop.permute.xlu0 %1998
        %2000 = vrot.lane.b32.xlu0 %v1723, 72
        %v2001 = vpop.permute.xlu0 %2000
        %2002 = vrot.lane.b32.xlu0 %v1724, 72
        %v2003 = vpop.permute.xlu0 %2002
        %2004 = vrot.lane.b32.xlu0 %v1725, 72
        %v2005 = vpop.permute.xlu0 %2004
        %2006 = vrot.lane.b32.xlu0 %v1726, 72
        %v2007 = vpop.permute.xlu0 %2006
        %2008 = vrot.lane.b32.xlu0 %v1727, 72
        %v2009 = vpop.permute.xlu0 %2008
        %2010 = vrot.lane.b32.xlu0 %v1728, 72
        %v2011 = vpop.permute.xlu0 %2010
        %2012 = vrot.lane.b32.xlu0 %v1729, 72
        %v2013 = vpop.permute.xlu0 %2012
        %2014 = vrot.lane.b32.xlu0 %v1730, 72
        %v2015 = vpop.permute.xlu0 %2014
        %2016 = vrot.lane.b32.xlu0 %v1731, 72
        %v2017 = vpop.permute.xlu0 %2016
        %2018 = vrot.lane.b32.xlu0 %v1732, 72
        %v2019 = vpop.permute.xlu0 %2018
        %2020 = vrot.lane.b32.xlu0 %v1733, 72
        %v2021 = vpop.permute.xlu0 %2020
        %2022 = vrot.lane.b32.xlu0 %v1734, 72
        %v2023 = vpop.permute.xlu0 %2022
        %2024 = vrot.lane.b32.xlu0 %v1735, 72
        %v2025 = vpop.permute.xlu0 %2024
        %2026 = vrot.lane.b32.xlu0 %v1736, 72
        %v2027 = vpop.permute.xlu0 %2026
        %2028 = vrot.lane.b32.xlu0 %v1737, 72
        %v2029 = vpop.permute.xlu0 %2028
        %2030 = vrot.lane.b32.xlu0 %v1738, 72
        %v2031 = vpop.permute.xlu0 %2030
        %2032 = vrot.lane.b32.xlu0 %v1739, 72
        %v2033 = vpop.permute.xlu0 %2032
        %2034 = vrot.lane.b32.xlu0 %v1740, 72
        %v2035 = vpop.permute.xlu0 %2034
        %2036 = vrot.lane.b32.xlu0 %v1741, 72
        %v2037 = vpop.permute.xlu0 %2036
        %2038 = vrot.lane.b32.xlu0 %v1742, 72
        %v2039 = vpop.permute.xlu0 %2038
        %2040 = vrot.lane.b32.xlu0 %v1743, 72
        %v2041 = vpop.permute.xlu0 %2040
        %2042 = vrot.lane.b32.xlu0 %v1744, 72
        %v2043 = vpop.permute.xlu0 %2042
        %2044 = vrot.lane.b32.xlu0 %v1745, 72
        %v2045 = vpop.permute.xlu0 %2044
        %2046 = vrot.lane.b32.xlu0 %v1746, 72
        %v2047 = vpop.permute.xlu0 %2046
        %2048 = vrot.lane.b32.xlu0 %v1747, 72
        %v2049 = vpop.permute.xlu0 %2048
        %2050 = vrot.lane.b32.xlu0 %v1748, 72
        %v2051 = vpop.permute.xlu0 %2050
        %2052 = vrot.lane.b32.xlu0 %v1749, 72
        %v2053 = vpop.permute.xlu0 %2052
        %2054 = vrot.lane.b32.xlu0 %v1750, 72
        %v2055 = vpop.permute.xlu0 %2054
        %2056 = vrot.lane.b32.xlu0 %v1751, 72
        %v2057 = vpop.permute.xlu0 %2056
        %2058 = vrot.lane.b32.xlu0 %v1752, 72
        %v2059 = vpop.permute.xlu0 %2058
        %2060 = vrot.lane.b32.xlu0 %v1753, 72
        %v2061 = vpop.permute.xlu0 %2060
        %2062 = vrot.lane.b32.xlu0 %v1754, 72
        %v2063 = vpop.permute.xlu0 %2062
        %2064 = vrot.lane.b32.xlu0 %v1755, 72
        %v2065 = vpop.permute.xlu0 %2064
        %2066 = vrot.lane.b32.xlu0 %v1756, 72
        %v2067 = vpop.permute.xlu0 %2066
        %2068 = vrot.lane.b32.xlu0 %v1757, 72
        %v2069 = vpop.permute.xlu0 %2068
        %2070 = vrot.lane.b32.xlu0 %v1758, 72
        %v2071 = vpop.permute.xlu0 %2070
        %2072 = vrot.lane.b32.xlu0 %v1759, 72
        %v2073 = vpop.permute.xlu0 %2072
        %2074 = vrot.lane.b32.xlu0 %v1760, 72
        %v2075 = vpop.permute.xlu0 %2074
        %2076 = vrot.lane.b32.xlu0 %v1761, 72
        %v2077 = vpop.permute.xlu0 %2076
        %2078 = vrot.lane.b32.xlu0 %v1762, 72
        %v2079 = vpop.permute.xlu0 %2078
        %2080 = vrot.lane.b32.xlu0 %v1763, 72
        %v2081 = vpop.permute.xlu0 %2080
        %2082 = vrot.lane.b32.xlu0 %v1764, 72
        %v2083 = vpop.permute.xlu0 %2082
        %2084 = vrot.lane.b32.xlu0 %v1765, 72
        %v2085 = vpop.permute.xlu0 %2084
        %2086 = vrot.lane.b32.xlu0 %v1766, 72
        %v2087 = vpop.permute.xlu0 %2086
        %2088 = vrot.lane.b32.xlu0 %v1767, 72
        %v2089 = vpop.permute.xlu0 %2088
        %2090 = vrot.lane.b32.xlu0 %v1768, 72
        %v2091 = vpop.permute.xlu0 %2090
        %2092 = vrot.lane.b32.xlu0 %v1769, 72
        %v2093 = vpop.permute.xlu0 %2092
        %2094 = vrot.lane.b32.xlu0 %v1770, 72
        %v2095 = vpop.permute.xlu0 %2094
        %2096 = vrot.lane.b32.xlu0 %v1771, 72
        %v2097 = vpop.permute.xlu0 %2096
        %2098 = vrot.lane.b32.xlu0 %v1772, 72
        %v2099 = vpop.permute.xlu0 %2098
        %2100 = vrot.lane.b32.xlu0 %v1773, 72
        %v2101 = vpop.permute.xlu0 %2100
        %2102 = vrot.lane.b32.xlu0 %v1774, 72
        %v2103 = vpop.permute.xlu0 %2102
        %2104 = vrot.lane.b32.xlu0 %v1775, 72
        %v2105 = vpop.permute.xlu0 %2104
        %2106 = vrot.lane.b32.xlu0 %v1776, 72
        %v2107 = vpop.permute.xlu0 %2106
        %2108 = vrot.lane.b32.xlu0 %v1777, 72
        %v2109 = vpop.permute.xlu0 %2108
        %2110 = vrot.lane.b32.xlu0 %v1778, 72
        %v2111 = vpop.permute.xlu0 %2110
        %2112 = vrot.lane.b32.xlu0 %v1779, 72
        %v2113 = vpop.permute.xlu0 %2112
        %2114 = vrot.lane.b32.xlu0 %v1780, 72
        %v2115 = vpop.permute.xlu0 %2114
        %2116 = vrot.lane.b32.xlu0 %v1781, 72
        %v2117 = vpop.permute.xlu0 %2116
        %vm2118 = vcmask 588800
        %v2119 = vsel %vm2118, %v1895, %v1897
        %v2120 = vsel %vm2118, %v1897, %v1899
        %v2121 = vsel %vm2118, %v1899, %v1901
        %v2122 = vsel %vm2118, %v1901, %v1903
        %v2123 = vsel %vm2118, %v1903, %v1905
        %v2124 = vsel %vm2118, %v1905, %v1907
        %v2125 = vsel %vm2118, %v1909, %v1911
        %v2126 = vsel %vm2118, %v1911, %v1913
        %v2127 = vsel %vm2118, %v1913, %v1915
        %v2128 = vsel %vm2118, %v1915, %v1917
        %v2129 = vsel %vm2118, %v1917, %v1919
        %v2130 = vsel %vm2118, %v1919, %v1921
        %v2131 = vsel %vm2118, %v1923, %v1925
        %v2132 = vsel %vm2118, %v1925, %v1927
        %v2133 = vsel %vm2118, %v1927, %v1929
        %v2134 = vsel %vm2118, %v1929, %v1931
        %v2135 = vsel %vm2118, %v1931, %v1933
        %v2136 = vsel %vm2118, %v1933, %v1935
        %v2137 = vsel %vm2118, %v1937, %v1939
        %v2138 = vsel %vm2118, %v1939, %v1941
        %v2139 = vsel %vm2118, %v1941, %v1943
        %v2140 = vsel %vm2118, %v1943, %v1945
        %v2141 = vsel %vm2118, %v1945, %v1947
        %v2142 = vsel %vm2118, %v1947, %v1949
        %v2143 = vsel %vm2118, %v1951, %v1953
        %v2144 = vsel %vm2118, %v1953, %v1955
        %v2145 = vsel %vm2118, %v1955, %v1957
        %v2146 = vsel %vm2118, %v1957, %v1959
        %v2147 = vsel %vm2118, %v1959, %v1961
        %v2148 = vsel %vm2118, %v1961, %v1963
        %v2149 = vsel %vm2118, %v1965, %v1967
        %v2150 = vsel %vm2118, %v1967, %v1969
        %v2151 = vsel %vm2118, %v1969, %v1971
        %v2152 = vsel %vm2118, %v1971, %v1973
        %v2153 = vsel %vm2118, %v1973, %v1975
        %v2154 = vsel %vm2118, %v1975, %v1977
        %v2155 = vsel %vm2118, %v1979, %v1981
        %v2156 = vsel %vm2118, %v1981, %v1983
        %v2157 = vsel %vm2118, %v1983, %v1985
        %v2158 = vsel %vm2118, %v1985, %v1987
        %v2159 = vsel %vm2118, %v1987, %v1989
        %v2160 = vsel %vm2118, %v1989, %v1991
        %v2161 = vsel %vm2118, %v1993, %v1995
        %v2162 = vsel %vm2118, %v1995, %v1997
        %v2163 = vsel %vm2118, %v1997, %v1999
        %v2164 = vsel %vm2118, %v1999, %v2001
        %v2165 = vsel %vm2118, %v2001, %v2003
        %v2166 = vsel %vm2118, %v2003, %v2005
        %v2167 = vsel %vm2118, %v2007, %v2009
        %v2168 = vsel %vm2118, %v2009, %v2011
        %v2169 = vsel %vm2118, %v2011, %v2013
        %v2170 = vsel %vm2118, %v2013, %v2015
        %v2171 = vsel %vm2118, %v2015, %v2017
        %v2172 = vsel %vm2118, %v2017, %v2019
        %v2173 = vsel %vm2118, %v2021, %v2023
        %v2174 = vsel %vm2118, %v2023, %v2025
        %v2175 = vsel %vm2118, %v2025, %v2027
        %v2176 = vsel %vm2118, %v2027, %v2029
        %v2177 = vsel %vm2118, %v2029, %v2031
        %v2178 = vsel %vm2118, %v2031, %v2033
        %v2179 = vsel %vm2118, %v2035, %v2037
        %v2180 = vsel %vm2118, %v2037, %v2039
        %v2181 = vsel %vm2118, %v2039, %v2041
        %v2182 = vsel %vm2118, %v2041, %v2043
        %v2183 = vsel %vm2118, %v2043, %v2045
        %v2184 = vsel %vm2118, %v2045, %v2047
        %v2185 = vsel %vm2118, %v2049, %v2051
        %v2186 = vsel %vm2118, %v2051, %v2053
        %v2187 = vsel %vm2118, %v2053, %v2055
        %v2188 = vsel %vm2118, %v2055, %v2057
        %v2189 = vsel %vm2118, %v2057, %v2059
        %v2190 = vsel %vm2118, %v2059, %v2061
        %v2191 = vsel %vm2118, %v2063, %v2065
        %v2192 = vsel %vm2118, %v2065, %v2067
        %v2193 = vsel %vm2118, %v2067, %v2069
        %v2194 = vsel %vm2118, %v2069, %v2071
        %v2195 = vsel %vm2118, %v2071, %v2073
        %v2196 = vsel %vm2118, %v2073, %v2075
        %v2197 = vsel %vm2118, %v2077, %v2079
        %v2198 = vsel %vm2118, %v2079, %v2081
        %v2199 = vsel %vm2118, %v2081, %v2083
        %v2200 = vsel %vm2118, %v2083, %v2085
        %v2201 = vsel %vm2118, %v2085, %v2087
        %v2202 = vsel %vm2118, %v2087, %v2089
        %v2203 = vsel %vm2118, %v2091, %v2093
        %v2204 = vsel %vm2118, %v2093, %v2095
        %v2205 = vsel %vm2118, %v2095, %v2097
        %v2206 = vsel %vm2118, %v2097, %v2099
        %v2207 = vsel %vm2118, %v2099, %v2101
        %v2208 = vsel %vm2118, %v2101, %v2103
        %v2209 = vsel %vm2118, %v2105, %v2107
        %v2210 = vsel %vm2118, %v2107, %v2109
        %v2211 = vsel %vm2118, %v2109, %v2111
        %v2212 = vsel %vm2118, %v2111, %v2113
        %v2213 = vsel %vm2118, %v2113, %v2115
        %v2214 = vsel %vm2118, %v2115, %v2117
        %v2327 = vadd.f32 %v1556, %v1895
        %v2328 = vadd.f32 %v1557, %v2119
        %v2329 = vadd.f32 %v1558, %v2120
        %v2330 = vadd.f32 %v1559, %v2121
        %v2331 = vadd.f32 %v1560, %v2122
        %v2332 = vadd.f32 %v1561, %v2123
        %v2333 = vadd.f32 %v1562, %v2124
        %v2334 = vadd.f32 %v1563, %v1909
        %v2335 = vadd.f32 %v1564, %v2125
        %v2336 = vadd.f32 %v1565, %v2126
        %v2337 = vadd.f32 %v1566, %v2127
        %v2338 = vadd.f32 %v1567, %v2128
        %v2339 = vadd.f32 %v1568, %v2129
        %v2340 = vadd.f32 %v1569, %v2130
        %v2341 = vadd.f32 %v1570, %v1923
        %v2342 = vadd.f32 %v1571, %v2131
        %v2343 = vadd.f32 %v1572, %v2132
        %v2344 = vadd.f32 %v1573, %v2133
        %v2345 = vadd.f32 %v1574, %v2134
        %v2346 = vadd.f32 %v1575, %v2135
        %v2347 = vadd.f32 %v1576, %v2136
        %v2348 = vadd.f32 %v1577, %v1937
        %v2349 = vadd.f32 %v1578, %v2137
        %v2350 = vadd.f32 %v1579, %v2138
        %v2351 = vadd.f32 %v1580, %v2139
        %v2352 = vadd.f32 %v1581, %v2140
        %v2353 = vadd.f32 %v1582, %v2141
        %v2354 = vadd.f32 %v1583, %v2142
        %v2355 = vadd.f32 %v1584, %v1951
        %v2356 = vadd.f32 %v1585, %v2143
        %v2357 = vadd.f32 %v1586, %v2144
        %v2358 = vadd.f32 %v1587, %v2145
        %v2359 = vadd.f32 %v1588, %v2146
        %v2360 = vadd.f32 %v1589, %v2147
        %v2361 = vadd.f32 %v1590, %v2148
        %v2362 = vadd.f32 %v1591, %v1965
        %v2363 = vadd.f32 %v1592, %v2149
        %v2364 = vadd.f32 %v1593, %v2150
        %v2365 = vadd.f32 %v1594, %v2151
        %v2366 = vadd.f32 %v1595, %v2152
        %v2367 = vadd.f32 %v1596, %v2153
        %v2368 = vadd.f32 %v1597, %v2154
        %v2369 = vadd.f32 %v1598, %v1979
        %v2370 = vadd.f32 %v1599, %v2155
        %v2371 = vadd.f32 %v1600, %v2156
        %v2372 = vadd.f32 %v1601, %v2157
        %v2373 = vadd.f32 %v1602, %v2158
        %v2374 = vadd.f32 %v1603, %v2159
        %v2375 = vadd.f32 %v1604, %v2160
        %v2376 = vadd.f32 %v1605, %v1993
        %v2377 = vadd.f32 %v1606, %v2161
        %v2378 = vadd.f32 %v1607, %v2162
        %v2379 = vadd.f32 %v1608, %v2163
        %v2380 = vadd.f32 %v1609, %v2164
        %v2381 = vadd.f32 %v1610, %v2165
        %v2382 = vadd.f32 %v1611, %v2166
        %v2383 = vadd.f32 %v1612, %v2007
        %v2384 = vadd.f32 %v1613, %v2167
        %v2385 = vadd.f32 %v1614, %v2168
        %v2386 = vadd.f32 %v1615, %v2169
        %v2387 = vadd.f32 %v1616, %v2170
        %v2388 = vadd.f32 %v1617, %v2171
        %v2389 = vadd.f32 %v1618, %v2172
        %v2390 = vadd.f32 %v1619, %v2021
        %v2391 = vadd.f32 %v1620, %v2173
        %v2392 = vadd.f32 %v1621, %v2174
        %v2393 = vadd.f32 %v1622, %v2175
        %v2394 = vadd.f32 %v1623, %v2176
        %v2395 = vadd.f32 %v1624, %v2177
        %v2396 = vadd.f32 %v1625, %v2178
        %v2397 = vadd.f32 %v1626, %v2035
        %v2398 = vadd.f32 %v1627, %v2179
        %v2399 = vadd.f32 %v1628, %v2180
        %v2400 = vadd.f32 %v1629, %v2181
        %v2401 = vadd.f32 %v1630, %v2182
        %v2402 = vadd.f32 %v1631, %v2183
        %v2403 = vadd.f32 %v1632, %v2184
        %v2404 = vadd.f32 %v1633, %v2049
        %v2405 = vadd.f32 %v1634, %v2185
        %v2406 = vadd.f32 %v1635, %v2186
        %v2407 = vadd.f32 %v1636, %v2187
        %v2408 = vadd.f32 %v1637, %v2188
        %v2409 = vadd.f32 %v1638, %v2189
        %v2410 = vadd.f32 %v1639, %v2190
        %v2411 = vadd.f32 %v1640, %v2063
        %v2412 = vadd.f32 %v1641, %v2191
        %v2413 = vadd.f32 %v1642, %v2192
        %v2414 = vadd.f32 %v1643, %v2193
        %v2415 = vadd.f32 %v1644, %v2194
        %v2416 = vadd.f32 %v1645, %v2195
        %v2417 = vadd.f32 %v1646, %v2196
        %v2418 = vadd.f32 %v1647, %v2077
        %v2419 = vadd.f32 %v1648, %v2197
        %v2420 = vadd.f32 %v1649, %v2198
        %v2421 = vadd.f32 %v1650, %v2199
        %v2422 = vadd.f32 %v1651, %v2200
        %v2423 = vadd.f32 %v1652, %v2201
        %v2424 = vadd.f32 %v1653, %v2202
        %v2425 = vadd.f32 %v1654, %v2091
        %v2426 = vadd.f32 %v1655, %v2203
        %v2427 = vadd.f32 %v1656, %v2204
        %v2428 = vadd.f32 %v1657, %v2205
        %v2429 = vadd.f32 %v1658, %v2206
        %v2430 = vadd.f32 %v1659, %v2207
        %v2431 = vadd.f32 %v1660, %v2208
        %v2432 = vadd.f32 %v1661, %v2105
        %v2433 = vadd.f32 %v1662, %v2209
        %v2434 = vadd.f32 %v1663, %v2210
        %v2435 = vadd.f32 %v1664, %v2211
        %v2436 = vadd.f32 %v1665, %v2212
        %v2437 = vadd.f32 %v1666, %v2213
        %v2438 = vadd.f32 %v1667, %v2214
        %s2439 = sld [smem:[#allocation4]]
        %v2440 = vstv %s2439
        %v2441 = vmul.f32 %v2440, %v560
        %v2442 = vmul.f32 %v2440, %v561
        %v2443 = vmul.f32 %v2440, %v562
        %v2444 = vmul.f32 %v2440, %v563
        %v2445 = vmul.f32 %v2440, %v564
        %v2446 = vmul.f32 %v2440, %v565
        %v2447 = vmul.f32 %v2440, %v566
        %v2448 = vmul.f32 %v2440, %v567
        %v2449 = vmul.f32 %v2440, %v568
        %v2450 = vmul.f32 %v2440, %v569
        %v2451 = vmul.f32 %v2440, %v570
        %v2452 = vmul.f32 %v2440, %v571
        %v2453 = vmul.f32 %v2440, %v572
        %v2454 = vmul.f32 %v2440, %v573
        %v2455 = vmul.f32 %v2440, %v574
        %v2456 = vmul.f32 %v2440, %v575
        %v2457 = vmul.f32 %v2440, %v576
        %v2458 = vmul.f32 %v2440, %v577
        %v2459 = vmul.f32 %v2440, %v578
        %v2460 = vmul.f32 %v2440, %v579
        %v2461 = vmul.f32 %v2440, %v580
        %v2462 = vmul.f32 %v2440, %v581
        %v2463 = vmul.f32 %v2440, %v582
        %v2464 = vmul.f32 %v2440, %v583
        %v2465 = vmul.f32 %v2440, %v584
        %v2466 = vmul.f32 %v2440, %v585
        %v2467 = vmul.f32 %v2440, %v586
        %v2468 = vmul.f32 %v2440, %v587
        %v2469 = vmul.f32 %v2440, %v588
        %v2470 = vmul.f32 %v2440, %v589
        %v2471 = vmul.f32 %v2440, %v590
        %v2472 = vmul.f32 %v2440, %v591
        %v2473 = vmul.f32 %v2440, %v592
        %v2474 = vmul.f32 %v2440, %v593
        %v2475 = vmul.f32 %v2440, %v594
        %v2476 = vmul.f32 %v2440, %v595
        %v2477 = vmul.f32 %v2440, %v596
        %v2478 = vmul.f32 %v2440, %v597
        %v2479 = vmul.f32 %v2440, %v598
        %v2480 = vmul.f32 %v2440, %v599
        %v2481 = vmul.f32 %v2440, %v600
        %v2482 = vmul.f32 %v2440, %v601
        %v2483 = vmul.f32 %v2440, %v602
        %v2484 = vmul.f32 %v2440, %v603
        %v2485 = vmul.f32 %v2440, %v604
        %v2486 = vmul.f32 %v2440, %v605
        %v2487 = vmul.f32 %v2440, %v606
        %v2488 = vmul.f32 %v2440, %v607
        %v2489 = vmul.f32 %v2440, %v608
        %v2490 = vmul.f32 %v2440, %v609
        %v2491 = vmul.f32 %v2440, %v610
        %v2492 = vmul.f32 %v2440, %v611
        %v2493 = vmul.f32 %v2440, %v612
        %v2494 = vmul.f32 %v2440, %v613
        %v2495 = vmul.f32 %v2440, %v614
        %v2496 = vmul.f32 %v2440, %v615
        %v2497 = vmul.f32 %v2440, %v616
        %v2498 = vmul.f32 %v2440, %v617
        %v2499 = vmul.f32 %v2440, %v618
        %v2500 = vmul.f32 %v2440, %v619
        %v2501 = vmul.f32 %v2440, %v620
        %v2502 = vmul.f32 %v2440, %v621
        %v2503 = vmul.f32 %v2440, %v622
        %v2504 = vmul.f32 %v2440, %v623
        %v2505 = vmul.f32 %v2440, %v624
        %v2506 = vmul.f32 %v2440, %v625
        %v2507 = vmul.f32 %v2440, %v626
        %v2508 = vmul.f32 %v2440, %v627
        %v2509 = vmul.f32 %v2440, %v628
        %v2510 = vmul.f32 %v2440, %v629
        %v2511 = vmul.f32 %v2440, %v630
        %v2512 = vmul.f32 %v2440, %v631
        %v2513 = vmul.f32 %v2440, %v632
        %v2514 = vmul.f32 %v2440, %v633
        %v2515 = vmul.f32 %v2440, %v634
        %v2516 = vmul.f32 %v2440, %v635
        %v2517 = vmul.f32 %v2440, %v636
        %v2518 = vmul.f32 %v2440, %v637
        %v2519 = vmul.f32 %v2440, %v638
        %v2520 = vmul.f32 %v2440, %v639
        %v2521 = vmul.f32 %v2440, %v640
        %v2522 = vmul.f32 %v2440, %v641
        %v2523 = vmul.f32 %v2440, %v642
        %v2524 = vmul.f32 %v2440, %v643
        %v2525 = vmul.f32 %v2440, %v644
        %v2526 = vmul.f32 %v2440, %v645
        %v2527 = vmul.f32 %v2440, %v646
        %v2528 = vmul.f32 %v2440, %v647
        %v2529 = vmul.f32 %v2440, %v648
        %v2530 = vmul.f32 %v2440, %v649
        %v2531 = vmul.f32 %v2440, %v650
        %v2532 = vmul.f32 %v2440, %v651
        %v2533 = vmul.f32 %v2440, %v652
        %v2534 = vmul.f32 %v2440, %v653
        %v2535 = vmul.f32 %v2440, %v654
        %v2536 = vmul.f32 %v2440, %v655
        %v2537 = vmul.f32 %v2440, %v656
        %v2538 = vmul.f32 %v2440, %v657
        %v2539 = vmul.f32 %v2440, %v658
        %v2540 = vmul.f32 %v2440, %v659
        %v2541 = vmul.f32 %v2440, %v660
        %v2542 = vmul.f32 %v2440, %v661
        %v2543 = vmul.f32 %v2440, %v662
        %v2544 = vmul.f32 %v2440, %v663
        %v2545 = vmul.f32 %v2440, %v664
        %v2546 = vmul.f32 %v2440, %v665
        %v2547 = vmul.f32 %v2440, %v666
        %v2548 = vmul.f32 %v2440, %v667
        %v2549 = vmul.f32 %v2440, %v668
        %v2550 = vmul.f32 %v2440, %v669
        %v2551 = vmul.f32 %v2440, %v670
        %v2552 = vmul.f32 %v2440, %v671
        %s2553 = sld [smem:[#allocation4 + $0x80]]
        %v2554 = vld [vmem:[#allocation2] sm:$0xff]
        %v2555 = vld [vmem:[#allocation2 + $0x40] sm:$0xff]
        %v2556 = vld [vmem:[#allocation2 + $0x80] sm:$0xff]
        %v2557 = vld [vmem:[#allocation2 + $0xc0] sm:$0xff]
        %v2558 = vld [vmem:[#allocation2 + $0x100] sm:$0xff]
        %v2559 = vld [vmem:[#allocation2 + $0x140] sm:$0xff]
        %v2560 = vld [vmem:[#allocation2 + $0x180] sm:$0xff]
        %v2561 = vld [vmem:[#allocation2 + $0x1c0] sm:$0xff]
        %v2562 = vld [vmem:[#allocation2 + $0x200] sm:$0xff]
        %v2563 = vld [vmem:[#allocation2 + $0x240] sm:$0xff]
        %v2564 = vld [vmem:[#allocation2 + $0x280] sm:$0xff]
        %v2565 = vld [vmem:[#allocation2 + $0x2c0] sm:$0xff]
        %v2566 = vld [vmem:[#allocation2 + $0x300] sm:$0xff]
        %v2567 = vld [vmem:[#allocation2 + $0x340] sm:$0xff]
        %v2568 = vld [vmem:[#allocation2 + $0x380] sm:$0xff]
        %v2569 = vld [vmem:[#allocation2 + $0x3c0] sm:$0xff]
        %v2570 = vstv %s2553
        %v2571 = vmul.f32 %v2570, %v2554
        %v2572 = vmul.f32 %v2570, %v786
        %v2573 = vmul.f32 %v2570, %v787
        %v2574 = vmul.f32 %v2570, %v788
        %v2575 = vmul.f32 %v2570, %v789
        %v2576 = vmul.f32 %v2570, %v790
        %v2577 = vmul.f32 %v2570, %v791
        %v2578 = vmul.f32 %v2570, %v792
        %v2579 = vmul.f32 %v2570, %v2555
        %v2580 = vmul.f32 %v2570, %v793
        %v2581 = vmul.f32 %v2570, %v794
        %v2582 = vmul.f32 %v2570, %v795
        %v2583 = vmul.f32 %v2570, %v796
        %v2584 = vmul.f32 %v2570, %v797
        %v2585 = vmul.f32 %v2570, %v798
        %v2586 = vmul.f32 %v2570, %v799
        %v2587 = vmul.f32 %v2570, %v2556
        %v2588 = vmul.f32 %v2570, %v800
        %v2589 = vmul.f32 %v2570, %v801
        %v2590 = vmul.f32 %v2570, %v802
        %v2591 = vmul.f32 %v2570, %v803
        %v2592 = vmul.f32 %v2570, %v804
        %v2593 = vmul.f32 %v2570, %v805
        %v2594 = vmul.f32 %v2570, %v806
        %v2595 = vmul.f32 %v2570, %v2557
        %v2596 = vmul.f32 %v2570, %v807
        %v2597 = vmul.f32 %v2570, %v808
        %v2598 = vmul.f32 %v2570, %v809
        %v2599 = vmul.f32 %v2570, %v810
        %v2600 = vmul.f32 %v2570, %v811
        %v2601 = vmul.f32 %v2570, %v812
        %v2602 = vmul.f32 %v2570, %v813
        %v2603 = vmul.f32 %v2570, %v2558
        %v2604 = vmul.f32 %v2570, %v814
        %v2605 = vmul.f32 %v2570, %v815
        %v2606 = vmul.f32 %v2570, %v816
        %v2607 = vmul.f32 %v2570, %v817
        %v2608 = vmul.f32 %v2570, %v818
        %v2609 = vmul.f32 %v2570, %v819
        %v2610 = vmul.f32 %v2570, %v820
        %v2611 = vmul.f32 %v2570, %v2559
        %v2612 = vmul.f32 %v2570, %v821
        %v2613 = vmul.f32 %v2570, %v822
        %v2614 = vmul.f32 %v2570, %v823
        %v2615 = vmul.f32 %v2570, %v824
        %v2616 = vmul.f32 %v2570, %v825
        %v2617 = vmul.f32 %v2570, %v826
        %v2618 = vmul.f32 %v2570, %v827
        %v2619 = vmul.f32 %v2570, %v2560
        %v2620 = vmul.f32 %v2570, %v828
        %v2621 = vmul.f32 %v2570, %v829
        %v2622 = vmul.f32 %v2570, %v830
        %v2623 = vmul.f32 %v2570, %v831
        %v2624 = vmul.f32 %v2570, %v832
        %v2625 = vmul.f32 %v2570, %v833
        %v2626 = vmul.f32 %v2570, %v834
        %v2627 = vmul.f32 %v2570, %v2561
        %v2628 = vmul.f32 %v2570, %v835
        %v2629 = vmul.f32 %v2570, %v836
        %v2630 = vmul.f32 %v2570, %v837
        %v2631 = vmul.f32 %v2570, %v838
        %v2632 = vmul.f32 %v2570, %v839
        %v2633 = vmul.f32 %v2570, %v840
        %v2634 = vmul.f32 %v2570, %v841
        %v2635 = vmul.f32 %v2570, %v2562
        %v2636 = vmul.f32 %v2570, %v842
        %v2637 = vmul.f32 %v2570, %v843
        %v2638 = vmul.f32 %v2570, %v844
        %v2639 = vmul.f32 %v2570, %v845
        %v2640 = vmul.f32 %v2570, %v846
        %v2641 = vmul.f32 %v2570, %v847
        %v2642 = vmul.f32 %v2570, %v848
        %v2643 = vmul.f32 %v2570, %v2563
        %v2644 = vmul.f32 %v2570, %v849
        %v2645 = vmul.f32 %v2570, %v850
        %v2646 = vmul.f32 %v2570, %v851
        %v2647 = vmul.f32 %v2570, %v852
        %v2648 = vmul.f32 %v2570, %v853
        %v2649 = vmul.f32 %v2570, %v854
        %v2650 = vmul.f32 %v2570, %v855
        %v2651 = vmul.f32 %v2570, %v2564
        %v2652 = vmul.f32 %v2570, %v856
        %v2653 = vmul.f32 %v2570, %v857
        %v2654 = vmul.f32 %v2570, %v858
        %v2655 = vmul.f32 %v2570, %v859
        %v2656 = vmul.f32 %v2570, %v860
        %v2657 = vmul.f32 %v2570, %v861
        %v2658 = vmul.f32 %v2570, %v862
        %v2659 = vmul.f32 %v2570, %v2565
        %v2660 = vmul.f32 %v2570, %v863
        %v2661 = vmul.f32 %v2570, %v864
        %v2662 = vmul.f32 %v2570, %v865
        %v2663 = vmul.f32 %v2570, %v866
        %v2664 = vmul.f32 %v2570, %v867
        %v2665 = vmul.f32 %v2570, %v868
        %v2666 = vmul.f32 %v2570, %v869
        %v2667 = vmul.f32 %v2570, %v2566
        %v2668 = vmul.f32 %v2570, %v870
        %v2669 = vmul.f32 %v2570, %v871
        %v2670 = vmul.f32 %v2570, %v872
        %v2671 = vmul.f32 %v2570, %v873
        %v2672 = vmul.f32 %v2570, %v874
        %v2673 = vmul.f32 %v2570, %v875
        %v2674 = vmul.f32 %v2570, %v876
        %v2675 = vmul.f32 %v2570, %v2567
        %v2676 = vmul.f32 %v2570, %v877
        %v2677 = vmul.f32 %v2570, %v878
        %v2678 = vmul.f32 %v2570, %v879
        %v2679 = vmul.f32 %v2570, %v880
        %v2680 = vmul.f32 %v2570, %v881
        %v2681 = vmul.f32 %v2570, %v882
        %v2682 = vmul.f32 %v2570, %v883
        %v2683 = vmul.f32 %v2570, %v2568
        %v2684 = vmul.f32 %v2570, %v884
        %v2685 = vmul.f32 %v2570, %v885
        %v2686 = vmul.f32 %v2570, %v886
        %v2687 = vmul.f32 %v2570, %v887
        %v2688 = vmul.f32 %v2570, %v888
        %v2689 = vmul.f32 %v2570, %v889
        %v2690 = vmul.f32 %v2570, %v890
        %v2691 = vmul.f32 %v2570, %v2569
        %v2692 = vmul.f32 %v2570, %v891
        %v2693 = vmul.f32 %v2570, %v892
        %v2694 = vmul.f32 %v2570, %v893
        %v2695 = vmul.f32 %v2570, %v894
        %v2696 = vmul.f32 %v2570, %v895
        %v2697 = vmul.f32 %v2570, %v896
        %v2698 = vmul.f32 %v2570, %v897
        %2827 = vrot.lane.b32.xlu0 %v2571, 100
        %v2828 = vpop.permute.xlu0 %2827
        %2829 = vrot.lane.b32.xlu0 %v2572, 100
        %v2830 = vpop.permute.xlu0 %2829
        %2831 = vrot.lane.b32.xlu0 %v2573, 100
        %v2832 = vpop.permute.xlu0 %2831
        %2833 = vrot.lane.b32.xlu0 %v2574, 100
        %v2834 = vpop.permute.xlu0 %2833
        %2835 = vrot.lane.b32.xlu0 %v2575, 100
        %v2836 = vpop.permute.xlu0 %2835
        %2837 = vrot.lane.b32.xlu0 %v2576, 100
        %v2838 = vpop.permute.xlu0 %2837
        %2839 = vrot.lane.b32.xlu0 %v2577, 100
        %v2840 = vpop.permute.xlu0 %2839
        %2841 = vrot.lane.b32.xlu0 %v2578, 100
        %v2842 = vpop.permute.xlu0 %2841
        %2843 = vrot.lane.b32.xlu0 %v2579, 100
        %v2844 = vpop.permute.xlu0 %2843
        %2845 = vrot.lane.b32.xlu0 %v2580, 100
        %v2846 = vpop.permute.xlu0 %2845
        %2847 = vrot.lane.b32.xlu0 %v2581, 100
        %v2848 = vpop.permute.xlu0 %2847
        %2849 = vrot.lane.b32.xlu0 %v2582, 100
        %v2850 = vpop.permute.xlu0 %2849
        %2851 = vrot.lane.b32.xlu0 %v2583, 100
        %v2852 = vpop.permute.xlu0 %2851
        %2853 = vrot.lane.b32.xlu0 %v2584, 100
        %v2854 = vpop.permute.xlu0 %2853
        %2855 = vrot.lane.b32.xlu0 %v2585, 100
        %v2856 = vpop.permute.xlu0 %2855
        %2857 = vrot.lane.b32.xlu0 %v2586, 100
        %v2858 = vpop.permute.xlu0 %2857
        %2859 = vrot.lane.b32.xlu0 %v2587, 100
        %v2860 = vpop.permute.xlu0 %2859
        %2861 = vrot.lane.b32.xlu0 %v2588, 100
        %v2862 = vpop.permute.xlu0 %2861
        %2863 = vrot.lane.b32.xlu0 %v2589, 100
        %v2864 = vpop.permute.xlu0 %2863
        %2865 = vrot.lane.b32.xlu0 %v2590, 100
        %v2866 = vpop.permute.xlu0 %2865
        %2867 = vrot.lane.b32.xlu0 %v2591, 100
        %v2868 = vpop.permute.xlu0 %2867
        %2869 = vrot.lane.b32.xlu0 %v2592, 100
        %v2870 = vpop.permute.xlu0 %2869
        %2871 = vrot.lane.b32.xlu0 %v2593, 100
        %v2872 = vpop.permute.xlu0 %2871
        %2873 = vrot.lane.b32.xlu0 %v2594, 100
        %v2874 = vpop.permute.xlu0 %2873
        %2875 = vrot.lane.b32.xlu0 %v2595, 100
        %v2876 = vpop.permute.xlu0 %2875
        %2877 = vrot.lane.b32.xlu0 %v2596, 100
        %v2878 = vpop.permute.xlu0 %2877
        %2879 = vrot.lane.b32.xlu0 %v2597, 100
        %v2880 = vpop.permute.xlu0 %2879
        %2881 = vrot.lane.b32.xlu0 %v2598, 100
        %v2882 = vpop.permute.xlu0 %2881
        %2883 = vrot.lane.b32.xlu0 %v2599, 100
        %v2884 = vpop.permute.xlu0 %2883
        %2885 = vrot.lane.b32.xlu0 %v2600, 100
        %v2886 = vpop.permute.xlu0 %2885
        %2887 = vrot.lane.b32.xlu0 %v2601, 100
        %v2888 = vpop.permute.xlu0 %2887
        %2889 = vrot.lane.b32.xlu0 %v2602, 100
        %v2890 = vpop.permute.xlu0 %2889
        %2891 = vrot.lane.b32.xlu0 %v2603, 100
        %v2892 = vpop.permute.xlu0 %2891
        %2893 = vrot.lane.b32.xlu0 %v2604, 100
        %v2894 = vpop.permute.xlu0 %2893
        %2895 = vrot.lane.b32.xlu0 %v2605, 100
        %v2896 = vpop.permute.xlu0 %2895
        %2897 = vrot.lane.b32.xlu0 %v2606, 100
        %v2898 = vpop.permute.xlu0 %2897
        %2899 = vrot.lane.b32.xlu0 %v2607, 100
        %v2900 = vpop.permute.xlu0 %2899
        %2901 = vrot.lane.b32.xlu0 %v2608, 100
        %v2902 = vpop.permute.xlu0 %2901
        %2903 = vrot.lane.b32.xlu0 %v2609, 100
        %v2904 = vpop.permute.xlu0 %2903
        %2905 = vrot.lane.b32.xlu0 %v2610, 100
        %v2906 = vpop.permute.xlu0 %2905
        %2907 = vrot.lane.b32.xlu0 %v2611, 100
        %v2908 = vpop.permute.xlu0 %2907
        %2909 = vrot.lane.b32.xlu0 %v2612, 100
        %v2910 = vpop.permute.xlu0 %2909
        %2911 = vrot.lane.b32.xlu0 %v2613, 100
        %v2912 = vpop.permute.xlu0 %2911
        %2913 = vrot.lane.b32.xlu0 %v2614, 100
        %v2914 = vpop.permute.xlu0 %2913
        %2915 = vrot.lane.b32.xlu0 %v2615, 100
        %v2916 = vpop.permute.xlu0 %2915
        %2917 = vrot.lane.b32.xlu0 %v2616, 100
        %v2918 = vpop.permute.xlu0 %2917
        %2919 = vrot.lane.b32.xlu0 %v2617, 100
        %v2920 = vpop.permute.xlu0 %2919
        %2921 = vrot.lane.b32.xlu0 %v2618, 100
        %v2922 = vpop.permute.xlu0 %2921
        %2923 = vrot.lane.b32.xlu0 %v2619, 100
        %v2924 = vpop.permute.xlu0 %2923
        %2925 = vrot.lane.b32.xlu0 %v2620, 100
        %v2926 = vpop.permute.xlu0 %2925
        %2927 = vrot.lane.b32.xlu0 %v2621, 100
        %v2928 = vpop.permute.xlu0 %2927
        %2929 = vrot.lane.b32.xlu0 %v2622, 100
        %v2930 = vpop.permute.xlu0 %2929
        %2931 = vrot.lane.b32.xlu0 %v2623, 100
        %v2932 = vpop.permute.xlu0 %2931
        %2933 = vrot.lane.b32.xlu0 %v2624, 100
        %v2934 = vpop.permute.xlu0 %2933
        %2935 = vrot.lane.b32.xlu0 %v2625, 100
        %v2936 = vpop.permute.xlu0 %2935
        %2937 = vrot.lane.b32.xlu0 %v2626, 100
        %v2938 = vpop.permute.xlu0 %2937
        %2939 = vrot.lane.b32.xlu0 %v2627, 100
        %v2940 = vpop.permute.xlu0 %2939
        %2941 = vrot.lane.b32.xlu0 %v2628, 100
        %v2942 = vpop.permute.xlu0 %2941
        %2943 = vrot.lane.b32.xlu0 %v2629, 100
        %v2944 = vpop.permute.xlu0 %2943
        %2945 = vrot.lane.b32.xlu0 %v2630, 100
        %v2946 = vpop.permute.xlu0 %2945
        %2947 = vrot.lane.b32.xlu0 %v2631, 100
        %v2948 = vpop.permute.xlu0 %2947
        %2949 = vrot.lane.b32.xlu0 %v2632, 100
        %v2950 = vpop.permute.xlu0 %2949
        %2951 = vrot.lane.b32.xlu0 %v2633, 100
        %v2952 = vpop.permute.xlu0 %2951
        %2953 = vrot.lane.b32.xlu0 %v2634, 100
        %v2954 = vpop.permute.xlu0 %2953
        %2955 = vrot.lane.b32.xlu0 %v2635, 100
        %v2956 = vpop.permute.xlu0 %2955
        %2957 = vrot.lane.b32.xlu0 %v2636, 100
        %v2958 = vpop.permute.xlu0 %2957
        %2959 = vrot.lane.b32.xlu0 %v2637, 100
        %v2960 = vpop.permute.xlu0 %2959
        %2961 = vrot.lane.b32.xlu0 %v2638, 100
        %v2962 = vpop.permute.xlu0 %2961
        %2963 = vrot.lane.b32.xlu0 %v2639, 100
        %v2964 = vpop.permute.xlu0 %2963
        %2965 = vrot.lane.b32.xlu0 %v2640, 100
        %v2966 = vpop.permute.xlu0 %2965
        %2967 = vrot.lane.b32.xlu0 %v2641, 100
        %v2968 = vpop.permute.xlu0 %2967
        %2969 = vrot.lane.b32.xlu0 %v2642, 100
        %v2970 = vpop.permute.xlu0 %2969
        %2971 = vrot.lane.b32.xlu0 %v2643, 100
        %v2972 = vpop.permute.xlu0 %2971
        %2973 = vrot.lane.b32.xlu0 %v2644, 100
        %v2974 = vpop.permute.xlu0 %2973
        %2975 = vrot.lane.b32.xlu0 %v2645, 100
        %v2976 = vpop.permute.xlu0 %2975
        %2977 = vrot.lane.b32.xlu0 %v2646, 100
        %v2978 = vpop.permute.xlu0 %2977
        %2979 = vrot.lane.b32.xlu0 %v2647, 100
        %v2980 = vpop.permute.xlu0 %2979
        %2981 = vrot.lane.b32.xlu0 %v2648, 100
        %v2982 = vpop.permute.xlu0 %2981
        %2983 = vrot.lane.b32.xlu0 %v2649, 100
        %v2984 = vpop.permute.xlu0 %2983
        %2985 = vrot.lane.b32.xlu0 %v2650, 100
        %v2986 = vpop.permute.xlu0 %2985
        %2987 = vrot.lane.b32.xlu0 %v2651, 100
        %v2988 = vpop.permute.xlu0 %2987
        %2989 = vrot.lane.b32.xlu0 %v2652, 100
        %v2990 = vpop.permute.xlu0 %2989
        %2991 = vrot.lane.b32.xlu0 %v2653, 100
        %v2992 = vpop.permute.xlu0 %2991
        %2993 = vrot.lane.b32.xlu0 %v2654, 100
        %v2994 = vpop.permute.xlu0 %2993
        %2995 = vrot.lane.b32.xlu0 %v2655, 100
        %v2996 = vpop.permute.xlu0 %2995
        %2997 = vrot.lane.b32.xlu0 %v2656, 100
        %v2998 = vpop.permute.xlu0 %2997
        %2999 = vrot.lane.b32.xlu0 %v2657, 100
        %v3000 = vpop.permute.xlu0 %2999
        %3001 = vrot.lane.b32.xlu0 %v2658, 100
        %v3002 = vpop.permute.xlu0 %3001
        %3003 = vrot.lane.b32.xlu0 %v2659, 100
        %v3004 = vpop.permute.xlu0 %3003
        %3005 = vrot.lane.b32.xlu0 %v2660, 100
        %v3006 = vpop.permute.xlu0 %3005
        %3007 = vrot.lane.b32.xlu0 %v2661, 100
        %v3008 = vpop.permute.xlu0 %3007
        %3009 = vrot.lane.b32.xlu0 %v2662, 100
        %v3010 = vpop.permute.xlu0 %3009
        %3011 = vrot.lane.b32.xlu0 %v2663, 100
        %v3012 = vpop.permute.xlu0 %3011
        %3013 = vrot.lane.b32.xlu0 %v2664, 100
        %v3014 = vpop.permute.xlu0 %3013
        %3015 = vrot.lane.b32.xlu0 %v2665, 100
        %v3016 = vpop.permute.xlu0 %3015
        %3017 = vrot.lane.b32.xlu0 %v2666, 100
        %v3018 = vpop.permute.xlu0 %3017
        %3019 = vrot.lane.b32.xlu0 %v2667, 100
        %v3020 = vpop.permute.xlu0 %3019
        %3021 = vrot.lane.b32.xlu0 %v2668, 100
        %v3022 = vpop.permute.xlu0 %3021
        %3023 = vrot.lane.b32.xlu0 %v2669, 100
        %v3024 = vpop.permute.xlu0 %3023
        %3025 = vrot.lane.b32.xlu0 %v2670, 100
        %v3026 = vpop.permute.xlu0 %3025
        %3027 = vrot.lane.b32.xlu0 %v2671, 100
        %v3028 = vpop.permute.xlu0 %3027
        %3029 = vrot.lane.b32.xlu0 %v2672, 100
        %v3030 = vpop.permute.xlu0 %3029
        %3031 = vrot.lane.b32.xlu0 %v2673, 100
        %v3032 = vpop.permute.xlu0 %3031
        %3033 = vrot.lane.b32.xlu0 %v2674, 100
        %v3034 = vpop.permute.xlu0 %3033
        %3035 = vrot.lane.b32.xlu0 %v2675, 100
        %v3036 = vpop.permute.xlu0 %3035
        %3037 = vrot.lane.b32.xlu0 %v2676, 100
        %v3038 = vpop.permute.xlu0 %3037
        %3039 = vrot.lane.b32.xlu0 %v2677, 100
        %v3040 = vpop.permute.xlu0 %3039
        %3041 = vrot.lane.b32.xlu0 %v2678, 100
        %v3042 = vpop.permute.xlu0 %3041
        %3043 = vrot.lane.b32.xlu0 %v2679, 100
        %v3044 = vpop.permute.xlu0 %3043
        %3045 = vrot.lane.b32.xlu0 %v2680, 100
        %v3046 = vpop.permute.xlu0 %3045
        %3047 = vrot.lane.b32.xlu0 %v2681, 100
        %v3048 = vpop.permute.xlu0 %3047
        %3049 = vrot.lane.b32.xlu0 %v2682, 100
        %v3050 = vpop.permute.xlu0 %3049
        %3051 = vrot.lane.b32.xlu0 %v2683, 100
        %v3052 = vpop.permute.xlu0 %3051
        %3053 = vrot.lane.b32.xlu0 %v2684, 100
        %v3054 = vpop.permute.xlu0 %3053
        %3055 = vrot.lane.b32.xlu0 %v2685, 100
        %v3056 = vpop.permute.xlu0 %3055
        %3057 = vrot.lane.b32.xlu0 %v2686, 100
        %v3058 = vpop.permute.xlu0 %3057
        %3059 = vrot.lane.b32.xlu0 %v2687, 100
        %v3060 = vpop.permute.xlu0 %3059
        %3061 = vrot.lane.b32.xlu0 %v2688, 100
        %v3062 = vpop.permute.xlu0 %3061
        %3063 = vrot.lane.b32.xlu0 %v2689, 100
        %v3064 = vpop.permute.xlu0 %3063
        %3065 = vrot.lane.b32.xlu0 %v2690, 100
        %v3066 = vpop.permute.xlu0 %3065
        %3067 = vrot.lane.b32.xlu0 %v2691, 100
        %v3068 = vpop.permute.xlu0 %3067
        %3069 = vrot.lane.b32.xlu0 %v2692, 100
        %v3070 = vpop.permute.xlu0 %3069
        %3071 = vrot.lane.b32.xlu0 %v2693, 100
        %v3072 = vpop.permute.xlu0 %3071
        %3073 = vrot.lane.b32.xlu0 %v2694, 100
        %v3074 = vpop.permute.xlu0 %3073
        %3075 = vrot.lane.b32.xlu0 %v2695, 100
        %v3076 = vpop.permute.xlu0 %3075
        %3077 = vrot.lane.b32.xlu0 %v2696, 100
        %v3078 = vpop.permute.xlu0 %3077
        %3079 = vrot.lane.b32.xlu0 %v2697, 100
        %v3080 = vpop.permute.xlu0 %3079
        %3081 = vrot.lane.b32.xlu0 %v2698, 100
        %v3082 = vpop.permute.xlu0 %3081
        %v3083 = vsel %vm1347, %v2828, %v2830
        %v3084 = vsel %vm1347, %v2830, %v2832
        %v3085 = vsel %vm1347, %v2832, %v2834
        %v3086 = vsel %vm1347, %v2834, %v2836
        %v3087 = vsel %vm1347, %v2836, %v2838
        %v3088 = vsel %vm1347, %v2838, %v2840
        %v3089 = vsel %vm1347, %v2840, %v2842
        %v3090 = vsel %vm1347, %v2844, %v2846
        %v3091 = vsel %vm1347, %v2846, %v2848
        %v3092 = vsel %vm1347, %v2848, %v2850
        %v3093 = vsel %vm1347, %v2850, %v2852
        %v3094 = vsel %vm1347, %v2852, %v2854
        %v3095 = vsel %vm1347, %v2854, %v2856
        %v3096 = vsel %vm1347, %v2856, %v2858
        %v3097 = vsel %vm1347, %v2860, %v2862
        %v3098 = vsel %vm1347, %v2862, %v2864
        %v3099 = vsel %vm1347, %v2864, %v2866
        %v3100 = vsel %vm1347, %v2866, %v2868
        %v3101 = vsel %vm1347, %v2868, %v2870
        %v3102 = vsel %vm1347, %v2870, %v2872
        %v3103 = vsel %vm1347, %v2872, %v2874
        %v3104 = vsel %vm1347, %v2876, %v2878
        %v3105 = vsel %vm1347, %v2878, %v2880
        %v3106 = vsel %vm1347, %v2880, %v2882
        %v3107 = vsel %vm1347, %v2882, %v2884
        %v3108 = vsel %vm1347, %v2884, %v2886
        %v3109 = vsel %vm1347, %v2886, %v2888
        %v3110 = vsel %vm1347, %v2888, %v2890
        %v3111 = vsel %vm1347, %v2892, %v2894
        %v3112 = vsel %vm1347, %v2894, %v2896
        %v3113 = vsel %vm1347, %v2896, %v2898
        %v3114 = vsel %vm1347, %v2898, %v2900
        %v3115 = vsel %vm1347, %v2900, %v2902
        %v3116 = vsel %vm1347, %v2902, %v2904
        %v3117 = vsel %vm1347, %v2904, %v2906
        %v3118 = vsel %vm1347, %v2908, %v2910
        %v3119 = vsel %vm1347, %v2910, %v2912
        %v3120 = vsel %vm1347, %v2912, %v2914
        %v3121 = vsel %vm1347, %v2914, %v2916
        %v3122 = vsel %vm1347, %v2916, %v2918
        %v3123 = vsel %vm1347, %v2918, %v2920
        %v3124 = vsel %vm1347, %v2920, %v2922
        %v3125 = vsel %vm1347, %v2924, %v2926
        %v3126 = vsel %vm1347, %v2926, %v2928
        %v3127 = vsel %vm1347, %v2928, %v2930
        %v3128 = vsel %vm1347, %v2930, %v2932
        %v3129 = vsel %vm1347, %v2932, %v2934
        %v3130 = vsel %vm1347, %v2934, %v2936
        %v3131 = vsel %vm1347, %v2936, %v2938
        %v3132 = vsel %vm1347, %v2940, %v2942
        %v3133 = vsel %vm1347, %v2942, %v2944
        %v3134 = vsel %vm1347, %v2944, %v2946
        %v3135 = vsel %vm1347, %v2946, %v2948
        %v3136 = vsel %vm1347, %v2948, %v2950
        %v3137 = vsel %vm1347, %v2950, %v2952
        %v3138 = vsel %vm1347, %v2952, %v2954
        %v3139 = vsel %vm1347, %v2956, %v2958
        %v3140 = vsel %vm1347, %v2958, %v2960
        %v3141 = vsel %vm1347, %v2960, %v2962
        %v3142 = vsel %vm1347, %v2962, %v2964
        %v3143 = vsel %vm1347, %v2964, %v2966
        %v3144 = vsel %vm1347, %v2966, %v2968
        %v3145 = vsel %vm1347, %v2968, %v2970
        %v3146 = vsel %vm1347, %v2972, %v2974
        %v3147 = vsel %vm1347, %v2974, %v2976
        %v3148 = vsel %vm1347, %v2976, %v2978
        %v3149 = vsel %vm1347, %v2978, %v2980
        %v3150 = vsel %vm1347, %v2980, %v2982
        %v3151 = vsel %vm1347, %v2982, %v2984
        %v3152 = vsel %vm1347, %v2984, %v2986
        %v3153 = vsel %vm1347, %v2988, %v2990
        %v3154 = vsel %vm1347, %v2990, %v2992
        %v3155 = vsel %vm1347, %v2992, %v2994
        %v3156 = vsel %vm1347, %v2994, %v2996
        %v3157 = vsel %vm1347, %v2996, %v2998
        %v3158 = vsel %vm1347, %v2998, %v3000
        %v3159 = vsel %vm1347, %v3000, %v3002
        %v3160 = vsel %vm1347, %v3004, %v3006
        %v3161 = vsel %vm1347, %v3006, %v3008
        %v3162 = vsel %vm1347, %v3008, %v3010
        %v3163 = vsel %vm1347, %v3010, %v3012
        %v3164 = vsel %vm1347, %v3012, %v3014
        %v3165 = vsel %vm1347, %v3014, %v3016
        %v3166 = vsel %vm1347, %v3016, %v3018
        %v3167 = vsel %vm1347, %v3020, %v3022
        %v3168 = vsel %vm1347, %v3022, %v3024
        %v3169 = vsel %vm1347, %v3024, %v3026
        %v3170 = vsel %vm1347, %v3026, %v3028
        %v3171 = vsel %vm1347, %v3028, %v3030
        %v3172 = vsel %vm1347, %v3030, %v3032
        %v3173 = vsel %vm1347, %v3032, %v3034
        %v3174 = vsel %vm1347, %v3036, %v3038
        %v3175 = vsel %vm1347, %v3038, %v3040
        %v3176 = vsel %vm1347, %v3040, %v3042
        %v3177 = vsel %vm1347, %v3042, %v3044
        %v3178 = vsel %vm1347, %v3044, %v3046
        %v3179 = vsel %vm1347, %v3046, %v3048
        %v3180 = vsel %vm1347, %v3048, %v3050
        %v3181 = vsel %vm1347, %v3052, %v3054
        %v3182 = vsel %vm1347, %v3054, %v3056
        %v3183 = vsel %vm1347, %v3056, %v3058
        %v3184 = vsel %vm1347, %v3058, %v3060
        %v3185 = vsel %vm1347, %v3060, %v3062
        %v3186 = vsel %vm1347, %v3062, %v3064
        %v3187 = vsel %vm1347, %v3064, %v3066
        %v3188 = vsel %vm1347, %v3068, %v3070
        %v3189 = vsel %vm1347, %v3070, %v3072
        %v3190 = vsel %vm1347, %v3072, %v3074
        %v3191 = vsel %vm1347, %v3074, %v3076
        %v3192 = vsel %vm1347, %v3076, %v3078
        %v3193 = vsel %vm1347, %v3078, %v3080
        %v3194 = vsel %vm1347, %v3080, %v3082
        %v3307 = vadd.f32 %v2441, %v3083
        %v3308 = vadd.f32 %v2442, %v3084
        %v3309 = vadd.f32 %v2443, %v3085
        %v3310 = vadd.f32 %v2444, %v3086
        %v3311 = vadd.f32 %v2445, %v3087
        %v3312 = vadd.f32 %v2446, %v3088
        %v3313 = vadd.f32 %v2447, %v3089
        %v3314 = vadd.f32 %v2448, %v3090
        %v3315 = vadd.f32 %v2449, %v3091
        %v3316 = vadd.f32 %v2450, %v3092
        %v3317 = vadd.f32 %v2451, %v3093
        %v3318 = vadd.f32 %v2452, %v3094
        %v3319 = vadd.f32 %v2453, %v3095
        %v3320 = vadd.f32 %v2454, %v3096
        %v3321 = vadd.f32 %v2455, %v3097
        %v3322 = vadd.f32 %v2456, %v3098
        %v3323 = vadd.f32 %v2457, %v3099
        %v3324 = vadd.f32 %v2458, %v3100
        %v3325 = vadd.f32 %v2459, %v3101
        %v3326 = vadd.f32 %v2460, %v3102
        %v3327 = vadd.f32 %v2461, %v3103
        %v3328 = vadd.f32 %v2462, %v3104
        %v3329 = vadd.f32 %v2463, %v3105
        %v3330 = vadd.f32 %v2464, %v3106
        %v3331 = vadd.f32 %v2465, %v3107
        %v3332 = vadd.f32 %v2466, %v3108
        %v3333 = vadd.f32 %v2467, %v3109
        %v3334 = vadd.f32 %v2468, %v3110
        %v3335 = vadd.f32 %v2469, %v3111
        %v3336 = vadd.f32 %v2470, %v3112
        %v3337 = vadd.f32 %v2471, %v3113
        %v3338 = vadd.f32 %v2472, %v3114
        %v3339 = vadd.f32 %v2473, %v3115
        %v3340 = vadd.f32 %v2474, %v3116
        %v3341 = vadd.f32 %v2475, %v3117
        %v3342 = vadd.f32 %v2476, %v3118
        %v3343 = vadd.f32 %v2477, %v3119
        %v3344 = vadd.f32 %v2478, %v3120
        %v3345 = vadd.f32 %v2479, %v3121
        %v3346 = vadd.f32 %v2480, %v3122
        %v3347 = vadd.f32 %v2481, %v3123
        %v3348 = vadd.f32 %v2482, %v3124
        %v3349 = vadd.f32 %v2483, %v3125
        %v3350 = vadd.f32 %v2484, %v3126
        %v3351 = vadd.f32 %v2485, %v3127
        %v3352 = vadd.f32 %v2486, %v3128
        %v3353 = vadd.f32 %v2487, %v3129
        %v3354 = vadd.f32 %v2488, %v3130
        %v3355 = vadd.f32 %v2489, %v3131
        %v3356 = vadd.f32 %v2490, %v3132
        %v3357 = vadd.f32 %v2491, %v3133
        %v3358 = vadd.f32 %v2492, %v3134
        %v3359 = vadd.f32 %v2493, %v3135
        %v3360 = vadd.f32 %v2494, %v3136
        %v3361 = vadd.f32 %v2495, %v3137
        %v3362 = vadd.f32 %v2496, %v3138
        %v3363 = vadd.f32 %v2497, %v3139
        %v3364 = vadd.f32 %v2498, %v3140
        %v3365 = vadd.f32 %v2499, %v3141
        %v3366 = vadd.f32 %v2500, %v3142
        %v3367 = vadd.f32 %v2501, %v3143
        %v3368 = vadd.f32 %v2502, %v3144
        %v3369 = vadd.f32 %v2503, %v3145
        %v3370 = vadd.f32 %v2504, %v3146
        %v3371 = vadd.f32 %v2505, %v3147
        %v3372 = vadd.f32 %v2506, %v3148
        %v3373 = vadd.f32 %v2507, %v3149
        %v3374 = vadd.f32 %v2508, %v3150
        %v3375 = vadd.f32 %v2509, %v3151
        %v3376 = vadd.f32 %v2510, %v3152
        %v3377 = vadd.f32 %v2511, %v3153
        %v3378 = vadd.f32 %v2512, %v3154
        %v3379 = vadd.f32 %v2513, %v3155
        %v3380 = vadd.f32 %v2514, %v3156
        %v3381 = vadd.f32 %v2515, %v3157
        %v3382 = vadd.f32 %v2516, %v3158
        %v3383 = vadd.f32 %v2517, %v3159
        %v3384 = vadd.f32 %v2518, %v3160
        %v3385 = vadd.f32 %v2519, %v3161
        %v3386 = vadd.f32 %v2520, %v3162
        %v3387 = vadd.f32 %v2521, %v3163
        %v3388 = vadd.f32 %v2522, %v3164
        %v3389 = vadd.f32 %v2523, %v3165
        %v3390 = vadd.f32 %v2524, %v3166
        %v3391 = vadd.f32 %v2525, %v3167
        %v3392 = vadd.f32 %v2526, %v3168
        %v3393 = vadd.f32 %v2527, %v3169
        %v3394 = vadd.f32 %v2528, %v3170
        %v3395 = vadd.f32 %v2529, %v3171
        %v3396 = vadd.f32 %v2530, %v3172
        %v3397 = vadd.f32 %v2531, %v3173
        %v3398 = vadd.f32 %v2532, %v3174
        %v3399 = vadd.f32 %v2533, %v3175
        %v3400 = vadd.f32 %v2534, %v3176
        %v3401 = vadd.f32 %v2535, %v3177
        %v3402 = vadd.f32 %v2536, %v3178
        %v3403 = vadd.f32 %v2537, %v3179
        %v3404 = vadd.f32 %v2538, %v3180
        %v3405 = vadd.f32 %v2539, %v3181
        %v3406 = vadd.f32 %v2540, %v3182
        %v3407 = vadd.f32 %v2541, %v3183
        %v3408 = vadd.f32 %v2542, %v3184
        %v3409 = vadd.f32 %v2543, %v3185
        %v3410 = vadd.f32 %v2544, %v3186
        %v3411 = vadd.f32 %v2545, %v3187
        %v3412 = vadd.f32 %v2546, %v3188
        %v3413 = vadd.f32 %v2547, %v3189
        %v3414 = vadd.f32 %v2548, %v3190
        %v3415 = vadd.f32 %v2549, %v3191
        %v3416 = vadd.f32 %v2550, %v3192
        %v3417 = vadd.f32 %v2551, %v3193
        %v3418 = vadd.f32 %v2552, %v3194
        %s3419 = sld [smem:[#allocation4 + $0x100]]
        %v3420 = vstv %s3419
        %v3421 = vmul.f32 %v3420, %v786
        %v3422 = vmul.f32 %v3420, %v787
        %v3423 = vmul.f32 %v3420, %v788
        %v3424 = vmul.f32 %v3420, %v789
        %v3425 = vmul.f32 %v3420, %v790
        %v3426 = vmul.f32 %v3420, %v791
        %v3427 = vmul.f32 %v3420, %v792
        %v3428 = vmul.f32 %v3420, %v793
        %v3429 = vmul.f32 %v3420, %v794
        %v3430 = vmul.f32 %v3420, %v795
        %v3431 = vmul.f32 %v3420, %v796
        %v3432 = vmul.f32 %v3420, %v797
        %v3433 = vmul.f32 %v3420, %v798
        %v3434 = vmul.f32 %v3420, %v799
        %v3435 = vmul.f32 %v3420, %v800
        %v3436 = vmul.f32 %v3420, %v801
        %v3437 = vmul.f32 %v3420, %v802
        %v3438 = vmul.f32 %v3420, %v803
        %v3439 = vmul.f32 %v3420, %v804
        %v3440 = vmul.f32 %v3420, %v805
        %v3441 = vmul.f32 %v3420, %v806
        %v3442 = vmul.f32 %v3420, %v807
        %v3443 = vmul.f32 %v3420, %v808
        %v3444 = vmul.f32 %v3420, %v809
        %v3445 = vmul.f32 %v3420, %v810
        %v3446 = vmul.f32 %v3420, %v811
        %v3447 = vmul.f32 %v3420, %v812
        %v3448 = vmul.f32 %v3420, %v813
        %v3449 = vmul.f32 %v3420, %v814
        %v3450 = vmul.f32 %v3420, %v815
        %v3451 = vmul.f32 %v3420, %v816
        %v3452 = vmul.f32 %v3420, %v817
        %v3453 = vmul.f32 %v3420, %v818
        %v3454 = vmul.f32 %v3420, %v819
        %v3455 = vmul.f32 %v3420, %v820
        %v3456 = vmul.f32 %v3420, %v821
        %v3457 = vmul.f32 %v3420, %v822
        %v3458 = vmul.f32 %v3420, %v823
        %v3459 = vmul.f32 %v3420, %v824
        %v3460 = vmul.f32 %v3420, %v825
        %v3461 = vmul.f32 %v3420, %v826
        %v3462 = vmul.f32 %v3420, %v827
        %v3463 = vmul.f32 %v3420, %v828
        %v3464 = vmul.f32 %v3420, %v829
        %v3465 = vmul.f32 %v3420, %v830
        %v3466 = vmul.f32 %v3420, %v831
        %v3467 = vmul.f32 %v3420, %v832
        %v3468 = vmul.f32 %v3420, %v833
        %v3469 = vmul.f32 %v3420, %v834
        %v3470 = vmul.f32 %v3420, %v835
        %v3471 = vmul.f32 %v3420, %v836
        %v3472 = vmul.f32 %v3420, %v837
        %v3473 = vmul.f32 %v3420, %v838
        %v3474 = vmul.f32 %v3420, %v839
        %v3475 = vmul.f32 %v3420, %v840
        %v3476 = vmul.f32 %v3420, %v841
        %v3477 = vmul.f32 %v3420, %v842
        %v3478 = vmul.f32 %v3420, %v843
        %v3479 = vmul.f32 %v3420, %v844
        %v3480 = vmul.f32 %v3420, %v845
        %v3481 = vmul.f32 %v3420, %v846
        %v3482 = vmul.f32 %v3420, %v847
        %v3483 = vmul.f32 %v3420, %v848
        %v3484 = vmul.f32 %v3420, %v849
        %v3485 = vmul.f32 %v3420, %v850
        %v3486 = vmul.f32 %v3420, %v851
        %v3487 = vmul.f32 %v3420, %v852
        %v3488 = vmul.f32 %v3420, %v853
        %v3489 = vmul.f32 %v3420, %v854
        %v3490 = vmul.f32 %v3420, %v855
        %v3491 = vmul.f32 %v3420, %v856
        %v3492 = vmul.f32 %v3420, %v857
        %v3493 = vmul.f32 %v3420, %v858
        %v3494 = vmul.f32 %v3420, %v859
        %v3495 = vmul.f32 %v3420, %v860
        %v3496 = vmul.f32 %v3420, %v861
        %v3497 = vmul.f32 %v3420, %v862
        %v3498 = vmul.f32 %v3420, %v863
        %v3499 = vmul.f32 %v3420, %v864
        %v3500 = vmul.f32 %v3420, %v865
        %v3501 = vmul.f32 %v3420, %v866
        %v3502 = vmul.f32 %v3420, %v867
        %v3503 = vmul.f32 %v3420, %v868
        %v3504 = vmul.f32 %v3420, %v869
        %v3505 = vmul.f32 %v3420, %v870
        %v3506 = vmul.f32 %v3420, %v871
        %v3507 = vmul.f32 %v3420, %v872
        %v3508 = vmul.f32 %v3420, %v873
        %v3509 = vmul.f32 %v3420, %v874
        %v3510 = vmul.f32 %v3420, %v875
        %v3511 = vmul.f32 %v3420, %v876
        %v3512 = vmul.f32 %v3420, %v877
        %v3513 = vmul.f32 %v3420, %v878
        %v3514 = vmul.f32 %v3420, %v879
        %v3515 = vmul.f32 %v3420, %v880
        %v3516 = vmul.f32 %v3420, %v881
        %v3517 = vmul.f32 %v3420, %v882
        %v3518 = vmul.f32 %v3420, %v883
        %v3519 = vmul.f32 %v3420, %v884
        %v3520 = vmul.f32 %v3420, %v885
        %v3521 = vmul.f32 %v3420, %v886
        %v3522 = vmul.f32 %v3420, %v887
        %v3523 = vmul.f32 %v3420, %v888
        %v3524 = vmul.f32 %v3420, %v889
        %v3525 = vmul.f32 %v3420, %v890
        %v3526 = vmul.f32 %v3420, %v891
        %v3527 = vmul.f32 %v3420, %v892
        %v3528 = vmul.f32 %v3420, %v893
        %v3529 = vmul.f32 %v3420, %v894
        %v3530 = vmul.f32 %v3420, %v895
        %v3531 = vmul.f32 %v3420, %v896
        %v3532 = vmul.f32 %v3420, %v897
        %3645 = vrot.lane.b32.xlu0 %v3421, 72
        %v3646 = vpop.permute.xlu0 %3645
        %3647 = vrot.lane.b32.xlu0 %v3422, 72
        %v3648 = vpop.permute.xlu0 %3647
        %3649 = vrot.lane.b32.xlu0 %v3423, 72
        %v3650 = vpop.permute.xlu0 %3649
        %3651 = vrot.lane.b32.xlu0 %v3424, 72
        %v3652 = vpop.permute.xlu0 %3651
        %3653 = vrot.lane.b32.xlu0 %v3425, 72
        %v3654 = vpop.permute.xlu0 %3653
        %3655 = vrot.lane.b32.xlu0 %v3426, 72
        %v3656 = vpop.permute.xlu0 %3655
        %3657 = vrot.lane.b32.xlu0 %v3427, 72
        %v3658 = vpop.permute.xlu0 %3657
        %3659 = vrot.lane.b32.xlu0 %v3428, 72
        %v3660 = vpop.permute.xlu0 %3659
        %3661 = vrot.lane.b32.xlu0 %v3429, 72
        %v3662 = vpop.permute.xlu0 %3661
        %3663 = vrot.lane.b32.xlu0 %v3430, 72
        %v3664 = vpop.permute.xlu0 %3663
        %3665 = vrot.lane.b32.xlu0 %v3431, 72
        %v3666 = vpop.permute.xlu0 %3665
        %3667 = vrot.lane.b32.xlu0 %v3432, 72
        %v3668 = vpop.permute.xlu0 %3667
        %3669 = vrot.lane.b32.xlu0 %v3433, 72
        %v3670 = vpop.permute.xlu0 %3669
        %3671 = vrot.lane.b32.xlu0 %v3434, 72
        %v3672 = vpop.permute.xlu0 %3671
        %3673 = vrot.lane.b32.xlu0 %v3435, 72
        %v3674 = vpop.permute.xlu0 %3673
        %3675 = vrot.lane.b32.xlu0 %v3436, 72
        %v3676 = vpop.permute.xlu0 %3675
        %3677 = vrot.lane.b32.xlu0 %v3437, 72
        %v3678 = vpop.permute.xlu0 %3677
        %3679 = vrot.lane.b32.xlu0 %v3438, 72
        %v3680 = vpop.permute.xlu0 %3679
        %3681 = vrot.lane.b32.xlu0 %v3439, 72
        %v3682 = vpop.permute.xlu0 %3681
        %3683 = vrot.lane.b32.xlu0 %v3440, 72
        %v3684 = vpop.permute.xlu0 %3683
        %3685 = vrot.lane.b32.xlu0 %v3441, 72
        %v3686 = vpop.permute.xlu0 %3685
        %3687 = vrot.lane.b32.xlu0 %v3442, 72
        %v3688 = vpop.permute.xlu0 %3687
        %3689 = vrot.lane.b32.xlu0 %v3443, 72
        %v3690 = vpop.permute.xlu0 %3689
        %3691 = vrot.lane.b32.xlu0 %v3444, 72
        %v3692 = vpop.permute.xlu0 %3691
        %3693 = vrot.lane.b32.xlu0 %v3445, 72
        %v3694 = vpop.permute.xlu0 %3693
        %3695 = vrot.lane.b32.xlu0 %v3446, 72
        %v3696 = vpop.permute.xlu0 %3695
        %3697 = vrot.lane.b32.xlu0 %v3447, 72
        %v3698 = vpop.permute.xlu0 %3697
        %3699 = vrot.lane.b32.xlu0 %v3448, 72
        %v3700 = vpop.permute.xlu0 %3699
        %3701 = vrot.lane.b32.xlu0 %v3449, 72
        %v3702 = vpop.permute.xlu0 %3701
        %3703 = vrot.lane.b32.xlu0 %v3450, 72
        %v3704 = vpop.permute.xlu0 %3703
        %3705 = vrot.lane.b32.xlu0 %v3451, 72
        %v3706 = vpop.permute.xlu0 %3705
        %3707 = vrot.lane.b32.xlu0 %v3452, 72
        %v3708 = vpop.permute.xlu0 %3707
        %3709 = vrot.lane.b32.xlu0 %v3453, 72
        %v3710 = vpop.permute.xlu0 %3709
        %3711 = vrot.lane.b32.xlu0 %v3454, 72
        %v3712 = vpop.permute.xlu0 %3711
        %3713 = vrot.lane.b32.xlu0 %v3455, 72
        %v3714 = vpop.permute.xlu0 %3713
        %3715 = vrot.lane.b32.xlu0 %v3456, 72
        %v3716 = vpop.permute.xlu0 %3715
        %3717 = vrot.lane.b32.xlu0 %v3457, 72
        %v3718 = vpop.permute.xlu0 %3717
        %3719 = vrot.lane.b32.xlu0 %v3458, 72
        %v3720 = vpop.permute.xlu0 %3719
        %3721 = vrot.lane.b32.xlu0 %v3459, 72
        %v3722 = vpop.permute.xlu0 %3721
        %3723 = vrot.lane.b32.xlu0 %v3460, 72
        %v3724 = vpop.permute.xlu0 %3723
        %3725 = vrot.lane.b32.xlu0 %v3461, 72
        %v3726 = vpop.permute.xlu0 %3725
        %3727 = vrot.lane.b32.xlu0 %v3462, 72
        %v3728 = vpop.permute.xlu0 %3727
        %3729 = vrot.lane.b32.xlu0 %v3463, 72
        %v3730 = vpop.permute.xlu0 %3729
        %3731 = vrot.lane.b32.xlu0 %v3464, 72
        %v3732 = vpop.permute.xlu0 %3731
        %3733 = vrot.lane.b32.xlu0 %v3465, 72
        %v3734 = vpop.permute.xlu0 %3733
        %3735 = vrot.lane.b32.xlu0 %v3466, 72
        %v3736 = vpop.permute.xlu0 %3735
        %3737 = vrot.lane.b32.xlu0 %v3467, 72
        %v3738 = vpop.permute.xlu0 %3737
        %3739 = vrot.lane.b32.xlu0 %v3468, 72
        %v3740 = vpop.permute.xlu0 %3739
        %3741 = vrot.lane.b32.xlu0 %v3469, 72
        %v3742 = vpop.permute.xlu0 %3741
        %3743 = vrot.lane.b32.xlu0 %v3470, 72
        %v3744 = vpop.permute.xlu0 %3743
        %3745 = vrot.lane.b32.xlu0 %v3471, 72
        %v3746 = vpop.permute.xlu0 %3745
        %3747 = vrot.lane.b32.xlu0 %v3472, 72
        %v3748 = vpop.permute.xlu0 %3747
        %3749 = vrot.lane.b32.xlu0 %v3473, 72
        %v3750 = vpop.permute.xlu0 %3749
        %3751 = vrot.lane.b32.xlu0 %v3474, 72
        %v3752 = vpop.permute.xlu0 %3751
        %3753 = vrot.lane.b32.xlu0 %v3475, 72
        %v3754 = vpop.permute.xlu0 %3753
        %3755 = vrot.lane.b32.xlu0 %v3476, 72
        %v3756 = vpop.permute.xlu0 %3755
        %3757 = vrot.lane.b32.xlu0 %v3477, 72
        %v3758 = vpop.permute.xlu0 %3757
        %3759 = vrot.lane.b32.xlu0 %v3478, 72
        %v3760 = vpop.permute.xlu0 %3759
        %3761 = vrot.lane.b32.xlu0 %v3479, 72
        %v3762 = vpop.permute.xlu0 %3761
        %3763 = vrot.lane.b32.xlu0 %v3480, 72
        %v3764 = vpop.permute.xlu0 %3763
        %3765 = vrot.lane.b32.xlu0 %v3481, 72
        %v3766 = vpop.permute.xlu0 %3765
        %3767 = vrot.lane.b32.xlu0 %v3482, 72
        %v3768 = vpop.permute.xlu0 %3767
        %3769 = vrot.lane.b32.xlu0 %v3483, 72
        %v3770 = vpop.permute.xlu0 %3769
        %3771 = vrot.lane.b32.xlu0 %v3484, 72
        %v3772 = vpop.permute.xlu0 %3771
        %3773 = vrot.lane.b32.xlu0 %v3485, 72
        %v3774 = vpop.permute.xlu0 %3773
        %3775 = vrot.lane.b32.xlu0 %v3486, 72
        %v3776 = vpop.permute.xlu0 %3775
        %3777 = vrot.lane.b32.xlu0 %v3487, 72
        %v3778 = vpop.permute.xlu0 %3777
        %3779 = vrot.lane.b32.xlu0 %v3488, 72
        %v3780 = vpop.permute.xlu0 %3779
        %3781 = vrot.lane.b32.xlu0 %v3489, 72
        %v3782 = vpop.permute.xlu0 %3781
        %3783 = vrot.lane.b32.xlu0 %v3490, 72
        %v3784 = vpop.permute.xlu0 %3783
        %3785 = vrot.lane.b32.xlu0 %v3491, 72
        %v3786 = vpop.permute.xlu0 %3785
        %3787 = vrot.lane.b32.xlu0 %v3492, 72
        %v3788 = vpop.permute.xlu0 %3787
        %3789 = vrot.lane.b32.xlu0 %v3493, 72
        %v3790 = vpop.permute.xlu0 %3789
        %3791 = vrot.lane.b32.xlu0 %v3494, 72
        %v3792 = vpop.permute.xlu0 %3791
        %3793 = vrot.lane.b32.xlu0 %v3495, 72
        %v3794 = vpop.permute.xlu0 %3793
        %3795 = vrot.lane.b32.xlu0 %v3496, 72
        %v3796 = vpop.permute.xlu0 %3795
        %3797 = vrot.lane.b32.xlu0 %v3497, 72
        %v3798 = vpop.permute.xlu0 %3797
        %3799 = vrot.lane.b32.xlu0 %v3498, 72
        %v3800 = vpop.permute.xlu0 %3799
        %3801 = vrot.lane.b32.xlu0 %v3499, 72
        %v3802 = vpop.permute.xlu0 %3801
        %3803 = vrot.lane.b32.xlu0 %v3500, 72
        %v3804 = vpop.permute.xlu0 %3803
        %3805 = vrot.lane.b32.xlu0 %v3501, 72
        %v3806 = vpop.permute.xlu0 %3805
        %3807 = vrot.lane.b32.xlu0 %v3502, 72
        %v3808 = vpop.permute.xlu0 %3807
        %3809 = vrot.lane.b32.xlu0 %v3503, 72
        %v3810 = vpop.permute.xlu0 %3809
        %3811 = vrot.lane.b32.xlu0 %v3504, 72
        %v3812 = vpop.permute.xlu0 %3811
        %3813 = vrot.lane.b32.xlu0 %v3505, 72
        %v3814 = vpop.permute.xlu0 %3813
        %3815 = vrot.lane.b32.xlu0 %v3506, 72
        %v3816 = vpop.permute.xlu0 %3815
        %3817 = vrot.lane.b32.xlu0 %v3507, 72
        %v3818 = vpop.permute.xlu0 %3817
        %3819 = vrot.lane.b32.xlu0 %v3508, 72
        %v3820 = vpop.permute.xlu0 %3819
        %3821 = vrot.lane.b32.xlu0 %v3509, 72
        %v3822 = vpop.permute.xlu0 %3821
        %3823 = vrot.lane.b32.xlu0 %v3510, 72
        %v3824 = vpop.permute.xlu0 %3823
        %3825 = vrot.lane.b32.xlu0 %v3511, 72
        %v3826 = vpop.permute.xlu0 %3825
        %3827 = vrot.lane.b32.xlu0 %v3512, 72
        %v3828 = vpop.permute.xlu0 %3827
        %3829 = vrot.lane.b32.xlu0 %v3513, 72
        %v3830 = vpop.permute.xlu0 %3829
        %3831 = vrot.lane.b32.xlu0 %v3514, 72
        %v3832 = vpop.permute.xlu0 %3831
        %3833 = vrot.lane.b32.xlu0 %v3515, 72
        %v3834 = vpop.permute.xlu0 %3833
        %3835 = vrot.lane.b32.xlu0 %v3516, 72
        %v3836 = vpop.permute.xlu0 %3835
        %3837 = vrot.lane.b32.xlu0 %v3517, 72
        %v3838 = vpop.permute.xlu0 %3837
        %3839 = vrot.lane.b32.xlu0 %v3518, 72
        %v3840 = vpop.permute.xlu0 %3839
        %3841 = vrot.lane.b32.xlu0 %v3519, 72
        %v3842 = vpop.permute.xlu0 %3841
        %3843 = vrot.lane.b32.xlu0 %v3520, 72
        %v3844 = vpop.permute.xlu0 %3843
        %3845 = vrot.lane.b32.xlu0 %v3521, 72
        %v3846 = vpop.permute.xlu0 %3845
        %3847 = vrot.lane.b32.xlu0 %v3522, 72
        %v3848 = vpop.permute.xlu0 %3847
        %3849 = vrot.lane.b32.xlu0 %v3523, 72
        %v3850 = vpop.permute.xlu0 %3849
        %3851 = vrot.lane.b32.xlu0 %v3524, 72
        %v3852 = vpop.permute.xlu0 %3851
        %3853 = vrot.lane.b32.xlu0 %v3525, 72
        %v3854 = vpop.permute.xlu0 %3853
        %3855 = vrot.lane.b32.xlu0 %v3526, 72
        %v3856 = vpop.permute.xlu0 %3855
        %3857 = vrot.lane.b32.xlu0 %v3527, 72
        %v3858 = vpop.permute.xlu0 %3857
        %3859 = vrot.lane.b32.xlu0 %v3528, 72
        %v3860 = vpop.permute.xlu0 %3859
        %3861 = vrot.lane.b32.xlu0 %v3529, 72
        %v3862 = vpop.permute.xlu0 %3861
        %3863 = vrot.lane.b32.xlu0 %v3530, 72
        %v3864 = vpop.permute.xlu0 %3863
        %3865 = vrot.lane.b32.xlu0 %v3531, 72
        %v3866 = vpop.permute.xlu0 %3865
        %3867 = vrot.lane.b32.xlu0 %v3532, 72
        %v3868 = vpop.permute.xlu0 %3867
        %v3869 = vsel %vm2118, %v3646, %v3648
        %v3870 = vsel %vm2118, %v3648, %v3650
        %v3871 = vsel %vm2118, %v3650, %v3652
        %v3872 = vsel %vm2118, %v3652, %v3654
        %v3873 = vsel %vm2118, %v3654, %v3656
        %v3874 = vsel %vm2118, %v3656, %v3658
        %v3875 = vsel %vm2118, %v3660, %v3662
        %v3876 = vsel %vm2118, %v3662, %v3664
        %v3877 = vsel %vm2118, %v3664, %v3666
        %v3878 = vsel %vm2118, %v3666, %v3668
        %v3879 = vsel %vm2118, %v3668, %v3670
        %v3880 = vsel %vm2118, %v3670, %v3672
        %v3881 = vsel %vm2118, %v3674, %v3676
        %v3882 = vsel %vm2118, %v3676, %v3678
        %v3883 = vsel %vm2118, %v3678, %v3680
        %v3884 = vsel %vm2118, %v3680, %v3682
        %v3885 = vsel %vm2118, %v3682, %v3684
        %v3886 = vsel %vm2118, %v3684, %v3686
        %v3887 = vsel %vm2118, %v3688, %v3690
        %v3888 = vsel %vm2118, %v3690, %v3692
        %v3889 = vsel %vm2118, %v3692, %v3694
        %v3890 = vsel %vm2118, %v3694, %v3696
        %v3891 = vsel %vm2118, %v3696, %v3698
        %v3892 = vsel %vm2118, %v3698, %v3700
        %v3893 = vsel %vm2118, %v3702, %v3704
        %v3894 = vsel %vm2118, %v3704, %v3706
        %v3895 = vsel %vm2118, %v3706, %v3708
        %v3896 = vsel %vm2118, %v3708, %v3710
        %v3897 = vsel %vm2118, %v3710, %v3712
        %v3898 = vsel %vm2118, %v3712, %v3714
        %v3899 = vsel %vm2118, %v3716, %v3718
        %v3900 = vsel %vm2118, %v3718, %v3720
        %v3901 = vsel %vm2118, %v3720, %v3722
        %v3902 = vsel %vm2118, %v3722, %v3724
        %v3903 = vsel %vm2118, %v3724, %v3726
        %v3904 = vsel %vm2118, %v3726, %v3728
        %v3905 = vsel %vm2118, %v3730, %v3732
        %v3906 = vsel %vm2118, %v3732, %v3734
        %v3907 = vsel %vm2118, %v3734, %v3736
        %v3908 = vsel %vm2118, %v3736, %v3738
        %v3909 = vsel %vm2118, %v3738, %v3740
        %v3910 = vsel %vm2118, %v3740, %v3742
        %v3911 = vsel %vm2118, %v3744, %v3746
        %v3912 = vsel %vm2118, %v3746, %v3748
        %v3913 = vsel %vm2118, %v3748, %v3750
        %v3914 = vsel %vm2118, %v3750, %v3752
        %v3915 = vsel %vm2118, %v3752, %v3754
        %v3916 = vsel %vm2118, %v3754, %v3756
        %v3917 = vsel %vm2118, %v3758, %v3760
        %v3918 = vsel %vm2118, %v3760, %v3762
        %v3919 = vsel %vm2118, %v3762, %v3764
        %v3920 = vsel %vm2118, %v3764, %v3766
        %v3921 = vsel %vm2118, %v3766, %v3768
        %v3922 = vsel %vm2118, %v3768, %v3770
        %v3923 = vsel %vm2118, %v3772, %v3774
        %v3924 = vsel %vm2118, %v3774, %v3776
        %v3925 = vsel %vm2118, %v3776, %v3778
        %v3926 = vsel %vm2118, %v3778, %v3780
        %v3927 = vsel %vm2118, %v3780, %v3782
        %v3928 = vsel %vm2118, %v3782, %v3784
        %v3929 = vsel %vm2118, %v3786, %v3788
        %v3930 = vsel %vm2118, %v3788, %v3790
        %v3931 = vsel %vm2118, %v3790, %v3792
        %v3932 = vsel %vm2118, %v3792, %v3794
        %v3933 = vsel %vm2118, %v3794, %v3796
        %v3934 = vsel %vm2118, %v3796, %v3798
        %v3935 = vsel %vm2118, %v3800, %v3802
        %v3936 = vsel %vm2118, %v3802, %v3804
        %v3937 = vsel %vm2118, %v3804, %v3806
        %v3938 = vsel %vm2118, %v3806, %v3808
        %v3939 = vsel %vm2118, %v3808, %v3810
        %v3940 = vsel %vm2118, %v3810, %v3812
        %v3941 = vsel %vm2118, %v3814, %v3816
        %v3942 = vsel %vm2118, %v3816, %v3818
        %v3943 = vsel %vm2118, %v3818, %v3820
        %v3944 = vsel %vm2118, %v3820, %v3822
        %v3945 = vsel %vm2118, %v3822, %v3824
        %v3946 = vsel %vm2118, %v3824, %v3826
        %v3947 = vsel %vm2118, %v3828, %v3830
        %v3948 = vsel %vm2118, %v3830, %v3832
        %v3949 = vsel %vm2118, %v3832, %v3834
        %v3950 = vsel %vm2118, %v3834, %v3836
        %v3951 = vsel %vm2118, %v3836, %v3838
        %v3952 = vsel %vm2118, %v3838, %v3840
        %v3953 = vsel %vm2118, %v3842, %v3844
        %v3954 = vsel %vm2118, %v3844, %v3846
        %v3955 = vsel %vm2118, %v3846, %v3848
        %v3956 = vsel %vm2118, %v3848, %v3850
        %v3957 = vsel %vm2118, %v3850, %v3852
        %v3958 = vsel %vm2118, %v3852, %v3854
        %v3959 = vsel %vm2118, %v3856, %v3858
        %v3960 = vsel %vm2118, %v3858, %v3860
        %v3961 = vsel %vm2118, %v3860, %v3862
        %v3962 = vsel %vm2118, %v3862, %v3864
        %v3963 = vsel %vm2118, %v3864, %v3866
        %v3964 = vsel %vm2118, %v3866, %v3868
        %v4077 = vadd.f32 %v3307, %v3646
        %v4078 = vadd.f32 %v3308, %v3869
        %v4079 = vadd.f32 %v3309, %v3870
        %v4080 = vadd.f32 %v3310, %v3871
        %v4081 = vadd.f32 %v3311, %v3872
        %v4082 = vadd.f32 %v3312, %v3873
        %v4083 = vadd.f32 %v3313, %v3874
        %v4084 = vadd.f32 %v3314, %v3660
        %v4085 = vadd.f32 %v3315, %v3875
        %v4086 = vadd.f32 %v3316, %v3876
        %v4087 = vadd.f32 %v3317, %v3877
        %v4088 = vadd.f32 %v3318, %v3878
        %v4089 = vadd.f32 %v3319, %v3879
        %v4090 = vadd.f32 %v3320, %v3880
        %v4091 = vadd.f32 %v3321, %v3674
        %v4092 = vadd.f32 %v3322, %v3881
        %v4093 = vadd.f32 %v3323, %v3882
        %v4094 = vadd.f32 %v3324, %v3883
        %v4095 = vadd.f32 %v3325, %v3884
        %v4096 = vadd.f32 %v3326, %v3885
        %v4097 = vadd.f32 %v3327, %v3886
        %v4098 = vadd.f32 %v3328, %v3688
        %v4099 = vadd.f32 %v3329, %v3887
        %v4100 = vadd.f32 %v3330, %v3888
        %v4101 = vadd.f32 %v3331, %v3889
        %v4102 = vadd.f32 %v3332, %v3890
        %v4103 = vadd.f32 %v3333, %v3891
        %v4104 = vadd.f32 %v3334, %v3892
        %v4105 = vadd.f32 %v3335, %v3702
        %v4106 = vadd.f32 %v3336, %v3893
        %v4107 = vadd.f32 %v3337, %v3894
        %v4108 = vadd.f32 %v3338, %v3895
        %v4109 = vadd.f32 %v3339, %v3896
        %v4110 = vadd.f32 %v3340, %v3897
        %v4111 = vadd.f32 %v3341, %v3898
        %v4112 = vadd.f32 %v3342, %v3716
        %v4113 = vadd.f32 %v3343, %v3899
        %v4114 = vadd.f32 %v3344, %v3900
        %v4115 = vadd.f32 %v3345, %v3901
        %v4116 = vadd.f32 %v3346, %v3902
        %v4117 = vadd.f32 %v3347, %v3903
        %v4118 = vadd.f32 %v3348, %v3904
        %v4119 = vadd.f32 %v3349, %v3730
        %v4120 = vadd.f32 %v3350, %v3905
        %v4121 = vadd.f32 %v3351, %v3906
        %v4122 = vadd.f32 %v3352, %v3907
        %v4123 = vadd.f32 %v3353, %v3908
        %v4124 = vadd.f32 %v3354, %v3909
        %v4125 = vadd.f32 %v3355, %v3910
        %v4126 = vadd.f32 %v3356, %v3744
        %v4127 = vadd.f32 %v3357, %v3911
        %v4128 = vadd.f32 %v3358, %v3912
        %v4129 = vadd.f32 %v3359, %v3913
        %v4130 = vadd.f32 %v3360, %v3914
        %v4131 = vadd.f32 %v3361, %v3915
        %v4132 = vadd.f32 %v3362, %v3916
        %v4133 = vadd.f32 %v3363, %v3758
        %v4134 = vadd.f32 %v3364, %v3917
        %v4135 = vadd.f32 %v3365, %v3918
        %v4136 = vadd.f32 %v3366, %v3919
        %v4137 = vadd.f32 %v3367, %v3920
        %v4138 = vadd.f32 %v3368, %v3921
        %v4139 = vadd.f32 %v3369, %v3922
        %v4140 = vadd.f32 %v3370, %v3772
        %v4141 = vadd.f32 %v3371, %v3923
        %v4142 = vadd.f32 %v3372, %v3924
        %v4143 = vadd.f32 %v3373, %v3925
        %v4144 = vadd.f32 %v3374, %v3926
        %v4145 = vadd.f32 %v3375, %v3927
        %v4146 = vadd.f32 %v3376, %v3928
        %v4147 = vadd.f32 %v3377, %v3786
        %v4148 = vadd.f32 %v3378, %v3929
        %v4149 = vadd.f32 %v3379, %v3930
        %v4150 = vadd.f32 %v3380, %v3931
        %v4151 = vadd.f32 %v3381, %v3932
        %v4152 = vadd.f32 %v3382, %v3933
        %v4153 = vadd.f32 %v3383, %v3934
        %v4154 = vadd.f32 %v3384, %v3800
        %v4155 = vadd.f32 %v3385, %v3935
        %v4156 = vadd.f32 %v3386, %v3936
        %v4157 = vadd.f32 %v3387, %v3937
        %v4158 = vadd.f32 %v3388, %v3938
        %v4159 = vadd.f32 %v3389, %v3939
        %v4160 = vadd.f32 %v3390, %v3940
        %v4161 = vadd.f32 %v3391, %v3814
        %v4162 = vadd.f32 %v3392, %v3941
        %v4163 = vadd.f32 %v3393, %v3942
        %v4164 = vadd.f32 %v3394, %v3943
        %v4165 = vadd.f32 %v3395, %v3944
        %v4166 = vadd.f32 %v3396, %v3945
        %v4167 = vadd.f32 %v3397, %v3946
        %v4168 = vadd.f32 %v3398, %v3828
        %v4169 = vadd.f32 %v3399, %v3947
        %v4170 = vadd.f32 %v3400, %v3948
        %v4171 = vadd.f32 %v3401, %v3949
        %v4172 = vadd.f32 %v3402, %v3950
        %v4173 = vadd.f32 %v3403, %v3951
        %v4174 = vadd.f32 %v3404, %v3952
        %v4175 = vadd.f32 %v3405, %v3842
        %v4176 = vadd.f32 %v3406, %v3953
        %v4177 = vadd.f32 %v3407, %v3954
        %v4178 = vadd.f32 %v3408, %v3955
        %v4179 = vadd.f32 %v3409, %v3956
        %v4180 = vadd.f32 %v3410, %v3957
        %v4181 = vadd.f32 %v3411, %v3958
        %v4182 = vadd.f32 %v3412, %v3856
        %v4183 = vadd.f32 %v3413, %v3959
        %v4184 = vadd.f32 %v3414, %v3960
        %v4185 = vadd.f32 %v3415, %v3961
        %v4186 = vadd.f32 %v3416, %v3962
        %v4187 = vadd.f32 %v3417, %v3963
        %v4188 = vadd.f32 %v3418, %v3964
        %s4189 = sld [smem:[#allocation4 + $0x2]]
        %v4190 = vstv %s4189
        %v4191 = vmul.f32 %v4190, %v560
        %v4192 = vmul.f32 %v4190, %v561
        %v4193 = vmul.f32 %v4190, %v562
        %v4194 = vmul.f32 %v4190, %v563
        %v4195 = vmul.f32 %v4190, %v564
        %v4196 = vmul.f32 %v4190, %v565
        %v4197 = vmul.f32 %v4190, %v566
        %v4198 = vmul.f32 %v4190, %v567
        %v4199 = vmul.f32 %v4190, %v568
        %v4200 = vmul.f32 %v4190, %v569
        %v4201 = vmul.f32 %v4190, %v570
        %v4202 = vmul.f32 %v4190, %v571
        %v4203 = vmul.f32 %v4190, %v572
        %v4204 = vmul.f32 %v4190, %v573
        %v4205 = vmul.f32 %v4190, %v574
        %v4206 = vmul.f32 %v4190, %v575
        %v4207 = vmul.f32 %v4190, %v576
        %v4208 = vmul.f32 %v4190, %v577
        %v4209 = vmul.f32 %v4190, %v578
        %v4210 = vmul.f32 %v4190, %v579
        %v4211 = vmul.f32 %v4190, %v580
        %v4212 = vmul.f32 %v4190, %v581
        %v4213 = vmul.f32 %v4190, %v582
        %v4214 = vmul.f32 %v4190, %v583
        %v4215 = vmul.f32 %v4190, %v584
        %v4216 = vmul.f32 %v4190, %v585
        %v4217 = vmul.f32 %v4190, %v586
        %v4218 = vmul.f32 %v4190, %v587
        %v4219 = vmul.f32 %v4190, %v588
        %v4220 = vmul.f32 %v4190, %v589
        %v4221 = vmul.f32 %v4190, %v590
        %v4222 = vmul.f32 %v4190, %v591
        %v4223 = vmul.f32 %v4190, %v592
        %v4224 = vmul.f32 %v4190, %v593
        %v4225 = vmul.f32 %v4190, %v594
        %v4226 = vmul.f32 %v4190, %v595
        %v4227 = vmul.f32 %v4190, %v596
        %v4228 = vmul.f32 %v4190, %v597
        %v4229 = vmul.f32 %v4190, %v598
        %v4230 = vmul.f32 %v4190, %v599
        %v4231 = vmul.f32 %v4190, %v600
        %v4232 = vmul.f32 %v4190, %v601
        %v4233 = vmul.f32 %v4190, %v602
        %v4234 = vmul.f32 %v4190, %v603
        %v4235 = vmul.f32 %v4190, %v604
        %v4236 = vmul.f32 %v4190, %v605
        %v4237 = vmul.f32 %v4190, %v606
        %v4238 = vmul.f32 %v4190, %v607
        %v4239 = vmul.f32 %v4190, %v608
        %v4240 = vmul.f32 %v4190, %v609
        %v4241 = vmul.f32 %v4190, %v610
        %v4242 = vmul.f32 %v4190, %v611
        %v4243 = vmul.f32 %v4190, %v612
        %v4244 = vmul.f32 %v4190, %v613
        %v4245 = vmul.f32 %v4190, %v614
        %v4246 = vmul.f32 %v4190, %v615
        %v4247 = vmul.f32 %v4190, %v616
        %v4248 = vmul.f32 %v4190, %v617
        %v4249 = vmul.f32 %v4190, %v618
        %v4250 = vmul.f32 %v4190, %v619
        %v4251 = vmul.f32 %v4190, %v620
        %v4252 = vmul.f32 %v4190, %v621
        %v4253 = vmul.f32 %v4190, %v622
        %v4254 = vmul.f32 %v4190, %v623
        %v4255 = vmul.f32 %v4190, %v624
        %v4256 = vmul.f32 %v4190, %v625
        %v4257 = vmul.f32 %v4190, %v626
        %v4258 = vmul.f32 %v4190, %v627
        %v4259 = vmul.f32 %v4190, %v628
        %v4260 = vmul.f32 %v4190, %v629
        %v4261 = vmul.f32 %v4190, %v630
        %v4262 = vmul.f32 %v4190, %v631
        %v4263 = vmul.f32 %v4190, %v632
        %v4264 = vmul.f32 %v4190, %v633
        %v4265 = vmul.f32 %v4190, %v634
        %v4266 = vmul.f32 %v4190, %v635
        %v4267 = vmul.f32 %v4190, %v636
        %v4268 = vmul.f32 %v4190, %v637
        %v4269 = vmul.f32 %v4190, %v638
        %v4270 = vmul.f32 %v4190, %v639
        %v4271 = vmul.f32 %v4190, %v640
        %v4272 = vmul.f32 %v4190, %v641
        %v4273 = vmul.f32 %v4190, %v642
        %v4274 = vmul.f32 %v4190, %v643
        %v4275 = vmul.f32 %v4190, %v644
        %v4276 = vmul.f32 %v4190, %v645
        %v4277 = vmul.f32 %v4190, %v646
        %v4278 = vmul.f32 %v4190, %v647
        %v4279 = vmul.f32 %v4190, %v648
        %v4280 = vmul.f32 %v4190, %v649
        %v4281 = vmul.f32 %v4190, %v650
        %v4282 = vmul.f32 %v4190, %v651
        %v4283 = vmul.f32 %v4190, %v652
        %v4284 = vmul.f32 %v4190, %v653
        %v4285 = vmul.f32 %v4190, %v654
        %v4286 = vmul.f32 %v4190, %v655
        %v4287 = vmul.f32 %v4190, %v656
        %v4288 = vmul.f32 %v4190, %v657
        %v4289 = vmul.f32 %v4190, %v658
        %v4290 = vmul.f32 %v4190, %v659
        %v4291 = vmul.f32 %v4190, %v660
        %v4292 = vmul.f32 %v4190, %v661
        %v4293 = vmul.f32 %v4190, %v662
        %v4294 = vmul.f32 %v4190, %v663
        %v4295 = vmul.f32 %v4190, %v664
        %v4296 = vmul.f32 %v4190, %v665
        %v4297 = vmul.f32 %v4190, %v666
        %v4298 = vmul.f32 %v4190, %v667
        %v4299 = vmul.f32 %v4190, %v668
        %v4300 = vmul.f32 %v4190, %v669
        %v4301 = vmul.f32 %v4190, %v670
        %v4302 = vmul.f32 %v4190, %v671
        %s4303 = sld [smem:[#allocation4 + $0x82]]
        %v4304 = vstv %s4303
        %v4305 = vmul.f32 %v4304, %v786
        %v4306 = vmul.f32 %v4304, %v787
        %v4307 = vmul.f32 %v4304, %v788
        %v4308 = vmul.f32 %v4304, %v789
        %v4309 = vmul.f32 %v4304, %v790
        %v4310 = vmul.f32 %v4304, %v791
        %v4311 = vmul.f32 %v4304, %v792
        %v4312 = vmul.f32 %v4304, %v793
        %v4313 = vmul.f32 %v4304, %v794
        %v4314 = vmul.f32 %v4304, %v795
        %v4315 = vmul.f32 %v4304, %v796
        %v4316 = vmul.f32 %v4304, %v797
        %v4317 = vmul.f32 %v4304, %v798
        %v4318 = vmul.f32 %v4304, %v799
        %v4319 = vmul.f32 %v4304, %v800
        %v4320 = vmul.f32 %v4304, %v801
        %v4321 = vmul.f32 %v4304, %v802
        %v4322 = vmul.f32 %v4304, %v803
        %v4323 = vmul.f32 %v4304, %v804
        %v4324 = vmul.f32 %v4304, %v805
        %v4325 = vmul.f32 %v4304, %v806
        %v4326 = vmul.f32 %v4304, %v807
        %v4327 = vmul.f32 %v4304, %v808
        %v4328 = vmul.f32 %v4304, %v809
        %v4329 = vmul.f32 %v4304, %v810
        %v4330 = vmul.f32 %v4304, %v811
        %v4331 = vmul.f32 %v4304, %v812
        %v4332 = vmul.f32 %v4304, %v813
        %v4333 = vmul.f32 %v4304, %v814
        %v4334 = vmul.f32 %v4304, %v815
        %v4335 = vmul.f32 %v4304, %v816
        %v4336 = vmul.f32 %v4304, %v817
        %v4337 = vmul.f32 %v4304, %v818
        %v4338 = vmul.f32 %v4304, %v819
        %v4339 = vmul.f32 %v4304, %v820
        %v4340 = vmul.f32 %v4304, %v821
        %v4341 = vmul.f32 %v4304, %v822
        %v4342 = vmul.f32 %v4304, %v823
        %v4343 = vmul.f32 %v4304, %v824
        %v4344 = vmul.f32 %v4304, %v825
        %v4345 = vmul.f32 %v4304, %v826
        %v4346 = vmul.f32 %v4304, %v827
        %v4347 = vmul.f32 %v4304, %v828
        %v4348 = vmul.f32 %v4304, %v829
        %v4349 = vmul.f32 %v4304, %v830
        %v4350 = vmul.f32 %v4304, %v831
        %v4351 = vmul.f32 %v4304, %v832
        %v4352 = vmul.f32 %v4304, %v833
        %v4353 = vmul.f32 %v4304, %v834
        %v4354 = vmul.f32 %v4304, %v835
        %v4355 = vmul.f32 %v4304, %v836
        %v4356 = vmul.f32 %v4304, %v837
        %v4357 = vmul.f32 %v4304, %v838
        %v4358 = vmul.f32 %v4304, %v839
        %v4359 = vmul.f32 %v4304, %v840
        %v4360 = vmul.f32 %v4304, %v841
        %v4361 = vmul.f32 %v4304, %v842
        %v4362 = vmul.f32 %v4304, %v843
        %v4363 = vmul.f32 %v4304, %v844
        %v4364 = vmul.f32 %v4304, %v845
        %v4365 = vmul.f32 %v4304, %v846
        %v4366 = vmul.f32 %v4304, %v847
        %v4367 = vmul.f32 %v4304, %v848
        %v4368 = vmul.f32 %v4304, %v849
        %v4369 = vmul.f32 %v4304, %v850
        %v4370 = vmul.f32 %v4304, %v851
        %v4371 = vmul.f32 %v4304, %v852
        %v4372 = vmul.f32 %v4304, %v853
        %v4373 = vmul.f32 %v4304, %v854
        %v4374 = vmul.f32 %v4304, %v855
        %v4375 = vmul.f32 %v4304, %v856
        %v4376 = vmul.f32 %v4304, %v857
        %v4377 = vmul.f32 %v4304, %v858
        %v4378 = vmul.f32 %v4304, %v859
        %v4379 = vmul.f32 %v4304, %v860
        %v4380 = vmul.f32 %v4304, %v861
        %v4381 = vmul.f32 %v4304, %v862
        %v4382 = vmul.f32 %v4304, %v863
        %v4383 = vmul.f32 %v4304, %v864
        %v4384 = vmul.f32 %v4304, %v865
        %v4385 = vmul.f32 %v4304, %v866
        %v4386 = vmul.f32 %v4304, %v867
        %v4387 = vmul.f32 %v4304, %v868
        %v4388 = vmul.f32 %v4304, %v869
        %v4389 = vmul.f32 %v4304, %v870
        %v4390 = vmul.f32 %v4304, %v871
        %v4391 = vmul.f32 %v4304, %v872
        %v4392 = vmul.f32 %v4304, %v873
        %v4393 = vmul.f32 %v4304, %v874
        %v4394 = vmul.f32 %v4304, %v875
        %v4395 = vmul.f32 %v4304, %v876
        %v4396 = vmul.f32 %v4304, %v877
        %v4397 = vmul.f32 %v4304, %v878
        %v4398 = vmul.f32 %v4304, %v879
        %v4399 = vmul.f32 %v4304, %v880
        %v4400 = vmul.f32 %v4304, %v881
        %v4401 = vmul.f32 %v4304, %v882
        %v4402 = vmul.f32 %v4304, %v883
        %v4403 = vmul.f32 %v4304, %v884
        %v4404 = vmul.f32 %v4304, %v885
        %v4405 = vmul.f32 %v4304, %v886
        %v4406 = vmul.f32 %v4304, %v887
        %v4407 = vmul.f32 %v4304, %v888
        %v4408 = vmul.f32 %v4304, %v889
        %v4409 = vmul.f32 %v4304, %v890
        %v4410 = vmul.f32 %v4304, %v891
        %v4411 = vmul.f32 %v4304, %v892
        %v4412 = vmul.f32 %v4304, %v893
        %v4413 = vmul.f32 %v4304, %v894
        %v4414 = vmul.f32 %v4304, %v895
        %v4415 = vmul.f32 %v4304, %v896
        %v4416 = vmul.f32 %v4304, %v897
        %4529 = vrot.lane.b32.xlu0 %v4305, 100
        %v4530 = vpop.permute.xlu0 %4529
        %4531 = vrot.lane.b32.xlu0 %v4306, 100
        %v4532 = vpop.permute.xlu0 %4531
        %4533 = vrot.lane.b32.xlu0 %v4307, 100
        %v4534 = vpop.permute.xlu0 %4533
        %4535 = vrot.lane.b32.xlu0 %v4308, 100
        %v4536 = vpop.permute.xlu0 %4535
        %4537 = vrot.lane.b32.xlu0 %v4309, 100
        %v4538 = vpop.permute.xlu0 %4537
        %4539 = vrot.lane.b32.xlu0 %v4310, 100
        %v4540 = vpop.permute.xlu0 %4539
        %4541 = vrot.lane.b32.xlu0 %v4311, 100
        %v4542 = vpop.permute.xlu0 %4541
        %4543 = vrot.lane.b32.xlu0 %v4312, 100
        %v4544 = vpop.permute.xlu0 %4543
        %4545 = vrot.lane.b32.xlu0 %v4313, 100
        %v4546 = vpop.permute.xlu0 %4545
        %4547 = vrot.lane.b32.xlu0 %v4314, 100
        %v4548 = vpop.permute.xlu0 %4547
        %4549 = vrot.lane.b32.xlu0 %v4315, 100
        %v4550 = vpop.permute.xlu0 %4549
        %4551 = vrot.lane.b32.xlu0 %v4316, 100
        %v4552 = vpop.permute.xlu0 %4551
        %4553 = vrot.lane.b32.xlu0 %v4317, 100
        %v4554 = vpop.permute.xlu0 %4553
        %4555 = vrot.lane.b32.xlu0 %v4318, 100
        %v4556 = vpop.permute.xlu0 %4555
        %4557 = vrot.lane.b32.xlu0 %v4319, 100
        %v4558 = vpop.permute.xlu0 %4557
        %4559 = vrot.lane.b32.xlu0 %v4320, 100
        %v4560 = vpop.permute.xlu0 %4559
        %4561 = vrot.lane.b32.xlu0 %v4321, 100
        %v4562 = vpop.permute.xlu0 %4561
        %4563 = vrot.lane.b32.xlu0 %v4322, 100
        %v4564 = vpop.permute.xlu0 %4563
        %4565 = vrot.lane.b32.xlu0 %v4323, 100
        %v4566 = vpop.permute.xlu0 %4565
        %4567 = vrot.lane.b32.xlu0 %v4324, 100
        %v4568 = vpop.permute.xlu0 %4567
        %4569 = vrot.lane.b32.xlu0 %v4325, 100
        %v4570 = vpop.permute.xlu0 %4569
        %4571 = vrot.lane.b32.xlu0 %v4326, 100
        %v4572 = vpop.permute.xlu0 %4571
        %4573 = vrot.lane.b32.xlu0 %v4327, 100
        %v4574 = vpop.permute.xlu0 %4573
        %4575 = vrot.lane.b32.xlu0 %v4328, 100
        %v4576 = vpop.permute.xlu0 %4575
        %4577 = vrot.lane.b32.xlu0 %v4329, 100
        %v4578 = vpop.permute.xlu0 %4577
        %4579 = vrot.lane.b32.xlu0 %v4330, 100
        %v4580 = vpop.permute.xlu0 %4579
        %4581 = vrot.lane.b32.xlu0 %v4331, 100
        %v4582 = vpop.permute.xlu0 %4581
        %4583 = vrot.lane.b32.xlu0 %v4332, 100
        %v4584 = vpop.permute.xlu0 %4583
        %4585 = vrot.lane.b32.xlu0 %v4333, 100
        %v4586 = vpop.permute.xlu0 %4585
        %4587 = vrot.lane.b32.xlu0 %v4334, 100
        %v4588 = vpop.permute.xlu0 %4587
        %4589 = vrot.lane.b32.xlu0 %v4335, 100
        %v4590 = vpop.permute.xlu0 %4589
        %4591 = vrot.lane.b32.xlu0 %v4336, 100
        %v4592 = vpop.permute.xlu0 %4591
        %4593 = vrot.lane.b32.xlu0 %v4337, 100
        %v4594 = vpop.permute.xlu0 %4593
        %4595 = vrot.lane.b32.xlu0 %v4338, 100
        %v4596 = vpop.permute.xlu0 %4595
        %4597 = vrot.lane.b32.xlu0 %v4339, 100
        %v4598 = vpop.permute.xlu0 %4597
        %4599 = vrot.lane.b32.xlu0 %v4340, 100
        %v4600 = vpop.permute.xlu0 %4599
        %4601 = vrot.lane.b32.xlu0 %v4341, 100
        %v4602 = vpop.permute.xlu0 %4601
        %4603 = vrot.lane.b32.xlu0 %v4342, 100
        %v4604 = vpop.permute.xlu0 %4603
        %4605 = vrot.lane.b32.xlu0 %v4343, 100
        %v4606 = vpop.permute.xlu0 %4605
        %4607 = vrot.lane.b32.xlu0 %v4344, 100
        %v4608 = vpop.permute.xlu0 %4607
        %4609 = vrot.lane.b32.xlu0 %v4345, 100
        %v4610 = vpop.permute.xlu0 %4609
        %4611 = vrot.lane.b32.xlu0 %v4346, 100
        %v4612 = vpop.permute.xlu0 %4611
        %4613 = vrot.lane.b32.xlu0 %v4347, 100
        %v4614 = vpop.permute.xlu0 %4613
        %4615 = vrot.lane.b32.xlu0 %v4348, 100
        %v4616 = vpop.permute.xlu0 %4615
        %4617 = vrot.lane.b32.xlu0 %v4349, 100
        %v4618 = vpop.permute.xlu0 %4617
        %4619 = vrot.lane.b32.xlu0 %v4350, 100
        %v4620 = vpop.permute.xlu0 %4619
        %4621 = vrot.lane.b32.xlu0 %v4351, 100
        %v4622 = vpop.permute.xlu0 %4621
        %4623 = vrot.lane.b32.xlu0 %v4352, 100
        %v4624 = vpop.permute.xlu0 %4623
        %4625 = vrot.lane.b32.xlu0 %v4353, 100
        %v4626 = vpop.permute.xlu0 %4625
        %4627 = vrot.lane.b32.xlu0 %v4354, 100
        %v4628 = vpop.permute.xlu0 %4627
        %4629 = vrot.lane.b32.xlu0 %v4355, 100
        %v4630 = vpop.permute.xlu0 %4629
        %4631 = vrot.lane.b32.xlu0 %v4356, 100
        %v4632 = vpop.permute.xlu0 %4631
        %4633 = vrot.lane.b32.xlu0 %v4357, 100
        %v4634 = vpop.permute.xlu0 %4633
        %4635 = vrot.lane.b32.xlu0 %v4358, 100
        %v4636 = vpop.permute.xlu0 %4635
        %4637 = vrot.lane.b32.xlu0 %v4359, 100
        %v4638 = vpop.permute.xlu0 %4637
        %4639 = vrot.lane.b32.xlu0 %v4360, 100
        %v4640 = vpop.permute.xlu0 %4639
        %4641 = vrot.lane.b32.xlu0 %v4361, 100
        %v4642 = vpop.permute.xlu0 %4641
        %4643 = vrot.lane.b32.xlu0 %v4362, 100
        %v4644 = vpop.permute.xlu0 %4643
        %4645 = vrot.lane.b32.xlu0 %v4363, 100
        %v4646 = vpop.permute.xlu0 %4645
        %4647 = vrot.lane.b32.xlu0 %v4364, 100
        %v4648 = vpop.permute.xlu0 %4647
        %4649 = vrot.lane.b32.xlu0 %v4365, 100
        %v4650 = vpop.permute.xlu0 %4649
        %4651 = vrot.lane.b32.xlu0 %v4366, 100
        %v4652 = vpop.permute.xlu0 %4651
        %4653 = vrot.lane.b32.xlu0 %v4367, 100
        %v4654 = vpop.permute.xlu0 %4653
        %4655 = vrot.lane.b32.xlu0 %v4368, 100
        %v4656 = vpop.permute.xlu0 %4655
        %4657 = vrot.lane.b32.xlu0 %v4369, 100
        %v4658 = vpop.permute.xlu0 %4657
        %4659 = vrot.lane.b32.xlu0 %v4370, 100
        %v4660 = vpop.permute.xlu0 %4659
        %4661 = vrot.lane.b32.xlu0 %v4371, 100
        %v4662 = vpop.permute.xlu0 %4661
        %4663 = vrot.lane.b32.xlu0 %v4372, 100
        %v4664 = vpop.permute.xlu0 %4663
        %4665 = vrot.lane.b32.xlu0 %v4373, 100
        %v4666 = vpop.permute.xlu0 %4665
        %4667 = vrot.lane.b32.xlu0 %v4374, 100
        %v4668 = vpop.permute.xlu0 %4667
        %4669 = vrot.lane.b32.xlu0 %v4375, 100
        %v4670 = vpop.permute.xlu0 %4669
        %4671 = vrot.lane.b32.xlu0 %v4376, 100
        %v4672 = vpop.permute.xlu0 %4671
        %4673 = vrot.lane.b32.xlu0 %v4377, 100
        %v4674 = vpop.permute.xlu0 %4673
        %4675 = vrot.lane.b32.xlu0 %v4378, 100
        %v4676 = vpop.permute.xlu0 %4675
        %4677 = vrot.lane.b32.xlu0 %v4379, 100
        %v4678 = vpop.permute.xlu0 %4677
        %4679 = vrot.lane.b32.xlu0 %v4380, 100
        %v4680 = vpop.permute.xlu0 %4679
        %4681 = vrot.lane.b32.xlu0 %v4381, 100
        %v4682 = vpop.permute.xlu0 %4681
        %4683 = vrot.lane.b32.xlu0 %v4382, 100
        %v4684 = vpop.permute.xlu0 %4683
        %4685 = vrot.lane.b32.xlu0 %v4383, 100
        %v4686 = vpop.permute.xlu0 %4685
        %4687 = vrot.lane.b32.xlu0 %v4384, 100
        %v4688 = vpop.permute.xlu0 %4687
        %4689 = vrot.lane.b32.xlu0 %v4385, 100
        %v4690 = vpop.permute.xlu0 %4689
        %4691 = vrot.lane.b32.xlu0 %v4386, 100
        %v4692 = vpop.permute.xlu0 %4691
        %4693 = vrot.lane.b32.xlu0 %v4387, 100
        %v4694 = vpop.permute.xlu0 %4693
        %4695 = vrot.lane.b32.xlu0 %v4388, 100
        %v4696 = vpop.permute.xlu0 %4695
        %4697 = vrot.lane.b32.xlu0 %v4389, 100
        %v4698 = vpop.permute.xlu0 %4697
        %4699 = vrot.lane.b32.xlu0 %v4390, 100
        %v4700 = vpop.permute.xlu0 %4699
        %4701 = vrot.lane.b32.xlu0 %v4391, 100
        %v4702 = vpop.permute.xlu0 %4701
        %4703 = vrot.lane.b32.xlu0 %v4392, 100
        %v4704 = vpop.permute.xlu0 %4703
        %4705 = vrot.lane.b32.xlu0 %v4393, 100
        %v4706 = vpop.permute.xlu0 %4705
        %4707 = vrot.lane.b32.xlu0 %v4394, 100
        %v4708 = vpop.permute.xlu0 %4707
        %4709 = vrot.lane.b32.xlu0 %v4395, 100
        %v4710 = vpop.permute.xlu0 %4709
        %4711 = vrot.lane.b32.xlu0 %v4396, 100
        %v4712 = vpop.permute.xlu0 %4711
        %4713 = vrot.lane.b32.xlu0 %v4397, 100
        %v4714 = vpop.permute.xlu0 %4713
        %4715 = vrot.lane.b32.xlu0 %v4398, 100
        %v4716 = vpop.permute.xlu0 %4715
        %4717 = vrot.lane.b32.xlu0 %v4399, 100
        %v4718 = vpop.permute.xlu0 %4717
        %4719 = vrot.lane.b32.xlu0 %v4400, 100
        %v4720 = vpop.permute.xlu0 %4719
        %4721 = vrot.lane.b32.xlu0 %v4401, 100
        %v4722 = vpop.permute.xlu0 %4721
        %4723 = vrot.lane.b32.xlu0 %v4402, 100
        %v4724 = vpop.permute.xlu0 %4723
        %4725 = vrot.lane.b32.xlu0 %v4403, 100
        %v4726 = vpop.permute.xlu0 %4725
        %4727 = vrot.lane.b32.xlu0 %v4404, 100
        %v4728 = vpop.permute.xlu0 %4727
        %4729 = vrot.lane.b32.xlu0 %v4405, 100
        %v4730 = vpop.permute.xlu0 %4729
        %4731 = vrot.lane.b32.xlu0 %v4406, 100
        %v4732 = vpop.permute.xlu0 %4731
        %4733 = vrot.lane.b32.xlu0 %v4407, 100
        %v4734 = vpop.permute.xlu0 %4733
        %4735 = vrot.lane.b32.xlu0 %v4408, 100
        %v4736 = vpop.permute.xlu0 %4735
        %4737 = vrot.lane.b32.xlu0 %v4409, 100
        %v4738 = vpop.permute.xlu0 %4737
        %4739 = vrot.lane.b32.xlu0 %v4410, 100
        %v4740 = vpop.permute.xlu0 %4739
        %4741 = vrot.lane.b32.xlu0 %v4411, 100
        %v4742 = vpop.permute.xlu0 %4741
        %4743 = vrot.lane.b32.xlu0 %v4412, 100
        %v4744 = vpop.permute.xlu0 %4743
        %4745 = vrot.lane.b32.xlu0 %v4413, 100
        %v4746 = vpop.permute.xlu0 %4745
        %4747 = vrot.lane.b32.xlu0 %v4414, 100
        %v4748 = vpop.permute.xlu0 %4747
        %4749 = vrot.lane.b32.xlu0 %v4415, 100
        %v4750 = vpop.permute.xlu0 %4749
        %4751 = vrot.lane.b32.xlu0 %v4416, 100
        %v4752 = vpop.permute.xlu0 %4751
        %v4753 = vsel %vm1347, %v4530, %v4532
        %v4754 = vsel %vm1347, %v4532, %v4534
        %v4755 = vsel %vm1347, %v4534, %v4536
        %v4756 = vsel %vm1347, %v4536, %v4538
        %v4757 = vsel %vm1347, %v4538, %v4540
        %v4758 = vsel %vm1347, %v4540, %v4542
        %v4759 = vsel %vm1347, %v4544, %v4546
        %v4760 = vsel %vm1347, %v4546, %v4548
        %v4761 = vsel %vm1347, %v4548, %v4550
        %v4762 = vsel %vm1347, %v4550, %v4552
        %v4763 = vsel %vm1347, %v4552, %v4554
        %v4764 = vsel %vm1347, %v4554, %v4556
        %v4765 = vsel %vm1347, %v4558, %v4560
        %v4766 = vsel %vm1347, %v4560, %v4562
        %v4767 = vsel %vm1347, %v4562, %v4564
        %v4768 = vsel %vm1347, %v4564, %v4566
        %v4769 = vsel %vm1347, %v4566, %v4568
        %v4770 = vsel %vm1347, %v4568, %v4570
        %v4771 = vsel %vm1347, %v4572, %v4574
        %v4772 = vsel %vm1347, %v4574, %v4576
        %v4773 = vsel %vm1347, %v4576, %v4578
        %v4774 = vsel %vm1347, %v4578, %v4580
        %v4775 = vsel %vm1347, %v4580, %v4582
        %v4776 = vsel %vm1347, %v4582, %v4584
        %v4777 = vsel %vm1347, %v4586, %v4588
        %v4778 = vsel %vm1347, %v4588, %v4590
        %v4779 = vsel %vm1347, %v4590, %v4592
        %v4780 = vsel %vm1347, %v4592, %v4594
        %v4781 = vsel %vm1347, %v4594, %v4596
        %v4782 = vsel %vm1347, %v4596, %v4598
        %v4783 = vsel %vm1347, %v4600, %v4602
        %v4784 = vsel %vm1347, %v4602, %v4604
        %v4785 = vsel %vm1347, %v4604, %v4606
        %v4786 = vsel %vm1347, %v4606, %v4608
        %v4787 = vsel %vm1347, %v4608, %v4610
        %v4788 = vsel %vm1347, %v4610, %v4612
        %v4789 = vsel %vm1347, %v4614, %v4616
        %v4790 = vsel %vm1347, %v4616, %v4618
        %v4791 = vsel %vm1347, %v4618, %v4620
        %v4792 = vsel %vm1347, %v4620, %v4622
        %v4793 = vsel %vm1347, %v4622, %v4624
        %v4794 = vsel %vm1347, %v4624, %v4626
        %v4795 = vsel %vm1347, %v4628, %v4630
        %v4796 = vsel %vm1347, %v4630, %v4632
        %v4797 = vsel %vm1347, %v4632, %v4634
        %v4798 = vsel %vm1347, %v4634, %v4636
        %v4799 = vsel %vm1347, %v4636, %v4638
        %v4800 = vsel %vm1347, %v4638, %v4640
        %v4801 = vsel %vm1347, %v4642, %v4644
        %v4802 = vsel %vm1347, %v4644, %v4646
        %v4803 = vsel %vm1347, %v4646, %v4648
        %v4804 = vsel %vm1347, %v4648, %v4650
        %v4805 = vsel %vm1347, %v4650, %v4652
        %v4806 = vsel %vm1347, %v4652, %v4654
        %v4807 = vsel %vm1347, %v4656, %v4658
        %v4808 = vsel %vm1347, %v4658, %v4660
        %v4809 = vsel %vm1347, %v4660, %v4662
        %v4810 = vsel %vm1347, %v4662, %v4664
        %v4811 = vsel %vm1347, %v4664, %v4666
        %v4812 = vsel %vm1347, %v4666, %v4668
        %v4813 = vsel %vm1347, %v4670, %v4672
        %v4814 = vsel %vm1347, %v4672, %v4674
        %v4815 = vsel %vm1347, %v4674, %v4676
        %v4816 = vsel %vm1347, %v4676, %v4678
        %v4817 = vsel %vm1347, %v4678, %v4680
        %v4818 = vsel %vm1347, %v4680, %v4682
        %v4819 = vsel %vm1347, %v4684, %v4686
        %v4820 = vsel %vm1347, %v4686, %v4688
        %v4821 = vsel %vm1347, %v4688, %v4690
        %v4822 = vsel %vm1347, %v4690, %v4692
        %v4823 = vsel %vm1347, %v4692, %v4694
        %v4824 = vsel %vm1347, %v4694, %v4696
        %v4825 = vsel %vm1347, %v4698, %v4700
        %v4826 = vsel %vm1347, %v4700, %v4702
        %v4827 = vsel %vm1347, %v4702, %v4704
        %v4828 = vsel %vm1347, %v4704, %v4706
        %v4829 = vsel %vm1347, %v4706, %v4708
        %v4830 = vsel %vm1347, %v4708, %v4710
        %v4831 = vsel %vm1347, %v4712, %v4714
        %v4832 = vsel %vm1347, %v4714, %v4716
        %v4833 = vsel %vm1347, %v4716, %v4718
        %v4834 = vsel %vm1347, %v4718, %v4720
        %v4835 = vsel %vm1347, %v4720, %v4722
        %v4836 = vsel %vm1347, %v4722, %v4724
        %v4837 = vsel %vm1347, %v4726, %v4728
        %v4838 = vsel %vm1347, %v4728, %v4730
        %v4839 = vsel %vm1347, %v4730, %v4732
        %v4840 = vsel %vm1347, %v4732, %v4734
        %v4841 = vsel %vm1347, %v4734, %v4736
        %v4842 = vsel %vm1347, %v4736, %v4738
        %v4843 = vsel %vm1347, %v4740, %v4742
        %v4844 = vsel %vm1347, %v4742, %v4744
        %v4845 = vsel %vm1347, %v4744, %v4746
        %v4846 = vsel %vm1347, %v4746, %v4748
        %v4847 = vsel %vm1347, %v4748, %v4750
        %v4848 = vsel %vm1347, %v4750, %v4752
        %v4961 = vadd.f32 %v4191, %v4530
        %v4962 = vadd.f32 %v4192, %v4753
        %v4963 = vadd.f32 %v4193, %v4754
        %v4964 = vadd.f32 %v4194, %v4755
        %v4965 = vadd.f32 %v4195, %v4756
        %v4966 = vadd.f32 %v4196, %v4757
        %v4967 = vadd.f32 %v4197, %v4758
        %v4968 = vadd.f32 %v4198, %v4544
        %v4969 = vadd.f32 %v4199, %v4759
        %v4970 = vadd.f32 %v4200, %v4760
        %v4971 = vadd.f32 %v4201, %v4761
        %v4972 = vadd.f32 %v4202, %v4762
        %v4973 = vadd.f32 %v4203, %v4763
        %v4974 = vadd.f32 %v4204, %v4764
        %v4975 = vadd.f32 %v4205, %v4558
        %v4976 = vadd.f32 %v4206, %v4765
        %v4977 = vadd.f32 %v4207, %v4766
        %v4978 = vadd.f32 %v4208, %v4767
        %v4979 = vadd.f32 %v4209, %v4768
        %v4980 = vadd.f32 %v4210, %v4769
        %v4981 = vadd.f32 %v4211, %v4770
        %v4982 = vadd.f32 %v4212, %v4572
        %v4983 = vadd.f32 %v4213, %v4771
        %v4984 = vadd.f32 %v4214, %v4772
        %v4985 = vadd.f32 %v4215, %v4773
        %v4986 = vadd.f32 %v4216, %v4774
        %v4987 = vadd.f32 %v4217, %v4775
        %v4988 = vadd.f32 %v4218, %v4776
        %v4989 = vadd.f32 %v4219, %v4586
        %v4990 = vadd.f32 %v4220, %v4777
        %v4991 = vadd.f32 %v4221, %v4778
        %v4992 = vadd.f32 %v4222, %v4779
        %v4993 = vadd.f32 %v4223, %v4780
        %v4994 = vadd.f32 %v4224, %v4781
        %v4995 = vadd.f32 %v4225, %v4782
        %v4996 = vadd.f32 %v4226, %v4600
        %v4997 = vadd.f32 %v4227, %v4783
        %v4998 = vadd.f32 %v4228, %v4784
        %v4999 = vadd.f32 %v4229, %v4785
        %v5000 = vadd.f32 %v4230, %v4786
        %v5001 = vadd.f32 %v4231, %v4787
        %v5002 = vadd.f32 %v4232, %v4788
        %v5003 = vadd.f32 %v4233, %v4614
        %v5004 = vadd.f32 %v4234, %v4789
        %v5005 = vadd.f32 %v4235, %v4790
        %v5006 = vadd.f32 %v4236, %v4791
        %v5007 = vadd.f32 %v4237, %v4792
        %v5008 = vadd.f32 %v4238, %v4793
        %v5009 = vadd.f32 %v4239, %v4794
        %v5010 = vadd.f32 %v4240, %v4628
        %v5011 = vadd.f32 %v4241, %v4795
        %v5012 = vadd.f32 %v4242, %v4796
        %v5013 = vadd.f32 %v4243, %v4797
        %v5014 = vadd.f32 %v4244, %v4798
        %v5015 = vadd.f32 %v4245, %v4799
        %v5016 = vadd.f32 %v4246, %v4800
        %v5017 = vadd.f32 %v4247, %v4642
        %v5018 = vadd.f32 %v4248, %v4801
        %v5019 = vadd.f32 %v4249, %v4802
        %v5020 = vadd.f32 %v4250, %v4803
        %v5021 = vadd.f32 %v4251, %v4804
        %v5022 = vadd.f32 %v4252, %v4805
        %v5023 = vadd.f32 %v4253, %v4806
        %v5024 = vadd.f32 %v4254, %v4656
        %v5025 = vadd.f32 %v4255, %v4807
        %v5026 = vadd.f32 %v4256, %v4808
        %v5027 = vadd.f32 %v4257, %v4809
        %v5028 = vadd.f32 %v4258, %v4810
        %v5029 = vadd.f32 %v4259, %v4811
        %v5030 = vadd.f32 %v4260, %v4812
        %v5031 = vadd.f32 %v4261, %v4670
        %v5032 = vadd.f32 %v4262, %v4813
        %v5033 = vadd.f32 %v4263, %v4814
        %v5034 = vadd.f32 %v4264, %v4815
        %v5035 = vadd.f32 %v4265, %v4816
        %v5036 = vadd.f32 %v4266, %v4817
        %v5037 = vadd.f32 %v4267, %v4818
        %v5038 = vadd.f32 %v4268, %v4684
        %v5039 = vadd.f32 %v4269, %v4819
        %v5040 = vadd.f32 %v4270, %v4820
        %v5041 = vadd.f32 %v4271, %v4821
        %v5042 = vadd.f32 %v4272, %v4822
        %v5043 = vadd.f32 %v4273, %v4823
        %v5044 = vadd.f32 %v4274, %v4824
        %v5045 = vadd.f32 %v4275, %v4698
        %v5046 = vadd.f32 %v4276, %v4825
        %v5047 = vadd.f32 %v4277, %v4826
        %v5048 = vadd.f32 %v4278, %v4827
        %v5049 = vadd.f32 %v4279, %v4828
        %v5050 = vadd.f32 %v4280, %v4829
        %v5051 = vadd.f32 %v4281, %v4830
        %v5052 = vadd.f32 %v4282, %v4712
        %v5053 = vadd.f32 %v4283, %v4831
        %v5054 = vadd.f32 %v4284, %v4832
        %v5055 = vadd.f32 %v4285, %v4833
        %v5056 = vadd.f32 %v4286, %v4834
        %v5057 = vadd.f32 %v4287, %v4835
        %v5058 = vadd.f32 %v4288, %v4836
        %v5059 = vadd.f32 %v4289, %v4726
        %v5060 = vadd.f32 %v4290, %v4837
        %v5061 = vadd.f32 %v4291, %v4838
        %v5062 = vadd.f32 %v4292, %v4839
        %v5063 = vadd.f32 %v4293, %v4840
        %v5064 = vadd.f32 %v4294, %v4841
        %v5065 = vadd.f32 %v4295, %v4842
        %v5066 = vadd.f32 %v4296, %v4740
        %v5067 = vadd.f32 %v4297, %v4843
        %v5068 = vadd.f32 %v4298, %v4844
        %v5069 = vadd.f32 %v4299, %v4845
        %v5070 = vadd.f32 %v4300, %v4846
        %v5071 = vadd.f32 %v4301, %v4847
        %v5072 = vadd.f32 %v4302, %v4848
        %s5073 = sld [smem:[#allocation4 + $0x102]]
        %v5074 = vstv %s5073
        %v5075 = vmul.f32 %v5074, %v786
        %v5076 = vmul.f32 %v5074, %v787
        %v5077 = vmul.f32 %v5074, %v788
        %v5078 = vmul.f32 %v5074, %v789
        %v5079 = vmul.f32 %v5074, %v790
        %v5080 = vmul.f32 %v5074, %v791
        %v5081 = vmul.f32 %v5074, %v792
        %v5082 = vmul.f32 %v5074, %v793
        %v5083 = vmul.f32 %v5074, %v794
        %v5084 = vmul.f32 %v5074, %v795
        %v5085 = vmul.f32 %v5074, %v796
        %v5086 = vmul.f32 %v5074, %v797
        %v5087 = vmul.f32 %v5074, %v798
        %v5088 = vmul.f32 %v5074, %v799
        %v5089 = vmul.f32 %v5074, %v800
        %v5090 = vmul.f32 %v5074, %v801
        %v5091 = vmul.f32 %v5074, %v802
        %v5092 = vmul.f32 %v5074, %v803
        %v5093 = vmul.f32 %v5074, %v804
        %v5094 = vmul.f32 %v5074, %v805
        %v5095 = vmul.f32 %v5074, %v806
        %v5096 = vmul.f32 %v5074, %v807
        %v5097 = vmul.f32 %v5074, %v808
        %v5098 = vmul.f32 %v5074, %v809
        %v5099 = vmul.f32 %v5074, %v810
        %v5100 = vmul.f32 %v5074, %v811
        %v5101 = vmul.f32 %v5074, %v812
        %v5102 = vmul.f32 %v5074, %v813
        %v5103 = vmul.f32 %v5074, %v814
        %v5104 = vmul.f32 %v5074, %v815
        %v5105 = vmul.f32 %v5074, %v816
        %v5106 = vmul.f32 %v5074, %v817
        %v5107 = vmul.f32 %v5074, %v818
        %v5108 = vmul.f32 %v5074, %v819
        %v5109 = vmul.f32 %v5074, %v820
        %v5110 = vmul.f32 %v5074, %v821
        %v5111 = vmul.f32 %v5074, %v822
        %v5112 = vmul.f32 %v5074, %v823
        %v5113 = vmul.f32 %v5074, %v824
        %v5114 = vmul.f32 %v5074, %v825
        %v5115 = vmul.f32 %v5074, %v826
        %v5116 = vmul.f32 %v5074, %v827
        %v5117 = vmul.f32 %v5074, %v828
        %v5118 = vmul.f32 %v5074, %v829
        %v5119 = vmul.f32 %v5074, %v830
        %v5120 = vmul.f32 %v5074, %v831
        %v5121 = vmul.f32 %v5074, %v832
        %v5122 = vmul.f32 %v5074, %v833
        %v5123 = vmul.f32 %v5074, %v834
        %v5124 = vmul.f32 %v5074, %v835
        %v5125 = vmul.f32 %v5074, %v836
        %v5126 = vmul.f32 %v5074, %v837
        %v5127 = vmul.f32 %v5074, %v838
        %v5128 = vmul.f32 %v5074, %v839
        %v5129 = vmul.f32 %v5074, %v840
        %v5130 = vmul.f32 %v5074, %v841
        %v5131 = vmul.f32 %v5074, %v842
        %v5132 = vmul.f32 %v5074, %v843
        %v5133 = vmul.f32 %v5074, %v844
        %v5134 = vmul.f32 %v5074, %v845
        %v5135 = vmul.f32 %v5074, %v846
        %v5136 = vmul.f32 %v5074, %v847
        %v5137 = vmul.f32 %v5074, %v848
        %v5138 = vmul.f32 %v5074, %v849
        %v5139 = vmul.f32 %v5074, %v850
        %v5140 = vmul.f32 %v5074, %v851
        %v5141 = vmul.f32 %v5074, %v852
        %v5142 = vmul.f32 %v5074, %v853
        %v5143 = vmul.f32 %v5074, %v854
        %v5144 = vmul.f32 %v5074, %v855
        %v5145 = vmul.f32 %v5074, %v856
        %v5146 = vmul.f32 %v5074, %v857
        %v5147 = vmul.f32 %v5074, %v858
        %v5148 = vmul.f32 %v5074, %v859
        %v5149 = vmul.f32 %v5074, %v860
        %v5150 = vmul.f32 %v5074, %v861
        %v5151 = vmul.f32 %v5074, %v862
        %v5152 = vmul.f32 %v5074, %v863
        %v5153 = vmul.f32 %v5074, %v864
        %v5154 = vmul.f32 %v5074, %v865
        %v5155 = vmul.f32 %v5074, %v866
        %v5156 = vmul.f32 %v5074, %v867
        %v5157 = vmul.f32 %v5074, %v868
        %v5158 = vmul.f32 %v5074, %v869
        %v5159 = vmul.f32 %v5074, %v870
        %v5160 = vmul.f32 %v5074, %v871
        %v5161 = vmul.f32 %v5074, %v872
        %v5162 = vmul.f32 %v5074, %v873
        %v5163 = vmul.f32 %v5074, %v874
        %v5164 = vmul.f32 %v5074, %v875
        %v5165 = vmul.f32 %v5074, %v876
        %v5166 = vmul.f32 %v5074, %v877
        %v5167 = vmul.f32 %v5074, %v878
        %v5168 = vmul.f32 %v5074, %v879
        %v5169 = vmul.f32 %v5074, %v880
        %v5170 = vmul.f32 %v5074, %v881
        %v5171 = vmul.f32 %v5074, %v882
        %v5172 = vmul.f32 %v5074, %v883
        %v5173 = vmul.f32 %v5074, %v884
        %v5174 = vmul.f32 %v5074, %v885
        %v5175 = vmul.f32 %v5074, %v886
        %v5176 = vmul.f32 %v5074, %v887
        %v5177 = vmul.f32 %v5074, %v888
        %v5178 = vmul.f32 %v5074, %v889
        %v5179 = vmul.f32 %v5074, %v890
        %v5180 = vmul.f32 %v5074, %v891
        %v5181 = vmul.f32 %v5074, %v892
        %v5182 = vmul.f32 %v5074, %v893
        %v5183 = vmul.f32 %v5074, %v894
        %v5184 = vmul.f32 %v5074, %v895
        %v5185 = vmul.f32 %v5074, %v896
        %v5186 = vmul.f32 %v5074, %v897
        %5299 = vrot.lane.b32.xlu0 %v5075, 72
        %v5300 = vpop.permute.xlu0 %5299
        %5301 = vrot.lane.b32.xlu0 %v5076, 72
        %v5302 = vpop.permute.xlu0 %5301
        %5303 = vrot.lane.b32.xlu0 %v5077, 72
        %v5304 = vpop.permute.xlu0 %5303
        %5305 = vrot.lane.b32.xlu0 %v5078, 72
        %v5306 = vpop.permute.xlu0 %5305
        %5307 = vrot.lane.b32.xlu0 %v5079, 72
        %v5308 = vpop.permute.xlu0 %5307
        %5309 = vrot.lane.b32.xlu0 %v5080, 72
        %v5310 = vpop.permute.xlu0 %5309
        %5311 = vrot.lane.b32.xlu0 %v5081, 72
        %v5312 = vpop.permute.xlu0 %5311
        %5313 = vrot.lane.b32.xlu0 %v5082, 72
        %v5314 = vpop.permute.xlu0 %5313
        %5315 = vrot.lane.b32.xlu0 %v5083, 72
        %v5316 = vpop.permute.xlu0 %5315
        %5317 = vrot.lane.b32.xlu0 %v5084, 72
        %v5318 = vpop.permute.xlu0 %5317
        %5319 = vrot.lane.b32.xlu0 %v5085, 72
        %v5320 = vpop.permute.xlu0 %5319
        %5321 = vrot.lane.b32.xlu0 %v5086, 72
        %v5322 = vpop.permute.xlu0 %5321
        %5323 = vrot.lane.b32.xlu0 %v5087, 72
        %v5324 = vpop.permute.xlu0 %5323
        %5325 = vrot.lane.b32.xlu0 %v5088, 72
        %v5326 = vpop.permute.xlu0 %5325
        %5327 = vrot.lane.b32.xlu0 %v5089, 72
        %v5328 = vpop.permute.xlu0 %5327
        %5329 = vrot.lane.b32.xlu0 %v5090, 72
        %v5330 = vpop.permute.xlu0 %5329
        %5331 = vrot.lane.b32.xlu0 %v5091, 72
        %v5332 = vpop.permute.xlu0 %5331
        %5333 = vrot.lane.b32.xlu0 %v5092, 72
        %v5334 = vpop.permute.xlu0 %5333
        %5335 = vrot.lane.b32.xlu0 %v5093, 72
        %v5336 = vpop.permute.xlu0 %5335
        %5337 = vrot.lane.b32.xlu0 %v5094, 72
        %v5338 = vpop.permute.xlu0 %5337
        %5339 = vrot.lane.b32.xlu0 %v5095, 72
        %v5340 = vpop.permute.xlu0 %5339
        %5341 = vrot.lane.b32.xlu0 %v5096, 72
        %v5342 = vpop.permute.xlu0 %5341
        %5343 = vrot.lane.b32.xlu0 %v5097, 72
        %v5344 = vpop.permute.xlu0 %5343
        %5345 = vrot.lane.b32.xlu0 %v5098, 72
        %v5346 = vpop.permute.xlu0 %5345
        %5347 = vrot.lane.b32.xlu0 %v5099, 72
        %v5348 = vpop.permute.xlu0 %5347
        %5349 = vrot.lane.b32.xlu0 %v5100, 72
        %v5350 = vpop.permute.xlu0 %5349
        %5351 = vrot.lane.b32.xlu0 %v5101, 72
        %v5352 = vpop.permute.xlu0 %5351
        %5353 = vrot.lane.b32.xlu0 %v5102, 72
        %v5354 = vpop.permute.xlu0 %5353
        %5355 = vrot.lane.b32.xlu0 %v5103, 72
        %v5356 = vpop.permute.xlu0 %5355
        %5357 = vrot.lane.b32.xlu0 %v5104, 72
        %v5358 = vpop.permute.xlu0 %5357
        %5359 = vrot.lane.b32.xlu0 %v5105, 72
        %v5360 = vpop.permute.xlu0 %5359
        %5361 = vrot.lane.b32.xlu0 %v5106, 72
        %v5362 = vpop.permute.xlu0 %5361
        %5363 = vrot.lane.b32.xlu0 %v5107, 72
        %v5364 = vpop.permute.xlu0 %5363
        %5365 = vrot.lane.b32.xlu0 %v5108, 72
        %v5366 = vpop.permute.xlu0 %5365
        %5367 = vrot.lane.b32.xlu0 %v5109, 72
        %v5368 = vpop.permute.xlu0 %5367
        %5369 = vrot.lane.b32.xlu0 %v5110, 72
        %v5370 = vpop.permute.xlu0 %5369
        %5371 = vrot.lane.b32.xlu0 %v5111, 72
        %v5372 = vpop.permute.xlu0 %5371
        %5373 = vrot.lane.b32.xlu0 %v5112, 72
        %v5374 = vpop.permute.xlu0 %5373
        %5375 = vrot.lane.b32.xlu0 %v5113, 72
        %v5376 = vpop.permute.xlu0 %5375
        %5377 = vrot.lane.b32.xlu0 %v5114, 72
        %v5378 = vpop.permute.xlu0 %5377
        %5379 = vrot.lane.b32.xlu0 %v5115, 72
        %v5380 = vpop.permute.xlu0 %5379
        %5381 = vrot.lane.b32.xlu0 %v5116, 72
        %v5382 = vpop.permute.xlu0 %5381
        %5383 = vrot.lane.b32.xlu0 %v5117, 72
        %v5384 = vpop.permute.xlu0 %5383
        %5385 = vrot.lane.b32.xlu0 %v5118, 72
        %v5386 = vpop.permute.xlu0 %5385
        %5387 = vrot.lane.b32.xlu0 %v5119, 72
        %v5388 = vpop.permute.xlu0 %5387
        %5389 = vrot.lane.b32.xlu0 %v5120, 72
        %v5390 = vpop.permute.xlu0 %5389
        %5391 = vrot.lane.b32.xlu0 %v5121, 72
        %v5392 = vpop.permute.xlu0 %5391
        %5393 = vrot.lane.b32.xlu0 %v5122, 72
        %v5394 = vpop.permute.xlu0 %5393
        %5395 = vrot.lane.b32.xlu0 %v5123, 72
        %v5396 = vpop.permute.xlu0 %5395
        %5397 = vrot.lane.b32.xlu0 %v5124, 72
        %v5398 = vpop.permute.xlu0 %5397
        %5399 = vrot.lane.b32.xlu0 %v5125, 72
        %v5400 = vpop.permute.xlu0 %5399
        %5401 = vrot.lane.b32.xlu0 %v5126, 72
        %v5402 = vpop.permute.xlu0 %5401
        %5403 = vrot.lane.b32.xlu0 %v5127, 72
        %v5404 = vpop.permute.xlu0 %5403
        %5405 = vrot.lane.b32.xlu0 %v5128, 72
        %v5406 = vpop.permute.xlu0 %5405
        %5407 = vrot.lane.b32.xlu0 %v5129, 72
        %v5408 = vpop.permute.xlu0 %5407
        %5409 = vrot.lane.b32.xlu0 %v5130, 72
        %v5410 = vpop.permute.xlu0 %5409
        %5411 = vrot.lane.b32.xlu0 %v5131, 72
        %v5412 = vpop.permute.xlu0 %5411
        %5413 = vrot.lane.b32.xlu0 %v5132, 72
        %v5414 = vpop.permute.xlu0 %5413
        %5415 = vrot.lane.b32.xlu0 %v5133, 72
        %v5416 = vpop.permute.xlu0 %5415
        %5417 = vrot.lane.b32.xlu0 %v5134, 72
        %v5418 = vpop.permute.xlu0 %5417
        %5419 = vrot.lane.b32.xlu0 %v5135, 72
        %v5420 = vpop.permute.xlu0 %5419
        %5421 = vrot.lane.b32.xlu0 %v5136, 72
        %v5422 = vpop.permute.xlu0 %5421
        %5423 = vrot.lane.b32.xlu0 %v5137, 72
        %v5424 = vpop.permute.xlu0 %5423
        %5425 = vrot.lane.b32.xlu0 %v5138, 72
        %v5426 = vpop.permute.xlu0 %5425
        %5427 = vrot.lane.b32.xlu0 %v5139, 72
        %v5428 = vpop.permute.xlu0 %5427
        %5429 = vrot.lane.b32.xlu0 %v5140, 72
        %v5430 = vpop.permute.xlu0 %5429
        %5431 = vrot.lane.b32.xlu0 %v5141, 72
        %v5432 = vpop.permute.xlu0 %5431
        %5433 = vrot.lane.b32.xlu0 %v5142, 72
        %v5434 = vpop.permute.xlu0 %5433
        %5435 = vrot.lane.b32.xlu0 %v5143, 72
        %v5436 = vpop.permute.xlu0 %5435
        %5437 = vrot.lane.b32.xlu0 %v5144, 72
        %v5438 = vpop.permute.xlu0 %5437
        %5439 = vrot.lane.b32.xlu0 %v5145, 72
        %v5440 = vpop.permute.xlu0 %5439
        %5441 = vrot.lane.b32.xlu0 %v5146, 72
        %v5442 = vpop.permute.xlu0 %5441
        %5443 = vrot.lane.b32.xlu0 %v5147, 72
        %v5444 = vpop.permute.xlu0 %5443
        %5445 = vrot.lane.b32.xlu0 %v5148, 72
        %v5446 = vpop.permute.xlu0 %5445
        %5447 = vrot.lane.b32.xlu0 %v5149, 72
        %v5448 = vpop.permute.xlu0 %5447
        %5449 = vrot.lane.b32.xlu0 %v5150, 72
        %v5450 = vpop.permute.xlu0 %5449
        %5451 = vrot.lane.b32.xlu0 %v5151, 72
        %v5452 = vpop.permute.xlu0 %5451
        %5453 = vrot.lane.b32.xlu0 %v5152, 72
        %v5454 = vpop.permute.xlu0 %5453
        %5455 = vrot.lane.b32.xlu0 %v5153, 72
        %v5456 = vpop.permute.xlu0 %5455
        %5457 = vrot.lane.b32.xlu0 %v5154, 72
        %v5458 = vpop.permute.xlu0 %5457
        %5459 = vrot.lane.b32.xlu0 %v5155, 72
        %v5460 = vpop.permute.xlu0 %5459
        %5461 = vrot.lane.b32.xlu0 %v5156, 72
        %v5462 = vpop.permute.xlu0 %5461
        %5463 = vrot.lane.b32.xlu0 %v5157, 72
        %v5464 = vpop.permute.xlu0 %5463
        %5465 = vrot.lane.b32.xlu0 %v5158, 72
        %v5466 = vpop.permute.xlu0 %5465
        %5467 = vrot.lane.b32.xlu0 %v5159, 72
        %v5468 = vpop.permute.xlu0 %5467
        %5469 = vrot.lane.b32.xlu0 %v5160, 72
        %v5470 = vpop.permute.xlu0 %5469
        %5471 = vrot.lane.b32.xlu0 %v5161, 72
        %v5472 = vpop.permute.xlu0 %5471
        %5473 = vrot.lane.b32.xlu0 %v5162, 72
        %v5474 = vpop.permute.xlu0 %5473
        %5475 = vrot.lane.b32.xlu0 %v5163, 72
        %v5476 = vpop.permute.xlu0 %5475
        %5477 = vrot.lane.b32.xlu0 %v5164, 72
        %v5478 = vpop.permute.xlu0 %5477
        %5479 = vrot.lane.b32.xlu0 %v5165, 72
        %v5480 = vpop.permute.xlu0 %5479
        %5481 = vrot.lane.b32.xlu0 %v5166, 72
        %v5482 = vpop.permute.xlu0 %5481
        %5483 = vrot.lane.b32.xlu0 %v5167, 72
        %v5484 = vpop.permute.xlu0 %5483
        %5485 = vrot.lane.b32.xlu0 %v5168, 72
        %v5486 = vpop.permute.xlu0 %5485
        %5487 = vrot.lane.b32.xlu0 %v5169, 72
        %v5488 = vpop.permute.xlu0 %5487
        %5489 = vrot.lane.b32.xlu0 %v5170, 72
        %v5490 = vpop.permute.xlu0 %5489
        %5491 = vrot.lane.b32.xlu0 %v5171, 72
        %v5492 = vpop.permute.xlu0 %5491
        %5493 = vrot.lane.b32.xlu0 %v5172, 72
        %v5494 = vpop.permute.xlu0 %5493
        %5495 = vrot.lane.b32.xlu0 %v5173, 72
        %v5496 = vpop.permute.xlu0 %5495
        %5497 = vrot.lane.b32.xlu0 %v5174, 72
        %v5498 = vpop.permute.xlu0 %5497
        %5499 = vrot.lane.b32.xlu0 %v5175, 72
        %v5500 = vpop.permute.xlu0 %5499
        %5501 = vrot.lane.b32.xlu0 %v5176, 72
        %v5502 = vpop.permute.xlu0 %5501
        %5503 = vrot.lane.b32.xlu0 %v5177, 72
        %v5504 = vpop.permute.xlu0 %5503
        %5505 = vrot.lane.b32.xlu0 %v5178, 72
        %v5506 = vpop.permute.xlu0 %5505
        %5507 = vrot.lane.b32.xlu0 %v5179, 72
        %v5508 = vpop.permute.xlu0 %5507
        %5509 = vrot.lane.b32.xlu0 %v5180, 72
        %v5510 = vpop.permute.xlu0 %5509
        %5511 = vrot.lane.b32.xlu0 %v5181, 72
        %v5512 = vpop.permute.xlu0 %5511
        %5513 = vrot.lane.b32.xlu0 %v5182, 72
        %v5514 = vpop.permute.xlu0 %5513
        %5515 = vrot.lane.b32.xlu0 %v5183, 72
        %v5516 = vpop.permute.xlu0 %5515
        %5517 = vrot.lane.b32.xlu0 %v5184, 72
        %v5518 = vpop.permute.xlu0 %5517
        %5519 = vrot.lane.b32.xlu0 %v5185, 72
        %v5520 = vpop.permute.xlu0 %5519
        %5521 = vrot.lane.b32.xlu0 %v5186, 72
        %v5522 = vpop.permute.xlu0 %5521
        %v5523 = vsel %vm2118, %v5300, %v5302
        %v5524 = vsel %vm2118, %v5302, %v5304
        %v5525 = vsel %vm2118, %v5304, %v5306
        %v5526 = vsel %vm2118, %v5306, %v5308
        %v5527 = vsel %vm2118, %v5308, %v5310
        %v5528 = vsel %vm2118, %v5310, %v5312
        %v5529 = vsel %vm2118, %v5314, %v5316
        %v5530 = vsel %vm2118, %v5316, %v5318
        %v5531 = vsel %vm2118, %v5318, %v5320
        %v5532 = vsel %vm2118, %v5320, %v5322
        %v5533 = vsel %vm2118, %v5322, %v5324
        %v5534 = vsel %vm2118, %v5324, %v5326
        %v5535 = vsel %vm2118, %v5328, %v5330
        %v5536 = vsel %vm2118, %v5330, %v5332
        %v5537 = vsel %vm2118, %v5332, %v5334
        %v5538 = vsel %vm2118, %v5334, %v5336
        %v5539 = vsel %vm2118, %v5336, %v5338
        %v5540 = vsel %vm2118, %v5338, %v5340
        %v5541 = vsel %vm2118, %v5342, %v5344
        %v5542 = vsel %vm2118, %v5344, %v5346
        %v5543 = vsel %vm2118, %v5346, %v5348
        %v5544 = vsel %vm2118, %v5348, %v5350
        %v5545 = vsel %vm2118, %v5350, %v5352
        %v5546 = vsel %vm2118, %v5352, %v5354
        %v5547 = vsel %vm2118, %v5356, %v5358
        %v5548 = vsel %vm2118, %v5358, %v5360
        %v5549 = vsel %vm2118, %v5360, %v5362
        %v5550 = vsel %vm2118, %v5362, %v5364
        %v5551 = vsel %vm2118, %v5364, %v5366
        %v5552 = vsel %vm2118, %v5366, %v5368
        %v5553 = vsel %vm2118, %v5370, %v5372
        %v5554 = vsel %vm2118, %v5372, %v5374
        %v5555 = vsel %vm2118, %v5374, %v5376
        %v5556 = vsel %vm2118, %v5376, %v5378
        %v5557 = vsel %vm2118, %v5378, %v5380
        %v5558 = vsel %vm2118, %v5380, %v5382
        %v5559 = vsel %vm2118, %v5384, %v5386
        %v5560 = vsel %vm2118, %v5386, %v5388
        %v5561 = vsel %vm2118, %v5388, %v5390
        %v5562 = vsel %vm2118, %v5390, %v5392
        %v5563 = vsel %vm2118, %v5392, %v5394
        %v5564 = vsel %vm2118, %v5394, %v5396
        %v5565 = vsel %vm2118, %v5398, %v5400
        %v5566 = vsel %vm2118, %v5400, %v5402
        %v5567 = vsel %vm2118, %v5402, %v5404
        %v5568 = vsel %vm2118, %v5404, %v5406
        %v5569 = vsel %vm2118, %v5406, %v5408
        %v5570 = vsel %vm2118, %v5408, %v5410
        %v5571 = vsel %vm2118, %v5412, %v5414
        %v5572 = vsel %vm2118, %v5414, %v5416
        %v5573 = vsel %vm2118, %v5416, %v5418
        %v5574 = vsel %vm2118, %v5418, %v5420
        %v5575 = vsel %vm2118, %v5420, %v5422
        %v5576 = vsel %vm2118, %v5422, %v5424
        %v5577 = vsel %vm2118, %v5426, %v5428
        %v5578 = vsel %vm2118, %v5428, %v5430
        %v5579 = vsel %vm2118, %v5430, %v5432
        %v5580 = vsel %vm2118, %v5432, %v5434
        %v5581 = vsel %vm2118, %v5434, %v5436
        %v5582 = vsel %vm2118, %v5436, %v5438
        %v5583 = vsel %vm2118, %v5440, %v5442
        %v5584 = vsel %vm2118, %v5442, %v5444
        %v5585 = vsel %vm2118, %v5444, %v5446
        %v5586 = vsel %vm2118, %v5446, %v5448
        %v5587 = vsel %vm2118, %v5448, %v5450
        %v5588 = vsel %vm2118, %v5450, %v5452
        %v5589 = vsel %vm2118, %v5454, %v5456
        %v5590 = vsel %vm2118, %v5456, %v5458
        %v5591 = vsel %vm2118, %v5458, %v5460
        %v5592 = vsel %vm2118, %v5460, %v5462
        %v5593 = vsel %vm2118, %v5462, %v5464
        %v5594 = vsel %vm2118, %v5464, %v5466
        %v5595 = vsel %vm2118, %v5468, %v5470
        %v5596 = vsel %vm2118, %v5470, %v5472
        %v5597 = vsel %vm2118, %v5472, %v5474
        %v5598 = vsel %vm2118, %v5474, %v5476
        %v5599 = vsel %vm2118, %v5476, %v5478
        %v5600 = vsel %vm2118, %v5478, %v5480
        %v5601 = vsel %vm2118, %v5482, %v5484
        %v5602 = vsel %vm2118, %v5484, %v5486
        %v5603 = vsel %vm2118, %v5486, %v5488
        %v5604 = vsel %vm2118, %v5488, %v5490
        %v5605 = vsel %vm2118, %v5490, %v5492
        %v5606 = vsel %vm2118, %v5492, %v5494
        %v5607 = vsel %vm2118, %v5496, %v5498
        %v5608 = vsel %vm2118, %v5498, %v5500
        %v5609 = vsel %vm2118, %v5500, %v5502
        %v5610 = vsel %vm2118, %v5502, %v5504
        %v5611 = vsel %vm2118, %v5504, %v5506
        %v5612 = vsel %vm2118, %v5506, %v5508
        %v5613 = vsel %vm2118, %v5510, %v5512
        %v5614 = vsel %vm2118, %v5512, %v5514
        %v5615 = vsel %vm2118, %v5514, %v5516
        %v5616 = vsel %vm2118, %v5516, %v5518
        %v5617 = vsel %vm2118, %v5518, %v5520
        %v5618 = vsel %vm2118, %v5520, %v5522
        %v5731 = vadd.f32 %v4961, %v5300
        %v5732 = vadd.f32 %v4962, %v5523
        %v5733 = vadd.f32 %v4963, %v5524
        %v5734 = vadd.f32 %v4964, %v5525
        %v5735 = vadd.f32 %v4965, %v5526
        %v5736 = vadd.f32 %v4966, %v5527
        %v5737 = vadd.f32 %v4967, %v5528
        %v5738 = vadd.f32 %v4968, %v5314
        %v5739 = vadd.f32 %v4969, %v5529
        %v5740 = vadd.f32 %v4970, %v5530
        %v5741 = vadd.f32 %v4971, %v5531
        %v5742 = vadd.f32 %v4972, %v5532
        %v5743 = vadd.f32 %v4973, %v5533
        %v5744 = vadd.f32 %v4974, %v5534
        %v5745 = vadd.f32 %v4975, %v5328
        %v5746 = vadd.f32 %v4976, %v5535
        %v5747 = vadd.f32 %v4977, %v5536
        %v5748 = vadd.f32 %v4978, %v5537
        %v5749 = vadd.f32 %v4979, %v5538
        %v5750 = vadd.f32 %v4980, %v5539
        %v5751 = vadd.f32 %v4981, %v5540
        %v5752 = vadd.f32 %v4982, %v5342
        %v5753 = vadd.f32 %v4983, %v5541
        %v5754 = vadd.f32 %v4984, %v5542
        %v5755 = vadd.f32 %v4985, %v5543
        %v5756 = vadd.f32 %v4986, %v5544
        %v5757 = vadd.f32 %v4987, %v5545
        %v5758 = vadd.f32 %v4988, %v5546
        %v5759 = vadd.f32 %v4989, %v5356
        %v5760 = vadd.f32 %v4990, %v5547
        %v5761 = vadd.f32 %v4991, %v5548
        %v5762 = vadd.f32 %v4992, %v5549
        %v5763 = vadd.f32 %v4993, %v5550
        %v5764 = vadd.f32 %v4994, %v5551
        %v5765 = vadd.f32 %v4995, %v5552
        %v5766 = vadd.f32 %v4996, %v5370
        %v5767 = vadd.f32 %v4997, %v5553
        %v5768 = vadd.f32 %v4998, %v5554
        %v5769 = vadd.f32 %v4999, %v5555
        %v5770 = vadd.f32 %v5000, %v5556
        %v5771 = vadd.f32 %v5001, %v5557
        %v5772 = vadd.f32 %v5002, %v5558
        %v5773 = vadd.f32 %v5003, %v5384
        %v5774 = vadd.f32 %v5004, %v5559
        %v5775 = vadd.f32 %v5005, %v5560
        %v5776 = vadd.f32 %v5006, %v5561
        %v5777 = vadd.f32 %v5007, %v5562
        %v5778 = vadd.f32 %v5008, %v5563
        %v5779 = vadd.f32 %v5009, %v5564
        %v5780 = vadd.f32 %v5010, %v5398
        %v5781 = vadd.f32 %v5011, %v5565
        %v5782 = vadd.f32 %v5012, %v5566
        %v5783 = vadd.f32 %v5013, %v5567
        %v5784 = vadd.f32 %v5014, %v5568
        %v5785 = vadd.f32 %v5015, %v5569
        %v5786 = vadd.f32 %v5016, %v5570
        %v5787 = vadd.f32 %v5017, %v5412
        %v5788 = vadd.f32 %v5018, %v5571
        %v5789 = vadd.f32 %v5019, %v5572
        %v5790 = vadd.f32 %v5020, %v5573
        %v5791 = vadd.f32 %v5021, %v5574
        %v5792 = vadd.f32 %v5022, %v5575
        %v5793 = vadd.f32 %v5023, %v5576
        %v5794 = vadd.f32 %v5024, %v5426
        %v5795 = vadd.f32 %v5025, %v5577
        %v5796 = vadd.f32 %v5026, %v5578
        %v5797 = vadd.f32 %v5027, %v5579
        %v5798 = vadd.f32 %v5028, %v5580
        %v5799 = vadd.f32 %v5029, %v5581
        %v5800 = vadd.f32 %v5030, %v5582
        %v5801 = vadd.f32 %v5031, %v5440
        %v5802 = vadd.f32 %v5032, %v5583
        %v5803 = vadd.f32 %v5033, %v5584
        %v5804 = vadd.f32 %v5034, %v5585
        %v5805 = vadd.f32 %v5035, %v5586
        %v5806 = vadd.f32 %v5036, %v5587
        %v5807 = vadd.f32 %v5037, %v5588
        %v5808 = vadd.f32 %v5038, %v5454
        %v5809 = vadd.f32 %v5039, %v5589
        %v5810 = vadd.f32 %v5040, %v5590
        %v5811 = vadd.f32 %v5041, %v5591
        %v5812 = vadd.f32 %v5042, %v5592
        %v5813 = vadd.f32 %v5043, %v5593
        %v5814 = vadd.f32 %v5044, %v5594
        %v5815 = vadd.f32 %v5045, %v5468
        %v5816 = vadd.f32 %v5046, %v5595
        %v5817 = vadd.f32 %v5047, %v5596
        %v5818 = vadd.f32 %v5048, %v5597
        %v5819 = vadd.f32 %v5049, %v5598
        %v5820 = vadd.f32 %v5050, %v5599
        %v5821 = vadd.f32 %v5051, %v5600
        %v5822 = vadd.f32 %v5052, %v5482
        %v5823 = vadd.f32 %v5053, %v5601
        %v5824 = vadd.f32 %v5054, %v5602
        %v5825 = vadd.f32 %v5055, %v5603
        %v5826 = vadd.f32 %v5056, %v5604
        %v5827 = vadd.f32 %v5057, %v5605
        %v5828 = vadd.f32 %v5058, %v5606
        %v5829 = vadd.f32 %v5059, %v5496
        %v5830 = vadd.f32 %v5060, %v5607
        %v5831 = vadd.f32 %v5061, %v5608
        %v5832 = vadd.f32 %v5062, %v5609
        %v5833 = vadd.f32 %v5063, %v5610
        %v5834 = vadd.f32 %v5064, %v5611
        %v5835 = vadd.f32 %v5065, %v5612
        %v5836 = vadd.f32 %v5066, %v5510
        %v5837 = vadd.f32 %v5067, %v5613
        %v5838 = vadd.f32 %v5068, %v5614
        %v5839 = vadd.f32 %v5069, %v5615
        %v5840 = vadd.f32 %v5070, %v5616
        %v5841 = vadd.f32 %v5071, %v5617
        %v5842 = vadd.f32 %v5072, %v5618
        %v5843 = vld [vmem:[%s3] sm:$0x7f]
        %v5845 = vlaneseq
        %v5846 = vshrl.u32 %v5845, 7
        %v5847 = vsub.s32 0, %v5846
        %v5848 = vrot.slane %v5843, %v5847
        %v5849 = vlaneseq
        %v5850 = vshrl.u32 %v5849, 7
        %v5851 = vsub.s32 1, %v5850
        %v5852 = vrot.slane %v5843, %v5851
        %v5853 = vlaneseq
        %v5854 = vshrl.u32 %v5853, 7
        %v5855 = vsub.s32 2, %v5854
        %v5856 = vrot.slane %v5843, %v5855
        %v5857 = vlaneseq
        %v5858 = vshrl.u32 %v5857, 7
        %v5859 = vsub.s32 3, %v5858
        %v5860 = vrot.slane %v5843, %v5859
        %v5861 = vlaneseq
        %v5862 = vshrl.u32 %v5861, 7
        %v5863 = vsub.s32 4, %v5862
        %v5864 = vrot.slane %v5843, %v5863
        %v5865 = vlaneseq
        %v5866 = vshrl.u32 %v5865, 7
        %v5867 = vsub.s32 5, %v5866
        %v5868 = vrot.slane %v5843, %v5867
        %v5869 = vlaneseq
        %v5870 = vshrl.u32 %v5869, 7
        %v5871 = vsub.s32 6, %v5870
        %v5872 = vrot.slane %v5843, %v5871
        %5992 = vrot.lane.b32.xlu0 %v4077, 29
        %v5993 = vpop.permute.xlu0 %5992
        %5994 = vrot.lane.b32.xlu0 %v4078, 29
        %v5995 = vpop.permute.xlu0 %5994
        %5996 = vrot.lane.b32.xlu0 %v4079, 29
        %v5997 = vpop.permute.xlu0 %5996
        %5998 = vrot.lane.b32.xlu0 %v4080, 29
        %v5999 = vpop.permute.xlu0 %5998
        %6000 = vrot.lane.b32.xlu0 %v4081, 29
        %v6001 = vpop.permute.xlu0 %6000
        %6002 = vrot.lane.b32.xlu0 %v4082, 29
        %v6003 = vpop.permute.xlu0 %6002
        %6004 = vrot.lane.b32.xlu0 %v4083, 29
        %v6005 = vpop.permute.xlu0 %6004
        %6006 = vrot.lane.b32.xlu0 %v4084, 29
        %v6007 = vpop.permute.xlu0 %6006
        %6008 = vrot.lane.b32.xlu0 %v4085, 29
        %v6009 = vpop.permute.xlu0 %6008
        %6010 = vrot.lane.b32.xlu0 %v4086, 29
        %v6011 = vpop.permute.xlu0 %6010
        %6012 = vrot.lane.b32.xlu0 %v4087, 29
        %v6013 = vpop.permute.xlu0 %6012
        %6014 = vrot.lane.b32.xlu0 %v4088, 29
        %v6015 = vpop.permute.xlu0 %6014
        %6016 = vrot.lane.b32.xlu0 %v4089, 29
        %v6017 = vpop.permute.xlu0 %6016
        %6018 = vrot.lane.b32.xlu0 %v4090, 29
        %v6019 = vpop.permute.xlu0 %6018
        %6020 = vrot.lane.b32.xlu0 %v4091, 29
        %v6021 = vpop.permute.xlu0 %6020
        %6022 = vrot.lane.b32.xlu0 %v4092, 29
        %v6023 = vpop.permute.xlu0 %6022
        %6024 = vrot.lane.b32.xlu0 %v4093, 29
        %v6025 = vpop.permute.xlu0 %6024
        %6026 = vrot.lane.b32.xlu0 %v4094, 29
        %v6027 = vpop.permute.xlu0 %6026
        %6028 = vrot.lane.b32.xlu0 %v4095, 29
        %v6029 = vpop.permute.xlu0 %6028
        %6030 = vrot.lane.b32.xlu0 %v4096, 29
        %v6031 = vpop.permute.xlu0 %6030
        %6032 = vrot.lane.b32.xlu0 %v4097, 29
        %v6033 = vpop.permute.xlu0 %6032
        %6034 = vrot.lane.b32.xlu0 %v4098, 29
        %v6035 = vpop.permute.xlu0 %6034
        %6036 = vrot.lane.b32.xlu0 %v4099, 29
        %v6037 = vpop.permute.xlu0 %6036
        %6038 = vrot.lane.b32.xlu0 %v4100, 29
        %v6039 = vpop.permute.xlu0 %6038
        %6040 = vrot.lane.b32.xlu0 %v4101, 29
        %v6041 = vpop.permute.xlu0 %6040
        %6042 = vrot.lane.b32.xlu0 %v4102, 29
        %v6043 = vpop.permute.xlu0 %6042
        %6044 = vrot.lane.b32.xlu0 %v4103, 29
        %v6045 = vpop.permute.xlu0 %6044
        %6046 = vrot.lane.b32.xlu0 %v4104, 29
        %v6047 = vpop.permute.xlu0 %6046
        %6048 = vrot.lane.b32.xlu0 %v4105, 29
        %v6049 = vpop.permute.xlu0 %6048
        %6050 = vrot.lane.b32.xlu0 %v4106, 29
        %v6051 = vpop.permute.xlu0 %6050
        %6052 = vrot.lane.b32.xlu0 %v4107, 29
        %v6053 = vpop.permute.xlu0 %6052
        %6054 = vrot.lane.b32.xlu0 %v4108, 29
        %v6055 = vpop.permute.xlu0 %6054
        %6056 = vrot.lane.b32.xlu0 %v4109, 29
        %v6057 = vpop.permute.xlu0 %6056
        %6058 = vrot.lane.b32.xlu0 %v4110, 29
        %v6059 = vpop.permute.xlu0 %6058
        %6060 = vrot.lane.b32.xlu0 %v4111, 29
        %v6061 = vpop.permute.xlu0 %6060
        %6062 = vrot.lane.b32.xlu0 %v4112, 29
        %v6063 = vpop.permute.xlu0 %6062
        %6064 = vrot.lane.b32.xlu0 %v4113, 29
        %v6065 = vpop.permute.xlu0 %6064
        %6066 = vrot.lane.b32.xlu0 %v4114, 29
        %v6067 = vpop.permute.xlu0 %6066
        %6068 = vrot.lane.b32.xlu0 %v4115, 29
        %v6069 = vpop.permute.xlu0 %6068
        %6070 = vrot.lane.b32.xlu0 %v4116, 29
        %v6071 = vpop.permute.xlu0 %6070
        %6072 = vrot.lane.b32.xlu0 %v4117, 29
        %v6073 = vpop.permute.xlu0 %6072
        %6074 = vrot.lane.b32.xlu0 %v4118, 29
        %v6075 = vpop.permute.xlu0 %6074
        %6076 = vrot.lane.b32.xlu0 %v4119, 29
        %v6077 = vpop.permute.xlu0 %6076
        %6078 = vrot.lane.b32.xlu0 %v4120, 29
        %v6079 = vpop.permute.xlu0 %6078
        %6080 = vrot.lane.b32.xlu0 %v4121, 29
        %v6081 = vpop.permute.xlu0 %6080
        %6082 = vrot.lane.b32.xlu0 %v4122, 29
        %v6083 = vpop.permute.xlu0 %6082
        %6084 = vrot.lane.b32.xlu0 %v4123, 29
        %v6085 = vpop.permute.xlu0 %6084
        %6086 = vrot.lane.b32.xlu0 %v4124, 29
        %v6087 = vpop.permute.xlu0 %6086
        %6088 = vrot.lane.b32.xlu0 %v4125, 29
        %v6089 = vpop.permute.xlu0 %6088
        %6090 = vrot.lane.b32.xlu0 %v4126, 29
        %v6091 = vpop.permute.xlu0 %6090
        %6092 = vrot.lane.b32.xlu0 %v4127, 29
        %v6093 = vpop.permute.xlu0 %6092
        %6094 = vrot.lane.b32.xlu0 %v4128, 29
        %v6095 = vpop.permute.xlu0 %6094
        %6096 = vrot.lane.b32.xlu0 %v4129, 29
        %v6097 = vpop.permute.xlu0 %6096
        %6098 = vrot.lane.b32.xlu0 %v4130, 29
        %v6099 = vpop.permute.xlu0 %6098
        %6100 = vrot.lane.b32.xlu0 %v4131, 29
        %v6101 = vpop.permute.xlu0 %6100
        %6102 = vrot.lane.b32.xlu0 %v4132, 29
        %v6103 = vpop.permute.xlu0 %6102
        %6104 = vrot.lane.b32.xlu0 %v4133, 29
        %v6105 = vpop.permute.xlu0 %6104
        %6106 = vrot.lane.b32.xlu0 %v4134, 29
        %v6107 = vpop.permute.xlu0 %6106
        %6108 = vrot.lane.b32.xlu0 %v4135, 29
        %v6109 = vpop.permute.xlu0 %6108
        %6110 = vrot.lane.b32.xlu0 %v4136, 29
        %v6111 = vpop.permute.xlu0 %6110
        %6112 = vrot.lane.b32.xlu0 %v4137, 29
        %v6113 = vpop.permute.xlu0 %6112
        %6114 = vrot.lane.b32.xlu0 %v4138, 29
        %v6115 = vpop.permute.xlu0 %6114
        %6116 = vrot.lane.b32.xlu0 %v4139, 29
        %v6117 = vpop.permute.xlu0 %6116
        %6118 = vrot.lane.b32.xlu0 %v4140, 29
        %v6119 = vpop.permute.xlu0 %6118
        %6120 = vrot.lane.b32.xlu0 %v4141, 29
        %v6121 = vpop.permute.xlu0 %6120
        %6122 = vrot.lane.b32.xlu0 %v4142, 29
        %v6123 = vpop.permute.xlu0 %6122
        %6124 = vrot.lane.b32.xlu0 %v4143, 29
        %v6125 = vpop.permute.xlu0 %6124
        %6126 = vrot.lane.b32.xlu0 %v4144, 29
        %v6127 = vpop.permute.xlu0 %6126
        %6128 = vrot.lane.b32.xlu0 %v4145, 29
        %v6129 = vpop.permute.xlu0 %6128
        %6130 = vrot.lane.b32.xlu0 %v4146, 29
        %v6131 = vpop.permute.xlu0 %6130
        %6132 = vrot.lane.b32.xlu0 %v4147, 29
        %v6133 = vpop.permute.xlu0 %6132
        %6134 = vrot.lane.b32.xlu0 %v4148, 29
        %v6135 = vpop.permute.xlu0 %6134
        %6136 = vrot.lane.b32.xlu0 %v4149, 29
        %v6137 = vpop.permute.xlu0 %6136
        %6138 = vrot.lane.b32.xlu0 %v4150, 29
        %v6139 = vpop.permute.xlu0 %6138
        %6140 = vrot.lane.b32.xlu0 %v4151, 29
        %v6141 = vpop.permute.xlu0 %6140
        %6142 = vrot.lane.b32.xlu0 %v4152, 29
        %v6143 = vpop.permute.xlu0 %6142
        %6144 = vrot.lane.b32.xlu0 %v4153, 29
        %v6145 = vpop.permute.xlu0 %6144
        %6146 = vrot.lane.b32.xlu0 %v4154, 29
        %v6147 = vpop.permute.xlu0 %6146
        %6148 = vrot.lane.b32.xlu0 %v4155, 29
        %v6149 = vpop.permute.xlu0 %6148
        %6150 = vrot.lane.b32.xlu0 %v4156, 29
        %v6151 = vpop.permute.xlu0 %6150
        %6152 = vrot.lane.b32.xlu0 %v4157, 29
        %v6153 = vpop.permute.xlu0 %6152
        %6154 = vrot.lane.b32.xlu0 %v4158, 29
        %v6155 = vpop.permute.xlu0 %6154
        %6156 = vrot.lane.b32.xlu0 %v4159, 29
        %v6157 = vpop.permute.xlu0 %6156
        %6158 = vrot.lane.b32.xlu0 %v4160, 29
        %v6159 = vpop.permute.xlu0 %6158
        %6160 = vrot.lane.b32.xlu0 %v4161, 29
        %v6161 = vpop.permute.xlu0 %6160
        %6162 = vrot.lane.b32.xlu0 %v4162, 29
        %v6163 = vpop.permute.xlu0 %6162
        %6164 = vrot.lane.b32.xlu0 %v4163, 29
        %v6165 = vpop.permute.xlu0 %6164
        %6166 = vrot.lane.b32.xlu0 %v4164, 29
        %v6167 = vpop.permute.xlu0 %6166
        %6168 = vrot.lane.b32.xlu0 %v4165, 29
        %v6169 = vpop.permute.xlu0 %6168
        %6170 = vrot.lane.b32.xlu0 %v4166, 29
        %v6171 = vpop.permute.xlu0 %6170
        %6172 = vrot.lane.b32.xlu0 %v4167, 29
        %v6173 = vpop.permute.xlu0 %6172
        %6174 = vrot.lane.b32.xlu0 %v4168, 29
        %v6175 = vpop.permute.xlu0 %6174
        %6176 = vrot.lane.b32.xlu0 %v4169, 29
        %v6177 = vpop.permute.xlu0 %6176
        %6178 = vrot.lane.b32.xlu0 %v4170, 29
        %v6179 = vpop.permute.xlu0 %6178
        %6180 = vrot.lane.b32.xlu0 %v4171, 29
        %v6181 = vpop.permute.xlu0 %6180
        %6182 = vrot.lane.b32.xlu0 %v4172, 29
        %v6183 = vpop.permute.xlu0 %6182
        %6184 = vrot.lane.b32.xlu0 %v4173, 29
        %v6185 = vpop.permute.xlu0 %6184
        %6186 = vrot.lane.b32.xlu0 %v4174, 29
        %v6187 = vpop.permute.xlu0 %6186
        %6188 = vrot.lane.b32.xlu0 %v4175, 29
        %v6189 = vpop.permute.xlu0 %6188
        %6190 = vrot.lane.b32.xlu0 %v4176, 29
        %v6191 = vpop.permute.xlu0 %6190
        %6192 = vrot.lane.b32.xlu0 %v4177, 29
        %v6193 = vpop.permute.xlu0 %6192
        %6194 = vrot.lane.b32.xlu0 %v4178, 29
        %v6195 = vpop.permute.xlu0 %6194
        %6196 = vrot.lane.b32.xlu0 %v4179, 29
        %v6197 = vpop.permute.xlu0 %6196
        %6198 = vrot.lane.b32.xlu0 %v4180, 29
        %v6199 = vpop.permute.xlu0 %6198
        %6200 = vrot.lane.b32.xlu0 %v4181, 29
        %v6201 = vpop.permute.xlu0 %6200
        %6202 = vrot.lane.b32.xlu0 %v4182, 29
        %v6203 = vpop.permute.xlu0 %6202
        %6204 = vrot.lane.b32.xlu0 %v4183, 29
        %v6205 = vpop.permute.xlu0 %6204
        %6206 = vrot.lane.b32.xlu0 %v4184, 29
        %v6207 = vpop.permute.xlu0 %6206
        %6208 = vrot.lane.b32.xlu0 %v4185, 29
        %v6209 = vpop.permute.xlu0 %6208
        %6210 = vrot.lane.b32.xlu0 %v4186, 29
        %v6211 = vpop.permute.xlu0 %6210
        %6212 = vrot.lane.b32.xlu0 %v4187, 29
        %v6213 = vpop.permute.xlu0 %6212
        %6214 = vrot.lane.b32.xlu0 %v4188, 29
        %v6215 = vpop.permute.xlu0 %6214
        %vm6216 = vcmask 236544
        %v6217 = vsel %vm6216, %v5993, %v5995
        %v6218 = vsel %vm6216, %v5995, %v5997
        %v6219 = vsel %vm6216, %v5997, %v5999
        %v6220 = vsel %vm6216, %v5999, %v6001
        %v6221 = vsel %vm6216, %v6001, %v6003
        %v6222 = vsel %vm6216, %v6003, %v6005
        %v6223 = vsel %vm6216, %v6007, %v6009
        %v6224 = vsel %vm6216, %v6009, %v6011
        %v6225 = vsel %vm6216, %v6011, %v6013
        %v6226 = vsel %vm6216, %v6013, %v6015
        %v6227 = vsel %vm6216, %v6015, %v6017
        %v6228 = vsel %vm6216, %v6017, %v6019
        %v6229 = vsel %vm6216, %v6021, %v6023
        %v6230 = vsel %vm6216, %v6023, %v6025
        %v6231 = vsel %vm6216, %v6025, %v6027
        %v6232 = vsel %vm6216, %v6027, %v6029
        %v6233 = vsel %vm6216, %v6029, %v6031
        %v6234 = vsel %vm6216, %v6031, %v6033
        %v6235 = vsel %vm6216, %v6035, %v6037
        %v6236 = vsel %vm6216, %v6037, %v6039
        %v6237 = vsel %vm6216, %v6039, %v6041
        %v6238 = vsel %vm6216, %v6041, %v6043
        %v6239 = vsel %vm6216, %v6043, %v6045
        %v6240 = vsel %vm6216, %v6045, %v6047
        %v6241 = vsel %vm6216, %v6049, %v6051
        %v6242 = vsel %vm6216, %v6051, %v6053
        %v6243 = vsel %vm6216, %v6053, %v6055
        %v6244 = vsel %vm6216, %v6055, %v6057
        %v6245 = vsel %vm6216, %v6057, %v6059
        %v6246 = vsel %vm6216, %v6059, %v6061
        %v6247 = vsel %vm6216, %v6063, %v6065
        %v6248 = vsel %vm6216, %v6065, %v6067
        %v6249 = vsel %vm6216, %v6067, %v6069
        %v6250 = vsel %vm6216, %v6069, %v6071
        %v6251 = vsel %vm6216, %v6071, %v6073
        %v6252 = vsel %vm6216, %v6073, %v6075
        %v6253 = vsel %vm6216, %v6077, %v6079
        %v6254 = vsel %vm6216, %v6079, %v6081
        %v6255 = vsel %vm6216, %v6081, %v6083
        %v6256 = vsel %vm6216, %v6083, %v6085
        %v6257 = vsel %vm6216, %v6085, %v6087
        %v6258 = vsel %vm6216, %v6087, %v6089
        %v6259 = vsel %vm6216, %v6091, %v6093
        %v6260 = vsel %vm6216, %v6093, %v6095
        %v6261 = vsel %vm6216, %v6095, %v6097
        %v6262 = vsel %vm6216, %v6097, %v6099
        %v6263 = vsel %vm6216, %v6099, %v6101
        %v6264 = vsel %vm6216, %v6101, %v6103
        %v6265 = vsel %vm6216, %v6105, %v6107
        %v6266 = vsel %vm6216, %v6107, %v6109
        %v6267 = vsel %vm6216, %v6109, %v6111
        %v6268 = vsel %vm6216, %v6111, %v6113
        %v6269 = vsel %vm6216, %v6113, %v6115
        %v6270 = vsel %vm6216, %v6115, %v6117
        %v6271 = vsel %vm6216, %v6119, %v6121
        %v6272 = vsel %vm6216, %v6121, %v6123
        %v6273 = vsel %vm6216, %v6123, %v6125
        %v6274 = vsel %vm6216, %v6125, %v6127
        %v6275 = vsel %vm6216, %v6127, %v6129
        %v6276 = vsel %vm6216, %v6129, %v6131
        %v6277 = vsel %vm6216, %v6133, %v6135
        %v6278 = vsel %vm6216, %v6135, %v6137
        %v6279 = vsel %vm6216, %v6137, %v6139
        %v6280 = vsel %vm6216, %v6139, %v6141
        %v6281 = vsel %vm6216, %v6141, %v6143
        %v6282 = vsel %vm6216, %v6143, %v6145
        %v6283 = vsel %vm6216, %v6147, %v6149
        %v6284 = vsel %vm6216, %v6149, %v6151
        %v6285 = vsel %vm6216, %v6151, %v6153
        %v6286 = vsel %vm6216, %v6153, %v6155
        %v6287 = vsel %vm6216, %v6155, %v6157
        %v6288 = vsel %vm6216, %v6157, %v6159
        %v6289 = vsel %vm6216, %v6161, %v6163
        %v6290 = vsel %vm6216, %v6163, %v6165
        %v6291 = vsel %vm6216, %v6165, %v6167
        %v6292 = vsel %vm6216, %v6167, %v6169
        %v6293 = vsel %vm6216, %v6169, %v6171
        %v6294 = vsel %vm6216, %v6171, %v6173
        %v6295 = vsel %vm6216, %v6175, %v6177
        %v6296 = vsel %vm6216, %v6177, %v6179
        %v6297 = vsel %vm6216, %v6179, %v6181
        %v6298 = vsel %vm6216, %v6181, %v6183
        %v6299 = vsel %vm6216, %v6183, %v6185
        %v6300 = vsel %vm6216, %v6185, %v6187
        %v6301 = vsel %vm6216, %v6189, %v6191
        %v6302 = vsel %vm6216, %v6191, %v6193
        %v6303 = vsel %vm6216, %v6193, %v6195
        %v6304 = vsel %vm6216, %v6195, %v6197
        %v6305 = vsel %vm6216, %v6197, %v6199
        %v6306 = vsel %vm6216, %v6199, %v6201
        %v6307 = vsel %vm6216, %v6203, %v6205
        %v6308 = vsel %vm6216, %v6205, %v6207
        %v6309 = vsel %vm6216, %v6207, %v6209
        %v6310 = vsel %vm6216, %v6209, %v6211
        %v6311 = vsel %vm6216, %v6211, %v6213
        %v6312 = vsel %vm6216, %v6213, %v6215
        %v6425 = vmul.f32 %v5848, %v6217
        %v6426 = vmul.f32 %v5852, %v6218
        %v6427 = vmul.f32 %v5856, %v6219
        %v6428 = vmul.f32 %v5860, %v6220
        %v6429 = vmul.f32 %v5864, %v6221
        %v6430 = vmul.f32 %v5868, %v6222
        %v6431 = vmul.f32 %v5872, %v6005
        %v6432 = vmul.f32 %v5848, %v6223
        %v6433 = vmul.f32 %v5852, %v6224
        %v6434 = vmul.f32 %v5856, %v6225
        %v6435 = vmul.f32 %v5860, %v6226
        %v6436 = vmul.f32 %v5864, %v6227
        %v6437 = vmul.f32 %v5868, %v6228
        %v6438 = vmul.f32 %v5872, %v6019
        %v6439 = vmul.f32 %v5848, %v6229
        %v6440 = vmul.f32 %v5852, %v6230
        %v6441 = vmul.f32 %v5856, %v6231
        %v6442 = vmul.f32 %v5860, %v6232
        %v6443 = vmul.f32 %v5864, %v6233
        %v6444 = vmul.f32 %v5868, %v6234
        %v6445 = vmul.f32 %v5872, %v6033
        %v6446 = vmul.f32 %v5848, %v6235
        %v6447 = vmul.f32 %v5852, %v6236
        %v6448 = vmul.f32 %v5856, %v6237
        %v6449 = vmul.f32 %v5860, %v6238
        %v6450 = vmul.f32 %v5864, %v6239
        %v6451 = vmul.f32 %v5868, %v6240
        %v6452 = vmul.f32 %v5872, %v6047
        %v6453 = vmul.f32 %v5848, %v6241
        %v6454 = vmul.f32 %v5852, %v6242
        %v6455 = vmul.f32 %v5856, %v6243
        %v6456 = vmul.f32 %v5860, %v6244
        %v6457 = vmul.f32 %v5864, %v6245
        %v6458 = vmul.f32 %v5868, %v6246
        %v6459 = vmul.f32 %v5872, %v6061
        %v6460 = vmul.f32 %v5848, %v6247
        %v6461 = vmul.f32 %v5852, %v6248
        %v6462 = vmul.f32 %v5856, %v6249
        %v6463 = vmul.f32 %v5860, %v6250
        %v6464 = vmul.f32 %v5864, %v6251
        %v6465 = vmul.f32 %v5868, %v6252
        %v6466 = vmul.f32 %v5872, %v6075
        %v6467 = vmul.f32 %v5848, %v6253
        %v6468 = vmul.f32 %v5852, %v6254
        %v6469 = vmul.f32 %v5856, %v6255
        %v6470 = vmul.f32 %v5860, %v6256
        %v6471 = vmul.f32 %v5864, %v6257
        %v6472 = vmul.f32 %v5868, %v6258
        %v6473 = vmul.f32 %v5872, %v6089
        %v6474 = vmul.f32 %v5848, %v6259
        %v6475 = vmul.f32 %v5852, %v6260
        %v6476 = vmul.f32 %v5856, %v6261
        %v6477 = vmul.f32 %v5860, %v6262
        %v6478 = vmul.f32 %v5864, %v6263
        %v6479 = vmul.f32 %v5868, %v6264
        %v6480 = vmul.f32 %v5872, %v6103
        %v6481 = vmul.f32 %v5848, %v6265
        %v6482 = vmul.f32 %v5852, %v6266
        %v6483 = vmul.f32 %v5856, %v6267
        %v6484 = vmul.f32 %v5860, %v6268
        %v6485 = vmul.f32 %v5864, %v6269
        %v6486 = vmul.f32 %v5868, %v6270
        %v6487 = vmul.f32 %v5872, %v6117
        %v6488 = vmul.f32 %v5848, %v6271
        %v6489 = vmul.f32 %v5852, %v6272
        %v6490 = vmul.f32 %v5856, %v6273
        %v6491 = vmul.f32 %v5860, %v6274
        %v6492 = vmul.f32 %v5864, %v6275
        %v6493 = vmul.f32 %v5868, %v6276
        %v6494 = vmul.f32 %v5872, %v6131
        %v6495 = vmul.f32 %v5848, %v6277
        %v6496 = vmul.f32 %v5852, %v6278
        %v6497 = vmul.f32 %v5856, %v6279
        %v6498 = vmul.f32 %v5860, %v6280
        %v6499 = vmul.f32 %v5864, %v6281
        %v6500 = vmul.f32 %v5868, %v6282
        %v6501 = vmul.f32 %v5872, %v6145
        %v6502 = vmul.f32 %v5848, %v6283
        %v6503 = vmul.f32 %v5852, %v6284
        %v6504 = vmul.f32 %v5856, %v6285
        %v6505 = vmul.f32 %v5860, %v6286
        %v6506 = vmul.f32 %v5864, %v6287
        %v6507 = vmul.f32 %v5868, %v6288
        %v6508 = vmul.f32 %v5872, %v6159
        %v6509 = vmul.f32 %v5848, %v6289
        %v6510 = vmul.f32 %v5852, %v6290
        %v6511 = vmul.f32 %v5856, %v6291
        %v6512 = vmul.f32 %v5860, %v6292
        %v6513 = vmul.f32 %v5864, %v6293
        %v6514 = vmul.f32 %v5868, %v6294
        %v6515 = vmul.f32 %v5872, %v6173
        %v6516 = vmul.f32 %v5848, %v6295
        %v6517 = vmul.f32 %v5852, %v6296
        %v6518 = vmul.f32 %v5856, %v6297
        %v6519 = vmul.f32 %v5860, %v6298
        %v6520 = vmul.f32 %v5864, %v6299
        %v6521 = vmul.f32 %v5868, %v6300
        %v6522 = vmul.f32 %v5872, %v6187
        %v6523 = vmul.f32 %v5848, %v6301
        %v6524 = vmul.f32 %v5852, %v6302
        %v6525 = vmul.f32 %v5856, %v6303
        %v6526 = vmul.f32 %v5860, %v6304
        %v6527 = vmul.f32 %v5864, %v6305
        %v6528 = vmul.f32 %v5868, %v6306
        %v6529 = vmul.f32 %v5872, %v6201
        %v6530 = vmul.f32 %v5848, %v6307
        %v6531 = vmul.f32 %v5852, %v6308
        %v6532 = vmul.f32 %v5856, %v6309
        %v6533 = vmul.f32 %v5860, %v6310
        %v6534 = vmul.f32 %v5864, %v6311
        %v6535 = vmul.f32 %v5868, %v6312
        %v6536 = vmul.f32 %v5872, %v6215
        %6649 = vrot.lane.b32.xlu0 %v6425, 100
        %v6650 = vpop.permute.xlu0 %6649
        %6651 = vrot.lane.b32.xlu0 %v6426, 100
        %v6652 = vpop.permute.xlu0 %6651
        %6653 = vrot.lane.b32.xlu0 %v6427, 100
        %v6654 = vpop.permute.xlu0 %6653
        %6655 = vrot.lane.b32.xlu0 %v6428, 100
        %v6656 = vpop.permute.xlu0 %6655
        %6657 = vrot.lane.b32.xlu0 %v6429, 100
        %v6658 = vpop.permute.xlu0 %6657
        %6659 = vrot.lane.b32.xlu0 %v6430, 100
        %v6660 = vpop.permute.xlu0 %6659
        %6661 = vrot.lane.b32.xlu0 %v6431, 100
        %v6662 = vpop.permute.xlu0 %6661
        %6663 = vrot.lane.b32.xlu0 %v6432, 100
        %v6664 = vpop.permute.xlu0 %6663
        %6665 = vrot.lane.b32.xlu0 %v6433, 100
        %v6666 = vpop.permute.xlu0 %6665
        %6667 = vrot.lane.b32.xlu0 %v6434, 100
        %v6668 = vpop.permute.xlu0 %6667
        %6669 = vrot.lane.b32.xlu0 %v6435, 100
        %v6670 = vpop.permute.xlu0 %6669
        %6671 = vrot.lane.b32.xlu0 %v6436, 100
        %v6672 = vpop.permute.xlu0 %6671
        %6673 = vrot.lane.b32.xlu0 %v6437, 100
        %v6674 = vpop.permute.xlu0 %6673
        %6675 = vrot.lane.b32.xlu0 %v6438, 100
        %v6676 = vpop.permute.xlu0 %6675
        %6677 = vrot.lane.b32.xlu0 %v6439, 100
        %v6678 = vpop.permute.xlu0 %6677
        %6679 = vrot.lane.b32.xlu0 %v6440, 100
        %v6680 = vpop.permute.xlu0 %6679
        %6681 = vrot.lane.b32.xlu0 %v6441, 100
        %v6682 = vpop.permute.xlu0 %6681
        %6683 = vrot.lane.b32.xlu0 %v6442, 100
        %v6684 = vpop.permute.xlu0 %6683
        %6685 = vrot.lane.b32.xlu0 %v6443, 100
        %v6686 = vpop.permute.xlu0 %6685
        %6687 = vrot.lane.b32.xlu0 %v6444, 100
        %v6688 = vpop.permute.xlu0 %6687
        %6689 = vrot.lane.b32.xlu0 %v6445, 100
        %v6690 = vpop.permute.xlu0 %6689
        %6691 = vrot.lane.b32.xlu0 %v6446, 100
        %v6692 = vpop.permute.xlu0 %6691
        %6693 = vrot.lane.b32.xlu0 %v6447, 100
        %v6694 = vpop.permute.xlu0 %6693
        %6695 = vrot.lane.b32.xlu0 %v6448, 100
        %v6696 = vpop.permute.xlu0 %6695
        %6697 = vrot.lane.b32.xlu0 %v6449, 100
        %v6698 = vpop.permute.xlu0 %6697
        %6699 = vrot.lane.b32.xlu0 %v6450, 100
        %v6700 = vpop.permute.xlu0 %6699
        %6701 = vrot.lane.b32.xlu0 %v6451, 100
        %v6702 = vpop.permute.xlu0 %6701
        %6703 = vrot.lane.b32.xlu0 %v6452, 100
        %v6704 = vpop.permute.xlu0 %6703
        %6705 = vrot.lane.b32.xlu0 %v6453, 100
        %v6706 = vpop.permute.xlu0 %6705
        %6707 = vrot.lane.b32.xlu0 %v6454, 100
        %v6708 = vpop.permute.xlu0 %6707
        %6709 = vrot.lane.b32.xlu0 %v6455, 100
        %v6710 = vpop.permute.xlu0 %6709
        %6711 = vrot.lane.b32.xlu0 %v6456, 100
        %v6712 = vpop.permute.xlu0 %6711
        %6713 = vrot.lane.b32.xlu0 %v6457, 100
        %v6714 = vpop.permute.xlu0 %6713
        %6715 = vrot.lane.b32.xlu0 %v6458, 100
        %v6716 = vpop.permute.xlu0 %6715
        %6717 = vrot.lane.b32.xlu0 %v6459, 100
        %v6718 = vpop.permute.xlu0 %6717
        %6719 = vrot.lane.b32.xlu0 %v6460, 100
        %v6720 = vpop.permute.xlu0 %6719
        %6721 = vrot.lane.b32.xlu0 %v6461, 100
        %v6722 = vpop.permute.xlu0 %6721
        %6723 = vrot.lane.b32.xlu0 %v6462, 100
        %v6724 = vpop.permute.xlu0 %6723
        %6725 = vrot.lane.b32.xlu0 %v6463, 100
        %v6726 = vpop.permute.xlu0 %6725
        %6727 = vrot.lane.b32.xlu0 %v6464, 100
        %v6728 = vpop.permute.xlu0 %6727
        %6729 = vrot.lane.b32.xlu0 %v6465, 100
        %v6730 = vpop.permute.xlu0 %6729
        %6731 = vrot.lane.b32.xlu0 %v6466, 100
        %v6732 = vpop.permute.xlu0 %6731
        %6733 = vrot.lane.b32.xlu0 %v6467, 100
        %v6734 = vpop.permute.xlu0 %6733
        %6735 = vrot.lane.b32.xlu0 %v6468, 100
        %v6736 = vpop.permute.xlu0 %6735
        %6737 = vrot.lane.b32.xlu0 %v6469, 100
        %v6738 = vpop.permute.xlu0 %6737
        %6739 = vrot.lane.b32.xlu0 %v6470, 100
        %v6740 = vpop.permute.xlu0 %6739
        %6741 = vrot.lane.b32.xlu0 %v6471, 100
        %v6742 = vpop.permute.xlu0 %6741
        %6743 = vrot.lane.b32.xlu0 %v6472, 100
        %v6744 = vpop.permute.xlu0 %6743
        %6745 = vrot.lane.b32.xlu0 %v6473, 100
        %v6746 = vpop.permute.xlu0 %6745
        %6747 = vrot.lane.b32.xlu0 %v6474, 100
        %v6748 = vpop.permute.xlu0 %6747
        %6749 = vrot.lane.b32.xlu0 %v6475, 100
        %v6750 = vpop.permute.xlu0 %6749
        %6751 = vrot.lane.b32.xlu0 %v6476, 100
        %v6752 = vpop.permute.xlu0 %6751
        %6753 = vrot.lane.b32.xlu0 %v6477, 100
        %v6754 = vpop.permute.xlu0 %6753
        %6755 = vrot.lane.b32.xlu0 %v6478, 100
        %v6756 = vpop.permute.xlu0 %6755
        %6757 = vrot.lane.b32.xlu0 %v6479, 100
        %v6758 = vpop.permute.xlu0 %6757
        %6759 = vrot.lane.b32.xlu0 %v6480, 100
        %v6760 = vpop.permute.xlu0 %6759
        %6761 = vrot.lane.b32.xlu0 %v6481, 100
        %v6762 = vpop.permute.xlu0 %6761
        %6763 = vrot.lane.b32.xlu0 %v6482, 100
        %v6764 = vpop.permute.xlu0 %6763
        %6765 = vrot.lane.b32.xlu0 %v6483, 100
        %v6766 = vpop.permute.xlu0 %6765
        %6767 = vrot.lane.b32.xlu0 %v6484, 100
        %v6768 = vpop.permute.xlu0 %6767
        %6769 = vrot.lane.b32.xlu0 %v6485, 100
        %v6770 = vpop.permute.xlu0 %6769
        %6771 = vrot.lane.b32.xlu0 %v6486, 100
        %v6772 = vpop.permute.xlu0 %6771
        %6773 = vrot.lane.b32.xlu0 %v6487, 100
        %v6774 = vpop.permute.xlu0 %6773
        %6775 = vrot.lane.b32.xlu0 %v6488, 100
        %v6776 = vpop.permute.xlu0 %6775
        %6777 = vrot.lane.b32.xlu0 %v6489, 100
        %v6778 = vpop.permute.xlu0 %6777
        %6779 = vrot.lane.b32.xlu0 %v6490, 100
        %v6780 = vpop.permute.xlu0 %6779
        %6781 = vrot.lane.b32.xlu0 %v6491, 100
        %v6782 = vpop.permute.xlu0 %6781
        %6783 = vrot.lane.b32.xlu0 %v6492, 100
        %v6784 = vpop.permute.xlu0 %6783
        %6785 = vrot.lane.b32.xlu0 %v6493, 100
        %v6786 = vpop.permute.xlu0 %6785
        %6787 = vrot.lane.b32.xlu0 %v6494, 100
        %v6788 = vpop.permute.xlu0 %6787
        %6789 = vrot.lane.b32.xlu0 %v6495, 100
        %v6790 = vpop.permute.xlu0 %6789
        %6791 = vrot.lane.b32.xlu0 %v6496, 100
        %v6792 = vpop.permute.xlu0 %6791
        %6793 = vrot.lane.b32.xlu0 %v6497, 100
        %v6794 = vpop.permute.xlu0 %6793
        %6795 = vrot.lane.b32.xlu0 %v6498, 100
        %v6796 = vpop.permute.xlu0 %6795
        %6797 = vrot.lane.b32.xlu0 %v6499, 100
        %v6798 = vpop.permute.xlu0 %6797
        %6799 = vrot.lane.b32.xlu0 %v6500, 100
        %v6800 = vpop.permute.xlu0 %6799
        %6801 = vrot.lane.b32.xlu0 %v6501, 100
        %v6802 = vpop.permute.xlu0 %6801
        %6803 = vrot.lane.b32.xlu0 %v6502, 100
        %v6804 = vpop.permute.xlu0 %6803
        %6805 = vrot.lane.b32.xlu0 %v6503, 100
        %v6806 = vpop.permute.xlu0 %6805
        %6807 = vrot.lane.b32.xlu0 %v6504, 100
        %v6808 = vpop.permute.xlu0 %6807
        %6809 = vrot.lane.b32.xlu0 %v6505, 100
        %v6810 = vpop.permute.xlu0 %6809
        %6811 = vrot.lane.b32.xlu0 %v6506, 100
        %v6812 = vpop.permute.xlu0 %6811
        %6813 = vrot.lane.b32.xlu0 %v6507, 100
        %v6814 = vpop.permute.xlu0 %6813
        %6815 = vrot.lane.b32.xlu0 %v6508, 100
        %v6816 = vpop.permute.xlu0 %6815
        %6817 = vrot.lane.b32.xlu0 %v6509, 100
        %v6818 = vpop.permute.xlu0 %6817
        %6819 = vrot.lane.b32.xlu0 %v6510, 100
        %v6820 = vpop.permute.xlu0 %6819
        %6821 = vrot.lane.b32.xlu0 %v6511, 100
        %v6822 = vpop.permute.xlu0 %6821
        %6823 = vrot.lane.b32.xlu0 %v6512, 100
        %v6824 = vpop.permute.xlu0 %6823
        %6825 = vrot.lane.b32.xlu0 %v6513, 100
        %v6826 = vpop.permute.xlu0 %6825
        %6827 = vrot.lane.b32.xlu0 %v6514, 100
        %v6828 = vpop.permute.xlu0 %6827
        %6829 = vrot.lane.b32.xlu0 %v6515, 100
        %v6830 = vpop.permute.xlu0 %6829
        %6831 = vrot.lane.b32.xlu0 %v6516, 100
        %v6832 = vpop.permute.xlu0 %6831
        %6833 = vrot.lane.b32.xlu0 %v6517, 100
        %v6834 = vpop.permute.xlu0 %6833
        %6835 = vrot.lane.b32.xlu0 %v6518, 100
        %v6836 = vpop.permute.xlu0 %6835
        %6837 = vrot.lane.b32.xlu0 %v6519, 100
        %v6838 = vpop.permute.xlu0 %6837
        %6839 = vrot.lane.b32.xlu0 %v6520, 100
        %v6840 = vpop.permute.xlu0 %6839
        %6841 = vrot.lane.b32.xlu0 %v6521, 100
        %v6842 = vpop.permute.xlu0 %6841
        %6843 = vrot.lane.b32.xlu0 %v6522, 100
        %v6844 = vpop.permute.xlu0 %6843
        %6845 = vrot.lane.b32.xlu0 %v6523, 100
        %v6846 = vpop.permute.xlu0 %6845
        %6847 = vrot.lane.b32.xlu0 %v6524, 100
        %v6848 = vpop.permute.xlu0 %6847
        %6849 = vrot.lane.b32.xlu0 %v6525, 100
        %v6850 = vpop.permute.xlu0 %6849
        %6851 = vrot.lane.b32.xlu0 %v6526, 100
        %v6852 = vpop.permute.xlu0 %6851
        %6853 = vrot.lane.b32.xlu0 %v6527, 100
        %v6854 = vpop.permute.xlu0 %6853
        %6855 = vrot.lane.b32.xlu0 %v6528, 100
        %v6856 = vpop.permute.xlu0 %6855
        %6857 = vrot.lane.b32.xlu0 %v6529, 100
        %v6858 = vpop.permute.xlu0 %6857
        %6859 = vrot.lane.b32.xlu0 %v6530, 100
        %v6860 = vpop.permute.xlu0 %6859
        %6861 = vrot.lane.b32.xlu0 %v6531, 100
        %v6862 = vpop.permute.xlu0 %6861
        %6863 = vrot.lane.b32.xlu0 %v6532, 100
        %v6864 = vpop.permute.xlu0 %6863
        %6865 = vrot.lane.b32.xlu0 %v6533, 100
        %v6866 = vpop.permute.xlu0 %6865
        %6867 = vrot.lane.b32.xlu0 %v6534, 100
        %v6868 = vpop.permute.xlu0 %6867
        %6869 = vrot.lane.b32.xlu0 %v6535, 100
        %v6870 = vpop.permute.xlu0 %6869
        %6871 = vrot.lane.b32.xlu0 %v6536, 100
        %v6872 = vpop.permute.xlu0 %6871
        %v6873 = vsel %vm1347, %v6650, %v6652
        %v6874 = vsel %vm1347, %v6652, %v6654
        %v6875 = vsel %vm1347, %v6654, %v6656
        %v6876 = vsel %vm1347, %v6656, %v6658
        %v6877 = vsel %vm1347, %v6658, %v6660
        %v6878 = vsel %vm1347, %v6660, %v6662
        %v6879 = vsel %vm1347, %v6664, %v6666
        %v6880 = vsel %vm1347, %v6666, %v6668
        %v6881 = vsel %vm1347, %v6668, %v6670
        %v6882 = vsel %vm1347, %v6670, %v6672
        %v6883 = vsel %vm1347, %v6672, %v6674
        %v6884 = vsel %vm1347, %v6674, %v6676
        %v6885 = vsel %vm1347, %v6678, %v6680
        %v6886 = vsel %vm1347, %v6680, %v6682
        %v6887 = vsel %vm1347, %v6682, %v6684
        %v6888 = vsel %vm1347, %v6684, %v6686
        %v6889 = vsel %vm1347, %v6686, %v6688
        %v6890 = vsel %vm1347, %v6688, %v6690
        %v6891 = vsel %vm1347, %v6692, %v6694
        %v6892 = vsel %vm1347, %v6694, %v6696
        %v6893 = vsel %vm1347, %v6696, %v6698
        %v6894 = vsel %vm1347, %v6698, %v6700
        %v6895 = vsel %vm1347, %v6700, %v6702
        %v6896 = vsel %vm1347, %v6702, %v6704
        %v6897 = vsel %vm1347, %v6706, %v6708
        %v6898 = vsel %vm1347, %v6708, %v6710
        %v6899 = vsel %vm1347, %v6710, %v6712
        %v6900 = vsel %vm1347, %v6712, %v6714
        %v6901 = vsel %vm1347, %v6714, %v6716
        %v6902 = vsel %vm1347, %v6716, %v6718
        %v6903 = vsel %vm1347, %v6720, %v6722
        %v6904 = vsel %vm1347, %v6722, %v6724
        %v6905 = vsel %vm1347, %v6724, %v6726
        %v6906 = vsel %vm1347, %v6726, %v6728
        %v6907 = vsel %vm1347, %v6728, %v6730
        %v6908 = vsel %vm1347, %v6730, %v6732
        %v6909 = vsel %vm1347, %v6734, %v6736
        %v6910 = vsel %vm1347, %v6736, %v6738
        %v6911 = vsel %vm1347, %v6738, %v6740
        %v6912 = vsel %vm1347, %v6740, %v6742
        %v6913 = vsel %vm1347, %v6742, %v6744
        %v6914 = vsel %vm1347, %v6744, %v6746
        %v6915 = vsel %vm1347, %v6748, %v6750
        %v6916 = vsel %vm1347, %v6750, %v6752
        %v6917 = vsel %vm1347, %v6752, %v6754
        %v6918 = vsel %vm1347, %v6754, %v6756
        %v6919 = vsel %vm1347, %v6756, %v6758
        %v6920 = vsel %vm1347, %v6758, %v6760
        %v6921 = vsel %vm1347, %v6762, %v6764
        %v6922 = vsel %vm1347, %v6764, %v6766
        %v6923 = vsel %vm1347, %v6766, %v6768
        %v6924 = vsel %vm1347, %v6768, %v6770
        %v6925 = vsel %vm1347, %v6770, %v6772
        %v6926 = vsel %vm1347, %v6772, %v6774
        %v6927 = vsel %vm1347, %v6776, %v6778
        %v6928 = vsel %vm1347, %v6778, %v6780
        %v6929 = vsel %vm1347, %v6780, %v6782
        %v6930 = vsel %vm1347, %v6782, %v6784
        %v6931 = vsel %vm1347, %v6784, %v6786
        %v6932 = vsel %vm1347, %v6786, %v6788
        %v6933 = vsel %vm1347, %v6790, %v6792
        %v6934 = vsel %vm1347, %v6792, %v6794
        %v6935 = vsel %vm1347, %v6794, %v6796
        %v6936 = vsel %vm1347, %v6796, %v6798
        %v6937 = vsel %vm1347, %v6798, %v6800
        %v6938 = vsel %vm1347, %v6800, %v6802
        %v6939 = vsel %vm1347, %v6804, %v6806
        %v6940 = vsel %vm1347, %v6806, %v6808
        %v6941 = vsel %vm1347, %v6808, %v6810
        %v6942 = vsel %vm1347, %v6810, %v6812
        %v6943 = vsel %vm1347, %v6812, %v6814
        %v6944 = vsel %vm1347, %v6814, %v6816
        %v6945 = vsel %vm1347, %v6818, %v6820
        %v6946 = vsel %vm1347, %v6820, %v6822
        %v6947 = vsel %vm1347, %v6822, %v6824
        %v6948 = vsel %vm1347, %v6824, %v6826
        %v6949 = vsel %vm1347, %v6826, %v6828
        %v6950 = vsel %vm1347, %v6828, %v6830
        %v6951 = vsel %vm1347, %v6832, %v6834
        %v6952 = vsel %vm1347, %v6834, %v6836
        %v6953 = vsel %vm1347, %v6836, %v6838
        %v6954 = vsel %vm1347, %v6838, %v6840
        %v6955 = vsel %vm1347, %v6840, %v6842
        %v6956 = vsel %vm1347, %v6842, %v6844
        %v6957 = vsel %vm1347, %v6846, %v6848
        %v6958 = vsel %vm1347, %v6848, %v6850
        %v6959 = vsel %vm1347, %v6850, %v6852
        %v6960 = vsel %vm1347, %v6852, %v6854
        %v6961 = vsel %vm1347, %v6854, %v6856
        %v6962 = vsel %vm1347, %v6856, %v6858
        %v6963 = vsel %vm1347, %v6860, %v6862
        %v6964 = vsel %vm1347, %v6862, %v6864
        %v6965 = vsel %vm1347, %v6864, %v6866
        %v6966 = vsel %vm1347, %v6866, %v6868
        %v6967 = vsel %vm1347, %v6868, %v6870
        %v6968 = vsel %vm1347, %v6870, %v6872
        %v7081 = vadd.f32 %v2327, %v6650
        %v7082 = vadd.f32 %v2328, %v6873
        %v7083 = vadd.f32 %v2329, %v6874
        %v7084 = vadd.f32 %v2330, %v6875
        %v7085 = vadd.f32 %v2331, %v6876
        %v7086 = vadd.f32 %v2332, %v6877
        %v7087 = vadd.f32 %v2333, %v6878
        %v7088 = vadd.f32 %v2334, %v6664
        %v7089 = vadd.f32 %v2335, %v6879
        %v7090 = vadd.f32 %v2336, %v6880
        %v7091 = vadd.f32 %v2337, %v6881
        %v7092 = vadd.f32 %v2338, %v6882
        %v7093 = vadd.f32 %v2339, %v6883
        %v7094 = vadd.f32 %v2340, %v6884
        %v7095 = vadd.f32 %v2341, %v6678
        %v7096 = vadd.f32 %v2342, %v6885
        %v7097 = vadd.f32 %v2343, %v6886
        %v7098 = vadd.f32 %v2344, %v6887
        %v7099 = vadd.f32 %v2345, %v6888
        %v7100 = vadd.f32 %v2346, %v6889
        %v7101 = vadd.f32 %v2347, %v6890
        %v7102 = vadd.f32 %v2348, %v6692
        %v7103 = vadd.f32 %v2349, %v6891
        %v7104 = vadd.f32 %v2350, %v6892
        %v7105 = vadd.f32 %v2351, %v6893
        %v7106 = vadd.f32 %v2352, %v6894
        %v7107 = vadd.f32 %v2353, %v6895
        %v7108 = vadd.f32 %v2354, %v6896
        %v7109 = vadd.f32 %v2355, %v6706
        %v7110 = vadd.f32 %v2356, %v6897
        %v7111 = vadd.f32 %v2357, %v6898
        %v7112 = vadd.f32 %v2358, %v6899
        %v7113 = vadd.f32 %v2359, %v6900
        %v7114 = vadd.f32 %v2360, %v6901
        %v7115 = vadd.f32 %v2361, %v6902
        %v7116 = vadd.f32 %v2362, %v6720
        %v7117 = vadd.f32 %v2363, %v6903
        %v7118 = vadd.f32 %v2364, %v6904
        %v7119 = vadd.f32 %v2365, %v6905
        %v7120 = vadd.f32 %v2366, %v6906
        %v7121 = vadd.f32 %v2367, %v6907
        %v7122 = vadd.f32 %v2368, %v6908
        %v7123 = vadd.f32 %v2369, %v6734
        %v7124 = vadd.f32 %v2370, %v6909
        %v7125 = vadd.f32 %v2371, %v6910
        %v7126 = vadd.f32 %v2372, %v6911
        %v7127 = vadd.f32 %v2373, %v6912
        %v7128 = vadd.f32 %v2374, %v6913
        %v7129 = vadd.f32 %v2375, %v6914
        %v7130 = vadd.f32 %v2376, %v6748
        %v7131 = vadd.f32 %v2377, %v6915
        %v7132 = vadd.f32 %v2378, %v6916
        %v7133 = vadd.f32 %v2379, %v6917
        %v7134 = vadd.f32 %v2380, %v6918
        %v7135 = vadd.f32 %v2381, %v6919
        %v7136 = vadd.f32 %v2382, %v6920
        %v7137 = vadd.f32 %v2383, %v6762
        %v7138 = vadd.f32 %v2384, %v6921
        %v7139 = vadd.f32 %v2385, %v6922
        %v7140 = vadd.f32 %v2386, %v6923
        %v7141 = vadd.f32 %v2387, %v6924
        %v7142 = vadd.f32 %v2388, %v6925
        %v7143 = vadd.f32 %v2389, %v6926
        %v7144 = vadd.f32 %v2390, %v6776
        %v7145 = vadd.f32 %v2391, %v6927
        %v7146 = vadd.f32 %v2392, %v6928
        %v7147 = vadd.f32 %v2393, %v6929
        %v7148 = vadd.f32 %v2394, %v6930
        %v7149 = vadd.f32 %v2395, %v6931
        %v7150 = vadd.f32 %v2396, %v6932
        %v7151 = vadd.f32 %v2397, %v6790
        %v7152 = vadd.f32 %v2398, %v6933
        %v7153 = vadd.f32 %v2399, %v6934
        %v7154 = vadd.f32 %v2400, %v6935
        %v7155 = vadd.f32 %v2401, %v6936
        %v7156 = vadd.f32 %v2402, %v6937
        %v7157 = vadd.f32 %v2403, %v6938
        %v7158 = vadd.f32 %v2404, %v6804
        %v7159 = vadd.f32 %v2405, %v6939
        %v7160 = vadd.f32 %v2406, %v6940
        %v7161 = vadd.f32 %v2407, %v6941
        %v7162 = vadd.f32 %v2408, %v6942
        %v7163 = vadd.f32 %v2409, %v6943
        %v7164 = vadd.f32 %v2410, %v6944
        %v7165 = vadd.f32 %v2411, %v6818
        %v7166 = vadd.f32 %v2412, %v6945
        %v7167 = vadd.f32 %v2413, %v6946
        %v7168 = vadd.f32 %v2414, %v6947
        %v7169 = vadd.f32 %v2415, %v6948
        %v7170 = vadd.f32 %v2416, %v6949
        %v7171 = vadd.f32 %v2417, %v6950
        %v7172 = vadd.f32 %v2418, %v6832
        %v7173 = vadd.f32 %v2419, %v6951
        %v7174 = vadd.f32 %v2420, %v6952
        %v7175 = vadd.f32 %v2421, %v6953
        %v7176 = vadd.f32 %v2422, %v6954
        %v7177 = vadd.f32 %v2423, %v6955
        %v7178 = vadd.f32 %v2424, %v6956
        %v7179 = vadd.f32 %v2425, %v6846
        %v7180 = vadd.f32 %v2426, %v6957
        %v7181 = vadd.f32 %v2427, %v6958
        %v7182 = vadd.f32 %v2428, %v6959
        %v7183 = vadd.f32 %v2429, %v6960
        %v7184 = vadd.f32 %v2430, %v6961
        %v7185 = vadd.f32 %v2431, %v6962
        %v7186 = vadd.f32 %v2432, %v6860
        %v7187 = vadd.f32 %v2433, %v6963
        %v7188 = vadd.f32 %v2434, %v6964
        %v7189 = vadd.f32 %v2435, %v6965
        %v7190 = vadd.f32 %v2436, %v6966
        %v7191 = vadd.f32 %v2437, %v6967
        %v7192 = vadd.f32 %v2438, %v6968
        %v7193 = vld [vmem:[%s4] sm:$0x7f]
        %v7195 = vlaneseq
        %v7196 = vshrl.u32 %v7195, 7
        %v7197 = vsub.s32 0, %v7196
        %v7198 = vrot.slane %v7193, %v7197
        %v7199 = vlaneseq
        %v7200 = vshrl.u32 %v7199, 7
        %v7201 = vsub.s32 1, %v7200
        %v7202 = vrot.slane %v7193, %v7201
        %v7203 = vlaneseq
        %v7204 = vshrl.u32 %v7203, 7
        %v7205 = vsub.s32 2, %v7204
        %v7206 = vrot.slane %v7193, %v7205
        %v7207 = vlaneseq
        %v7208 = vshrl.u32 %v7207, 7
        %v7209 = vsub.s32 3, %v7208
        %v7210 = vrot.slane %v7193, %v7209
        %v7211 = vlaneseq
        %v7212 = vshrl.u32 %v7211, 7
        %v7213 = vsub.s32 4, %v7212
        %v7214 = vrot.slane %v7193, %v7213
        %v7215 = vlaneseq
        %v7216 = vshrl.u32 %v7215, 7
        %v7217 = vsub.s32 5, %v7216
        %v7218 = vrot.slane %v7193, %v7217
        %v7219 = vlaneseq
        %v7220 = vshrl.u32 %v7219, 7
        %v7221 = vsub.s32 6, %v7220
        %v7222 = vrot.slane %v7193, %v7221
        %7342 = vrot.lane.b32.xlu0 %v5731, 27
        %v7343 = vpop.permute.xlu0 %7342
        %7344 = vrot.lane.b32.xlu0 %v5732, 27
        %v7345 = vpop.permute.xlu0 %7344
        %7346 = vrot.lane.b32.xlu0 %v5733, 27
        %v7347 = vpop.permute.xlu0 %7346
        %7348 = vrot.lane.b32.xlu0 %v5734, 27
        %v7349 = vpop.permute.xlu0 %7348
        %7350 = vrot.lane.b32.xlu0 %v5735, 27
        %v7351 = vpop.permute.xlu0 %7350
        %7352 = vrot.lane.b32.xlu0 %v5736, 27
        %v7353 = vpop.permute.xlu0 %7352
        %7354 = vrot.lane.b32.xlu0 %v5737, 27
        %v7355 = vpop.permute.xlu0 %7354
        %7356 = vrot.lane.b32.xlu0 %v5738, 27
        %v7357 = vpop.permute.xlu0 %7356
        %7358 = vrot.lane.b32.xlu0 %v5739, 27
        %v7359 = vpop.permute.xlu0 %7358
        %7360 = vrot.lane.b32.xlu0 %v5740, 27
        %v7361 = vpop.permute.xlu0 %7360
        %7362 = vrot.lane.b32.xlu0 %v5741, 27
        %v7363 = vpop.permute.xlu0 %7362
        %7364 = vrot.lane.b32.xlu0 %v5742, 27
        %v7365 = vpop.permute.xlu0 %7364
        %7366 = vrot.lane.b32.xlu0 %v5743, 27
        %v7367 = vpop.permute.xlu0 %7366
        %7368 = vrot.lane.b32.xlu0 %v5744, 27
        %v7369 = vpop.permute.xlu0 %7368
        %7370 = vrot.lane.b32.xlu0 %v5745, 27
        %v7371 = vpop.permute.xlu0 %7370
        %7372 = vrot.lane.b32.xlu0 %v5746, 27
        %v7373 = vpop.permute.xlu0 %7372
        %7374 = vrot.lane.b32.xlu0 %v5747, 27
        %v7375 = vpop.permute.xlu0 %7374
        %7376 = vrot.lane.b32.xlu0 %v5748, 27
        %v7377 = vpop.permute.xlu0 %7376
        %7378 = vrot.lane.b32.xlu0 %v5749, 27
        %v7379 = vpop.permute.xlu0 %7378
        %7380 = vrot.lane.b32.xlu0 %v5750, 27
        %v7381 = vpop.permute.xlu0 %7380
        %7382 = vrot.lane.b32.xlu0 %v5751, 27
        %v7383 = vpop.permute.xlu0 %7382
        %7384 = vrot.lane.b32.xlu0 %v5752, 27
        %v7385 = vpop.permute.xlu0 %7384
        %7386 = vrot.lane.b32.xlu0 %v5753, 27
        %v7387 = vpop.permute.xlu0 %7386
        %7388 = vrot.lane.b32.xlu0 %v5754, 27
        %v7389 = vpop.permute.xlu0 %7388
        %7390 = vrot.lane.b32.xlu0 %v5755, 27
        %v7391 = vpop.permute.xlu0 %7390
        %7392 = vrot.lane.b32.xlu0 %v5756, 27
        %v7393 = vpop.permute.xlu0 %7392
        %7394 = vrot.lane.b32.xlu0 %v5757, 27
        %v7395 = vpop.permute.xlu0 %7394
        %7396 = vrot.lane.b32.xlu0 %v5758, 27
        %v7397 = vpop.permute.xlu0 %7396
        %7398 = vrot.lane.b32.xlu0 %v5759, 27
        %v7399 = vpop.permute.xlu0 %7398
        %7400 = vrot.lane.b32.xlu0 %v5760, 27
        %v7401 = vpop.permute.xlu0 %7400
        %7402 = vrot.lane.b32.xlu0 %v5761, 27
        %v7403 = vpop.permute.xlu0 %7402
        %7404 = vrot.lane.b32.xlu0 %v5762, 27
        %v7405 = vpop.permute.xlu0 %7404
        %7406 = vrot.lane.b32.xlu0 %v5763, 27
        %v7407 = vpop.permute.xlu0 %7406
        %7408 = vrot.lane.b32.xlu0 %v5764, 27
        %v7409 = vpop.permute.xlu0 %7408
        %7410 = vrot.lane.b32.xlu0 %v5765, 27
        %v7411 = vpop.permute.xlu0 %7410
        %7412 = vrot.lane.b32.xlu0 %v5766, 27
        %v7413 = vpop.permute.xlu0 %7412
        %7414 = vrot.lane.b32.xlu0 %v5767, 27
        %v7415 = vpop.permute.xlu0 %7414
        %7416 = vrot.lane.b32.xlu0 %v5768, 27
        %v7417 = vpop.permute.xlu0 %7416
        %7418 = vrot.lane.b32.xlu0 %v5769, 27
        %v7419 = vpop.permute.xlu0 %7418
        %7420 = vrot.lane.b32.xlu0 %v5770, 27
        %v7421 = vpop.permute.xlu0 %7420
        %7422 = vrot.lane.b32.xlu0 %v5771, 27
        %v7423 = vpop.permute.xlu0 %7422
        %7424 = vrot.lane.b32.xlu0 %v5772, 27
        %v7425 = vpop.permute.xlu0 %7424
        %7426 = vrot.lane.b32.xlu0 %v5773, 27
        %v7427 = vpop.permute.xlu0 %7426
        %7428 = vrot.lane.b32.xlu0 %v5774, 27
        %v7429 = vpop.permute.xlu0 %7428
        %7430 = vrot.lane.b32.xlu0 %v5775, 27
        %v7431 = vpop.permute.xlu0 %7430
        %7432 = vrot.lane.b32.xlu0 %v5776, 27
        %v7433 = vpop.permute.xlu0 %7432
        %7434 = vrot.lane.b32.xlu0 %v5777, 27
        %v7435 = vpop.permute.xlu0 %7434
        %7436 = vrot.lane.b32.xlu0 %v5778, 27
        %v7437 = vpop.permute.xlu0 %7436
        %7438 = vrot.lane.b32.xlu0 %v5779, 27
        %v7439 = vpop.permute.xlu0 %7438
        %7440 = vrot.lane.b32.xlu0 %v5780, 27
        %v7441 = vpop.permute.xlu0 %7440
        %7442 = vrot.lane.b32.xlu0 %v5781, 27
        %v7443 = vpop.permute.xlu0 %7442
        %7444 = vrot.lane.b32.xlu0 %v5782, 27
        %v7445 = vpop.permute.xlu0 %7444
        %7446 = vrot.lane.b32.xlu0 %v5783, 27
        %v7447 = vpop.permute.xlu0 %7446
        %7448 = vrot.lane.b32.xlu0 %v5784, 27
        %v7449 = vpop.permute.xlu0 %7448
        %7450 = vrot.lane.b32.xlu0 %v5785, 27
        %v7451 = vpop.permute.xlu0 %7450
        %7452 = vrot.lane.b32.xlu0 %v5786, 27
        %v7453 = vpop.permute.xlu0 %7452
        %7454 = vrot.lane.b32.xlu0 %v5787, 27
        %v7455 = vpop.permute.xlu0 %7454
        %7456 = vrot.lane.b32.xlu0 %v5788, 27
        %v7457 = vpop.permute.xlu0 %7456
        %7458 = vrot.lane.b32.xlu0 %v5789, 27
        %v7459 = vpop.permute.xlu0 %7458
        %7460 = vrot.lane.b32.xlu0 %v5790, 27
        %v7461 = vpop.permute.xlu0 %7460
        %7462 = vrot.lane.b32.xlu0 %v5791, 27
        %v7463 = vpop.permute.xlu0 %7462
        %7464 = vrot.lane.b32.xlu0 %v5792, 27
        %v7465 = vpop.permute.xlu0 %7464
        %7466 = vrot.lane.b32.xlu0 %v5793, 27
        %v7467 = vpop.permute.xlu0 %7466
        %7468 = vrot.lane.b32.xlu0 %v5794, 27
        %v7469 = vpop.permute.xlu0 %7468
        %7470 = vrot.lane.b32.xlu0 %v5795, 27
        %v7471 = vpop.permute.xlu0 %7470
        %7472 = vrot.lane.b32.xlu0 %v5796, 27
        %v7473 = vpop.permute.xlu0 %7472
        %7474 = vrot.lane.b32.xlu0 %v5797, 27
        %v7475 = vpop.permute.xlu0 %7474
        %7476 = vrot.lane.b32.xlu0 %v5798, 27
        %v7477 = vpop.permute.xlu0 %7476
        %7478 = vrot.lane.b32.xlu0 %v5799, 27
        %v7479 = vpop.permute.xlu0 %7478
        %7480 = vrot.lane.b32.xlu0 %v5800, 27
        %v7481 = vpop.permute.xlu0 %7480
        %7482 = vrot.lane.b32.xlu0 %v5801, 27
        %v7483 = vpop.permute.xlu0 %7482
        %7484 = vrot.lane.b32.xlu0 %v5802, 27
        %v7485 = vpop.permute.xlu0 %7484
        %7486 = vrot.lane.b32.xlu0 %v5803, 27
        %v7487 = vpop.permute.xlu0 %7486
        %7488 = vrot.lane.b32.xlu0 %v5804, 27
        %v7489 = vpop.permute.xlu0 %7488
        %7490 = vrot.lane.b32.xlu0 %v5805, 27
        %v7491 = vpop.permute.xlu0 %7490
        %7492 = vrot.lane.b32.xlu0 %v5806, 27
        %v7493 = vpop.permute.xlu0 %7492
        %7494 = vrot.lane.b32.xlu0 %v5807, 27
        %v7495 = vpop.permute.xlu0 %7494
        %7496 = vrot.lane.b32.xlu0 %v5808, 27
        %v7497 = vpop.permute.xlu0 %7496
        %7498 = vrot.lane.b32.xlu0 %v5809, 27
        %v7499 = vpop.permute.xlu0 %7498
        %7500 = vrot.lane.b32.xlu0 %v5810, 27
        %v7501 = vpop.permute.xlu0 %7500
        %7502 = vrot.lane.b32.xlu0 %v5811, 27
        %v7503 = vpop.permute.xlu0 %7502
        %7504 = vrot.lane.b32.xlu0 %v5812, 27
        %v7505 = vpop.permute.xlu0 %7504
        %7506 = vrot.lane.b32.xlu0 %v5813, 27
        %v7507 = vpop.permute.xlu0 %7506
        %7508 = vrot.lane.b32.xlu0 %v5814, 27
        %v7509 = vpop.permute.xlu0 %7508
        %7510 = vrot.lane.b32.xlu0 %v5815, 27
        %v7511 = vpop.permute.xlu0 %7510
        %7512 = vrot.lane.b32.xlu0 %v5816, 27
        %v7513 = vpop.permute.xlu0 %7512
        %7514 = vrot.lane.b32.xlu0 %v5817, 27
        %v7515 = vpop.permute.xlu0 %7514
        %7516 = vrot.lane.b32.xlu0 %v5818, 27
        %v7517 = vpop.permute.xlu0 %7516
        %7518 = vrot.lane.b32.xlu0 %v5819, 27
        %v7519 = vpop.permute.xlu0 %7518
        %7520 = vrot.lane.b32.xlu0 %v5820, 27
        %v7521 = vpop.permute.xlu0 %7520
        %7522 = vrot.lane.b32.xlu0 %v5821, 27
        %v7523 = vpop.permute.xlu0 %7522
        %7524 = vrot.lane.b32.xlu0 %v5822, 27
        %v7525 = vpop.permute.xlu0 %7524
        %7526 = vrot.lane.b32.xlu0 %v5823, 27
        %v7527 = vpop.permute.xlu0 %7526
        %7528 = vrot.lane.b32.xlu0 %v5824, 27
        %v7529 = vpop.permute.xlu0 %7528
        %7530 = vrot.lane.b32.xlu0 %v5825, 27
        %v7531 = vpop.permute.xlu0 %7530
        %7532 = vrot.lane.b32.xlu0 %v5826, 27
        %v7533 = vpop.permute.xlu0 %7532
        %7534 = vrot.lane.b32.xlu0 %v5827, 27
        %v7535 = vpop.permute.xlu0 %7534
        %7536 = vrot.lane.b32.xlu0 %v5828, 27
        %v7537 = vpop.permute.xlu0 %7536
        %7538 = vrot.lane.b32.xlu0 %v5829, 27
        %v7539 = vpop.permute.xlu0 %7538
        %7540 = vrot.lane.b32.xlu0 %v5830, 27
        %v7541 = vpop.permute.xlu0 %7540
        %7542 = vrot.lane.b32.xlu0 %v5831, 27
        %v7543 = vpop.permute.xlu0 %7542
        %7544 = vrot.lane.b32.xlu0 %v5832, 27
        %v7545 = vpop.permute.xlu0 %7544
        %7546 = vrot.lane.b32.xlu0 %v5833, 27
        %v7547 = vpop.permute.xlu0 %7546
        %7548 = vrot.lane.b32.xlu0 %v5834, 27
        %v7549 = vpop.permute.xlu0 %7548
        %7550 = vrot.lane.b32.xlu0 %v5835, 27
        %v7551 = vpop.permute.xlu0 %7550
        %7552 = vrot.lane.b32.xlu0 %v5836, 27
        %v7553 = vpop.permute.xlu0 %7552
        %7554 = vrot.lane.b32.xlu0 %v5837, 27
        %v7555 = vpop.permute.xlu0 %7554
        %7556 = vrot.lane.b32.xlu0 %v5838, 27
        %v7557 = vpop.permute.xlu0 %7556
        %7558 = vrot.lane.b32.xlu0 %v5839, 27
        %v7559 = vpop.permute.xlu0 %7558
        %7560 = vrot.lane.b32.xlu0 %v5840, 27
        %v7561 = vpop.permute.xlu0 %7560
        %7562 = vrot.lane.b32.xlu0 %v5841, 27
        %v7563 = vpop.permute.xlu0 %7562
        %7564 = vrot.lane.b32.xlu0 %v5842, 27
        %v7565 = vpop.permute.xlu0 %7564
        %vm7566 = vcmask 220160
        %v7567 = vsel %vm7566, %v7343, %v7345
        %v7568 = vsel %vm7566, %v7345, %v7347
        %v7569 = vsel %vm7566, %v7347, %v7349
        %v7570 = vsel %vm7566, %v7349, %v7351
        %v7571 = vsel %vm7566, %v7351, %v7353
        %v7572 = vsel %vm7566, %v7353, %v7355
        %v7573 = vsel %vm7566, %v7357, %v7359
        %v7574 = vsel %vm7566, %v7359, %v7361
        %v7575 = vsel %vm7566, %v7361, %v7363
        %v7576 = vsel %vm7566, %v7363, %v7365
        %v7577 = vsel %vm7566, %v7365, %v7367
        %v7578 = vsel %vm7566, %v7367, %v7369
        %v7579 = vsel %vm7566, %v7371, %v7373
        %v7580 = vsel %vm7566, %v7373, %v7375
        %v7581 = vsel %vm7566, %v7375, %v7377
        %v7582 = vsel %vm7566, %v7377, %v7379
        %v7583 = vsel %vm7566, %v7379, %v7381
        %v7584 = vsel %vm7566, %v7381, %v7383
        %v7585 = vsel %vm7566, %v7385, %v7387
        %v7586 = vsel %vm7566, %v7387, %v7389
        %v7587 = vsel %vm7566, %v7389, %v7391
        %v7588 = vsel %vm7566, %v7391, %v7393
        %v7589 = vsel %vm7566, %v7393, %v7395
        %v7590 = vsel %vm7566, %v7395, %v7397
        %v7591 = vsel %vm7566, %v7399, %v7401
        %v7592 = vsel %vm7566, %v7401, %v7403
        %v7593 = vsel %vm7566, %v7403, %v7405
        %v7594 = vsel %vm7566, %v7405, %v7407
        %v7595 = vsel %vm7566, %v7407, %v7409
        %v7596 = vsel %vm7566, %v7409, %v7411
        %v7597 = vsel %vm7566, %v7413, %v7415
        %v7598 = vsel %vm7566, %v7415, %v7417
        %v7599 = vsel %vm7566, %v7417, %v7419
        %v7600 = vsel %vm7566, %v7419, %v7421
        %v7601 = vsel %vm7566, %v7421, %v7423
        %v7602 = vsel %vm7566, %v7423, %v7425
        %v7603 = vsel %vm7566, %v7427, %v7429
        %v7604 = vsel %vm7566, %v7429, %v7431
        %v7605 = vsel %vm7566, %v7431, %v7433
        %v7606 = vsel %vm7566, %v7433, %v7435
        %v7607 = vsel %vm7566, %v7435, %v7437
        %v7608 = vsel %vm7566, %v7437, %v7439
        %v7609 = vsel %vm7566, %v7441, %v7443
        %v7610 = vsel %vm7566, %v7443, %v7445
        %v7611 = vsel %vm7566, %v7445, %v7447
        %v7612 = vsel %vm7566, %v7447, %v7449
        %v7613 = vsel %vm7566, %v7449, %v7451
        %v7614 = vsel %vm7566, %v7451, %v7453
        %v7615 = vsel %vm7566, %v7455, %v7457
        %v7616 = vsel %vm7566, %v7457, %v7459
        %v7617 = vsel %vm7566, %v7459, %v7461
        %v7618 = vsel %vm7566, %v7461, %v7463
        %v7619 = vsel %vm7566, %v7463, %v7465
        %v7620 = vsel %vm7566, %v7465, %v7467
        %v7621 = vsel %vm7566, %v7469, %v7471
        %v7622 = vsel %vm7566, %v7471, %v7473
        %v7623 = vsel %vm7566, %v7473, %v7475
        %v7624 = vsel %vm7566, %v7475, %v7477
        %v7625 = vsel %vm7566, %v7477, %v7479
        %v7626 = vsel %vm7566, %v7479, %v7481
        %v7627 = vsel %vm7566, %v7483, %v7485
        %v7628 = vsel %vm7566, %v7485, %v7487
        %v7629 = vsel %vm7566, %v7487, %v7489
        %v7630 = vsel %vm7566, %v7489, %v7491
        %v7631 = vsel %vm7566, %v7491, %v7493
        %v7632 = vsel %vm7566, %v7493, %v7495
        %v7633 = vsel %vm7566, %v7497, %v7499
        %v7634 = vsel %vm7566, %v7499, %v7501
        %v7635 = vsel %vm7566, %v7501, %v7503
        %v7636 = vsel %vm7566, %v7503, %v7505
        %v7637 = vsel %vm7566, %v7505, %v7507
        %v7638 = vsel %vm7566, %v7507, %v7509
        %v7639 = vsel %vm7566, %v7511, %v7513
        %v7640 = vsel %vm7566, %v7513, %v7515
        %v7641 = vsel %vm7566, %v7515, %v7517
        %v7642 = vsel %vm7566, %v7517, %v7519
        %v7643 = vsel %vm7566, %v7519, %v7521
        %v7644 = vsel %vm7566, %v7521, %v7523
        %v7645 = vsel %vm7566, %v7525, %v7527
        %v7646 = vsel %vm7566, %v7527, %v7529
        %v7647 = vsel %vm7566, %v7529, %v7531
        %v7648 = vsel %vm7566, %v7531, %v7533
        %v7649 = vsel %vm7566, %v7533, %v7535
        %v7650 = vsel %vm7566, %v7535, %v7537
        %v7651 = vsel %vm7566, %v7539, %v7541
        %v7652 = vsel %vm7566, %v7541, %v7543
        %v7653 = vsel %vm7566, %v7543, %v7545
        %v7654 = vsel %vm7566, %v7545, %v7547
        %v7655 = vsel %vm7566, %v7547, %v7549
        %v7656 = vsel %vm7566, %v7549, %v7551
        %v7657 = vsel %vm7566, %v7553, %v7555
        %v7658 = vsel %vm7566, %v7555, %v7557
        %v7659 = vsel %vm7566, %v7557, %v7559
        %v7660 = vsel %vm7566, %v7559, %v7561
        %v7661 = vsel %vm7566, %v7561, %v7563
        %v7662 = vsel %vm7566, %v7563, %v7565
        %v7775 = vmul.f32 %v7198, %v7567
        %v7776 = vmul.f32 %v7202, %v7568
        %v7777 = vmul.f32 %v7206, %v7569
        %v7778 = vmul.f32 %v7210, %v7570
        %v7779 = vmul.f32 %v7214, %v7571
        %v7780 = vmul.f32 %v7218, %v7572
        %v7781 = vmul.f32 %v7222, %v7355
        %v7782 = vmul.f32 %v7198, %v7573
        %v7783 = vmul.f32 %v7202, %v7574
        %v7784 = vmul.f32 %v7206, %v7575
        %v7785 = vmul.f32 %v7210, %v7576
        %v7786 = vmul.f32 %v7214, %v7577
        %v7787 = vmul.f32 %v7218, %v7578
        %v7788 = vmul.f32 %v7222, %v7369
        %v7789 = vmul.f32 %v7198, %v7579
        %v7790 = vmul.f32 %v7202, %v7580
        %v7791 = vmul.f32 %v7206, %v7581
        %v7792 = vmul.f32 %v7210, %v7582
        %v7793 = vmul.f32 %v7214, %v7583
        %v7794 = vmul.f32 %v7218, %v7584
        %v7795 = vmul.f32 %v7222, %v7383
        %v7796 = vmul.f32 %v7198, %v7585
        %v7797 = vmul.f32 %v7202, %v7586
        %v7798 = vmul.f32 %v7206, %v7587
        %v7799 = vmul.f32 %v7210, %v7588
        %v7800 = vmul.f32 %v7214, %v7589
        %v7801 = vmul.f32 %v7218, %v7590
        %v7802 = vmul.f32 %v7222, %v7397
        %v7803 = vmul.f32 %v7198, %v7591
        %v7804 = vmul.f32 %v7202, %v7592
        %v7805 = vmul.f32 %v7206, %v7593
        %v7806 = vmul.f32 %v7210, %v7594
        %v7807 = vmul.f32 %v7214, %v7595
        %v7808 = vmul.f32 %v7218, %v7596
        %v7809 = vmul.f32 %v7222, %v7411
        %v7810 = vmul.f32 %v7198, %v7597
        %v7811 = vmul.f32 %v7202, %v7598
        %v7812 = vmul.f32 %v7206, %v7599
        %v7813 = vmul.f32 %v7210, %v7600
        %v7814 = vmul.f32 %v7214, %v7601
        %v7815 = vmul.f32 %v7218, %v7602
        %v7816 = vmul.f32 %v7222, %v7425
        %v7817 = vmul.f32 %v7198, %v7603
        %v7818 = vmul.f32 %v7202, %v7604
        %v7819 = vmul.f32 %v7206, %v7605
        %v7820 = vmul.f32 %v7210, %v7606
        %v7821 = vmul.f32 %v7214, %v7607
        %v7822 = vmul.f32 %v7218, %v7608
        %v7823 = vmul.f32 %v7222, %v7439
        %v7824 = vmul.f32 %v7198, %v7609
        %v7825 = vmul.f32 %v7202, %v7610
        %v7826 = vmul.f32 %v7206, %v7611
        %v7827 = vmul.f32 %v7210, %v7612
        %v7828 = vmul.f32 %v7214, %v7613
        %v7829 = vmul.f32 %v7218, %v7614
        %v7830 = vmul.f32 %v7222, %v7453
        %v7831 = vmul.f32 %v7198, %v7615
        %v7832 = vmul.f32 %v7202, %v7616
        %v7833 = vmul.f32 %v7206, %v7617
        %v7834 = vmul.f32 %v7210, %v7618
        %v7835 = vmul.f32 %v7214, %v7619
        %v7836 = vmul.f32 %v7218, %v7620
        %v7837 = vmul.f32 %v7222, %v7467
        %v7838 = vmul.f32 %v7198, %v7621
        %v7839 = vmul.f32 %v7202, %v7622
        %v7840 = vmul.f32 %v7206, %v7623
        %v7841 = vmul.f32 %v7210, %v7624
        %v7842 = vmul.f32 %v7214, %v7625
        %v7843 = vmul.f32 %v7218, %v7626
        %v7844 = vmul.f32 %v7222, %v7481
        %v7845 = vmul.f32 %v7198, %v7627
        %v7846 = vmul.f32 %v7202, %v7628
        %v7847 = vmul.f32 %v7206, %v7629
        %v7848 = vmul.f32 %v7210, %v7630
        %v7849 = vmul.f32 %v7214, %v7631
        %v7850 = vmul.f32 %v7218, %v7632
        %v7851 = vmul.f32 %v7222, %v7495
        %v7852 = vmul.f32 %v7198, %v7633
        %v7853 = vmul.f32 %v7202, %v7634
        %v7854 = vmul.f32 %v7206, %v7635
        %v7855 = vmul.f32 %v7210, %v7636
        %v7856 = vmul.f32 %v7214, %v7637
        %v7857 = vmul.f32 %v7218, %v7638
        %v7858 = vmul.f32 %v7222, %v7509
        %v7859 = vmul.f32 %v7198, %v7639
        %v7860 = vmul.f32 %v7202, %v7640
        %v7861 = vmul.f32 %v7206, %v7641
        %v7862 = vmul.f32 %v7210, %v7642
        %v7863 = vmul.f32 %v7214, %v7643
        %v7864 = vmul.f32 %v7218, %v7644
        %v7865 = vmul.f32 %v7222, %v7523
        %v7866 = vmul.f32 %v7198, %v7645
        %v7867 = vmul.f32 %v7202, %v7646
        %v7868 = vmul.f32 %v7206, %v7647
        %v7869 = vmul.f32 %v7210, %v7648
        %v7870 = vmul.f32 %v7214, %v7649
        %v7871 = vmul.f32 %v7218, %v7650
        %v7872 = vmul.f32 %v7222, %v7537
        %v7873 = vmul.f32 %v7198, %v7651
        %v7874 = vmul.f32 %v7202, %v7652
        %v7875 = vmul.f32 %v7206, %v7653
        %v7876 = vmul.f32 %v7210, %v7654
        %v7877 = vmul.f32 %v7214, %v7655
        %v7878 = vmul.f32 %v7218, %v7656
        %v7879 = vmul.f32 %v7222, %v7551
        %v7880 = vmul.f32 %v7198, %v7657
        %v7881 = vmul.f32 %v7202, %v7658
        %v7882 = vmul.f32 %v7206, %v7659
        %v7883 = vmul.f32 %v7210, %v7660
        %v7884 = vmul.f32 %v7214, %v7661
        %v7885 = vmul.f32 %v7218, %v7662
        %v7886 = vmul.f32 %v7222, %v7565
        %7999 = vrot.lane.b32.xlu0 %v7775, 100
        %v8000 = vpop.permute.xlu0 %7999
        %8001 = vrot.lane.b32.xlu0 %v7776, 100
        %v8002 = vpop.permute.xlu0 %8001
        %8003 = vrot.lane.b32.xlu0 %v7777, 100
        %v8004 = vpop.permute.xlu0 %8003
        %8005 = vrot.lane.b32.xlu0 %v7778, 100
        %v8006 = vpop.permute.xlu0 %8005
        %8007 = vrot.lane.b32.xlu0 %v7779, 100
        %v8008 = vpop.permute.xlu0 %8007
        %8009 = vrot.lane.b32.xlu0 %v7780, 100
        %v8010 = vpop.permute.xlu0 %8009
        %8011 = vrot.lane.b32.xlu0 %v7781, 100
        %v8012 = vpop.permute.xlu0 %8011
        %8013 = vrot.lane.b32.xlu0 %v7782, 100
        %v8014 = vpop.permute.xlu0 %8013
        %8015 = vrot.lane.b32.xlu0 %v7783, 100
        %v8016 = vpop.permute.xlu0 %8015
        %8017 = vrot.lane.b32.xlu0 %v7784, 100
        %v8018 = vpop.permute.xlu0 %8017
        %8019 = vrot.lane.b32.xlu0 %v7785, 100
        %v8020 = vpop.permute.xlu0 %8019
        %8021 = vrot.lane.b32.xlu0 %v7786, 100
        %v8022 = vpop.permute.xlu0 %8021
        %8023 = vrot.lane.b32.xlu0 %v7787, 100
        %v8024 = vpop.permute.xlu0 %8023
        %8025 = vrot.lane.b32.xlu0 %v7788, 100
        %v8026 = vpop.permute.xlu0 %8025
        %8027 = vrot.lane.b32.xlu0 %v7789, 100
        %v8028 = vpop.permute.xlu0 %8027
        %8029 = vrot.lane.b32.xlu0 %v7790, 100
        %v8030 = vpop.permute.xlu0 %8029
        %8031 = vrot.lane.b32.xlu0 %v7791, 100
        %v8032 = vpop.permute.xlu0 %8031
        %8033 = vrot.lane.b32.xlu0 %v7792, 100
        %v8034 = vpop.permute.xlu0 %8033
        %8035 = vrot.lane.b32.xlu0 %v7793, 100
        %v8036 = vpop.permute.xlu0 %8035
        %8037 = vrot.lane.b32.xlu0 %v7794, 100
        %v8038 = vpop.permute.xlu0 %8037
        %8039 = vrot.lane.b32.xlu0 %v7795, 100
        %v8040 = vpop.permute.xlu0 %8039
        %8041 = vrot.lane.b32.xlu0 %v7796, 100
        %v8042 = vpop.permute.xlu0 %8041
        %8043 = vrot.lane.b32.xlu0 %v7797, 100
        %v8044 = vpop.permute.xlu0 %8043
        %8045 = vrot.lane.b32.xlu0 %v7798, 100
        %v8046 = vpop.permute.xlu0 %8045
        %8047 = vrot.lane.b32.xlu0 %v7799, 100
        %v8048 = vpop.permute.xlu0 %8047
        %8049 = vrot.lane.b32.xlu0 %v7800, 100
        %v8050 = vpop.permute.xlu0 %8049
        %8051 = vrot.lane.b32.xlu0 %v7801, 100
        %v8052 = vpop.permute.xlu0 %8051
        %8053 = vrot.lane.b32.xlu0 %v7802, 100
        %v8054 = vpop.permute.xlu0 %8053
        %8055 = vrot.lane.b32.xlu0 %v7803, 100
        %v8056 = vpop.permute.xlu0 %8055
        %8057 = vrot.lane.b32.xlu0 %v7804, 100
        %v8058 = vpop.permute.xlu0 %8057
        %8059 = vrot.lane.b32.xlu0 %v7805, 100
        %v8060 = vpop.permute.xlu0 %8059
        %8061 = vrot.lane.b32.xlu0 %v7806, 100
        %v8062 = vpop.permute.xlu0 %8061
        %8063 = vrot.lane.b32.xlu0 %v7807, 100
        %v8064 = vpop.permute.xlu0 %8063
        %8065 = vrot.lane.b32.xlu0 %v7808, 100
        %v8066 = vpop.permute.xlu0 %8065
        %8067 = vrot.lane.b32.xlu0 %v7809, 100
        %v8068 = vpop.permute.xlu0 %8067
        %8069 = vrot.lane.b32.xlu0 %v7810, 100
        %v8070 = vpop.permute.xlu0 %8069
        %8071 = vrot.lane.b32.xlu0 %v7811, 100
        %v8072 = vpop.permute.xlu0 %8071
        %8073 = vrot.lane.b32.xlu0 %v7812, 100
        %v8074 = vpop.permute.xlu0 %8073
        %8075 = vrot.lane.b32.xlu0 %v7813, 100
        %v8076 = vpop.permute.xlu0 %8075
        %8077 = vrot.lane.b32.xlu0 %v7814, 100
        %v8078 = vpop.permute.xlu0 %8077
        %8079 = vrot.lane.b32.xlu0 %v7815, 100
        %v8080 = vpop.permute.xlu0 %8079
        %8081 = vrot.lane.b32.xlu0 %v7816, 100
        %v8082 = vpop.permute.xlu0 %8081
        %8083 = vrot.lane.b32.xlu0 %v7817, 100
        %v8084 = vpop.permute.xlu0 %8083
        %8085 = vrot.lane.b32.xlu0 %v7818, 100
        %v8086 = vpop.permute.xlu0 %8085
        %8087 = vrot.lane.b32.xlu0 %v7819, 100
        %v8088 = vpop.permute.xlu0 %8087
        %8089 = vrot.lane.b32.xlu0 %v7820, 100
        %v8090 = vpop.permute.xlu0 %8089
        %8091 = vrot.lane.b32.xlu0 %v7821, 100
        %v8092 = vpop.permute.xlu0 %8091
        %8093 = vrot.lane.b32.xlu0 %v7822, 100
        %v8094 = vpop.permute.xlu0 %8093
        %8095 = vrot.lane.b32.xlu0 %v7823, 100
        %v8096 = vpop.permute.xlu0 %8095
        %8097 = vrot.lane.b32.xlu0 %v7824, 100
        %v8098 = vpop.permute.xlu0 %8097
        %8099 = vrot.lane.b32.xlu0 %v7825, 100
        %v8100 = vpop.permute.xlu0 %8099
        %8101 = vrot.lane.b32.xlu0 %v7826, 100
        %v8102 = vpop.permute.xlu0 %8101
        %8103 = vrot.lane.b32.xlu0 %v7827, 100
        %v8104 = vpop.permute.xlu0 %8103
        %8105 = vrot.lane.b32.xlu0 %v7828, 100
        %v8106 = vpop.permute.xlu0 %8105
        %8107 = vrot.lane.b32.xlu0 %v7829, 100
        %v8108 = vpop.permute.xlu0 %8107
        %8109 = vrot.lane.b32.xlu0 %v7830, 100
        %v8110 = vpop.permute.xlu0 %8109
        %8111 = vrot.lane.b32.xlu0 %v7831, 100
        %v8112 = vpop.permute.xlu0 %8111
        %8113 = vrot.lane.b32.xlu0 %v7832, 100
        %v8114 = vpop.permute.xlu0 %8113
        %8115 = vrot.lane.b32.xlu0 %v7833, 100
        %v8116 = vpop.permute.xlu0 %8115
        %8117 = vrot.lane.b32.xlu0 %v7834, 100
        %v8118 = vpop.permute.xlu0 %8117
        %8119 = vrot.lane.b32.xlu0 %v7835, 100
        %v8120 = vpop.permute.xlu0 %8119
        %8121 = vrot.lane.b32.xlu0 %v7836, 100
        %v8122 = vpop.permute.xlu0 %8121
        %8123 = vrot.lane.b32.xlu0 %v7837, 100
        %v8124 = vpop.permute.xlu0 %8123
        %8125 = vrot.lane.b32.xlu0 %v7838, 100
        %v8126 = vpop.permute.xlu0 %8125
        %8127 = vrot.lane.b32.xlu0 %v7839, 100
        %v8128 = vpop.permute.xlu0 %8127
        %8129 = vrot.lane.b32.xlu0 %v7840, 100
        %v8130 = vpop.permute.xlu0 %8129
        %8131 = vrot.lane.b32.xlu0 %v7841, 100
        %v8132 = vpop.permute.xlu0 %8131
        %8133 = vrot.lane.b32.xlu0 %v7842, 100
        %v8134 = vpop.permute.xlu0 %8133
        %8135 = vrot.lane.b32.xlu0 %v7843, 100
        %v8136 = vpop.permute.xlu0 %8135
        %8137 = vrot.lane.b32.xlu0 %v7844, 100
        %v8138 = vpop.permute.xlu0 %8137
        %8139 = vrot.lane.b32.xlu0 %v7845, 100
        %v8140 = vpop.permute.xlu0 %8139
        %8141 = vrot.lane.b32.xlu0 %v7846, 100
        %v8142 = vpop.permute.xlu0 %8141
        %8143 = vrot.lane.b32.xlu0 %v7847, 100
        %v8144 = vpop.permute.xlu0 %8143
        %8145 = vrot.lane.b32.xlu0 %v7848, 100
        %v8146 = vpop.permute.xlu0 %8145
        %8147 = vrot.lane.b32.xlu0 %v7849, 100
        %v8148 = vpop.permute.xlu0 %8147
        %8149 = vrot.lane.b32.xlu0 %v7850, 100
        %v8150 = vpop.permute.xlu0 %8149
        %8151 = vrot.lane.b32.xlu0 %v7851, 100
        %v8152 = vpop.permute.xlu0 %8151
        %8153 = vrot.lane.b32.xlu0 %v7852, 100
        %v8154 = vpop.permute.xlu0 %8153
        %8155 = vrot.lane.b32.xlu0 %v7853, 100
        %v8156 = vpop.permute.xlu0 %8155
        %8157 = vrot.lane.b32.xlu0 %v7854, 100
        %v8158 = vpop.permute.xlu0 %8157
        %8159 = vrot.lane.b32.xlu0 %v7855, 100
        %v8160 = vpop.permute.xlu0 %8159
        %8161 = vrot.lane.b32.xlu0 %v7856, 100
        %v8162 = vpop.permute.xlu0 %8161
        %8163 = vrot.lane.b32.xlu0 %v7857, 100
        %v8164 = vpop.permute.xlu0 %8163
        %8165 = vrot.lane.b32.xlu0 %v7858, 100
        %v8166 = vpop.permute.xlu0 %8165
        %8167 = vrot.lane.b32.xlu0 %v7859, 100
        %v8168 = vpop.permute.xlu0 %8167
        %8169 = vrot.lane.b32.xlu0 %v7860, 100
        %v8170 = vpop.permute.xlu0 %8169
        %8171 = vrot.lane.b32.xlu0 %v7861, 100
        %v8172 = vpop.permute.xlu0 %8171
        %8173 = vrot.lane.b32.xlu0 %v7862, 100
        %v8174 = vpop.permute.xlu0 %8173
        %8175 = vrot.lane.b32.xlu0 %v7863, 100
        %v8176 = vpop.permute.xlu0 %8175
        %8177 = vrot.lane.b32.xlu0 %v7864, 100
        %v8178 = vpop.permute.xlu0 %8177
        %8179 = vrot.lane.b32.xlu0 %v7865, 100
        %v8180 = vpop.permute.xlu0 %8179
        %8181 = vrot.lane.b32.xlu0 %v7866, 100
        %v8182 = vpop.permute.xlu0 %8181
        %8183 = vrot.lane.b32.xlu0 %v7867, 100
        %v8184 = vpop.permute.xlu0 %8183
        %8185 = vrot.lane.b32.xlu0 %v7868, 100
        %v8186 = vpop.permute.xlu0 %8185
        %8187 = vrot.lane.b32.xlu0 %v7869, 100
        %v8188 = vpop.permute.xlu0 %8187
        %8189 = vrot.lane.b32.xlu0 %v7870, 100
        %v8190 = vpop.permute.xlu0 %8189
        %8191 = vrot.lane.b32.xlu0 %v7871, 100
        %v8192 = vpop.permute.xlu0 %8191
        %8193 = vrot.lane.b32.xlu0 %v7872, 100
        %v8194 = vpop.permute.xlu0 %8193
        %8195 = vrot.lane.b32.xlu0 %v7873, 100
        %v8196 = vpop.permute.xlu0 %8195
        %8197 = vrot.lane.b32.xlu0 %v7874, 100
        %v8198 = vpop.permute.xlu0 %8197
        %8199 = vrot.lane.b32.xlu0 %v7875, 100
        %v8200 = vpop.permute.xlu0 %8199
        %8201 = vrot.lane.b32.xlu0 %v7876, 100
        %v8202 = vpop.permute.xlu0 %8201
        %8203 = vrot.lane.b32.xlu0 %v7877, 100
        %v8204 = vpop.permute.xlu0 %8203
        %8205 = vrot.lane.b32.xlu0 %v7878, 100
        %v8206 = vpop.permute.xlu0 %8205
        %8207 = vrot.lane.b32.xlu0 %v7879, 100
        %v8208 = vpop.permute.xlu0 %8207
        %8209 = vrot.lane.b32.xlu0 %v7880, 100
        %v8210 = vpop.permute.xlu0 %8209
        %8211 = vrot.lane.b32.xlu0 %v7881, 100
        %v8212 = vpop.permute.xlu0 %8211
        %8213 = vrot.lane.b32.xlu0 %v7882, 100
        %v8214 = vpop.permute.xlu0 %8213
        %8215 = vrot.lane.b32.xlu0 %v7883, 100
        %v8216 = vpop.permute.xlu0 %8215
        %8217 = vrot.lane.b32.xlu0 %v7884, 100
        %v8218 = vpop.permute.xlu0 %8217
        %8219 = vrot.lane.b32.xlu0 %v7885, 100
        %v8220 = vpop.permute.xlu0 %8219
        %8221 = vrot.lane.b32.xlu0 %v7886, 100
        %v8222 = vpop.permute.xlu0 %8221
        %v8223 = vsel %vm1347, %v8000, %v8002
        %v8224 = vsel %vm1347, %v8002, %v8004
        %v8225 = vsel %vm1347, %v8004, %v8006
        %v8226 = vsel %vm1347, %v8006, %v8008
        %v8227 = vsel %vm1347, %v8008, %v8010
        %v8228 = vsel %vm1347, %v8010, %v8012
        %v8229 = vsel %vm1347, %v8014, %v8016
        %v8230 = vsel %vm1347, %v8016, %v8018
        %v8231 = vsel %vm1347, %v8018, %v8020
        %v8232 = vsel %vm1347, %v8020, %v8022
        %v8233 = vsel %vm1347, %v8022, %v8024
        %v8234 = vsel %vm1347, %v8024, %v8026
        %v8235 = vsel %vm1347, %v8028, %v8030
        %v8236 = vsel %vm1347, %v8030, %v8032
        %v8237 = vsel %vm1347, %v8032, %v8034
        %v8238 = vsel %vm1347, %v8034, %v8036
        %v8239 = vsel %vm1347, %v8036, %v8038
        %v8240 = vsel %vm1347, %v8038, %v8040
        %v8241 = vsel %vm1347, %v8042, %v8044
        %v8242 = vsel %vm1347, %v8044, %v8046
        %v8243 = vsel %vm1347, %v8046, %v8048
        %v8244 = vsel %vm1347, %v8048, %v8050
        %v8245 = vsel %vm1347, %v8050, %v8052
        %v8246 = vsel %vm1347, %v8052, %v8054
        %v8247 = vsel %vm1347, %v8056, %v8058
        %v8248 = vsel %vm1347, %v8058, %v8060
        %v8249 = vsel %vm1347, %v8060, %v8062
        %v8250 = vsel %vm1347, %v8062, %v8064
        %v8251 = vsel %vm1347, %v8064, %v8066
        %v8252 = vsel %vm1347, %v8066, %v8068
        %v8253 = vsel %vm1347, %v8070, %v8072
        %v8254 = vsel %vm1347, %v8072, %v8074
        %v8255 = vsel %vm1347, %v8074, %v8076
        %v8256 = vsel %vm1347, %v8076, %v8078
        %v8257 = vsel %vm1347, %v8078, %v8080
        %v8258 = vsel %vm1347, %v8080, %v8082
        %v8259 = vsel %vm1347, %v8084, %v8086
        %v8260 = vsel %vm1347, %v8086, %v8088
        %v8261 = vsel %vm1347, %v8088, %v8090
        %v8262 = vsel %vm1347, %v8090, %v8092
        %v8263 = vsel %vm1347, %v8092, %v8094
        %v8264 = vsel %vm1347, %v8094, %v8096
        %v8265 = vsel %vm1347, %v8098, %v8100
        %v8266 = vsel %vm1347, %v8100, %v8102
        %v8267 = vsel %vm1347, %v8102, %v8104
        %v8268 = vsel %vm1347, %v8104, %v8106
        %v8269 = vsel %vm1347, %v8106, %v8108
        %v8270 = vsel %vm1347, %v8108, %v8110
        %v8271 = vsel %vm1347, %v8112, %v8114
        %v8272 = vsel %vm1347, %v8114, %v8116
        %v8273 = vsel %vm1347, %v8116, %v8118
        %v8274 = vsel %vm1347, %v8118, %v8120
        %v8275 = vsel %vm1347, %v8120, %v8122
        %v8276 = vsel %vm1347, %v8122, %v8124
        %v8277 = vsel %vm1347, %v8126, %v8128
        %v8278 = vsel %vm1347, %v8128, %v8130
        %v8279 = vsel %vm1347, %v8130, %v8132
        %v8280 = vsel %vm1347, %v8132, %v8134
        %v8281 = vsel %vm1347, %v8134, %v8136
        %v8282 = vsel %vm1347, %v8136, %v8138
        %v8283 = vsel %vm1347, %v8140, %v8142
        %v8284 = vsel %vm1347, %v8142, %v8144
        %v8285 = vsel %vm1347, %v8144, %v8146
        %v8286 = vsel %vm1347, %v8146, %v8148
        %v8287 = vsel %vm1347, %v8148, %v8150
        %v8288 = vsel %vm1347, %v8150, %v8152
        %v8289 = vsel %vm1347, %v8154, %v8156
        %v8290 = vsel %vm1347, %v8156, %v8158
        %v8291 = vsel %vm1347, %v8158, %v8160
        %v8292 = vsel %vm1347, %v8160, %v8162
        %v8293 = vsel %vm1347, %v8162, %v8164
        %v8294 = vsel %vm1347, %v8164, %v8166
        %v8295 = vsel %vm1347, %v8168, %v8170
        %v8296 = vsel %vm1347, %v8170, %v8172
        %v8297 = vsel %vm1347, %v8172, %v8174
        %v8298 = vsel %vm1347, %v8174, %v8176
        %v8299 = vsel %vm1347, %v8176, %v8178
        %v8300 = vsel %vm1347, %v8178, %v8180
        %v8301 = vsel %vm1347, %v8182, %v8184
        %v8302 = vsel %vm1347, %v8184, %v8186
        %v8303 = vsel %vm1347, %v8186, %v8188
        %v8304 = vsel %vm1347, %v8188, %v8190
        %v8305 = vsel %vm1347, %v8190, %v8192
        %v8306 = vsel %vm1347, %v8192, %v8194
        %v8307 = vsel %vm1347, %v8196, %v8198
        %v8308 = vsel %vm1347, %v8198, %v8200
        %v8309 = vsel %vm1347, %v8200, %v8202
        %v8310 = vsel %vm1347, %v8202, %v8204
        %v8311 = vsel %vm1347, %v8204, %v8206
        %v8312 = vsel %vm1347, %v8206, %v8208
        %v8313 = vsel %vm1347, %v8210, %v8212
        %v8314 = vsel %vm1347, %v8212, %v8214
        %v8315 = vsel %vm1347, %v8214, %v8216
        %v8316 = vsel %vm1347, %v8216, %v8218
        %v8317 = vsel %vm1347, %v8218, %v8220
        %v8318 = vsel %vm1347, %v8220, %v8222
        %v8431 = vadd.f32 %v7081, %v8000
        %v8432 = vadd.f32 %v7082, %v8223
        %v8433 = vadd.f32 %v7083, %v8224
        %v8434 = vadd.f32 %v7084, %v8225
        %v8435 = vadd.f32 %v7085, %v8226
        %v8436 = vadd.f32 %v7086, %v8227
        %v8437 = vadd.f32 %v7087, %v8228
        %v8438 = vadd.f32 %v7088, %v8014
        %v8439 = vadd.f32 %v7089, %v8229
        %v8440 = vadd.f32 %v7090, %v8230
        %v8441 = vadd.f32 %v7091, %v8231
        %v8442 = vadd.f32 %v7092, %v8232
        %v8443 = vadd.f32 %v7093, %v8233
        %v8444 = vadd.f32 %v7094, %v8234
        %v8445 = vadd.f32 %v7095, %v8028
        %v8446 = vadd.f32 %v7096, %v8235
        %v8447 = vadd.f32 %v7097, %v8236
        %v8448 = vadd.f32 %v7098, %v8237
        %v8449 = vadd.f32 %v7099, %v8238
        %v8450 = vadd.f32 %v7100, %v8239
        %v8451 = vadd.f32 %v7101, %v8240
        %v8452 = vadd.f32 %v7102, %v8042
        %v8453 = vadd.f32 %v7103, %v8241
        %v8454 = vadd.f32 %v7104, %v8242
        %v8455 = vadd.f32 %v7105, %v8243
        %v8456 = vadd.f32 %v7106, %v8244
        %v8457 = vadd.f32 %v7107, %v8245
        %v8458 = vadd.f32 %v7108, %v8246
        %v8459 = vadd.f32 %v7109, %v8056
        %v8460 = vadd.f32 %v7110, %v8247
        %v8461 = vadd.f32 %v7111, %v8248
        %v8462 = vadd.f32 %v7112, %v8249
        %v8463 = vadd.f32 %v7113, %v8250
        %v8464 = vadd.f32 %v7114, %v8251
        %v8465 = vadd.f32 %v7115, %v8252
        %v8466 = vadd.f32 %v7116, %v8070
        %v8467 = vadd.f32 %v7117, %v8253
        %v8468 = vadd.f32 %v7118, %v8254
        %v8469 = vadd.f32 %v7119, %v8255
        %v8470 = vadd.f32 %v7120, %v8256
        %v8471 = vadd.f32 %v7121, %v8257
        %v8472 = vadd.f32 %v7122, %v8258
        %v8473 = vadd.f32 %v7123, %v8084
        %v8474 = vadd.f32 %v7124, %v8259
        %v8475 = vadd.f32 %v7125, %v8260
        %v8476 = vadd.f32 %v7126, %v8261
        %v8477 = vadd.f32 %v7127, %v8262
        %v8478 = vadd.f32 %v7128, %v8263
        %v8479 = vadd.f32 %v7129, %v8264
        %v8480 = vadd.f32 %v7130, %v8098
        %v8481 = vadd.f32 %v7131, %v8265
        %v8482 = vadd.f32 %v7132, %v8266
        %v8483 = vadd.f32 %v7133, %v8267
        %v8484 = vadd.f32 %v7134, %v8268
        %v8485 = vadd.f32 %v7135, %v8269
        %v8486 = vadd.f32 %v7136, %v8270
        %v8487 = vadd.f32 %v7137, %v8112
        %v8488 = vadd.f32 %v7138, %v8271
        %v8489 = vadd.f32 %v7139, %v8272
        %v8490 = vadd.f32 %v7140, %v8273
        %v8491 = vadd.f32 %v7141, %v8274
        %v8492 = vadd.f32 %v7142, %v8275
        %v8493 = vadd.f32 %v7143, %v8276
        %v8494 = vadd.f32 %v7144, %v8126
        %v8495 = vadd.f32 %v7145, %v8277
        %v8496 = vadd.f32 %v7146, %v8278
        %v8497 = vadd.f32 %v7147, %v8279
        %v8498 = vadd.f32 %v7148, %v8280
        %v8499 = vadd.f32 %v7149, %v8281
        %v8500 = vadd.f32 %v7150, %v8282
        %v8501 = vadd.f32 %v7151, %v8140
        %v8502 = vadd.f32 %v7152, %v8283
        %v8503 = vadd.f32 %v7153, %v8284
        %v8504 = vadd.f32 %v7154, %v8285
        %v8505 = vadd.f32 %v7155, %v8286
        %v8506 = vadd.f32 %v7156, %v8287
        %v8507 = vadd.f32 %v7157, %v8288
        %v8508 = vadd.f32 %v7158, %v8154
        %v8509 = vadd.f32 %v7159, %v8289
        %v8510 = vadd.f32 %v7160, %v8290
        %v8511 = vadd.f32 %v7161, %v8291
        %v8512 = vadd.f32 %v7162, %v8292
        %v8513 = vadd.f32 %v7163, %v8293
        %v8514 = vadd.f32 %v7164, %v8294
        %v8515 = vadd.f32 %v7165, %v8168
        %v8516 = vadd.f32 %v7166, %v8295
        %v8517 = vadd.f32 %v7167, %v8296
        %v8518 = vadd.f32 %v7168, %v8297
        %v8519 = vadd.f32 %v7169, %v8298
        %v8520 = vadd.f32 %v7170, %v8299
        %v8521 = vadd.f32 %v7171, %v8300
        %v8522 = vadd.f32 %v7172, %v8182
        %v8523 = vadd.f32 %v7173, %v8301
        %v8524 = vadd.f32 %v7174, %v8302
        %v8525 = vadd.f32 %v7175, %v8303
        %v8526 = vadd.f32 %v7176, %v8304
        %v8527 = vadd.f32 %v7177, %v8305
        %v8528 = vadd.f32 %v7178, %v8306
        %v8529 = vadd.f32 %v7179, %v8196
        %v8530 = vadd.f32 %v7180, %v8307
        %v8531 = vadd.f32 %v7181, %v8308
        %v8532 = vadd.f32 %v7182, %v8309
        %v8533 = vadd.f32 %v7183, %v8310
        %v8534 = vadd.f32 %v7184, %v8311
        %v8535 = vadd.f32 %v7185, %v8312
        %v8536 = vadd.f32 %v7186, %v8210
        %v8537 = vadd.f32 %v7187, %v8313
        %v8538 = vadd.f32 %v7188, %v8314
        %v8539 = vadd.f32 %v7189, %v8315
        %v8540 = vadd.f32 %v7190, %v8316
        %v8541 = vadd.f32 %v7191, %v8317
        %v8542 = vadd.f32 %v7192, %v8318
        %s8543 = sld [smem:[#allocation3]]
        %v8544 = vstv %s8543
        %v8545 = vadd.f32 %v8431, %v8544
        %v8546 = vadd.f32 %v8432, %v8544
        %v8547 = vadd.f32 %v8433, %v8544
        %v8548 = vadd.f32 %v8434, %v8544
        %v8549 = vadd.f32 %v8435, %v8544
        %v8550 = vadd.f32 %v8436, %v8544
        %v8551 = vadd.f32 %v8437, %v8544
        %v8552 = vadd.f32 %v8438, %v8544
        %v8553 = vadd.f32 %v8439, %v8544
        %v8554 = vadd.f32 %v8440, %v8544
        %v8555 = vadd.f32 %v8441, %v8544
        %v8556 = vadd.f32 %v8442, %v8544
        %v8557 = vadd.f32 %v8443, %v8544
        %v8558 = vadd.f32 %v8444, %v8544
        %v8559 = vadd.f32 %v8445, %v8544
        %v8560 = vadd.f32 %v8446, %v8544
        %v8561 = vadd.f32 %v8447, %v8544
        %v8562 = vadd.f32 %v8448, %v8544
        %v8563 = vadd.f32 %v8449, %v8544
        %v8564 = vadd.f32 %v8450, %v8544
        %v8565 = vadd.f32 %v8451, %v8544
        %v8566 = vadd.f32 %v8452, %v8544
        %v8567 = vadd.f32 %v8453, %v8544
        %v8568 = vadd.f32 %v8454, %v8544
        %v8569 = vadd.f32 %v8455, %v8544
        %v8570 = vadd.f32 %v8456, %v8544
        %v8571 = vadd.f32 %v8457, %v8544
        %v8572 = vadd.f32 %v8458, %v8544
        %v8573 = vadd.f32 %v8459, %v8544
        %v8574 = vadd.f32 %v8460, %v8544
        %v8575 = vadd.f32 %v8461, %v8544
        %v8576 = vadd.f32 %v8462, %v8544
        %v8577 = vadd.f32 %v8463, %v8544
        %v8578 = vadd.f32 %v8464, %v8544
        %v8579 = vadd.f32 %v8465, %v8544
        %v8580 = vadd.f32 %v8466, %v8544
        %v8581 = vadd.f32 %v8467, %v8544
        %v8582 = vadd.f32 %v8468, %v8544
        %v8583 = vadd.f32 %v8469, %v8544
        %v8584 = vadd.f32 %v8470, %v8544
        %v8585 = vadd.f32 %v8471, %v8544
        %v8586 = vadd.f32 %v8472, %v8544
        %v8587 = vadd.f32 %v8473, %v8544
        %v8588 = vadd.f32 %v8474, %v8544
        %v8589 = vadd.f32 %v8475, %v8544
        %v8590 = vadd.f32 %v8476, %v8544
        %v8591 = vadd.f32 %v8477, %v8544
        %v8592 = vadd.f32 %v8478, %v8544
        %v8593 = vadd.f32 %v8479, %v8544
        %v8594 = vadd.f32 %v8480, %v8544
        %v8595 = vadd.f32 %v8481, %v8544
        %v8596 = vadd.f32 %v8482, %v8544
        %v8597 = vadd.f32 %v8483, %v8544
        %v8598 = vadd.f32 %v8484, %v8544
        %v8599 = vadd.f32 %v8485, %v8544
        %v8600 = vadd.f32 %v8486, %v8544
        %v8601 = vadd.f32 %v8487, %v8544
        %v8602 = vadd.f32 %v8488, %v8544
        %v8603 = vadd.f32 %v8489, %v8544
        %v8604 = vadd.f32 %v8490, %v8544
        %v8605 = vadd.f32 %v8491, %v8544
        %v8606 = vadd.f32 %v8492, %v8544
        %v8607 = vadd.f32 %v8493, %v8544
        %v8608 = vadd.f32 %v8494, %v8544
        %v8609 = vadd.f32 %v8495, %v8544
        %v8610 = vadd.f32 %v8496, %v8544
        %v8611 = vadd.f32 %v8497, %v8544
        %v8612 = vadd.f32 %v8498, %v8544
        %v8613 = vadd.f32 %v8499, %v8544
        %v8614 = vadd.f32 %v8500, %v8544
        %v8615 = vadd.f32 %v8501, %v8544
        %v8616 = vadd.f32 %v8502, %v8544
        %v8617 = vadd.f32 %v8503, %v8544
        %v8618 = vadd.f32 %v8504, %v8544
        %v8619 = vadd.f32 %v8505, %v8544
        %v8620 = vadd.f32 %v8506, %v8544
        %v8621 = vadd.f32 %v8507, %v8544
        %v8622 = vadd.f32 %v8508, %v8544
        %v8623 = vadd.f32 %v8509, %v8544
        %v8624 = vadd.f32 %v8510, %v8544
        %v8625 = vadd.f32 %v8511, %v8544
        %v8626 = vadd.f32 %v8512, %v8544
        %v8627 = vadd.f32 %v8513, %v8544
        %v8628 = vadd.f32 %v8514, %v8544
        %v8629 = vadd.f32 %v8515, %v8544
        %v8630 = vadd.f32 %v8516, %v8544
        %v8631 = vadd.f32 %v8517, %v8544
        %v8632 = vadd.f32 %v8518, %v8544
        %v8633 = vadd.f32 %v8519, %v8544
        %v8634 = vadd.f32 %v8520, %v8544
        %v8635 = vadd.f32 %v8521, %v8544
        %v8636 = vadd.f32 %v8522, %v8544
        %v8637 = vadd.f32 %v8523, %v8544
        %v8638 = vadd.f32 %v8524, %v8544
        %v8639 = vadd.f32 %v8525, %v8544
        %v8640 = vadd.f32 %v8526, %v8544
        %v8641 = vadd.f32 %v8527, %v8544
        %v8642 = vadd.f32 %v8528, %v8544
        %v8643 = vadd.f32 %v8529, %v8544
        %v8644 = vadd.f32 %v8530, %v8544
        %v8645 = vadd.f32 %v8531, %v8544
        %v8646 = vadd.f32 %v8532, %v8544
        %v8647 = vadd.f32 %v8533, %v8544
        %v8648 = vadd.f32 %v8534, %v8544
        %v8649 = vadd.f32 %v8535, %v8544
        %v8650 = vadd.f32 %v8536, %v8544
        %v8651 = vadd.f32 %v8537, %v8544
        %v8652 = vadd.f32 %v8538, %v8544
        %v8653 = vadd.f32 %v8539, %v8544
        %v8654 = vadd.f32 %v8540, %v8544
        %v8655 = vadd.f32 %v8541, %v8544
        %v8656 = vadd.f32 %v8542, %v8544
        %v8657 = vmax.f32 %v8545, 0.0
        %v8658 = vmax.f32 %v8546, 0.0
        %v8659 = vmax.f32 %v8547, 0.0
        %v8660 = vmax.f32 %v8548, 0.0
        %v8661 = vmax.f32 %v8549, 0.0
        %v8662 = vmax.f32 %v8550, 0.0
        %v8663 = vmax.f32 %v8551, 0.0
        %v8664 = vmax.f32 %v8552, 0.0
        %v8665 = vmax.f32 %v8553, 0.0
        %v8666 = vmax.f32 %v8554, 0.0
        %v8667 = vmax.f32 %v8555, 0.0
        %v8668 = vmax.f32 %v8556, 0.0
        %v8669 = vmax.f32 %v8557, 0.0
        %v8670 = vmax.f32 %v8558, 0.0
        %v8671 = vmax.f32 %v8559, 0.0
        %v8672 = vmax.f32 %v8560, 0.0
        %v8673 = vmax.f32 %v8561, 0.0
        %v8674 = vmax.f32 %v8562, 0.0
        %v8675 = vmax.f32 %v8563, 0.0
        %v8676 = vmax.f32 %v8564, 0.0
        %v8677 = vmax.f32 %v8565, 0.0
        %v8678 = vmax.f32 %v8566, 0.0
        %v8679 = vmax.f32 %v8567, 0.0
        %v8680 = vmax.f32 %v8568, 0.0
        %v8681 = vmax.f32 %v8569, 0.0
        %v8682 = vmax.f32 %v8570, 0.0
        %v8683 = vmax.f32 %v8571, 0.0
        %v8684 = vmax.f32 %v8572, 0.0
        %v8685 = vmax.f32 %v8573, 0.0
        %v8686 = vmax.f32 %v8574, 0.0
        %v8687 = vmax.f32 %v8575, 0.0
        %v8688 = vmax.f32 %v8576, 0.0
        %v8689 = vmax.f32 %v8577, 0.0
        %v8690 = vmax.f32 %v8578, 0.0
        %v8691 = vmax.f32 %v8579, 0.0
        %v8692 = vmax.f32 %v8580, 0.0
        %v8693 = vmax.f32 %v8581, 0.0
        %v8694 = vmax.f32 %v8582, 0.0
        %v8695 = vmax.f32 %v8583, 0.0
        %v8696 = vmax.f32 %v8584, 0.0
        %v8697 = vmax.f32 %v8585, 0.0
        %v8698 = vmax.f32 %v8586, 0.0
        %v8699 = vmax.f32 %v8587, 0.0
        %v8700 = vmax.f32 %v8588, 0.0
        %v8701 = vmax.f32 %v8589, 0.0
        %v8702 = vmax.f32 %v8590, 0.0
        %v8703 = vmax.f32 %v8591, 0.0
        %v8704 = vmax.f32 %v8592, 0.0
        %v8705 = vmax.f32 %v8593, 0.0
        %v8706 = vmax.f32 %v8594, 0.0
        %v8707 = vmax.f32 %v8595, 0.0
        %v8708 = vmax.f32 %v8596, 0.0
        %v8709 = vmax.f32 %v8597, 0.0
        %v8710 = vmax.f32 %v8598, 0.0
        %v8711 = vmax.f32 %v8599, 0.0
        %v8712 = vmax.f32 %v8600, 0.0
        %v8713 = vmax.f32 %v8601, 0.0
        %v8714 = vmax.f32 %v8602, 0.0
        %v8715 = vmax.f32 %v8603, 0.0
        %v8716 = vmax.f32 %v8604, 0.0
        %v8717 = vmax.f32 %v8605, 0.0
        %v8718 = vmax.f32 %v8606, 0.0
        %v8719 = vmax.f32 %v8607, 0.0
        %v8720 = vmax.f32 %v8608, 0.0
        %v8721 = vmax.f32 %v8609, 0.0
        %v8722 = vmax.f32 %v8610, 0.0
        %v8723 = vmax.f32 %v8611, 0.0
        %v8724 = vmax.f32 %v8612, 0.0
        %v8725 = vmax.f32 %v8613, 0.0
        %v8726 = vmax.f32 %v8614, 0.0
        %v8727 = vmax.f32 %v8615, 0.0
        %v8728 = vmax.f32 %v8616, 0.0
        %v8729 = vmax.f32 %v8617, 0.0
        %v8730 = vmax.f32 %v8618, 0.0
        %v8731 = vmax.f32 %v8619, 0.0
        %v8732 = vmax.f32 %v8620, 0.0
        %v8733 = vmax.f32 %v8621, 0.0
        %v8734 = vmax.f32 %v8622, 0.0
        %v8735 = vmax.f32 %v8623, 0.0
        %v8736 = vmax.f32 %v8624, 0.0
        %v8737 = vmax.f32 %v8625, 0.0
        %v8738 = vmax.f32 %v8626, 0.0
        %v8739 = vmax.f32 %v8627, 0.0
        %v8740 = vmax.f32 %v8628, 0.0
        %v8741 = vmax.f32 %v8629, 0.0
        %v8742 = vmax.f32 %v8630, 0.0
        %v8743 = vmax.f32 %v8631, 0.0
        %v8744 = vmax.f32 %v8632, 0.0
        %v8745 = vmax.f32 %v8633, 0.0
        %v8746 = vmax.f32 %v8634, 0.0
        %v8747 = vmax.f32 %v8635, 0.0
        %v8748 = vmax.f32 %v8636, 0.0
        %v8749 = vmax.f32 %v8637, 0.0
        %v8750 = vmax.f32 %v8638, 0.0
        %v8751 = vmax.f32 %v8639, 0.0
        %v8752 = vmax.f32 %v8640, 0.0
        %v8753 = vmax.f32 %v8641, 0.0
        %v8754 = vmax.f32 %v8642, 0.0
        %v8755 = vmax.f32 %v8643, 0.0
        %v8756 = vmax.f32 %v8644, 0.0
        %v8757 = vmax.f32 %v8645, 0.0
        %v8758 = vmax.f32 %v8646, 0.0
        %v8759 = vmax.f32 %v8647, 0.0
        %v8760 = vmax.f32 %v8648, 0.0
        %v8761 = vmax.f32 %v8649, 0.0
        %v8762 = vmax.f32 %v8650, 0.0
        %v8763 = vmax.f32 %v8651, 0.0
        %v8764 = vmax.f32 %v8652, 0.0
        %v8765 = vmax.f32 %v8653, 0.0
        %v8766 = vmax.f32 %v8654, 0.0
        %v8767 = vmax.f32 %v8655, 0.0
        %v8768 = vmax.f32 %v8656, 0.0
        %v8769 = vld [vmem:[%s5] sm:$0xff]
        %v8770 = vld [vmem:[%s5 + $0x8] sm:$0xff]
        %v8771 = vld [vmem:[%s5 + $0x10] sm:$0xff]
        %v8772 = vld [vmem:[%s5 + $0x18] sm:$0xff]
        %v8773 = vld [vmem:[%s5 + $0x20] sm:$0xff]
        %v8774 = vld [vmem:[%s5 + $0x28] sm:$0xff]
        %v8775 = vld [vmem:[%s5 + $0x30] sm:$0xff]
        %v8776 = vld [vmem:[%s5 + $0x38] sm:$0xff]
        %v8777 = vld [vmem:[%s5 + $0x40] sm:$0xff]
        %v8778 = vld [vmem:[%s5 + $0x48] sm:$0xff]
        %v8779 = vld [vmem:[%s5 + $0x50] sm:$0xff]
        %v8780 = vld [vmem:[%s5 + $0x58] sm:$0xff]
        %v8781 = vld [vmem:[%s5 + $0x60] sm:$0xff]
        %v8782 = vld [vmem:[%s5 + $0x68] sm:$0xff]
        %v8783 = vld [vmem:[%s5 + $0x70] sm:$0xff]
        %v8784 = vld [vmem:[%s5 + $0x78] sm:$0xff]
        %v8785 = vld [vmem:[%s5 + $0x80] sm:$0xff]
        %v8786 = vld [vmem:[%s5 + $0x88] sm:$0xff]
        %v8787 = vld [vmem:[%s5 + $0x90] sm:$0xff]
        %v8788 = vld [vmem:[%s5 + $0x98] sm:$0xff]
        %v8789 = vld [vmem:[%s5 + $0xa0] sm:$0xff]
        %v8790 = vld [vmem:[%s5 + $0xa8] sm:$0xff]
        %v8791 = vld [vmem:[%s5 + $0xb0] sm:$0xff]
        %v8792 = vld [vmem:[%s5 + $0xb8] sm:$0xff]
        %v8793 = vld [vmem:[%s5 + $0xc0] sm:$0xff]
        %v8794 = vld [vmem:[%s5 + $0xc8] sm:$0xff]
        %v8795 = vld [vmem:[%s5 + $0xd0] sm:$0xff]
        %v8796 = vld [vmem:[%s5 + $0xd8] sm:$0xff]
        %v8797 = vld [vmem:[%s5 + $0xe0] sm:$0xff]
        %v8798 = vld [vmem:[%s5 + $0xe8] sm:$0xff]
        %v8799 = vld [vmem:[%s5 + $0xf0] sm:$0xff]
        %v8800 = vld [vmem:[%s5 + $0xf8] sm:$0xff]
        %v8801 = vld [vmem:[%s5 + $0x100] sm:$0xff]
        %v8802 = vld [vmem:[%s5 + $0x108] sm:$0xff]
        %v8803 = vld [vmem:[%s5 + $0x110] sm:$0xff]
        %v8804 = vld [vmem:[%s5 + $0x118] sm:$0xff]
        %v8805 = vld [vmem:[%s5 + $0x120] sm:$0xff]
        %v8806 = vld [vmem:[%s5 + $0x128] sm:$0xff]
        %v8807 = vld [vmem:[%s5 + $0x130] sm:$0xff]
        %v8808 = vld [vmem:[%s5 + $0x138] sm:$0xff]
        %v8809 = vld [vmem:[%s5 + $0x140] sm:$0xff]
        %v8810 = vld [vmem:[%s5 + $0x148] sm:$0xff]
        %v8811 = vld [vmem:[%s5 + $0x150] sm:$0xff]
        %v8812 = vld [vmem:[%s5 + $0x158] sm:$0xff]
        %v8813 = vld [vmem:[%s5 + $0x160] sm:$0xff]
        %v8814 = vld [vmem:[%s5 + $0x168] sm:$0xff]
        %v8815 = vld [vmem:[%s5 + $0x170] sm:$0xff]
        %v8816 = vld [vmem:[%s5 + $0x178] sm:$0xff]
        %v8817 = vld [vmem:[%s5 + $0x180] sm:$0xff]
        %v8818 = vld [vmem:[%s5 + $0x188] sm:$0xff]
        %v8819 = vld [vmem:[%s5 + $0x190] sm:$0xff]
        %v8820 = vld [vmem:[%s5 + $0x198] sm:$0xff]
        %v8821 = vld [vmem:[%s5 + $0x1a0] sm:$0xff]
        %v8822 = vld [vmem:[%s5 + $0x1a8] sm:$0xff]
        %v8823 = vld [vmem:[%s5 + $0x1b0] sm:$0xff]
        %v8824 = vld [vmem:[%s5 + $0x1b8] sm:$0xff]
        %v8825 = vld [vmem:[%s5 + $0x1c0] sm:$0xff]
        %v8826 = vld [vmem:[%s5 + $0x1c8] sm:$0xff]
        %v8827 = vld [vmem:[%s5 + $0x1d0] sm:$0xff]
        %v8828 = vld [vmem:[%s5 + $0x1d8] sm:$0xff]
        %v8829 = vld [vmem:[%s5 + $0x1e0] sm:$0xff]
        %v8830 = vld [vmem:[%s5 + $0x1e8] sm:$0xff]
        %v8831 = vld [vmem:[%s5 + $0x1f0] sm:$0xff]
        %v8832 = vld [vmem:[%s5 + $0x1f8] sm:$0xff]
        %v8833 = vld [vmem:[%s5 + $0x200] sm:$0xff]
        %v8834 = vld [vmem:[%s5 + $0x208] sm:$0xff]
        %v8835 = vld [vmem:[%s5 + $0x210] sm:$0xff]
        %v8836 = vld [vmem:[%s5 + $0x218] sm:$0xff]
        %v8837 = vld [vmem:[%s5 + $0x220] sm:$0xff]
        %v8838 = vld [vmem:[%s5 + $0x228] sm:$0xff]
        %v8839 = vld [vmem:[%s5 + $0x230] sm:$0xff]
        %v8840 = vld [vmem:[%s5 + $0x238] sm:$0xff]
        %v8841 = vld [vmem:[%s5 + $0x240] sm:$0xff]
        %v8842 = vld [vmem:[%s5 + $0x248] sm:$0xff]
        %v8843 = vld [vmem:[%s5 + $0x250] sm:$0xff]
        %v8844 = vld [vmem:[%s5 + $0x258] sm:$0xff]
        %v8845 = vld [vmem:[%s5 + $0x260] sm:$0xff]
        %v8846 = vld [vmem:[%s5 + $0x268] sm:$0xff]
        %v8847 = vld [vmem:[%s5 + $0x270] sm:$0xff]
        %v8848 = vld [vmem:[%s5 + $0x278] sm:$0xff]
        %v8849 = vld [vmem:[%s5 + $0x280] sm:$0xff]
        %v8850 = vld [vmem:[%s5 + $0x288] sm:$0xff]
        %v8851 = vld [vmem:[%s5 + $0x290] sm:$0xff]
        %v8852 = vld [vmem:[%s5 + $0x298] sm:$0xff]
        %v8853 = vld [vmem:[%s5 + $0x2a0] sm:$0xff]
        %v8854 = vld [vmem:[%s5 + $0x2a8] sm:$0xff]
        %v8855 = vld [vmem:[%s5 + $0x2b0] sm:$0xff]
        %v8856 = vld [vmem:[%s5 + $0x2b8] sm:$0xff]
        %v8857 = vld [vmem:[%s5 + $0x2c0] sm:$0xff]
        %v8858 = vld [vmem:[%s5 + $0x2c8] sm:$0xff]
        %v8859 = vld [vmem:[%s5 + $0x2d0] sm:$0xff]
        %v8860 = vld [vmem:[%s5 + $0x2d8] sm:$0xff]
        %v8861 = vld [vmem:[%s5 + $0x2e0] sm:$0xff]
        %v8862 = vld [vmem:[%s5 + $0x2e8] sm:$0xff]
        %v8863 = vld [vmem:[%s5 + $0x2f0] sm:$0xff]
        %v8864 = vld [vmem:[%s5 + $0x2f8] sm:$0xff]
        %v8865 = vld [vmem:[%s5 + $0x300] sm:$0xff]
        %v8866 = vld [vmem:[%s5 + $0x308] sm:$0xff]
        %v8867 = vld [vmem:[%s6] sm:$0x1]
        %v8869 = vlaneseq
        %v8870 = vshrl.u32 %v8869, 7
        %v8871 = vsub.s32 0, %v8870
        %v8872 = vrot.slane %v8867, %v8871
        %8986 = vrot.lane.b32.xlu0 %v8657, 28
        %v8987 = vpop.permute.xlu0 %8986
        %8988 = vrot.lane.b32.xlu0 %v8658, 28
        %v8989 = vpop.permute.xlu0 %8988
        %8990 = vrot.lane.b32.xlu0 %v8659, 28
        %v8991 = vpop.permute.xlu0 %8990
        %8992 = vrot.lane.b32.xlu0 %v8660, 28
        %v8993 = vpop.permute.xlu0 %8992
        %8994 = vrot.lane.b32.xlu0 %v8661, 28
        %v8995 = vpop.permute.xlu0 %8994
        %8996 = vrot.lane.b32.xlu0 %v8662, 28
        %v8997 = vpop.permute.xlu0 %8996
        %8998 = vrot.lane.b32.xlu0 %v8663, 28
        %v8999 = vpop.permute.xlu0 %8998
        %9000 = vrot.lane.b32.xlu0 %v8664, 28
        %v9001 = vpop.permute.xlu0 %9000
        %9002 = vrot.lane.b32.xlu0 %v8665, 28
        %v9003 = vpop.permute.xlu0 %9002
        %9004 = vrot.lane.b32.xlu0 %v8666, 28
        %v9005 = vpop.permute.xlu0 %9004
        %9006 = vrot.lane.b32.xlu0 %v8667, 28
        %v9007 = vpop.permute.xlu0 %9006
        %9008 = vrot.lane.b32.xlu0 %v8668, 28
        %v9009 = vpop.permute.xlu0 %9008
        %9010 = vrot.lane.b32.xlu0 %v8669, 28
        %v9011 = vpop.permute.xlu0 %9010
        %9012 = vrot.lane.b32.xlu0 %v8670, 28
        %v9013 = vpop.permute.xlu0 %9012
        %9014 = vrot.lane.b32.xlu0 %v8671, 28
        %v9015 = vpop.permute.xlu0 %9014
        %9016 = vrot.lane.b32.xlu0 %v8672, 28
        %v9017 = vpop.permute.xlu0 %9016
        %9018 = vrot.lane.b32.xlu0 %v8673, 28
        %v9019 = vpop.permute.xlu0 %9018
        %9020 = vrot.lane.b32.xlu0 %v8674, 28
        %v9021 = vpop.permute.xlu0 %9020
        %9022 = vrot.lane.b32.xlu0 %v8675, 28
        %v9023 = vpop.permute.xlu0 %9022
        %9024 = vrot.lane.b32.xlu0 %v8676, 28
        %v9025 = vpop.permute.xlu0 %9024
        %9026 = vrot.lane.b32.xlu0 %v8677, 28
        %v9027 = vpop.permute.xlu0 %9026
        %9028 = vrot.lane.b32.xlu0 %v8678, 28
        %v9029 = vpop.permute.xlu0 %9028
        %9030 = vrot.lane.b32.xlu0 %v8679, 28
        %v9031 = vpop.permute.xlu0 %9030
        %9032 = vrot.lane.b32.xlu0 %v8680, 28
        %v9033 = vpop.permute.xlu0 %9032
        %9034 = vrot.lane.b32.xlu0 %v8681, 28
        %v9035 = vpop.permute.xlu0 %9034
        %9036 = vrot.lane.b32.xlu0 %v8682, 28
        %v9037 = vpop.permute.xlu0 %9036
        %9038 = vrot.lane.b32.xlu0 %v8683, 28
        %v9039 = vpop.permute.xlu0 %9038
        %9040 = vrot.lane.b32.xlu0 %v8684, 28
        %v9041 = vpop.permute.xlu0 %9040
        %9042 = vrot.lane.b32.xlu0 %v8685, 28
        %v9043 = vpop.permute.xlu0 %9042
        %9044 = vrot.lane.b32.xlu0 %v8686, 28
        %v9045 = vpop.permute.xlu0 %9044
        %9046 = vrot.lane.b32.xlu0 %v8687, 28
        %v9047 = vpop.permute.xlu0 %9046
        %9048 = vrot.lane.b32.xlu0 %v8688, 28
        %v9049 = vpop.permute.xlu0 %9048
        %9050 = vrot.lane.b32.xlu0 %v8689, 28
        %v9051 = vpop.permute.xlu0 %9050
        %9052 = vrot.lane.b32.xlu0 %v8690, 28
        %v9053 = vpop.permute.xlu0 %9052
        %9054 = vrot.lane.b32.xlu0 %v8691, 28
        %v9055 = vpop.permute.xlu0 %9054
        %9056 = vrot.lane.b32.xlu0 %v8692, 28
        %v9057 = vpop.permute.xlu0 %9056
        %9058 = vrot.lane.b32.xlu0 %v8693, 28
        %v9059 = vpop.permute.xlu0 %9058
        %9060 = vrot.lane.b32.xlu0 %v8694, 28
        %v9061 = vpop.permute.xlu0 %9060
        %9062 = vrot.lane.b32.xlu0 %v8695, 28
        %v9063 = vpop.permute.xlu0 %9062
        %9064 = vrot.lane.b32.xlu0 %v8696, 28
        %v9065 = vpop.permute.xlu0 %9064
        %9066 = vrot.lane.b32.xlu0 %v8697, 28
        %v9067 = vpop.permute.xlu0 %9066
        %9068 = vrot.lane.b32.xlu0 %v8698, 28
        %v9069 = vpop.permute.xlu0 %9068
        %9070 = vrot.lane.b32.xlu0 %v8699, 28
        %v9071 = vpop.permute.xlu0 %9070
        %9072 = vrot.lane.b32.xlu0 %v8700, 28
        %v9073 = vpop.permute.xlu0 %9072
        %9074 = vrot.lane.b32.xlu0 %v8701, 28
        %v9075 = vpop.permute.xlu0 %9074
        %9076 = vrot.lane.b32.xlu0 %v8702, 28
        %v9077 = vpop.permute.xlu0 %9076
        %9078 = vrot.lane.b32.xlu0 %v8703, 28
        %v9079 = vpop.permute.xlu0 %9078
        %9080 = vrot.lane.b32.xlu0 %v8704, 28
        %v9081 = vpop.permute.xlu0 %9080
        %9082 = vrot.lane.b32.xlu0 %v8705, 28
        %v9083 = vpop.permute.xlu0 %9082
        %9084 = vrot.lane.b32.xlu0 %v8706, 28
        %v9085 = vpop.permute.xlu0 %9084
        %9086 = vrot.lane.b32.xlu0 %v8707, 28
        %v9087 = vpop.permute.xlu0 %9086
        %9088 = vrot.lane.b32.xlu0 %v8708, 28
        %v9089 = vpop.permute.xlu0 %9088
        %9090 = vrot.lane.b32.xlu0 %v8709, 28
        %v9091 = vpop.permute.xlu0 %9090
        %9092 = vrot.lane.b32.xlu0 %v8710, 28
        %v9093 = vpop.permute.xlu0 %9092
        %9094 = vrot.lane.b32.xlu0 %v8711, 28
        %v9095 = vpop.permute.xlu0 %9094
        %9096 = vrot.lane.b32.xlu0 %v8712, 28
        %v9097 = vpop.permute.xlu0 %9096
        %9098 = vrot.lane.b32.xlu0 %v8713, 28
        %v9099 = vpop.permute.xlu0 %9098
        %9100 = vrot.lane.b32.xlu0 %v8714, 28
        %v9101 = vpop.permute.xlu0 %9100
        %9102 = vrot.lane.b32.xlu0 %v8715, 28
        %v9103 = vpop.permute.xlu0 %9102
        %9104 = vrot.lane.b32.xlu0 %v8716, 28
        %v9105 = vpop.permute.xlu0 %9104
        %9106 = vrot.lane.b32.xlu0 %v8717, 28
        %v9107 = vpop.permute.xlu0 %9106
        %9108 = vrot.lane.b32.xlu0 %v8718, 28
        %v9109 = vpop.permute.xlu0 %9108
        %9110 = vrot.lane.b32.xlu0 %v8719, 28
        %v9111 = vpop.permute.xlu0 %9110
        %9112 = vrot.lane.b32.xlu0 %v8720, 28
        %v9113 = vpop.permute.xlu0 %9112
        %9114 = vrot.lane.b32.xlu0 %v8721, 28
        %v9115 = vpop.permute.xlu0 %9114
        %9116 = vrot.lane.b32.xlu0 %v8722, 28
        %v9117 = vpop.permute.xlu0 %9116
        %9118 = vrot.lane.b32.xlu0 %v8723, 28
        %v9119 = vpop.permute.xlu0 %9118
        %9120 = vrot.lane.b32.xlu0 %v8724, 28
        %v9121 = vpop.permute.xlu0 %9120
        %9122 = vrot.lane.b32.xlu0 %v8725, 28
        %v9123 = vpop.permute.xlu0 %9122
        %9124 = vrot.lane.b32.xlu0 %v8726, 28
        %v9125 = vpop.permute.xlu0 %9124
        %9126 = vrot.lane.b32.xlu0 %v8727, 28
        %v9127 = vpop.permute.xlu0 %9126
        %9128 = vrot.lane.b32.xlu0 %v8728, 28
        %v9129 = vpop.permute.xlu0 %9128
        %9130 = vrot.lane.b32.xlu0 %v8729, 28
        %v9131 = vpop.permute.xlu0 %9130
        %9132 = vrot.lane.b32.xlu0 %v8730, 28
        %v9133 = vpop.permute.xlu0 %9132
        %9134 = vrot.lane.b32.xlu0 %v8731, 28
        %v9135 = vpop.permute.xlu0 %9134
        %9136 = vrot.lane.b32.xlu0 %v8732, 28
        %v9137 = vpop.permute.xlu0 %9136
        %9138 = vrot.lane.b32.xlu0 %v8733, 28
        %v9139 = vpop.permute.xlu0 %9138
        %9140 = vrot.lane.b32.xlu0 %v8734, 28
        %v9141 = vpop.permute.xlu0 %9140
        %9142 = vrot.lane.b32.xlu0 %v8735, 28
        %v9143 = vpop.permute.xlu0 %9142
        %9144 = vrot.lane.b32.xlu0 %v8736, 28
        %v9145 = vpop.permute.xlu0 %9144
        %9146 = vrot.lane.b32.xlu0 %v8737, 28
        %v9147 = vpop.permute.xlu0 %9146
        %9148 = vrot.lane.b32.xlu0 %v8738, 28
        %v9149 = vpop.permute.xlu0 %9148
        %9150 = vrot.lane.b32.xlu0 %v8739, 28
        %v9151 = vpop.permute.xlu0 %9150
        %9152 = vrot.lane.b32.xlu0 %v8740, 28
        %v9153 = vpop.permute.xlu0 %9152
        %9154 = vrot.lane.b32.xlu0 %v8741, 28
        %v9155 = vpop.permute.xlu0 %9154
        %9156 = vrot.lane.b32.xlu0 %v8742, 28
        %v9157 = vpop.permute.xlu0 %9156
        %9158 = vrot.lane.b32.xlu0 %v8743, 28
        %v9159 = vpop.permute.xlu0 %9158
        %9160 = vrot.lane.b32.xlu0 %v8744, 28
        %v9161 = vpop.permute.xlu0 %9160
        %9162 = vrot.lane.b32.xlu0 %v8745, 28
        %v9163 = vpop.permute.xlu0 %9162
        %9164 = vrot.lane.b32.xlu0 %v8746, 28
        %v9165 = vpop.permute.xlu0 %9164
        %9166 = vrot.lane.b32.xlu0 %v8747, 28
        %v9167 = vpop.permute.xlu0 %9166
        %9168 = vrot.lane.b32.xlu0 %v8748, 28
        %v9169 = vpop.permute.xlu0 %9168
        %9170 = vrot.lane.b32.xlu0 %v8749, 28
        %v9171 = vpop.permute.xlu0 %9170
        %9172 = vrot.lane.b32.xlu0 %v8750, 28
        %v9173 = vpop.permute.xlu0 %9172
        %9174 = vrot.lane.b32.xlu0 %v8751, 28
        %v9175 = vpop.permute.xlu0 %9174
        %9176 = vrot.lane.b32.xlu0 %v8752, 28
        %v9177 = vpop.permute.xlu0 %9176
        %9178 = vrot.lane.b32.xlu0 %v8753, 28
        %v9179 = vpop.permute.xlu0 %9178
        %9180 = vrot.lane.b32.xlu0 %v8754, 28
        %v9181 = vpop.permute.xlu0 %9180
        %9182 = vrot.lane.b32.xlu0 %v8755, 28
        %v9183 = vpop.permute.xlu0 %9182
        %9184 = vrot.lane.b32.xlu0 %v8756, 28
        %v9185 = vpop.permute.xlu0 %9184
        %9186 = vrot.lane.b32.xlu0 %v8757, 28
        %v9187 = vpop.permute.xlu0 %9186
        %9188 = vrot.lane.b32.xlu0 %v8758, 28
        %v9189 = vpop.permute.xlu0 %9188
        %9190 = vrot.lane.b32.xlu0 %v8759, 28
        %v9191 = vpop.permute.xlu0 %9190
        %9192 = vrot.lane.b32.xlu0 %v8760, 28
        %v9193 = vpop.permute.xlu0 %9192
        %9194 = vrot.lane.b32.xlu0 %v8761, 28
        %v9195 = vpop.permute.xlu0 %9194
        %9196 = vrot.lane.b32.xlu0 %v8762, 28
        %v9197 = vpop.permute.xlu0 %9196
        %9198 = vrot.lane.b32.xlu0 %v8763, 28
        %v9199 = vpop.permute.xlu0 %9198
        %9200 = vrot.lane.b32.xlu0 %v8764, 28
        %v9201 = vpop.permute.xlu0 %9200
        %9202 = vrot.lane.b32.xlu0 %v8765, 28
        %v9203 = vpop.permute.xlu0 %9202
        %9204 = vrot.lane.b32.xlu0 %v8766, 28
        %v9205 = vpop.permute.xlu0 %9204
        %9206 = vrot.lane.b32.xlu0 %v8767, 28
        %v9207 = vpop.permute.xlu0 %9206
        %9208 = vrot.lane.b32.xlu0 %v8768, 28
        %v9209 = vpop.permute.xlu0 %9208
        %vm9210 = vcmask 228352
        %v9211 = vsel %vm9210, %v8987, %v8989
        %v9212 = vsel %vm9210, %v8989, %v8991
        %v9213 = vsel %vm9210, %v8991, %v8993
        %v9214 = vsel %vm9210, %v8993, %v8995
        %v9215 = vsel %vm9210, %v8995, %v8997
        %v9216 = vsel %vm9210, %v8997, %v8999
        %v9217 = vsel %vm9210, %v9001, %v9003
        %v9218 = vsel %vm9210, %v9003, %v9005
        %v9219 = vsel %vm9210, %v9005, %v9007
        %v9220 = vsel %vm9210, %v9007, %v9009
        %v9221 = vsel %vm9210, %v9009, %v9011
        %v9222 = vsel %vm9210, %v9011, %v9013
        %v9223 = vsel %vm9210, %v9015, %v9017
        %v9224 = vsel %vm9210, %v9017, %v9019
        %v9225 = vsel %vm9210, %v9019, %v9021
        %v9226 = vsel %vm9210, %v9021, %v9023
        %v9227 = vsel %vm9210, %v9023, %v9025
        %v9228 = vsel %vm9210, %v9025, %v9027
        %v9229 = vsel %vm9210, %v9029, %v9031
        %v9230 = vsel %vm9210, %v9031, %v9033
        %v9231 = vsel %vm9210, %v9033, %v9035
        %v9232 = vsel %vm9210, %v9035, %v9037
        %v9233 = vsel %vm9210, %v9037, %v9039
        %v9234 = vsel %vm9210, %v9039, %v9041
        %v9235 = vsel %vm9210, %v9043, %v9045
        %v9236 = vsel %vm9210, %v9045, %v9047
        %v9237 = vsel %vm9210, %v9047, %v9049
        %v9238 = vsel %vm9210, %v9049, %v9051
        %v9239 = vsel %vm9210, %v9051, %v9053
        %v9240 = vsel %vm9210, %v9053, %v9055
        %v9241 = vsel %vm9210, %v9057, %v9059
        %v9242 = vsel %vm9210, %v9059, %v9061
        %v9243 = vsel %vm9210, %v9061, %v9063
        %v9244 = vsel %vm9210, %v9063, %v9065
        %v9245 = vsel %vm9210, %v9065, %v9067
        %v9246 = vsel %vm9210, %v9067, %v9069
        %v9247 = vsel %vm9210, %v9071, %v9073
        %v9248 = vsel %vm9210, %v9073, %v9075
        %v9249 = vsel %vm9210, %v9075, %v9077
        %v9250 = vsel %vm9210, %v9077, %v9079
        %v9251 = vsel %vm9210, %v9079, %v9081
        %v9252 = vsel %vm9210, %v9081, %v9083
        %v9253 = vsel %vm9210, %v9085, %v9087
        %v9254 = vsel %vm9210, %v9087, %v9089
        %v9255 = vsel %vm9210, %v9089, %v9091
        %v9256 = vsel %vm9210, %v9091, %v9093
        %v9257 = vsel %vm9210, %v9093, %v9095
        %v9258 = vsel %vm9210, %v9095, %v9097
        %v9259 = vsel %vm9210, %v9099, %v9101
        %v9260 = vsel %vm9210, %v9101, %v9103
        %v9261 = vsel %vm9210, %v9103, %v9105
        %v9262 = vsel %vm9210, %v9105, %v9107
        %v9263 = vsel %vm9210, %v9107, %v9109
        %v9264 = vsel %vm9210, %v9109, %v9111
        %v9265 = vsel %vm9210, %v9113, %v9115
        %v9266 = vsel %vm9210, %v9115, %v9117
        %v9267 = vsel %vm9210, %v9117, %v9119
        %v9268 = vsel %vm9210, %v9119, %v9121
        %v9269 = vsel %vm9210, %v9121, %v9123
        %v9270 = vsel %vm9210, %v9123, %v9125
        %v9271 = vsel %vm9210, %v9127, %v9129
        %v9272 = vsel %vm9210, %v9129, %v9131
        %v9273 = vsel %vm9210, %v9131, %v9133
        %v9274 = vsel %vm9210, %v9133, %v9135
        %v9275 = vsel %vm9210, %v9135, %v9137
        %v9276 = vsel %vm9210, %v9137, %v9139
        %v9277 = vsel %vm9210, %v9141, %v9143
        %v9278 = vsel %vm9210, %v9143, %v9145
        %v9279 = vsel %vm9210, %v9145, %v9147
        %v9280 = vsel %vm9210, %v9147, %v9149
        %v9281 = vsel %vm9210, %v9149, %v9151
        %v9282 = vsel %vm9210, %v9151, %v9153
        %v9283 = vsel %vm9210, %v9155, %v9157
        %v9284 = vsel %vm9210, %v9157, %v9159
        %v9285 = vsel %vm9210, %v9159, %v9161
        %v9286 = vsel %vm9210, %v9161, %v9163
        %v9287 = vsel %vm9210, %v9163, %v9165
        %v9288 = vsel %vm9210, %v9165, %v9167
        %v9289 = vsel %vm9210, %v9169, %v9171
        %v9290 = vsel %vm9210, %v9171, %v9173
        %v9291 = vsel %vm9210, %v9173, %v9175
        %v9292 = vsel %vm9210, %v9175, %v9177
        %v9293 = vsel %vm9210, %v9177, %v9179
        %v9294 = vsel %vm9210, %v9179, %v9181
        %v9295 = vsel %vm9210, %v9183, %v9185
        %v9296 = vsel %vm9210, %v9185, %v9187
        %v9297 = vsel %vm9210, %v9187, %v9189
        %v9298 = vsel %vm9210, %v9189, %v9191
        %v9299 = vsel %vm9210, %v9191, %v9193
        %v9300 = vsel %vm9210, %v9193, %v9195
        %v9301 = vsel %vm9210, %v9197, %v9199
        %v9302 = vsel %vm9210, %v9199, %v9201
        %v9303 = vsel %vm9210, %v9201, %v9203
        %v9304 = vsel %vm9210, %v9203, %v9205
        %v9305 = vsel %vm9210, %v9205, %v9207
        %v9306 = vsel %vm9210, %v9207, %v9209
        %v9403 = vsel %vm452, %v8999, 0
        %v9405 = vsel %vm452, %v9013, 0
        %v9407 = vsel %vm452, %v9027, 0
        %v9409 = vsel %vm452, %v9041, 0
        %v9411 = vsel %vm452, %v9055, 0
        %v9413 = vsel %vm452, %v9069, 0
        %v9415 = vsel %vm452, %v9083, 0
        %v9417 = vsel %vm452, %v9097, 0
        %v9419 = vsel %vm452, %v9111, 0
        %v9421 = vsel %vm452, %v9125, 0
        %v9423 = vsel %vm452, %v9139, 0
        %v9425 = vsel %vm452, %v9153, 0
        %v9427 = vsel %vm452, %v9167, 0
        %v9429 = vsel %vm452, %v9181, 0
        %v9431 = vsel %vm452, %v9195, 0
        %v9433 = vsel %vm452, %v9209, 0
        %9435 = vmatprep.subr.mxu0 0.0
        %9436 = vmatpush1.msra.mxu0 %v8769
        %9437 = vmatprep.subr.mxu0 0.0
        %9438 = vmatpush1.msra.mxu0 %v8770
        %9439 = vmatprep.subr.mxu0 0.0
        %9440 = vmatpush1.msra.mxu0 %v8771
        %9441 = vmatprep.subr.mxu0 0.0
        %9442 = vmatpush1.msra.mxu0 %v8772
        %9443 = vmatprep.subr.mxu0 0.0
        %9444 = vmatpush1.msra.mxu0 %v8773
        %9445 = vmatprep.subr.mxu0 0.0
        %9446 = vmatpush1.msra.mxu0 %v8774
        %9447 = vmatprep.subr.mxu0 0.0
        %9448 = vmatpush1.msra.mxu0 %v8775
        %9449 = vmatprep.subr.mxu0 0.0
        %9450 = vmatpush1.msra.mxu0 %v8776
        %9451 = vmatprep.subr.mxu0 0.0
        %9452 = vmatpush1.msra.mxu0 %v8777
        %9453 = vmatprep.subr.mxu0 0.0
        %9454 = vmatpush1.msra.mxu0 %v8778
        %9455 = vmatprep.subr.mxu0 0.0
        %9456 = vmatpush1.msra.mxu0 %v8779
        %9457 = vmatprep.subr.mxu0 0.0
        %9458 = vmatpush1.msra.mxu0 %v8780
        %9459 = vmatprep.subr.mxu0 0.0
        %9460 = vmatpush1.msra.mxu0 %v8781
        %9461 = vmatprep.subr.mxu0 0.0
        %9462 = vmatpush1.msra.mxu0 %v8782
        %9463 = vmatprep.subr.mxu0 0.0
        %9464 = vmatpush1.msra.mxu0 %v8783
        %9465 = vmatprep.subr.mxu0 0.0
        %9466 = vmatpush1.msra.mxu0 %v8784
        %9467 = vmatprep.subr.mxu0 0.0
        %9468 = vmatpush1.msra.mxu0 %v8785
        %9469 = vmatprep.subr.mxu0 0.0
        %9470 = vmatpush1.msra.mxu0 %v8786
        %9471 = vmatprep.subr.mxu0 0.0
        %9472 = vmatpush1.msra.mxu0 %v8787
        %9473 = vmatprep.subr.mxu0 0.0
        %9474 = vmatpush1.msra.mxu0 %v8788
        %9475 = vmatprep.subr.mxu0 0.0
        %9476 = vmatpush1.msra.mxu0 %v8789
        %9477 = vmatprep.subr.mxu0 0.0
        %9478 = vmatpush1.msra.mxu0 %v8790
        %9479 = vmatprep.subr.mxu0 0.0
        %9480 = vmatpush1.msra.mxu0 %v8791
        %9481 = vmatprep.subr.mxu0 0.0
        %9482 = vmatpush1.msra.mxu0 %v8792
        %9483 = vmatprep.subr.mxu0 0.0
        %9484 = vmatpush1.msra.mxu0 %v8793
        %9485 = vmatprep.subr.mxu0 0.0
        %9486 = vmatpush1.msra.mxu0 %v8794
        %9487 = vmatprep.subr.mxu0 0.0
        %9488 = vmatpush1.msra.mxu0 %v8795
        %9489 = vmatprep.subr.mxu0 0.0
        %9490 = vmatpush1.msra.mxu0 %v8796
        %9491 = vmatprep.subr.mxu0 0.0
        %9492 = vmatpush1.msra.mxu0 %v8797
        %9493 = vmatprep.subr.mxu0 0.0
        %9494 = vmatpush1.msra.mxu0 %v8798
        %9495 = vmatprep.subr.mxu0 0.0
        %9496 = vmatpush1.msra.mxu0 %v8799
        %9497 = vmatprep.subr.mxu0 0.0
        %9498 = vmatpush1.msra.mxu0 %v8800
        %9499 = vmatprep.mubr.f32.mxu0 %v9212
        %9500 = vmatmul.mubr.f32.gmra.mrb[0].mxu0 %v9211
        %v9501 = vpop.f32.mrb[0].mxu0
        %v9502 = vadd.f32 %v8872, %v9501
        %v9503 = vpop.f32.mrb[0].mxu0
        %9504 = vmatprep.mubr.f32.mxu0 %v9218
        %9505 = vmatmul.mubr.f32.gmra.mrb[0].mxu0 %v9217
        %v9506 = vpop.f32.mrb[0].mxu0
        %v9507 = vadd.f32 %v8872, %v9506
        %v9508 = vpop.f32.mrb[0].mxu0
        %9509 = vmatprep.mubr.f32.mxu0 %v9224
        %9510 = vmatmul.mubr.f32.gmra.mrb[0].mxu0 %v9223
        %v9511 = vpop.f32.mrb[0].mxu0
        %v9512 = vadd.f32 %v8872, %v9511
        %v9513 = vpop.f32.mrb[0].mxu0
        %9514 = vmatprep.mubr.f32.mxu0 %v9230
        %9515 = vmatmul.mubr.f32.gmra.mrb[0].mxu0 %v9229
        %v9516 = vpop.f32.mrb[0].mxu0
        %v9517 = vadd.f32 %v8872, %v9516
        %v9518 = vpop.f32.mrb[0].mxu0
        %9519 = vmatprep.mubr.f32.mxu0 %v9236
        %9520 = vmatmul.mubr.f32.gmra.mrb[0].mxu0 %v9235
        %v9521 = vpop.f32.mrb[0].mxu0
        %v9522 = vadd.f32 %v8872, %v9521
        %v9523 = vpop.f32.mrb[0].mxu0
        %9524 = vmatprep.mubr.f32.mxu0 %v9242
        %9525 = vmatmul.mubr.f32.gmra.mrb[0].mxu0 %v9241
        %v9526 = vpop.f32.mrb[0].mxu0
        %v9527 = vadd.f32 %v8872, %v9526
        %v9528 = vpop.f32.mrb[0].mxu0
        %9529 = vmatprep.mubr.f32.mxu0 %v9248
        %9530 = vmatmul.mubr.f32.gmra.mrb[0].mxu0 %v9247
        %v9531 = vpop.f32.mrb[0].mxu0
        %v9532 = vadd.f32 %v8872, %v9531
        %v9533 = vpop.f32.mrb[0].mxu0
        %9534 = vmatprep.mubr.f32.mxu0 %v9254
        %9535 = vmatmul.mubr.f32.gmra.mrb[0].mxu0 %v9253
        %v9536 = vpop.f32.mrb[0].mxu0
        %v9537 = vadd.f32 %v8872, %v9536
        %v9538 = vpop.f32.mrb[0].mxu0
        %9539 = vmatprep.mubr.f32.mxu0 %v9260
        %9540 = vmatmul.mubr.f32.gmra.mrb[0].mxu0 %v9259
        %v9541 = vpop.f32.mrb[0].mxu0
        %v9542 = vadd.f32 %v8872, %v9541
        %v9543 = vpop.f32.mrb[0].mxu0
        %9544 = vmatprep.mubr.f32.mxu0 %v9266
        %9545 = vmatmul.mubr.f32.gmra.mrb[0].mxu0 %v9265
        %v9546 = vpop.f32.mrb[0].mxu0
        %v9547 = vadd.f32 %v8872, %v9546
        %v9548 = vpop.f32.mrb[0].mxu0
        %9549 = vmatprep.mubr.f32.mxu0 %v9272
        %9550 = vmatmul.mubr.f32.gmra.mrb[0].mxu0 %v9271
        %v9551 = vpop.f32.mrb[0].mxu0
        %v9552 = vadd.f32 %v8872, %v9551
        %v9553 = vpop.f32.mrb[0].mxu0
        %9554 = vmatprep.mubr.f32.mxu0 %v9278
        %9555 = vmatmul.mubr.f32.gmra.mrb[0].mxu0 %v9277
        %v9556 = vpop.f32.mrb[0].mxu0
        %v9557 = vadd.f32 %v8872, %v9556
        %v9558 = vpop.f32.mrb[0].mxu0
        %9559 = vmatprep.mubr.f32.mxu0 %v9284
        %9560 = vmatmul.mubr.f32.gmra.mrb[0].mxu0 %v9283
        %v9561 = vpop.f32.mrb[0].mxu0
        %v9562 = vadd.f32 %v8872, %v9561
        %v9563 = vpop.f32.mrb[0].mxu0
        %9564 = vmatprep.mubr.f32.mxu0 %v9290
        %9565 = vmatmul.mubr.f32.gmra.mrb[0].mxu0 %v9289
        %v9566 = vpop.f32.mrb[0].mxu0
        %v9567 = vadd.f32 %v8872, %v9566
        %v9568 = vpop.f32.mrb[0].mxu0
        %9569 = vmatprep.mubr.f32.mxu0 %v9296
        %9570 = vmatmul.mubr.f32.gmra.mrb[0].mxu0 %v9295
        %v9571 = vpop.f32.mrb[0].mxu0
        %v9572 = vadd.f32 %v8872, %v9571
        %v9573 = vpop.f32.mrb[0].mxu0
        %9574 = vmatprep.mubr.f32.mxu0 %v9302
        %9575 = vmatmul.mubr.f32.gmra.mrb[0].mxu0 %v9301
        %v9576 = vpop.f32.mrb[0].mxu0
        %v9577 = vadd.f32 %v8872, %v9576
        %v9578 = vpop.f32.mrb[0].mxu0
        %9579 = vdwg.mxu0
        %9580 = vmatprep.subr.mxu0 0.0
        %9581 = vmatpush1.msra.mxu0 %v8801
        %9582 = vmatprep.subr.mxu0 0.0
        %9583 = vmatpush1.msra.mxu0 %v8802
        %9584 = vmatprep.subr.mxu0 0.0
        %9585 = vmatpush1.msra.mxu0 %v8803
        %9586 = vmatprep.subr.mxu0 0.0
        %9587 = vmatpush1.msra.mxu0 %v8804
        %9588 = vmatprep.subr.mxu0 0.0
        %9589 = vmatpush1.msra.mxu0 %v8805
        %9590 = vmatprep.subr.mxu0 0.0
        %9591 = vmatpush1.msra.mxu0 %v8806
        %9592 = vmatprep.subr.mxu0 0.0
        %9593 = vmatpush1.msra.mxu0 %v8807
        %9594 = vmatprep.subr.mxu0 0.0
        %9595 = vmatpush1.msra.mxu0 %v8808
        %9596 = vmatprep.subr.mxu0 0.0
        %9597 = vmatpush1.msra.mxu0 %v8809
        %9598 = vmatprep.subr.mxu0 0.0
        %9599 = vmatpush1.msra.mxu0 %v8810
        %9600 = vmatprep.subr.mxu0 0.0
        %9601 = vmatpush1.msra.mxu0 %v8811
        %9602 = vmatprep.subr.mxu0 0.0
        %9603 = vmatpush1.msra.mxu0 %v8812
        %9604 = vmatprep.subr.mxu0 0.0
        %9605 = vmatpush1.msra.mxu0 %v8813
        %9606 = vmatprep.subr.mxu0 0.0
        %9607 = vmatpush1.msra.mxu0 %v8814
        %9608 = vmatprep.subr.mxu0 0.0
        %9609 = vmatpush1.msra.mxu0 %v8815
        %9610 = vmatprep.subr.mxu0 0.0
        %9611 = vmatpush1.msra.mxu0 %v8816
        %9612 = vmatprep.subr.mxu0 0.0
        %9613 = vmatpush1.msra.mxu0 %v8817
        %9614 = vmatprep.subr.mxu0 0.0
        %9615 = vmatpush1.msra.mxu0 %v8818
        %9616 = vmatprep.subr.mxu0 0.0
        %9617 = vmatpush1.msra.mxu0 %v8819
        %9618 = vmatprep.subr.mxu0 0.0
        %9619 = vmatpush1.msra.mxu0 %v8820
        %9620 = vmatprep.subr.mxu0 0.0
        %9621 = vmatpush1.msra.mxu0 %v8821
        %9622 = vmatprep.subr.mxu0 0.0
        %9623 = vmatpush1.msra.mxu0 %v8822
        %9624 = vmatprep.subr.mxu0 0.0
        %9625 = vmatpush1.msra.mxu0 %v8823
        %9626 = vmatprep.subr.mxu0 0.0
        %9627 = vmatpush1.msra.mxu0 %v8824
        %9628 = vmatprep.subr.mxu0 0.0
        %9629 = vmatpush1.msra.mxu0 %v8825
        %9630 = vmatprep.subr.mxu0 0.0
        %9631 = vmatpush1.msra.mxu0 %v8826
        %9632 = vmatprep.subr.mxu0 0.0
        %9633 = vmatpush1.msra.mxu0 %v8827
        %9634 = vmatprep.subr.mxu0 0.0
        %9635 = vmatpush1.msra.mxu0 %v8828
        %9636 = vmatprep.subr.mxu0 0.0
        %9637 = vmatpush1.msra.mxu0 %v8829
        %9638 = vmatprep.subr.mxu0 0.0
        %9639 = vmatpush1.msra.mxu0 %v8830
        %9640 = vmatprep.subr.mxu0 0.0
        %9641 = vmatpush1.msra.mxu0 %v8831
        %9642 = vmatprep.subr.mxu0 0.0
        %9643 = vmatpush1.msra.mxu0 %v8832
        %9644 = vmatprep.mubr.f32.mxu0 %v9214
        %9645 = vmatmul.mubr.f32.gmra.mrb[0].mxu0 %v9213
        %v9646 = vpop.f32.mrb[0].mxu0
        %v9647 = vadd.f32 %v9502, %v9646
        %v9648 = vpop.f32.mrb[0].mxu0
        %9649 = vmatprep.mubr.f32.mxu0 %v9220
        %9650 = vmatmul.mubr.f32.gmra.mrb[0].mxu0 %v9219
        %v9651 = vpop.f32.mrb[0].mxu0
        %v9652 = vadd.f32 %v9507, %v9651
        %v9653 = vpop.f32.mrb[0].mxu0
        %9654 = vmatprep.mubr.f32.mxu0 %v9226
        %9655 = vmatmul.mubr.f32.gmra.mrb[0].mxu0 %v9225
        %v9656 = vpop.f32.mrb[0].mxu0
        %v9657 = vadd.f32 %v9512, %v9656
        %v9658 = vpop.f32.mrb[0].mxu0
        %9659 = vmatprep.mubr.f32.mxu0 %v9232
        %9660 = vmatmul.mubr.f32.gmra.mrb[0].mxu0 %v9231
        %v9661 = vpop.f32.mrb[0].mxu0
        %v9662 = vadd.f32 %v9517, %v9661
        %v9663 = vpop.f32.mrb[0].mxu0
        %9664 = vmatprep.mubr.f32.mxu0 %v9238
        %9665 = vmatmul.mubr.f32.gmra.mrb[0].mxu0 %v9237
        %v9666 = vpop.f32.mrb[0].mxu0
        %v9667 = vadd.f32 %v9522, %v9666
        %v9668 = vpop.f32.mrb[0].mxu0
        %9669 = vmatprep.mubr.f32.mxu0 %v9244
        %9670 = vmatmul.mubr.f32.gmra.mrb[0].mxu0 %v9243
        %v9671 = vpop.f32.mrb[0].mxu0
        %v9672 = vadd.f32 %v9527, %v9671
        %v9673 = vpop.f32.mrb[0].mxu0
        %9674 = vmatprep.mubr.f32.mxu0 %v9250
        %9675 = vmatmul.mubr.f32.gmra.mrb[0].mxu0 %v9249
        %v9676 = vpop.f32.mrb[0].mxu0
        %v9677 = vadd.f32 %v9532, %v9676
        %v9678 = vpop.f32.mrb[0].mxu0
        %9679 = vmatprep.mubr.f32.mxu0 %v9256
        %9680 = vmatmul.mubr.f32.gmra.mrb[0].mxu0 %v9255
        %v9681 = vpop.f32.mrb[0].mxu0
        %v9682 = vadd.f32 %v9537, %v9681
        %v9683 = vpop.f32.mrb[0].mxu0
        %9684 = vmatprep.mubr.f32.mxu0 %v9262
        %9685 = vmatmul.mubr.f32.gmra.mrb[0].mxu0 %v9261
        %v9686 = vpop.f32.mrb[0].mxu0
        %v9687 = vadd.f32 %v9542, %v9686
        %v9688 = vpop.f32.mrb[0].mxu0
        %9689 = vmatprep.mubr.f32.mxu0 %v9268
        %9690 = vmatmul.mubr.f32.gmra.mrb[0].mxu0 %v9267
        %v9691 = vpop.f32.mrb[0].mxu0
        %v9692 = vadd.f32 %v9547, %v9691
        %v9693 = vpop.f32.mrb[0].mxu0
        %9694 = vmatprep.mubr.f32.mxu0 %v9274
        %9695 = vmatmul.mubr.f32.gmra.mrb[0].mxu0 %v9273
        %v9696 = vpop.f32.mrb[0].mxu0
        %v9697 = vadd.f32 %v9552, %v9696
        %v9698 = vpop.f32.mrb[0].mxu0
        %9699 = vmatprep.mubr.f32.mxu0 %v9280
        %9700 = vmatmul.mubr.f32.gmra.mrb[0].mxu0 %v9279
        %v9701 = vpop.f32.mrb[0].mxu0
        %v9702 = vadd.f32 %v9557, %v9701
        %v9703 = vpop.f32.mrb[0].mxu0
        %9704 = vmatprep.mubr.f32.mxu0 %v9286
        %9705 = vmatmul.mubr.f32.gmra.mrb[0].mxu0 %v9285
        %v9706 = vpop.f32.mrb[0].mxu0
        %v9707 = vadd.f32 %v9562, %v9706
        %v9708 = vpop.f32.mrb[0].mxu0
        %9709 = vmatprep.mubr.f32.mxu0 %v9292
        %9710 = vmatmul.mubr.f32.gmra.mrb[0].mxu0 %v9291
        %v9711 = vpop.f32.mrb[0].mxu0
        %v9712 = vadd.f32 %v9567, %v9711
        %v9713 = vpop.f32.mrb[0].mxu0
        %9714 = vmatprep.mubr.f32.mxu0 %v9298
        %9715 = vmatmul.mubr.f32.gmra.mrb[0].mxu0 %v9297
        %v9716 = vpop.f32.mrb[0].mxu0
        %v9717 = vadd.f32 %v9572, %v9716
        %v9718 = vpop.f32.mrb[0].mxu0
        %9719 = vmatprep.mubr.f32.mxu0 %v9304
        %9720 = vmatmul.mubr.f32.gmra.mrb[0].mxu0 %v9303
        %v9721 = vpop.f32.mrb[0].mxu0
        %v9722 = vadd.f32 %v9577, %v9721
        %v9723 = vpop.f32.mrb[0].mxu0
        %9724 = vdwg.mxu0
        %9725 = vmatprep.subr.mxu0 0.0
        %9726 = vmatpush1.msra.mxu0 %v8833
        %9727 = vmatprep.subr.mxu0 0.0
        %9728 = vmatpush1.msra.mxu0 %v8834
        %9729 = vmatprep.subr.mxu0 0.0
        %9730 = vmatpush1.msra.mxu0 %v8835
        %9731 = vmatprep.subr.mxu0 0.0
        %9732 = vmatpush1.msra.mxu0 %v8836
        %9733 = vmatprep.subr.mxu0 0.0
        %9734 = vmatpush1.msra.mxu0 %v8837
        %9735 = vmatprep.subr.mxu0 0.0
        %9736 = vmatpush1.msra.mxu0 %v8838
        %9737 = vmatprep.subr.mxu0 0.0
        %9738 = vmatpush1.msra.mxu0 %v8839
        %9739 = vmatprep.subr.mxu0 0.0
        %9740 = vmatpush1.msra.mxu0 %v8840
        %9741 = vmatprep.subr.mxu0 0.0
        %9742 = vmatpush1.msra.mxu0 %v8841
        %9743 = vmatprep.subr.mxu0 0.0
        %9744 = vmatpush1.msra.mxu0 %v8842
        %9745 = vmatprep.subr.mxu0 0.0
        %9746 = vmatpush1.msra.mxu0 %v8843
        %9747 = vmatprep.subr.mxu0 0.0
        %9748 = vmatpush1.msra.mxu0 %v8844
        %9749 = vmatprep.subr.mxu0 0.0
        %9750 = vmatpush1.msra.mxu0 %v8845
        %9751 = vmatprep.subr.mxu0 0.0
        %9752 = vmatpush1.msra.mxu0 %v8846
        %9753 = vmatprep.subr.mxu0 0.0
        %9754 = vmatpush1.msra.mxu0 %v8847
        %9755 = vmatprep.subr.mxu0 0.0
        %9756 = vmatpush1.msra.mxu0 %v8848
        %9757 = vmatprep.subr.mxu0 0.0
        %9758 = vmatpush1.msra.mxu0 %v8849
        %9759 = vmatprep.subr.mxu0 0.0
        %9760 = vmatpush1.msra.mxu0 %v8850
        %9761 = vmatprep.subr.mxu0 0.0
        %9762 = vmatpush1.msra.mxu0 %v8851
        %9763 = vmatprep.subr.mxu0 0.0
        %9764 = vmatpush1.msra.mxu0 %v8852
        %9765 = vmatprep.subr.mxu0 0.0
        %9766 = vmatpush1.msra.mxu0 %v8853
        %9767 = vmatprep.subr.mxu0 0.0
        %9768 = vmatpush1.msra.mxu0 %v8854
        %9769 = vmatprep.subr.mxu0 0.0
        %9770 = vmatpush1.msra.mxu0 %v8855
        %9771 = vmatprep.subr.mxu0 0.0
        %9772 = vmatpush1.msra.mxu0 %v8856
        %9773 = vmatprep.subr.mxu0 0.0
        %9774 = vmatpush1.msra.mxu0 %v8857
        %9775 = vmatprep.subr.mxu0 0.0
        %9776 = vmatpush1.msra.mxu0 %v8858
        %9777 = vmatprep.subr.mxu0 0.0
        %9778 = vmatpush1.msra.mxu0 %v8859
        %9779 = vmatprep.subr.mxu0 0.0
        %9780 = vmatpush1.msra.mxu0 %v8860
        %9781 = vmatprep.subr.mxu0 0.0
        %9782 = vmatpush1.msra.mxu0 %v8861
        %9783 = vmatprep.subr.mxu0 0.0
        %9784 = vmatpush1.msra.mxu0 %v8862
        %9785 = vmatprep.subr.mxu0 0.0
        %9786 = vmatpush1.msra.mxu0 %v8863
        %9787 = vmatprep.subr.mxu0 0.0
        %9788 = vmatpush1.msra.mxu0 %v8864
        %9789 = vmatprep.mubr.f32.mxu0 %v9216
        %9790 = vmatmul.mubr.f32.gmra.mrb[0].mxu0 %v9215
        %v9791 = vpop.f32.mrb[0].mxu0
        %v9792 = vadd.f32 %v9647, %v9791
        %v9793 = vpop.f32.mrb[0].mxu0
        %9794 = vmatprep.mubr.f32.mxu0 %v9222
        %9795 = vmatmul.mubr.f32.gmra.mrb[0].mxu0 %v9221
        %v9796 = vpop.f32.mrb[0].mxu0
        %v9797 = vadd.f32 %v9652, %v9796
        %v9798 = vpop.f32.mrb[0].mxu0
        %9799 = vmatprep.mubr.f32.mxu0 %v9228
        %9800 = vmatmul.mubr.f32.gmra.mrb[0].mxu0 %v9227
        %v9801 = vpop.f32.mrb[0].mxu0
        %v9802 = vadd.f32 %v9657, %v9801
        %v9803 = vpop.f32.mrb[0].mxu0
        %9804 = vmatprep.mubr.f32.mxu0 %v9234
        %9805 = vmatmul.mubr.f32.gmra.mrb[0].mxu0 %v9233
        %v9806 = vpop.f32.mrb[0].mxu0
        %v9807 = vadd.f32 %v9662, %v9806
        %v9808 = vpop.f32.mrb[0].mxu0
        %9809 = vmatprep.mubr.f32.mxu0 %v9240
        %9810 = vmatmul.mubr.f32.gmra.mrb[0].mxu0 %v9239
        %v9811 = vpop.f32.mrb[0].mxu0
        %v9812 = vadd.f32 %v9667, %v9811
        %v9813 = vpop.f32.mrb[0].mxu0
        %9814 = vmatprep.mubr.f32.mxu0 %v9246
        %9815 = vmatmul.mubr.f32.gmra.mrb[0].mxu0 %v9245
        %v9816 = vpop.f32.mrb[0].mxu0
        %v9817 = vadd.f32 %v9672, %v9816
        %v9818 = vpop.f32.mrb[0].mxu0
        %9819 = vmatprep.mubr.f32.mxu0 %v9252
        %9820 = vmatmul.mubr.f32.gmra.mrb[0].mxu0 %v9251
        %v9821 = vpop.f32.mrb[0].mxu0
        %v9822 = vadd.f32 %v9677, %v9821
        %v9823 = vpop.f32.mrb[0].mxu0
        %9824 = vmatprep.mubr.f32.mxu0 %v9258
        %9825 = vmatmul.mubr.f32.gmra.mrb[0].mxu0 %v9257
        %v9826 = vpop.f32.mrb[0].mxu0
        %v9827 = vadd.f32 %v9682, %v9826
        %v9828 = vpop.f32.mrb[0].mxu0
        %9829 = vmatprep.mubr.f32.mxu0 %v9264
        %9830 = vmatmul.mubr.f32.gmra.mrb[0].mxu0 %v9263
        %v9831 = vpop.f32.mrb[0].mxu0
        %v9832 = vadd.f32 %v9687, %v9831
        %v9833 = vpop.f32.mrb[0].mxu0
        %9834 = vmatprep.mubr.f32.mxu0 %v9270
        %9835 = vmatmul.mubr.f32.gmra.mrb[0].mxu0 %v9269
        %v9836 = vpop.f32.mrb[0].mxu0
        %v9837 = vadd.f32 %v9692, %v9836
        %v9838 = vpop.f32.mrb[0].mxu0
        %9839 = vmatprep.mubr.f32.mxu0 %v9276
        %9840 = vmatmul.mubr.f32.gmra.mrb[0].mxu0 %v9275
        %v9841 = vpop.f32.mrb[0].mxu0
        %v9842 = vadd.f32 %v9697, %v9841
        %v9843 = vpop.f32.mrb[0].mxu0
        %9844 = vmatprep.mubr.f32.mxu0 %v9282
        %9845 = vmatmul.mubr.f32.gmra.mrb[0].mxu0 %v9281
        %v9846 = vpop.f32.mrb[0].mxu0
        %v9847 = vadd.f32 %v9702, %v9846
        %v9848 = vpop.f32.mrb[0].mxu0
        %9849 = vmatprep.mubr.f32.mxu0 %v9288
        %9850 = vmatmul.mubr.f32.gmra.mrb[0].mxu0 %v9287
        %v9851 = vpop.f32.mrb[0].mxu0
        %v9852 = vadd.f32 %v9707, %v9851
        %v9853 = vpop.f32.mrb[0].mxu0
        %9854 = vmatprep.mubr.f32.mxu0 %v9294
        %9855 = vmatmul.mubr.f32.gmra.mrb[0].mxu0 %v9293
        %v9856 = vpop.f32.mrb[0].mxu0
        %v9857 = vadd.f32 %v9712, %v9856
        %v9858 = vpop.f32.mrb[0].mxu0
        %9859 = vmatprep.mubr.f32.mxu0 %v9300
        %9860 = vmatmul.mubr.f32.gmra.mrb[0].mxu0 %v9299
        %v9861 = vpop.f32.mrb[0].mxu0
        %v9862 = vadd.f32 %v9717, %v9861
        %v9863 = vpop.f32.mrb[0].mxu0
        %9864 = vmatprep.mubr.f32.mxu0 %v9306
        %9865 = vmatmul.mubr.f32.gmra.mrb[0].mxu0 %v9305
        %v9866 = vpop.f32.mrb[0].mxu0
        %v9867 = vadd.f32 %v9722, %v9866
        %v9868 = vpop.f32.mrb[0].mxu0
        %9869 = vdwg.mxu0
        %9870 = vmatprep.subr.mxu0 0.0
        %9871 = vmatpush1.msra.mxu0 %v8865
        %9872 = vmatprep.subr.mxu0 0.0
        %9873 = vmatpush1.msra.mxu0 %v8866
        %9874 = vmatprep.subr.mxu0 0.0
        %9875 = vmatpush1.msra.mxu0 0.0
        %9876 = vmatprep.subr.mxu0 0.0
        %9877 = vmatpush1.msra.mxu0 0.0
        %9878 = vmatprep.subr.mxu0 0.0
        %9879 = vmatpush1.msra.mxu0 0.0
        %9880 = vmatprep.subr.mxu0 0.0
        %9881 = vmatpush1.msra.mxu0 0.0
        %9882 = vmatprep.subr.mxu0 0.0
        %9883 = vmatpush1.msra.mxu0 0.0
        %9884 = vmatprep.subr.mxu0 0.0
        %9885 = vmatpush1.msra.mxu0 0.0
        %9886 = vmatprep.subr.mxu0 0.0
        %9887 = vmatpush1.msra.mxu0 0.0
        %9888 = vmatprep.subr.mxu0 0.0
        %9889 = vmatpush1.msra.mxu0 0.0
        %9890 = vmatprep.subr.mxu0 0.0
        %9891 = vmatpush1.msra.mxu0 0.0
        %9892 = vmatprep.subr.mxu0 0.0
        %9893 = vmatpush1.msra.mxu0 0.0
        %9894 = vmatprep.subr.mxu0 0.0
        %9895 = vmatpush1.msra.mxu0 0.0
        %9896 = vmatprep.subr.mxu0 0.0
        %9897 = vmatpush1.msra.mxu0 0.0
        %9898 = vmatprep.subr.mxu0 0.0
        %9899 = vmatpush1.msra.mxu0 0.0
        %9900 = vmatprep.subr.mxu0 0.0
        %9901 = vmatpush1.msra.mxu0 0.0
        %9902 = vmatprep.subr.mxu0 0.0
        %9903 = vmatpush1.msra.mxu0 0.0
        %9904 = vmatprep.subr.mxu0 0.0
        %9905 = vmatpush1.msra.mxu0 0.0
        %9906 = vmatprep.subr.mxu0 0.0
        %9907 = vmatpush1.msra.mxu0 0.0
        %9908 = vmatprep.subr.mxu0 0.0
        %9909 = vmatpush1.msra.mxu0 0.0
        %9910 = vmatprep.subr.mxu0 0.0
        %9911 = vmatpush1.msra.mxu0 0.0
        %9912 = vmatprep.subr.mxu0 0.0
        %9913 = vmatpush1.msra.mxu0 0.0
        %9914 = vmatprep.subr.mxu0 0.0
        %9915 = vmatpush1.msra.mxu0 0.0
        %9916 = vmatprep.subr.mxu0 0.0
        %9917 = vmatpush1.msra.mxu0 0.0
        %9918 = vmatprep.subr.mxu0 0.0
        %9919 = vmatpush1.msra.mxu0 0.0
        %9920 = vmatprep.subr.mxu0 0.0
        %9921 = vmatpush1.msra.mxu0 0.0
        %9922 = vmatprep.subr.mxu0 0.0
        %9923 = vmatpush1.msra.mxu0 0.0
        %9924 = vmatprep.subr.mxu0 0.0
        %9925 = vmatpush1.msra.mxu0 0.0
        %9926 = vmatprep.subr.mxu0 0.0
        %9927 = vmatpush1.msra.mxu0 0.0
        %9928 = vmatprep.subr.mxu0 0.0
        %9929 = vmatpush1.msra.mxu0 0.0
        %9930 = vmatprep.subr.mxu0 0.0
        %9931 = vmatpush1.msra.mxu0 0.0
        %9932 = vmatprep.subr.mxu0 0.0
        %9933 = vmatpush1.msra.mxu0 0.0
        %9934 = vmatprep.mubr.f32.mxu0 0.0
        %9935 = vmatmul.mubr.f32.gmra.mrb[0].mxu0 %v9403
        %v9936 = vpop.f32.mrb[0].mxu0
        %v9937 = vadd.f32 %v9792, %v9936
        %v9938 = vpop.f32.mrb[0].mxu0
        %9939 = vmatprep.mubr.f32.mxu0 0.0
        %9940 = vmatmul.mubr.f32.gmra.mrb[0].mxu0 %v9405
        %v9941 = vpop.f32.mrb[0].mxu0
        %v9942 = vadd.f32 %v9797, %v9941
        %v9943 = vpop.f32.mrb[0].mxu0
        %9944 = vmatprep.mubr.f32.mxu0 0.0
        %9945 = vmatmul.mubr.f32.gmra.mrb[0].mxu0 %v9407
        %v9946 = vpop.f32.mrb[0].mxu0
        %v9947 = vadd.f32 %v9802, %v9946
        %v9948 = vpop.f32.mrb[0].mxu0
        %9949 = vmatprep.mubr.f32.mxu0 0.0
        %9950 = vmatmul.mubr.f32.gmra.mrb[0].mxu0 %v9409
        %v9951 = vpop.f32.mrb[0].mxu0
        %v9952 = vadd.f32 %v9807, %v9951
        %v9953 = vpop.f32.mrb[0].mxu0
        %9954 = vmatprep.mubr.f32.mxu0 0.0
        %9955 = vmatmul.mubr.f32.gmra.mrb[0].mxu0 %v9411
        %v9956 = vpop.f32.mrb[0].mxu0
        %v9957 = vadd.f32 %v9812, %v9956
        %v9958 = vpop.f32.mrb[0].mxu0
        %9959 = vmatprep.mubr.f32.mxu0 0.0
        %9960 = vmatmul.mubr.f32.gmra.mrb[0].mxu0 %v9413
        %v9961 = vpop.f32.mrb[0].mxu0
        %v9962 = vadd.f32 %v9817, %v9961
        %v9963 = vpop.f32.mrb[0].mxu0
        %9964 = vmatprep.mubr.f32.mxu0 0.0
        %9965 = vmatmul.mubr.f32.gmra.mrb[0].mxu0 %v9415
        %v9966 = vpop.f32.mrb[0].mxu0
        %v9967 = vadd.f32 %v9822, %v9966
        %v9968 = vpop.f32.mrb[0].mxu0
        %9969 = vmatprep.mubr.f32.mxu0 0.0
        %9970 = vmatmul.mubr.f32.gmra.mrb[0].mxu0 %v9417
        %v9971 = vpop.f32.mrb[0].mxu0
        %v9972 = vadd.f32 %v9827, %v9971
        %v9973 = vpop.f32.mrb[0].mxu0
        %9974 = vmatprep.mubr.f32.mxu0 0.0
        %9975 = vmatmul.mubr.f32.gmra.mrb[0].mxu0 %v9419
        %v9976 = vpop.f32.mrb[0].mxu0
        %v9977 = vadd.f32 %v9832, %v9976
        %v9978 = vpop.f32.mrb[0].mxu0
        %9979 = vmatprep.mubr.f32.mxu0 0.0
        %9980 = vmatmul.mubr.f32.gmra.mrb[0].mxu0 %v9421
        %v9981 = vpop.f32.mrb[0].mxu0
        %v9982 = vadd.f32 %v9837, %v9981
        %v9983 = vpop.f32.mrb[0].mxu0
        %9984 = vmatprep.mubr.f32.mxu0 0.0
        %9985 = vmatmul.mubr.f32.gmra.mrb[0].mxu0 %v9423
        %v9986 = vpop.f32.mrb[0].mxu0
        %v9987 = vadd.f32 %v9842, %v9986
        %v9988 = vpop.f32.mrb[0].mxu0
        %9989 = vmatprep.mubr.f32.mxu0 0.0
        %9990 = vmatmul.mubr.f32.gmra.mrb[0].mxu0 %v9425
        %v9991 = vpop.f32.mrb[0].mxu0
        %v9992 = vadd.f32 %v9847, %v9991
        %v9993 = vpop.f32.mrb[0].mxu0
        %9994 = vmatprep.mubr.f32.mxu0 0.0
        %9995 = vmatmul.mubr.f32.gmra.mrb[0].mxu0 %v9427
        %v9996 = vpop.f32.mrb[0].mxu0
        %v9997 = vadd.f32 %v9852, %v9996
        %v9998 = vpop.f32.mrb[0].mxu0
        %9999 = vmatprep.mubr.f32.mxu0 0.0
        %10000 = vmatmul.mubr.f32.gmra.mrb[0].mxu0 %v9429
        %v10001 = vpop.f32.mrb[0].mxu0
        %v10002 = vadd.f32 %v9857, %v10001
        %v10003 = vpop.f32.mrb[0].mxu0
        %10004 = vmatprep.mubr.f32.mxu0 0.0
        %10005 = vmatmul.mubr.f32.gmra.mrb[0].mxu0 %v9431
        %v10006 = vpop.f32.mrb[0].mxu0
        %v10007 = vadd.f32 %v9862, %v10006
        %v10008 = vpop.f32.mrb[0].mxu0
        %10009 = vmatprep.mubr.f32.mxu0 0.0
        %10010 = vmatmul.mubr.f32.gmra.mrb[0].mxu0 %v9433
        %v10011 = vpop.f32.mrb[0].mxu0
        %v10012 = vadd.f32 %v9867, %v10011
        %v10013 = vpop.f32.mrb[0].mxu0
        %10014 = vdwg.mxu0
        %v10015 = vmax.f32 %v9937, 0.0
        %v10016 = vmax.f32 %v9942, 0.0
        %v10017 = vmax.f32 %v9947, 0.0
        %v10018 = vmax.f32 %v9952, 0.0
        %v10019 = vmax.f32 %v9957, 0.0
        %v10020 = vmax.f32 %v9962, 0.0
        %v10021 = vmax.f32 %v9967, 0.0
        %v10022 = vmax.f32 %v9972, 0.0
        %v10023 = vmax.f32 %v9977, 0.0
        %v10024 = vmax.f32 %v9982, 0.0
        %v10025 = vmax.f32 %v9987, 0.0
        %v10026 = vmax.f32 %v9992, 0.0
        %v10027 = vmax.f32 %v9997, 0.0
        %v10028 = vmax.f32 %v10002, 0.0
        %v10029 = vmax.f32 %v10007, 0.0
        %v10030 = vmax.f32 %v10012, 0.0
        %vm10031 = vcmask 80896
        %10032 = vst.msk [vmem:[%s298] sm:$0xff] %vm10031, %v10015
        %10033 = vst.msk [vmem:[%s298 + $0x8] sm:$0xff] %vm10031, %v10016
        %10034 = vst.msk [vmem:[%s298 + $0x10] sm:$0xff] %vm10031, %v10017
        %10035 = vst.msk [vmem:[%s298 + $0x18] sm:$0xff] %vm10031, %v10018
        %10036 = vst.msk [vmem:[%s298 + $0x20] sm:$0xff] %vm10031, %v10019
        %10037 = vst.msk [vmem:[%s298 + $0x28] sm:$0xff] %vm10031, %v10020
        %10038 = vst.msk [vmem:[%s298 + $0x30] sm:$0xff] %vm10031, %v10021
        %10039 = vst.msk [vmem:[%s298 + $0x38] sm:$0xff] %vm10031, %v10022
        %10040 = vst.msk [vmem:[%s298 + $0x40] sm:$0xff] %vm10031, %v10023
        %10041 = vst.msk [vmem:[%s298 + $0x48] sm:$0xff] %vm10031, %v10024
        %10042 = vst.msk [vmem:[%s298 + $0x50] sm:$0xff] %vm10031, %v10025
        %10043 = vst.msk [vmem:[%s298 + $0x58] sm:$0xff] %vm10031, %v10026
        %10044 = vst.msk [vmem:[%s298 + $0x60] sm:$0xff] %vm10031, %v10027
        %10045 = vst.msk [vmem:[%s298 + $0x68] sm:$0xff] %vm10031, %v10028
        %10046 = vst.msk [vmem:[%s298 + $0x70] sm:$0xff] %vm10031, %v10029
        %10047 = vst.msk [vmem:[%s298 + $0x78] sm:$0xff] %vm10031, %v10030
        %s10048 = smul.u32 16, %s20
        %p10049 = scmp.lt.s32.totalorder %s10048, 31
        %s10050 = scalar_select %p10049, %s10048, 31
        %s10051 = smul.addr %s10050, 8
        %s10052 = scalar_lea.vmem %s7, %s10051
        // Predicated region
        $region53: #{tpu_custom_call.1} parent=47 // pred_check
          %p10053 = pneg %p190
        $region54: #{tpu_custom_call.1} parent=47 // pred_check_branch
          %10055 = sbr.rel (%p10053) target = $region56
        $region55: #{tpu_custom_call.1} parent=47 // pred_region
          %s10056 = smul.u32 16, %s20
        $region56: #{tpu_custom_call.1} parent=47 // pred_fallthru
          _
      $region48: #{tpu_custom_call.1} parent=5 // pred_fallthru
        _
      %p10057 = scmp.le.s32.totalorder 2, %s15
      // Predicated region
      $region57: #{tpu_custom_call.1} parent=5 // pred_check
        %p10058 = pneg %p10057
      $region58: #{tpu_custom_call.1} parent=5 // pred_check_branch
        %10060 = sbr.rel (%p10058) target = $region60
      $region59: #{tpu_custom_call.1} parent=5 // pred_region
        %s10061 = ssub.s32 %s15, 2
        // Predicated region
        $region61: #{tpu_custom_call.1} parent=59 // pred_check
          %p10062 = pneg %p196
        $region62: #{tpu_custom_call.1} parent=59 // pred_check_branch
          %10064 = sbr.rel (%p10062) target = $region64
        $region63: #{tpu_custom_call.1} parent=59 // pred_region
          %s10065 = smul.u32 16, %s21
          %p10066 = scmp.lt.s32.totalorder %s10065, 31
          %s10067 = scalar_select %p10066, %s10065, 31
          %s10068 = smul.addr %s10067, 8
          %s10069 = scalar_lea.vmem %s7, %s10068
        $region64: #{tpu_custom_call.1} parent=59 // pred_fallthru
          _
      $region60: #{tpu_custom_call.1} parent=5 // pred_fallthru
        _
    $region6: #{tpu_custom_call.1} parent=1 // loop_footer
      %s19 = sadd.s32 1, %s15
    $region7: #{tpu_custom_call.1} parent=1 // loop_footer_branch
      %14 = sbr.rel target = $region3
    $region8: #{tpu_custom_call.1} parent=1 // loop_exit
      _
    %10070 = vsyncpa [#allocation5], 1
    %s10071 = scalar_lea.sflag [#allocation5], 1
    %10072 = vsyncpa %s10071, 1

</llo_original>
